<compile_context>
chip_gen: v7x
topology: tpu7x:2x2x1
jax: 0.10.0
libtpu: 0.0.40
codegen_flags: <defaults>
</compile_context>

<pallas_src>
import functools

import jax
import jax.numpy as jnp
import numpy as np
from jax.experimental import pallas as pl
from jax.experimental.pallas import tpu as pltpu

LEAKY_SLOPE = 0.3
BN_EPS = 1e-5


# ----------------------------------------------------------------------------
# Fused whole-network kernel
# ----------------------------------------------------------------------------
def _disc_forward_kernel(x_ref, pw_ref, pb_ref, rw_ref, rs_ref, rt_ref,
                         fcw_ref, fcb_ref, gmat_ref, *rest, lengths):
    nb = len(lengths)                      # number of residual blocks
    pos_refs = rest[:nb]                   # (1, N*L_i) int32 within-segment pos
    pmat_refs = rest[nb:2 * nb - 1]        # avg-pool matrices (block diagonal)
    o_ref = rest[-1]                       # (1, N) output

    def conv_affine(h, pos, lseg, w_flat, scale, shift, act, residual=None):
        """'same' Conv1d as one im2col MXU matmul (+BN affine, LeakyReLU, res)."""
        cin, width = h.shape
        ktaps = w_flat.shape[1] // cin
        pad = (ktaps - 1) // 2
        taps = []
        for k in range(ktaps):             # static unroll: builds (K*Cin, W)
            s = pad - k                    # tap value = h[:, g - s]
            if s == 0:
                t = h
            else:
                t = jnp.roll(h, s, axis=1)
                if s > 0:                  # zero lanes that crossed a batch segment
                    t = jnp.where(pos >= s, t, 0.0)
                else:
                    t = jnp.where(pos < lseg + s, t, 0.0)
            taps.append(t)
        xcol = jnp.concatenate(taps, axis=0).astype(jnp.bfloat16)
        y = jnp.dot(w_flat, xcol, preferred_element_type=jnp.float32)
        if scale is not None:
            y = y * scale
        y = y + shift
        if act:
            y = jnp.where(y >= 0, y, LEAKY_SLOPE * y)
        if residual is not None:
            y = y + residual
        return y

    # pri_block: Conv1d(c_dim -> C, k=9, pad=4, bias=True) + LeakyReLU(0.3)
    h = conv_affine(x_ref[...], pos_refs[0][...], lengths[0], pw_ref[...],
                    None, pb_ref[...], act=True)

    # ResidualBlock, then num_layers x [AvgPool1d(3,2,1), ResidualBlock]
    for i in range(nb):
        if i > 0:  # AvgPool1d(k=3,s=2,p=1) as a matmul with a constant matrix
            h = jnp.dot(h, pmat_refs[i - 1][...],
                        preferred_element_type=jnp.float32)
        pos = pos_refs[i][...]
        lseg = lengths[i]
        res = h
        t = conv_affine(h, pos, lseg, rw_ref[i, 0], rs_ref[i, 0], rt_ref[i, 0],
                        act=True)
        h = conv_affine(t, pos, lseg, rw_ref[i, 1], rs_ref[i, 1], rt_ref[i, 1],
                        act=False, residual=res)

    # head: global average pool over each batch segment + Linear(C, 1)
    pooled = jnp.dot(h, gmat_ref[...], preferred_element_type=jnp.float32)  # (C, N)
    out = jnp.dot(fcw_ref[...], pooled,
                  preferred_element_type=jnp.float32) + fcb_ref[...]        # (1, N)
    o_ref[...] = out.astype(o_ref.dtype)


# ----------------------------------------------------------------------------
# Wrapper: single pallas_call for the whole forward pass
# ----------------------------------------------------------------------------
def discriminator_forward(packed, x):
    N, c_dim, L = x.shape
    C = packed["pw"].shape[0]
    nb = packed["rw"].shape[0]
    num_layers = nb - 1
    c_pad = ((c_dim + 7) // 8) * 8

    lengths = [L]
    for _ in range(num_layers):
        lengths.append((lengths[-1] - 1) // 2 + 1)
    lengths = tuple(lengths)

    # Pack the batch into the lane dimension: (c_pad, N*L); batch n occupies
    # lanes [n*L, (n+1)*L).  Channel dim zero-padded to a sublane multiple.
    xp = jnp.transpose(x, (1, 0, 2)).reshape(c_dim, N * L).astype(jnp.float32)
    xp = jnp.pad(xp, ((0, c_pad - c_dim), (0, 0)))

    # Structural constants (numpy at trace time; tiny).
    pos_arrays = [jnp.asarray(np.tile(np.arange(Ls, dtype=np.int32), N)[None, :])
                  for Ls in lengths]
    pmats = []
    for i in range(num_layers):
        Lin, Lout = lengths[i], lengths[i + 1]
        P = np.zeros((N * Lin, N * Lout), np.float32)
        for n in range(N):
            for j in range(Lout):
                for src in (2 * j - 1, 2 * j, 2 * j + 1):
                    if 0 <= src < Lin:  # count_include_pad=True -> always /3
                        P[n * Lin + src, n * Lout + j] = 1.0 / 3.0
        pmats.append(jnp.asarray(P))
    Lf = lengths[-1]
    G = np.zeros((N * Lf, N), np.float32)
    for n in range(N):
        G[n * Lf:(n + 1) * Lf, n] = 1.0 / Lf
    gmat = jnp.asarray(G)

    args = [xp, packed["pw"], packed["pb"], packed["rw"], packed["rs"],
            packed["rt"], packed["fcw"], packed["fcb"], gmat,
            *pos_arrays, *pmats]

    def full_spec(a):
        nd = a.ndim
        return pl.BlockSpec(a.shape, lambda i, _nd=nd: (0,) * _nd)

    kernel = functools.partial(_disc_forward_kernel, lengths=lengths)
    out = pl.pallas_call(
        kernel,
        out_shape=jax.ShapeDtypeStruct((1, N), jnp.float32),
        grid=(1,),
        in_specs=[full_spec(a) for a in args],
        out_specs=pl.BlockSpec((1, N), lambda i: (0, 0)),
        compiler_params=pltpu.CompilerParams(
            dimension_semantics=("arbitrary",)),
    )(*args)
    return out.T  # (N, 1)


# ----------------------------------------------------------------------------
# Parameters: synthetic init (PyTorch layout) + one-time prepack for the kernel
# ----------------------------------------------------------------------------
def init_params(key, c_dim=12, num_layers=6, num_channels=64):
    n_keys = 4 + 10 * (num_layers + 1)
    keys = iter(jax.random.split(key, n_keys))

    def nrm(shape, s=0.05):
        return s * jax.random.normal(next(keys), shape, dtype=jnp.float32)

    params = {
        "pri_w": nrm((num_channels, c_dim, 9)),
        "pri_b": nrm((num_channels,)),
        "fc_w": nrm((1, num_channels)),
        "fc_b": nrm((1,)),
        "blocks": [],
    }
    for _ in range(num_layers + 1):
        blk = {}
        for j in (1, 2):
            blk[f"conv{j}_w"] = nrm((num_channels, num_channels, 3))
            gamma = 1.0 + 0.1 * jax.random.normal(next(keys), (num_channels,), jnp.float32)
            beta = 0.1 * jax.random.normal(next(keys), (num_channels,), jnp.float32)
            rmean = 0.1 * jax.random.normal(next(keys), (num_channels,), jnp.float32)
            rvar = jax.random.uniform(next(keys), (num_channels,), jnp.float32, 0.5, 1.5)
            scale = gamma * jax.lax.rsqrt(rvar + BN_EPS)   # eval-mode BN folded
            shift = beta - rmean * scale
            blk[f"bn{j}_scale"] = scale
            blk[f"bn{j}_shift"] = shift
        params["blocks"].append(blk)
    return params


def prepack_params(params):
    """Hoist all weight transposes/reshapes out of the forward pass."""
    C, c_dim, K0 = params["pri_w"].shape
    c_pad = ((c_dim + 7) // 8) * 8
    pw = jnp.zeros((C, K0, c_pad), jnp.float32)
    pw = pw.at[:, :, :c_dim].set(jnp.transpose(params["pri_w"], (0, 2, 1)))
    pw = pw.reshape(C, K0 * c_pad).astype(jnp.bfloat16)

    rw, rs, rt = [], [], []
    for blk in params["blocks"]:
        w1 = jnp.transpose(blk["conv1_w"], (0, 2, 1)).reshape(C, 3 * C)
        w2 = jnp.transpose(blk["conv2_w"], (0, 2, 1)).reshape(C, 3 * C)
        rw.append(jnp.stack([w1, w2]))
        rs.append(jnp.stack([blk["bn1_scale"], blk["bn2_scale"]]).reshape(2, C, 1))
        rt.append(jnp.stack([blk["bn1_shift"], blk["bn2_shift"]]).reshape(2, C, 1))

    return {
        "pw": pw,                                                  # (C, 9*c_pad) bf16
        "pb": params["pri_b"].reshape(C, 1).astype(jnp.float32),
        "rw": jnp.stack(rw).astype(jnp.bfloat16),                  # (nb, 2, C, 3C)
        "rs": jnp.stack(rs).astype(jnp.float32),                   # (nb, 2, C, 1)
        "rt": jnp.stack(rt).astype(jnp.float32),                   # (nb, 2, C, 1)
        "fcw": params["fc_w"].reshape(1, C).astype(jnp.float32),
        "fcb": params["fc_b"].reshape(1, 1).astype(jnp.float32),
    }


# ----------------------------------------------------------------------------
# Pure-JAX reference (same bf16-in / f32-accumulate convs) for a self-check
# ----------------------------------------------------------------------------
def reference_forward(params, x):
    def conv(h, w, pad):
        return jax.lax.conv_general_dilated(
            h.astype(jnp.bfloat16), w.astype(jnp.bfloat16),
            window_strides=(1,), padding=[(pad, pad)],
            dimension_numbers=("NCH", "OIH", "NCH"),
            preferred_element_type=jnp.float32)

    def leaky(v):
        return jnp.where(v >= 0, v, LEAKY_SLOPE * v)

    h = leaky(conv(x, params["pri_w"], 4) + params["pri_b"][None, :, None])
    for i, blk in enumerate(params["blocks"]):
        if i > 0:  # AvgPool1d(k=3, s=2, p=1), count_include_pad=True
            Lin = h.shape[-1]
            Lout = (Lin - 1) // 2 + 1
            hp = jnp.pad(h, ((0, 0), (0, 0), (1, 1)))
            h = (hp[:, :, 0:2 * Lout:2] + hp[:, :, 1:2 * Lout:2]
                 + hp[:, :, 2:2 * Lout + 1:2]) / 3.0
        r = h
        t = leaky(conv(h, blk["conv1_w"], 1) * blk["bn1_scale"][None, :, None]
                  + blk["bn1_shift"][None, :, None])
        u = (conv(t, blk["conv2_w"], 1) * blk["bn2_scale"][None, :, None]
             + blk["bn2_shift"][None, :, None])
        h = u + r
    m = jnp.mean(h, axis=-1)                        # (N, C)
    return m @ params["fc_w"].T + params["fc_b"][None, :]


if __name__ == "__main__":
    C_DIM, NUM_LAYERS, NUM_CHANNELS = 12, 6, 64
    N, L = 2, 128

    key = jax.random.PRNGKey(0)
    kp, kx = jax.random.split(key)
    params = init_params(kp, c_dim=C_DIM, num_layers=NUM_LAYERS,
                         num_channels=NUM_CHANNELS)
    packed = prepack_params(params)
    x = jax.random.normal(kx, (N, C_DIM, L), dtype=jnp.float32)

    out = jax.jit(discriminator_forward)(packed, x)
    out = jax.block_until_ready(out)
    assert out.shape == (N, 1) and out.dtype == jnp.float32

    ref = reference_forward(params, x)
    np.testing.assert_allclose(np.asarray(out), np.asarray(ref),
                               rtol=5e-2, atol=5e-3)
    print("KERNEL_OK")
</pallas_src>

<mosaic_0001>
module attributes {stable_mosaic.version = 11 : i64} {
  func.func @_disc_forward_kernel(%arg0: i32, %arg1: memref<16x256xf32, #tpu.memory_space<vmem>>, %arg2: memref<64x144xbf16, #tpu.memory_space<vmem>>, %arg3: memref<64x1xf32, #tpu.memory_space<vmem>>, %arg4: memref<7x2x64x192xbf16, #tpu.memory_space<vmem>>, %arg5: memref<7x2x64x1xf32, #tpu.memory_space<vmem>>, %arg6: memref<7x2x64x1xf32, #tpu.memory_space<vmem>>, %arg7: memref<1x64xf32, #tpu.memory_space<vmem>>, %arg8: memref<1x1xf32, #tpu.memory_space<vmem>>, %arg9: memref<4x2xf32, #tpu.memory_space<vmem>>, %arg10: memref<1x256xi32, #tpu.memory_space<vmem>>, %arg11: memref<1x128xi32, #tpu.memory_space<vmem>>, %arg12: memref<1x64xi32, #tpu.memory_space<vmem>>, %arg13: memref<1x32xi32, #tpu.memory_space<vmem>>, %arg14: memref<1x16xi32, #tpu.memory_space<vmem>>, %arg15: memref<1x8xi32, #tpu.memory_space<vmem>>, %arg16: memref<1x4xi32, #tpu.memory_space<vmem>>, %arg17: memref<256x128xf32, #tpu.memory_space<vmem>>, %arg18: memref<128x64xf32, #tpu.memory_space<vmem>>, %arg19: memref<64x32xf32, #tpu.memory_space<vmem>>, %arg20: memref<32x16xf32, #tpu.memory_space<vmem>>, %arg21: memref<16x8xf32, #tpu.memory_space<vmem>>, %arg22: memref<8x4xf32, #tpu.memory_space<vmem>>, %arg23: memref<1x2xf32, #tpu.memory_space<vmem>>) attributes {dimension_semantics = [#tpu.dimension_semantics<arbitrary>], iteration_bounds = array<i64: 1>, scalar_prefetch = 0 : i64, scratch_operands = 0 : i64, tpu.core_type = #tpu.core_type<tc>, window_params = [{pipeline_mode = #tpu.pipeline_mode<synchronous>, transform_indices = @transform_0, window_bounds = array<i64: 16, 256>}, {pipeline_mode = #tpu.pipeline_mode<synchronous>, transform_indices = @transform_1, window_bounds = array<i64: 64, 144>}, {pipeline_mode = #tpu.pipeline_mode<synchronous>, transform_indices = @transform_2, window_bounds = array<i64: 64, 1>}, {pipeline_mode = #tpu.pipeline_mode<synchronous>, transform_indices = @transform_3, window_bounds = array<i64: 7, 2, 64, 192>}, {pipeline_mode = #tpu.pipeline_mode<synchronous>, transform_indices = @transform_4, window_bounds = array<i64: 7, 2, 64, 1>}, {pipeline_mode = #tpu.pipeline_mode<synchronous>, transform_indices = @transform_5, window_bounds = array<i64: 7, 2, 64, 1>}, {pipeline_mode = #tpu.pipeline_mode<synchronous>, transform_indices = @transform_6, window_bounds = array<i64: 1, 64>}, {pipeline_mode = #tpu.pipeline_mode<synchronous>, transform_indices = @transform_7, window_bounds = array<i64: 1, 1>}, {pipeline_mode = #tpu.pipeline_mode<synchronous>, transform_indices = @transform_8, window_bounds = array<i64: 4, 2>}, {pipeline_mode = #tpu.pipeline_mode<synchronous>, transform_indices = @transform_9, window_bounds = array<i64: 1, 256>}, {pipeline_mode = #tpu.pipeline_mode<synchronous>, transform_indices = @transform_10, window_bounds = array<i64: 1, 128>}, {pipeline_mode = #tpu.pipeline_mode<synchronous>, transform_indices = @transform_11, window_bounds = array<i64: 1, 64>}, {pipeline_mode = #tpu.pipeline_mode<synchronous>, transform_indices = @transform_12, window_bounds = array<i64: 1, 32>}, {pipeline_mode = #tpu.pipeline_mode<synchronous>, transform_indices = @transform_13, window_bounds = array<i64: 1, 16>}, {pipeline_mode = #tpu.pipeline_mode<synchronous>, transform_indices = @transform_14, window_bounds = array<i64: 1, 8>}, {pipeline_mode = #tpu.pipeline_mode<synchronous>, transform_indices = @transform_15, window_bounds = array<i64: 1, 4>}, {pipeline_mode = #tpu.pipeline_mode<synchronous>, transform_indices = @transform_16, window_bounds = array<i64: 256, 128>}, {pipeline_mode = #tpu.pipeline_mode<synchronous>, transform_indices = @transform_17, window_bounds = array<i64: 128, 64>}, {pipeline_mode = #tpu.pipeline_mode<synchronous>, transform_indices = @transform_18, window_bounds = array<i64: 64, 32>}, {pipeline_mode = #tpu.pipeline_mode<synchronous>, transform_indices = @transform_19, window_bounds = array<i64: 32, 16>}, {pipeline_mode = #tpu.pipeline_mode<synchronous>, transform_indices = @transform_20, window_bounds = array<i64: 16, 8>}, {pipeline_mode = #tpu.pipeline_mode<synchronous>, transform_indices = @transform_21, window_bounds = array<i64: 8, 4>}, {pipeline_mode = #tpu.pipeline_mode<synchronous>, transform_indices = @transform_22, window_bounds = array<i64: 1, 2>}]} {
    %c0 = arith.constant 0 : index
    %c0_0 = arith.constant 0 : index
    %0 = vector.load %arg1[%c0, %c0_0] : memref<16x256xf32, #tpu.memory_space<vmem>>, vector<16x256xf32>
    %c0_1 = arith.constant 0 : index
    %c0_2 = arith.constant 0 : index
    %1 = vector.load %arg10[%c0_1, %c0_2] : memref<1x256xi32, #tpu.memory_space<vmem>>, vector<1x256xi32>
    %c0_3 = arith.constant 0 : index
    %c0_4 = arith.constant 0 : index
    %2 = vector.load %arg2[%c0_3, %c0_4] : memref<64x144xbf16, #tpu.memory_space<vmem>>, vector<64x144xbf16>
    %c0_5 = arith.constant 0 : index
    %c0_6 = arith.constant 0 : index
    %3 = vector.load %arg3[%c0_5, %c0_6] : memref<64x1xf32, #tpu.memory_space<vmem>>, vector<64x1xf32>
    %4 = vector.extract_strided_slice %0 {offsets = [0, 252], sizes = [16, 4], strides = [1, 1]} : vector<16x256xf32> to vector<16x4xf32>
    %5 = vector.extract_strided_slice %0 {offsets = [0, 0], sizes = [16, 252], strides = [1, 1]} : vector<16x256xf32> to vector<16x252xf32>
    %6 = tpu.concatenate %4, %5 in 1 : vector<16x4xf32>, vector<16x252xf32> -> vector<16x256xf32>
    %c4_i32 = arith.constant 4 : i32
    %7 = vector.broadcast %c4_i32 : i32 to vector<1x256xi32>
    %8 = arith.cmpi sge, %1, %7 : vector<1x256xi32>
    %cst = arith.constant 0.000000e+00 : f32
    %9 = vector.shape_cast %8 : vector<1x256xi1> to vector<1x256xi1>
    %10 = vector.broadcast %9 : vector<1x256xi1> to vector<16x256xi1>
    %11 = vector.broadcast %cst : f32 to vector<16x256xf32>
    %12 = arith.select %10, %6, %11 : vector<16x256xi1>, vector<16x256xf32>
    %13 = vector.extract_strided_slice %0 {offsets = [0, 253], sizes = [16, 3], strides = [1, 1]} : vector<16x256xf32> to vector<16x3xf32>
    %14 = vector.extract_strided_slice %0 {offsets = [0, 0], sizes = [16, 253], strides = [1, 1]} : vector<16x256xf32> to vector<16x253xf32>
    %15 = tpu.concatenate %13, %14 in 1 : vector<16x3xf32>, vector<16x253xf32> -> vector<16x256xf32>
    %c3_i32 = arith.constant 3 : i32
    %16 = vector.broadcast %c3_i32 : i32 to vector<1x256xi32>
    %17 = arith.cmpi sge, %1, %16 : vector<1x256xi32>
    %cst_7 = arith.constant 0.000000e+00 : f32
    %18 = vector.shape_cast %17 : vector<1x256xi1> to vector<1x256xi1>
    %19 = vector.broadcast %18 : vector<1x256xi1> to vector<16x256xi1>
    %20 = vector.broadcast %cst_7 : f32 to vector<16x256xf32>
    %21 = arith.select %19, %15, %20 : vector<16x256xi1>, vector<16x256xf32>
    %22 = vector.extract_strided_slice %0 {offsets = [0, 254], sizes = [16, 2], strides = [1, 1]} : vector<16x256xf32> to vector<16x2xf32>
    %23 = vector.extract_strided_slice %0 {offsets = [0, 0], sizes = [16, 254], strides = [1, 1]} : vector<16x256xf32> to vector<16x254xf32>
    %24 = tpu.concatenate %22, %23 in 1 : vector<16x2xf32>, vector<16x254xf32> -> vector<16x256xf32>
    %c2_i32 = arith.constant 2 : i32
    %25 = vector.broadcast %c2_i32 : i32 to vector<1x256xi32>
    %26 = arith.cmpi sge, %1, %25 : vector<1x256xi32>
    %cst_8 = arith.constant 0.000000e+00 : f32
    %27 = vector.shape_cast %26 : vector<1x256xi1> to vector<1x256xi1>
    %28 = vector.broadcast %27 : vector<1x256xi1> to vector<16x256xi1>
    %29 = vector.broadcast %cst_8 : f32 to vector<16x256xf32>
    %30 = arith.select %28, %24, %29 : vector<16x256xi1>, vector<16x256xf32>
    %31 = vector.extract_strided_slice %0 {offsets = [0, 255], sizes = [16, 1], strides = [1, 1]} : vector<16x256xf32> to vector<16x1xf32>
    %32 = vector.extract_strided_slice %0 {offsets = [0, 0], sizes = [16, 255], strides = [1, 1]} : vector<16x256xf32> to vector<16x255xf32>
    %33 = tpu.concatenate %31, %32 in 1 : vector<16x1xf32>, vector<16x255xf32> -> vector<16x256xf32>
    %c1_i32 = arith.constant 1 : i32
    %34 = vector.broadcast %c1_i32 : i32 to vector<1x256xi32>
    %35 = arith.cmpi sge, %1, %34 : vector<1x256xi32>
    %cst_9 = arith.constant 0.000000e+00 : f32
    %36 = vector.shape_cast %35 : vector<1x256xi1> to vector<1x256xi1>
    %37 = vector.broadcast %36 : vector<1x256xi1> to vector<16x256xi1>
    %38 = vector.broadcast %cst_9 : f32 to vector<16x256xf32>
    %39 = arith.select %37, %33, %38 : vector<16x256xi1>, vector<16x256xf32>
    %40 = vector.extract_strided_slice %0 {offsets = [0, 1], sizes = [16, 255], strides = [1, 1]} : vector<16x256xf32> to vector<16x255xf32>
    %41 = vector.extract_strided_slice %0 {offsets = [0, 0], sizes = [16, 1], strides = [1, 1]} : vector<16x256xf32> to vector<16x1xf32>
    %42 = tpu.concatenate %40, %41 in 1 : vector<16x255xf32>, vector<16x1xf32> -> vector<16x256xf32>
    %c127_i32 = arith.constant 127 : i32
    %43 = vector.broadcast %c127_i32 : i32 to vector<1x256xi32>
    %44 = arith.cmpi slt, %1, %43 : vector<1x256xi32>
    %cst_10 = arith.constant 0.000000e+00 : f32
    %45 = vector.shape_cast %44 : vector<1x256xi1> to vector<1x256xi1>
    %46 = vector.broadcast %45 : vector<1x256xi1> to vector<16x256xi1>
    %47 = vector.broadcast %cst_10 : f32 to vector<16x256xf32>
    %48 = arith.select %46, %42, %47 : vector<16x256xi1>, vector<16x256xf32>
    %49 = vector.extract_strided_slice %0 {offsets = [0, 2], sizes = [16, 254], strides = [1, 1]} : vector<16x256xf32> to vector<16x254xf32>
    %50 = vector.extract_strided_slice %0 {offsets = [0, 0], sizes = [16, 2], strides = [1, 1]} : vector<16x256xf32> to vector<16x2xf32>
    %51 = tpu.concatenate %49, %50 in 1 : vector<16x254xf32>, vector<16x2xf32> -> vector<16x256xf32>
    %c126_i32 = arith.constant 126 : i32
    %52 = vector.broadcast %c126_i32 : i32 to vector<1x256xi32>
    %53 = arith.cmpi slt, %1, %52 : vector<1x256xi32>
    %cst_11 = arith.constant 0.000000e+00 : f32
    %54 = vector.shape_cast %53 : vector<1x256xi1> to vector<1x256xi1>
    %55 = vector.broadcast %54 : vector<1x256xi1> to vector<16x256xi1>
    %56 = vector.broadcast %cst_11 : f32 to vector<16x256xf32>
    %57 = arith.select %55, %51, %56 : vector<16x256xi1>, vector<16x256xf32>
    %58 = vector.extract_strided_slice %0 {offsets = [0, 3], sizes = [16, 253], strides = [1, 1]} : vector<16x256xf32> to vector<16x253xf32>
    %59 = vector.extract_strided_slice %0 {offsets = [0, 0], sizes = [16, 3], strides = [1, 1]} : vector<16x256xf32> to vector<16x3xf32>
    %60 = tpu.concatenate %58, %59 in 1 : vector<16x253xf32>, vector<16x3xf32> -> vector<16x256xf32>
    %c125_i32 = arith.constant 125 : i32
    %61 = vector.broadcast %c125_i32 : i32 to vector<1x256xi32>
    %62 = arith.cmpi slt, %1, %61 : vector<1x256xi32>
    %cst_12 = arith.constant 0.000000e+00 : f32
    %63 = vector.shape_cast %62 : vector<1x256xi1> to vector<1x256xi1>
    %64 = vector.broadcast %63 : vector<1x256xi1> to vector<16x256xi1>
    %65 = vector.broadcast %cst_12 : f32 to vector<16x256xf32>
    %66 = arith.select %64, %60, %65 : vector<16x256xi1>, vector<16x256xf32>
    %67 = vector.extract_strided_slice %0 {offsets = [0, 4], sizes = [16, 252], strides = [1, 1]} : vector<16x256xf32> to vector<16x252xf32>
    %68 = vector.extract_strided_slice %0 {offsets = [0, 0], sizes = [16, 4], strides = [1, 1]} : vector<16x256xf32> to vector<16x4xf32>
    %69 = tpu.concatenate %67, %68 in 1 : vector<16x252xf32>, vector<16x4xf32> -> vector<16x256xf32>
    %c124_i32 = arith.constant 124 : i32
    %70 = vector.broadcast %c124_i32 : i32 to vector<1x256xi32>
    %71 = arith.cmpi slt, %1, %70 : vector<1x256xi32>
    %cst_13 = arith.constant 0.000000e+00 : f32
    %72 = vector.shape_cast %71 : vector<1x256xi1> to vector<1x256xi1>
    %73 = vector.broadcast %72 : vector<1x256xi1> to vector<16x256xi1>
    %74 = vector.broadcast %cst_13 : f32 to vector<16x256xf32>
    %75 = arith.select %73, %69, %74 : vector<16x256xi1>, vector<16x256xf32>
    %76 = tpu.concatenate %12, %21, %30, %39, %0, %48, %57, %66, %75 in 0 : vector<16x256xf32>, vector<16x256xf32>, vector<16x256xf32>, vector<16x256xf32>, vector<16x256xf32>, vector<16x256xf32>, vector<16x256xf32>, vector<16x256xf32>, vector<16x256xf32> -> vector<144x256xf32>
    %77 = arith.truncf %76 : vector<144x256xf32> to vector<144x256xbf16>
    %cst_14 = arith.constant dense<0.000000e+00> : vector<64x256xf32>
    %78 = tpu.matmul %2, %77, %cst_14 {dimension_numbers = #tpu.dot_dimension_numbers<[1], [0], [0], [1], [0, 0, 1, 1], [], []>} : vector<64x144xbf16>, vector<144x256xbf16>, vector<64x256xf32> -> vector<64x256xf32>
    %79 = vector.broadcast %3 : vector<64x1xf32> to vector<64x256xf32>
    %80 = arith.addf %78, %79 : vector<64x256xf32>
    %cst_15 = arith.constant 0.000000e+00 : f32
    %81 = vector.broadcast %cst_15 : f32 to vector<64x256xf32>
    %82 = arith.cmpf oge, %80, %81 : vector<64x256xf32>
    %cst_16 = arith.constant 3.000000e-01 : f32
    %83 = vector.broadcast %cst_16 : f32 to vector<64x256xf32>
    %84 = arith.mulf %83, %80 : vector<64x256xf32>
    %85 = arith.select %82, %80, %84 : vector<64x256xi1>, vector<64x256xf32>
    %c0_17 = arith.constant 0 : index
    %c0_18 = arith.constant 0 : index
    %86 = vector.load %arg10[%c0_17, %c0_18] : memref<1x256xi32, #tpu.memory_space<vmem>>, vector<1x256xi32>
    %c0_19 = arith.constant 0 : index
    %c0_20 = arith.constant 0 : index
    %c0_21 = arith.constant 0 : index
    %c0_22 = arith.constant 0 : index
    %87 = vector.load %arg4[%c0_19, %c0_20, %c0_21, %c0_22] : memref<7x2x64x192xbf16, #tpu.memory_space<vmem>>, vector<1x1x64x192xbf16>
    %88 = vector.shape_cast %87 : vector<1x1x64x192xbf16> to vector<64x192xbf16>
    %c0_23 = arith.constant 0 : index
    %c0_24 = arith.constant 0 : index
    %c0_25 = arith.constant 0 : index
    %c0_26 = arith.constant 0 : index
    %89 = vector.load %arg5[%c0_23, %c0_24, %c0_25, %c0_26] : memref<7x2x64x1xf32, #tpu.memory_space<vmem>>, vector<1x1x64x1xf32>
    %90 = vector.shape_cast %89 : vector<1x1x64x1xf32> to vector<64x1xf32>
    %c0_27 = arith.constant 0 : index
    %c0_28 = arith.constant 0 : index
    %c0_29 = arith.constant 0 : index
    %c0_30 = arith.constant 0 : index
    %91 = vector.load %arg6[%c0_27, %c0_28, %c0_29, %c0_30] : memref<7x2x64x1xf32, #tpu.memory_space<vmem>>, vector<1x1x64x1xf32>
    %92 = vector.shape_cast %91 : vector<1x1x64x1xf32> to vector<64x1xf32>
    %93 = vector.extract_strided_slice %85 {offsets = [0, 255], sizes = [64, 1], strides = [1, 1]} : vector<64x256xf32> to vector<64x1xf32>
    %94 = vector.extract_strided_slice %85 {offsets = [0, 0], sizes = [64, 255], strides = [1, 1]} : vector<64x256xf32> to vector<64x255xf32>
    %95 = tpu.concatenate %93, %94 in 1 : vector<64x1xf32>, vector<64x255xf32> -> vector<64x256xf32>
    %c1_i32_31 = arith.constant 1 : i32
    %96 = vector.broadcast %c1_i32_31 : i32 to vector<1x256xi32>
    %97 = arith.cmpi sge, %86, %96 : vector<1x256xi32>
    %cst_32 = arith.constant 0.000000e+00 : f32
    %98 = vector.shape_cast %97 : vector<1x256xi1> to vector<1x256xi1>
    %99 = vector.broadcast %98 : vector<1x256xi1> to vector<64x256xi1>
    %100 = vector.broadcast %cst_32 : f32 to vector<64x256xf32>
    %101 = arith.select %99, %95, %100 : vector<64x256xi1>, vector<64x256xf32>
    %102 = vector.extract_strided_slice %85 {offsets = [0, 1], sizes = [64, 255], strides = [1, 1]} : vector<64x256xf32> to vector<64x255xf32>
    %103 = vector.extract_strided_slice %85 {offsets = [0, 0], sizes = [64, 1], strides = [1, 1]} : vector<64x256xf32> to vector<64x1xf32>
    %104 = tpu.concatenate %102, %103 in 1 : vector<64x255xf32>, vector<64x1xf32> -> vector<64x256xf32>
    %c127_i32_33 = arith.constant 127 : i32
    %105 = vector.broadcast %c127_i32_33 : i32 to vector<1x256xi32>
    %106 = arith.cmpi slt, %86, %105 : vector<1x256xi32>
    %cst_34 = arith.constant 0.000000e+00 : f32
    %107 = vector.shape_cast %106 : vector<1x256xi1> to vector<1x256xi1>
    %108 = vector.broadcast %107 : vector<1x256xi1> to vector<64x256xi1>
    %109 = vector.broadcast %cst_34 : f32 to vector<64x256xf32>
    %110 = arith.select %108, %104, %109 : vector<64x256xi1>, vector<64x256xf32>
    %111 = tpu.concatenate %101, %85, %110 in 0 : vector<64x256xf32>, vector<64x256xf32>, vector<64x256xf32> -> vector<192x256xf32>
    %112 = arith.truncf %111 : vector<192x256xf32> to vector<192x256xbf16>
    %cst_35 = arith.constant dense<0.000000e+00> : vector<64x256xf32>
    %113 = tpu.matmul %88, %112, %cst_35 {dimension_numbers = #tpu.dot_dimension_numbers<[1], [0], [0], [1], [0, 0, 1, 1], [], []>} : vector<64x192xbf16>, vector<192x256xbf16>, vector<64x256xf32> -> vector<64x256xf32>
    %114 = vector.broadcast %90 : vector<64x1xf32> to vector<64x256xf32>
    %115 = arith.mulf %113, %114 : vector<64x256xf32>
    %116 = vector.broadcast %92 : vector<64x1xf32> to vector<64x256xf32>
    %117 = arith.addf %115, %116 : vector<64x256xf32>
    %cst_36 = arith.constant 0.000000e+00 : f32
    %118 = vector.broadcast %cst_36 : f32 to vector<64x256xf32>
    %119 = arith.cmpf oge, %117, %118 : vector<64x256xf32>
    %cst_37 = arith.constant 3.000000e-01 : f32
    %120 = vector.broadcast %cst_37 : f32 to vector<64x256xf32>
    %121 = arith.mulf %120, %117 : vector<64x256xf32>
    %122 = arith.select %119, %117, %121 : vector<64x256xi1>, vector<64x256xf32>
    %c0_38 = arith.constant 0 : index
    %c1 = arith.constant 1 : index
    %c0_39 = arith.constant 0 : index
    %c0_40 = arith.constant 0 : index
    %123 = vector.load %arg4[%c0_38, %c1, %c0_39, %c0_40] : memref<7x2x64x192xbf16, #tpu.memory_space<vmem>>, vector<1x1x64x192xbf16>
    %124 = vector.shape_cast %123 : vector<1x1x64x192xbf16> to vector<64x192xbf16>
    %c0_41 = arith.constant 0 : index
    %c1_42 = arith.constant 1 : index
    %c0_43 = arith.constant 0 : index
    %c0_44 = arith.constant 0 : index
    %125 = vector.load %arg5[%c0_41, %c1_42, %c0_43, %c0_44] : memref<7x2x64x1xf32, #tpu.memory_space<vmem>>, vector<1x1x64x1xf32>
    %126 = vector.shape_cast %125 : vector<1x1x64x1xf32> to vector<64x1xf32>
    %c0_45 = arith.constant 0 : index
    %c1_46 = arith.constant 1 : index
    %c0_47 = arith.constant 0 : index
    %c0_48 = arith.constant 0 : index
    %127 = vector.load %arg6[%c0_45, %c1_46, %c0_47, %c0_48] : memref<7x2x64x1xf32, #tpu.memory_space<vmem>>, vector<1x1x64x1xf32>
    %128 = vector.shape_cast %127 : vector<1x1x64x1xf32> to vector<64x1xf32>
    %129 = vector.extract_strided_slice %122 {offsets = [0, 255], sizes = [64, 1], strides = [1, 1]} : vector<64x256xf32> to vector<64x1xf32>
    %130 = vector.extract_strided_slice %122 {offsets = [0, 0], sizes = [64, 255], strides = [1, 1]} : vector<64x256xf32> to vector<64x255xf32>
    %131 = tpu.concatenate %129, %130 in 1 : vector<64x1xf32>, vector<64x255xf32> -> vector<64x256xf32>
    %c1_i32_49 = arith.constant 1 : i32
    %132 = vector.broadcast %c1_i32_49 : i32 to vector<1x256xi32>
    %133 = arith.cmpi sge, %86, %132 : vector<1x256xi32>
    %cst_50 = arith.constant 0.000000e+00 : f32
    %134 = vector.shape_cast %133 : vector<1x256xi1> to vector<1x256xi1>
    %135 = vector.broadcast %134 : vector<1x256xi1> to vector<64x256xi1>
    %136 = vector.broadcast %cst_50 : f32 to vector<64x256xf32>
    %137 = arith.select %135, %131, %136 : vector<64x256xi1>, vector<64x256xf32>
    %138 = vector.extract_strided_slice %122 {offsets = [0, 1], sizes = [64, 255], strides = [1, 1]} : vector<64x256xf32> to vector<64x255xf32>
    %139 = vector.extract_strided_slice %122 {offsets = [0, 0], sizes = [64, 1], strides = [1, 1]} : vector<64x256xf32> to vector<64x1xf32>
    %140 = tpu.concatenate %138, %139 in 1 : vector<64x255xf32>, vector<64x1xf32> -> vector<64x256xf32>
    %c127_i32_51 = arith.constant 127 : i32
    %141 = vector.broadcast %c127_i32_51 : i32 to vector<1x256xi32>
    %142 = arith.cmpi slt, %86, %141 : vector<1x256xi32>
    %cst_52 = arith.constant 0.000000e+00 : f32
    %143 = vector.shape_cast %142 : vector<1x256xi1> to vector<1x256xi1>
    %144 = vector.broadcast %143 : vector<1x256xi1> to vector<64x256xi1>
    %145 = vector.broadcast %cst_52 : f32 to vector<64x256xf32>
    %146 = arith.select %144, %140, %145 : vector<64x256xi1>, vector<64x256xf32>
    %147 = tpu.concatenate %137, %122, %146 in 0 : vector<64x256xf32>, vector<64x256xf32>, vector<64x256xf32> -> vector<192x256xf32>
    %148 = arith.truncf %147 : vector<192x256xf32> to vector<192x256xbf16>
    %cst_53 = arith.constant dense<0.000000e+00> : vector<64x256xf32>
    %149 = tpu.matmul %124, %148, %cst_53 {dimension_numbers = #tpu.dot_dimension_numbers<[1], [0], [0], [1], [0, 0, 1, 1], [], []>} : vector<64x192xbf16>, vector<192x256xbf16>, vector<64x256xf32> -> vector<64x256xf32>
    %150 = vector.broadcast %126 : vector<64x1xf32> to vector<64x256xf32>
    %151 = arith.mulf %149, %150 : vector<64x256xf32>
    %152 = vector.broadcast %128 : vector<64x1xf32> to vector<64x256xf32>
    %153 = arith.addf %151, %152 : vector<64x256xf32>
    %154 = arith.addf %153, %85 : vector<64x256xf32>
    %c0_54 = arith.constant 0 : index
    %c0_55 = arith.constant 0 : index
    %155 = vector.load %arg17[%c0_54, %c0_55] : memref<256x128xf32, #tpu.memory_space<vmem>>, vector<256x128xf32>
    %cst_56 = arith.constant dense<0.000000e+00> : vector<64x128xf32>
    %156 = tpu.matmul %154, %155, %cst_56 {dimension_numbers = #tpu.dot_dimension_numbers<[1], [0], [0], [1], [0, 0, 1, 1], [], []>} : vector<64x256xf32>, vector<256x128xf32>, vector<64x128xf32> -> vector<64x128xf32>
    %c0_57 = arith.constant 0 : index
    %c0_58 = arith.constant 0 : index
    %157 = vector.load %arg11[%c0_57, %c0_58] : memref<1x128xi32, #tpu.memory_space<vmem>>, vector<1x128xi32>
    %c1_59 = arith.constant 1 : index
    %c0_60 = arith.constant 0 : index
    %c0_61 = arith.constant 0 : index
    %c0_62 = arith.constant 0 : index
    %158 = vector.load %arg4[%c1_59, %c0_60, %c0_61, %c0_62] : memref<7x2x64x192xbf16, #tpu.memory_space<vmem>>, vector<1x1x64x192xbf16>
    %159 = vector.shape_cast %158 : vector<1x1x64x192xbf16> to vector<64x192xbf16>
    %c1_63 = arith.constant 1 : index
    %c0_64 = arith.constant 0 : index
    %c0_65 = arith.constant 0 : index
    %c0_66 = arith.constant 0 : index
    %160 = vector.load %arg5[%c1_63, %c0_64, %c0_65, %c0_66] : memref<7x2x64x1xf32, #tpu.memory_space<vmem>>, vector<1x1x64x1xf32>
    %161 = vector.shape_cast %160 : vector<1x1x64x1xf32> to vector<64x1xf32>
    %c1_67 = arith.constant 1 : index
    %c0_68 = arith.constant 0 : index
    %c0_69 = arith.constant 0 : index
    %c0_70 = arith.constant 0 : index
    %162 = vector.load %arg6[%c1_67, %c0_68, %c0_69, %c0_70] : memref<7x2x64x1xf32, #tpu.memory_space<vmem>>, vector<1x1x64x1xf32>
    %163 = vector.shape_cast %162 : vector<1x1x64x1xf32> to vector<64x1xf32>
    %164 = vector.extract_strided_slice %156 {offsets = [0, 127], sizes = [64, 1], strides = [1, 1]} : vector<64x128xf32> to vector<64x1xf32>
    %165 = vector.extract_strided_slice %156 {offsets = [0, 0], sizes = [64, 127], strides = [1, 1]} : vector<64x128xf32> to vector<64x127xf32>
    %166 = tpu.concatenate %164, %165 in 1 : vector<64x1xf32>, vector<64x127xf32> -> vector<64x128xf32>
    %c1_i32_71 = arith.constant 1 : i32
    %167 = vector.broadcast %c1_i32_71 : i32 to vector<1x128xi32>
    %168 = arith.cmpi sge, %157, %167 : vector<1x128xi32>
    %cst_72 = arith.constant 0.000000e+00 : f32
    %169 = vector.shape_cast %168 : vector<1x128xi1> to vector<1x128xi1>
    %170 = vector.broadcast %169 : vector<1x128xi1> to vector<64x128xi1>
    %171 = vector.broadcast %cst_72 : f32 to vector<64x128xf32>
    %172 = arith.select %170, %166, %171 : vector<64x128xi1>, vector<64x128xf32>
    %173 = vector.extract_strided_slice %156 {offsets = [0, 1], sizes = [64, 127], strides = [1, 1]} : vector<64x128xf32> to vector<64x127xf32>
    %174 = vector.extract_strided_slice %156 {offsets = [0, 0], sizes = [64, 1], strides = [1, 1]} : vector<64x128xf32> to vector<64x1xf32>
    %175 = tpu.concatenate %173, %174 in 1 : vector<64x127xf32>, vector<64x1xf32> -> vector<64x128xf32>
    %c63_i32 = arith.constant 63 : i32
    %176 = vector.broadcast %c63_i32 : i32 to vector<1x128xi32>
    %177 = arith.cmpi slt, %157, %176 : vector<1x128xi32>
    %cst_73 = arith.constant 0.000000e+00 : f32
    %178 = vector.shape_cast %177 : vector<1x128xi1> to vector<1x128xi1>
    %179 = vector.broadcast %178 : vector<1x128xi1> to vector<64x128xi1>
    %180 = vector.broadcast %cst_73 : f32 to vector<64x128xf32>
    %181 = arith.select %179, %175, %180 : vector<64x128xi1>, vector<64x128xf32>
    %182 = tpu.concatenate %172, %156, %181 in 0 : vector<64x128xf32>, vector<64x128xf32>, vector<64x128xf32> -> vector<192x128xf32>
    %183 = arith.truncf %182 : vector<192x128xf32> to vector<192x128xbf16>
    %cst_74 = arith.constant dense<0.000000e+00> : vector<64x128xf32>
    %184 = tpu.matmul %159, %183, %cst_74 {dimension_numbers = #tpu.dot_dimension_numbers<[1], [0], [0], [1], [0, 0, 1, 1], [], []>} : vector<64x192xbf16>, vector<192x128xbf16>, vector<64x128xf32> -> vector<64x128xf32>
    %185 = vector.broadcast %161 : vector<64x1xf32> to vector<64x128xf32>
    %186 = arith.mulf %184, %185 : vector<64x128xf32>
    %187 = vector.broadcast %163 : vector<64x1xf32> to vector<64x128xf32>
    %188 = arith.addf %186, %187 : vector<64x128xf32>
    %cst_75 = arith.constant 0.000000e+00 : f32
    %189 = vector.broadcast %cst_75 : f32 to vector<64x128xf32>
    %190 = arith.cmpf oge, %188, %189 : vector<64x128xf32>
    %cst_76 = arith.constant 3.000000e-01 : f32
    %191 = vector.broadcast %cst_76 : f32 to vector<64x128xf32>
    %192 = arith.mulf %191, %188 : vector<64x128xf32>
    %193 = arith.select %190, %188, %192 : vector<64x128xi1>, vector<64x128xf32>
    %c1_77 = arith.constant 1 : index
    %c1_78 = arith.constant 1 : index
    %c0_79 = arith.constant 0 : index
    %c0_80 = arith.constant 0 : index
    %194 = vector.load %arg4[%c1_77, %c1_78, %c0_79, %c0_80] : memref<7x2x64x192xbf16, #tpu.memory_space<vmem>>, vector<1x1x64x192xbf16>
    %195 = vector.shape_cast %194 : vector<1x1x64x192xbf16> to vector<64x192xbf16>
    %c1_81 = arith.constant 1 : index
    %c1_82 = arith.constant 1 : index
    %c0_83 = arith.constant 0 : index
    %c0_84 = arith.constant 0 : index
    %196 = vector.load %arg5[%c1_81, %c1_82, %c0_83, %c0_84] : memref<7x2x64x1xf32, #tpu.memory_space<vmem>>, vector<1x1x64x1xf32>
    %197 = vector.shape_cast %196 : vector<1x1x64x1xf32> to vector<64x1xf32>
    %c1_85 = arith.constant 1 : index
    %c1_86 = arith.constant 1 : index
    %c0_87 = arith.constant 0 : index
    %c0_88 = arith.constant 0 : index
    %198 = vector.load %arg6[%c1_85, %c1_86, %c0_87, %c0_88] : memref<7x2x64x1xf32, #tpu.memory_space<vmem>>, vector<1x1x64x1xf32>
    %199 = vector.shape_cast %198 : vector<1x1x64x1xf32> to vector<64x1xf32>
    %200 = vector.extract_strided_slice %193 {offsets = [0, 127], sizes = [64, 1], strides = [1, 1]} : vector<64x128xf32> to vector<64x1xf32>
    %201 = vector.extract_strided_slice %193 {offsets = [0, 0], sizes = [64, 127], strides = [1, 1]} : vector<64x128xf32> to vector<64x127xf32>
    %202 = tpu.concatenate %200, %201 in 1 : vector<64x1xf32>, vector<64x127xf32> -> vector<64x128xf32>
    %c1_i32_89 = arith.constant 1 : i32
    %203 = vector.broadcast %c1_i32_89 : i32 to vector<1x128xi32>
    %204 = arith.cmpi sge, %157, %203 : vector<1x128xi32>
    %cst_90 = arith.constant 0.000000e+00 : f32
    %205 = vector.shape_cast %204 : vector<1x128xi1> to vector<1x128xi1>
    %206 = vector.broadcast %205 : vector<1x128xi1> to vector<64x128xi1>
    %207 = vector.broadcast %cst_90 : f32 to vector<64x128xf32>
    %208 = arith.select %206, %202, %207 : vector<64x128xi1>, vector<64x128xf32>
    %209 = vector.extract_strided_slice %193 {offsets = [0, 1], sizes = [64, 127], strides = [1, 1]} : vector<64x128xf32> to vector<64x127xf32>
    %210 = vector.extract_strided_slice %193 {offsets = [0, 0], sizes = [64, 1], strides = [1, 1]} : vector<64x128xf32> to vector<64x1xf32>
    %211 = tpu.concatenate %209, %210 in 1 : vector<64x127xf32>, vector<64x1xf32> -> vector<64x128xf32>
    %c63_i32_91 = arith.constant 63 : i32
    %212 = vector.broadcast %c63_i32_91 : i32 to vector<1x128xi32>
    %213 = arith.cmpi slt, %157, %212 : vector<1x128xi32>
    %cst_92 = arith.constant 0.000000e+00 : f32
    %214 = vector.shape_cast %213 : vector<1x128xi1> to vector<1x128xi1>
    %215 = vector.broadcast %214 : vector<1x128xi1> to vector<64x128xi1>
    %216 = vector.broadcast %cst_92 : f32 to vector<64x128xf32>
    %217 = arith.select %215, %211, %216 : vector<64x128xi1>, vector<64x128xf32>
    %218 = tpu.concatenate %208, %193, %217 in 0 : vector<64x128xf32>, vector<64x128xf32>, vector<64x128xf32> -> vector<192x128xf32>
    %219 = arith.truncf %218 : vector<192x128xf32> to vector<192x128xbf16>
    %cst_93 = arith.constant dense<0.000000e+00> : vector<64x128xf32>
    %220 = tpu.matmul %195, %219, %cst_93 {dimension_numbers = #tpu.dot_dimension_numbers<[1], [0], [0], [1], [0, 0, 1, 1], [], []>} : vector<64x192xbf16>, vector<192x128xbf16>, vector<64x128xf32> -> vector<64x128xf32>
    %221 = vector.broadcast %197 : vector<64x1xf32> to vector<64x128xf32>
    %222 = arith.mulf %220, %221 : vector<64x128xf32>
    %223 = vector.broadcast %199 : vector<64x1xf32> to vector<64x128xf32>
    %224 = arith.addf %222, %223 : vector<64x128xf32>
    %225 = arith.addf %224, %156 : vector<64x128xf32>
    %c0_94 = arith.constant 0 : index
    %c0_95 = arith.constant 0 : index
    %226 = vector.load %arg18[%c0_94, %c0_95] : memref<128x64xf32, #tpu.memory_space<vmem>>, vector<128x64xf32>
    %cst_96 = arith.constant dense<0.000000e+00> : vector<64x64xf32>
    %227 = tpu.matmul %225, %226, %cst_96 {dimension_numbers = #tpu.dot_dimension_numbers<[1], [0], [0], [1], [0, 0, 1, 1], [], []>} : vector<64x128xf32>, vector<128x64xf32>, vector<64x64xf32> -> vector<64x64xf32>
    %c0_97 = arith.constant 0 : index
    %c0_98 = arith.constant 0 : index
    %228 = vector.load %arg12[%c0_97, %c0_98] : memref<1x64xi32, #tpu.memory_space<vmem>>, vector<1x64xi32>
    %c2 = arith.constant 2 : index
    %c0_99 = arith.constant 0 : index
    %c0_100 = arith.constant 0 : index
    %c0_101 = arith.constant 0 : index
    %229 = vector.load %arg4[%c2, %c0_99, %c0_100, %c0_101] : memref<7x2x64x192xbf16, #tpu.memory_space<vmem>>, vector<1x1x64x192xbf16>
    %230 = vector.shape_cast %229 : vector<1x1x64x192xbf16> to vector<64x192xbf16>
    %c2_102 = arith.constant 2 : index
    %c0_103 = arith.constant 0 : index
    %c0_104 = arith.constant 0 : index
    %c0_105 = arith.constant 0 : index
    %231 = vector.load %arg5[%c2_102, %c0_103, %c0_104, %c0_105] : memref<7x2x64x1xf32, #tpu.memory_space<vmem>>, vector<1x1x64x1xf32>
    %232 = vector.shape_cast %231 : vector<1x1x64x1xf32> to vector<64x1xf32>
    %c2_106 = arith.constant 2 : index
    %c0_107 = arith.constant 0 : index
    %c0_108 = arith.constant 0 : index
    %c0_109 = arith.constant 0 : index
    %233 = vector.load %arg6[%c2_106, %c0_107, %c0_108, %c0_109] : memref<7x2x64x1xf32, #tpu.memory_space<vmem>>, vector<1x1x64x1xf32>
    %234 = vector.shape_cast %233 : vector<1x1x64x1xf32> to vector<64x1xf32>
    %235 = vector.extract_strided_slice %227 {offsets = [0, 63], sizes = [64, 1], strides = [1, 1]} : vector<64x64xf32> to vector<64x1xf32>
    %236 = vector.extract_strided_slice %227 {offsets = [0, 0], sizes = [64, 63], strides = [1, 1]} : vector<64x64xf32> to vector<64x63xf32>
    %237 = tpu.concatenate %235, %236 in 1 : vector<64x1xf32>, vector<64x63xf32> -> vector<64x64xf32>
    %c1_i32_110 = arith.constant 1 : i32
    %238 = vector.broadcast %c1_i32_110 : i32 to vector<1x64xi32>
    %239 = arith.cmpi sge, %228, %238 : vector<1x64xi32>
    %cst_111 = arith.constant 0.000000e+00 : f32
    %240 = vector.shape_cast %239 : vector<1x64xi1> to vector<1x64xi1>
    %241 = vector.broadcast %240 : vector<1x64xi1> to vector<64x64xi1>
    %242 = vector.broadcast %cst_111 : f32 to vector<64x64xf32>
    %243 = arith.select %241, %237, %242 : vector<64x64xi1>, vector<64x64xf32>
    %244 = vector.extract_strided_slice %227 {offsets = [0, 1], sizes = [64, 63], strides = [1, 1]} : vector<64x64xf32> to vector<64x63xf32>
    %245 = vector.extract_strided_slice %227 {offsets = [0, 0], sizes = [64, 1], strides = [1, 1]} : vector<64x64xf32> to vector<64x1xf32>
    %246 = tpu.concatenate %244, %245 in 1 : vector<64x63xf32>, vector<64x1xf32> -> vector<64x64xf32>
    %c31_i32 = arith.constant 31 : i32
    %247 = vector.broadcast %c31_i32 : i32 to vector<1x64xi32>
    %248 = arith.cmpi slt, %228, %247 : vector<1x64xi32>
    %cst_112 = arith.constant 0.000000e+00 : f32
    %249 = vector.shape_cast %248 : vector<1x64xi1> to vector<1x64xi1>
    %250 = vector.broadcast %249 : vector<1x64xi1> to vector<64x64xi1>
    %251 = vector.broadcast %cst_112 : f32 to vector<64x64xf32>
    %252 = arith.select %250, %246, %251 : vector<64x64xi1>, vector<64x64xf32>
    %253 = tpu.concatenate %243, %227, %252 in 0 : vector<64x64xf32>, vector<64x64xf32>, vector<64x64xf32> -> vector<192x64xf32>
    %254 = arith.truncf %253 : vector<192x64xf32> to vector<192x64xbf16>
    %cst_113 = arith.constant dense<0.000000e+00> : vector<64x64xf32>
    %255 = tpu.matmul %230, %254, %cst_113 {dimension_numbers = #tpu.dot_dimension_numbers<[1], [0], [0], [1], [0, 0, 1, 1], [], []>} : vector<64x192xbf16>, vector<192x64xbf16>, vector<64x64xf32> -> vector<64x64xf32>
    %256 = vector.broadcast %232 : vector<64x1xf32> to vector<64x64xf32>
    %257 = arith.mulf %255, %256 : vector<64x64xf32>
    %258 = vector.broadcast %234 : vector<64x1xf32> to vector<64x64xf32>
    %259 = arith.addf %257, %258 : vector<64x64xf32>
    %cst_114 = arith.constant 0.000000e+00 : f32
    %260 = vector.broadcast %cst_114 : f32 to vector<64x64xf32>
    %261 = arith.cmpf oge, %259, %260 : vector<64x64xf32>
    %cst_115 = arith.constant 3.000000e-01 : f32
    %262 = vector.broadcast %cst_115 : f32 to vector<64x64xf32>
    %263 = arith.mulf %262, %259 : vector<64x64xf32>
    %264 = arith.select %261, %259, %263 : vector<64x64xi1>, vector<64x64xf32>
    %c2_116 = arith.constant 2 : index
    %c1_117 = arith.constant 1 : index
    %c0_118 = arith.constant 0 : index
    %c0_119 = arith.constant 0 : index
    %265 = vector.load %arg4[%c2_116, %c1_117, %c0_118, %c0_119] : memref<7x2x64x192xbf16, #tpu.memory_space<vmem>>, vector<1x1x64x192xbf16>
    %266 = vector.shape_cast %265 : vector<1x1x64x192xbf16> to vector<64x192xbf16>
    %c2_120 = arith.constant 2 : index
    %c1_121 = arith.constant 1 : index
    %c0_122 = arith.constant 0 : index
    %c0_123 = arith.constant 0 : index
    %267 = vector.load %arg5[%c2_120, %c1_121, %c0_122, %c0_123] : memref<7x2x64x1xf32, #tpu.memory_space<vmem>>, vector<1x1x64x1xf32>
    %268 = vector.shape_cast %267 : vector<1x1x64x1xf32> to vector<64x1xf32>
    %c2_124 = arith.constant 2 : index
    %c1_125 = arith.constant 1 : index
    %c0_126 = arith.constant 0 : index
    %c0_127 = arith.constant 0 : index
    %269 = vector.load %arg6[%c2_124, %c1_125, %c0_126, %c0_127] : memref<7x2x64x1xf32, #tpu.memory_space<vmem>>, vector<1x1x64x1xf32>
    %270 = vector.shape_cast %269 : vector<1x1x64x1xf32> to vector<64x1xf32>
    %271 = vector.extract_strided_slice %264 {offsets = [0, 63], sizes = [64, 1], strides = [1, 1]} : vector<64x64xf32> to vector<64x1xf32>
    %272 = vector.extract_strided_slice %264 {offsets = [0, 0], sizes = [64, 63], strides = [1, 1]} : vector<64x64xf32> to vector<64x63xf32>
    %273 = tpu.concatenate %271, %272 in 1 : vector<64x1xf32>, vector<64x63xf32> -> vector<64x64xf32>
    %c1_i32_128 = arith.constant 1 : i32
    %274 = vector.broadcast %c1_i32_128 : i32 to vector<1x64xi32>
    %275 = arith.cmpi sge, %228, %274 : vector<1x64xi32>
    %cst_129 = arith.constant 0.000000e+00 : f32
    %276 = vector.shape_cast %275 : vector<1x64xi1> to vector<1x64xi1>
    %277 = vector.broadcast %276 : vector<1x64xi1> to vector<64x64xi1>
    %278 = vector.broadcast %cst_129 : f32 to vector<64x64xf32>
    %279 = arith.select %277, %273, %278 : vector<64x64xi1>, vector<64x64xf32>
    %280 = vector.extract_strided_slice %264 {offsets = [0, 1], sizes = [64, 63], strides = [1, 1]} : vector<64x64xf32> to vector<64x63xf32>
    %281 = vector.extract_strided_slice %264 {offsets = [0, 0], sizes = [64, 1], strides = [1, 1]} : vector<64x64xf32> to vector<64x1xf32>
    %282 = tpu.concatenate %280, %281 in 1 : vector<64x63xf32>, vector<64x1xf32> -> vector<64x64xf32>
    %c31_i32_130 = arith.constant 31 : i32
    %283 = vector.broadcast %c31_i32_130 : i32 to vector<1x64xi32>
    %284 = arith.cmpi slt, %228, %283 : vector<1x64xi32>
    %cst_131 = arith.constant 0.000000e+00 : f32
    %285 = vector.shape_cast %284 : vector<1x64xi1> to vector<1x64xi1>
    %286 = vector.broadcast %285 : vector<1x64xi1> to vector<64x64xi1>
    %287 = vector.broadcast %cst_131 : f32 to vector<64x64xf32>
    %288 = arith.select %286, %282, %287 : vector<64x64xi1>, vector<64x64xf32>
    %289 = tpu.concatenate %279, %264, %288 in 0 : vector<64x64xf32>, vector<64x64xf32>, vector<64x64xf32> -> vector<192x64xf32>
    %290 = arith.truncf %289 : vector<192x64xf32> to vector<192x64xbf16>
    %cst_132 = arith.constant dense<0.000000e+00> : vector<64x64xf32>
    %291 = tpu.matmul %266, %290, %cst_132 {dimension_numbers = #tpu.dot_dimension_numbers<[1], [0], [0], [1], [0, 0, 1, 1], [], []>} : vector<64x192xbf16>, vector<192x64xbf16>, vector<64x64xf32> -> vector<64x64xf32>
    %292 = vector.broadcast %268 : vector<64x1xf32> to vector<64x64xf32>
    %293 = arith.mulf %291, %292 : vector<64x64xf32>
    %294 = vector.broadcast %270 : vector<64x1xf32> to vector<64x64xf32>
    %295 = arith.addf %293, %294 : vector<64x64xf32>
    %296 = arith.addf %295, %227 : vector<64x64xf32>
    %c0_133 = arith.constant 0 : index
    %c0_134 = arith.constant 0 : index
    %297 = vector.load %arg19[%c0_133, %c0_134] : memref<64x32xf32, #tpu.memory_space<vmem>>, vector<64x32xf32>
    %cst_135 = arith.constant dense<0.000000e+00> : vector<64x32xf32>
    %298 = tpu.matmul %296, %297, %cst_135 {dimension_numbers = #tpu.dot_dimension_numbers<[1], [0], [0], [1], [0, 0, 1, 1], [], []>} : vector<64x64xf32>, vector<64x32xf32>, vector<64x32xf32> -> vector<64x32xf32>
    %c0_136 = arith.constant 0 : index
    %c0_137 = arith.constant 0 : index
    %299 = vector.load %arg13[%c0_136, %c0_137] : memref<1x32xi32, #tpu.memory_space<vmem>>, vector<1x32xi32>
    %c3 = arith.constant 3 : index
    %c0_138 = arith.constant 0 : index
    %c0_139 = arith.constant 0 : index
    %c0_140 = arith.constant 0 : index
    %300 = vector.load %arg4[%c3, %c0_138, %c0_139, %c0_140] : memref<7x2x64x192xbf16, #tpu.memory_space<vmem>>, vector<1x1x64x192xbf16>
    %301 = vector.shape_cast %300 : vector<1x1x64x192xbf16> to vector<64x192xbf16>
    %c3_141 = arith.constant 3 : index
    %c0_142 = arith.constant 0 : index
    %c0_143 = arith.constant 0 : index
    %c0_144 = arith.constant 0 : index
    %302 = vector.load %arg5[%c3_141, %c0_142, %c0_143, %c0_144] : memref<7x2x64x1xf32, #tpu.memory_space<vmem>>, vector<1x1x64x1xf32>
    %303 = vector.shape_cast %302 : vector<1x1x64x1xf32> to vector<64x1xf32>
    %c3_145 = arith.constant 3 : index
    %c0_146 = arith.constant 0 : index
    %c0_147 = arith.constant 0 : index
    %c0_148 = arith.constant 0 : index
    %304 = vector.load %arg6[%c3_145, %c0_146, %c0_147, %c0_148] : memref<7x2x64x1xf32, #tpu.memory_space<vmem>>, vector<1x1x64x1xf32>
    %305 = vector.shape_cast %304 : vector<1x1x64x1xf32> to vector<64x1xf32>
    %306 = vector.extract_strided_slice %298 {offsets = [0, 31], sizes = [64, 1], strides = [1, 1]} : vector<64x32xf32> to vector<64x1xf32>
    %307 = vector.extract_strided_slice %298 {offsets = [0, 0], sizes = [64, 31], strides = [1, 1]} : vector<64x32xf32> to vector<64x31xf32>
    %308 = tpu.concatenate %306, %307 in 1 : vector<64x1xf32>, vector<64x31xf32> -> vector<64x32xf32>
    %c1_i32_149 = arith.constant 1 : i32
    %309 = vector.broadcast %c1_i32_149 : i32 to vector<1x32xi32>
    %310 = arith.cmpi sge, %299, %309 : vector<1x32xi32>
    %cst_150 = arith.constant 0.000000e+00 : f32
    %311 = vector.shape_cast %310 : vector<1x32xi1> to vector<1x32xi1>
    %312 = vector.broadcast %311 : vector<1x32xi1> to vector<64x32xi1>
    %313 = vector.broadcast %cst_150 : f32 to vector<64x32xf32>
    %314 = arith.select %312, %308, %313 : vector<64x32xi1>, vector<64x32xf32>
    %315 = vector.extract_strided_slice %298 {offsets = [0, 1], sizes = [64, 31], strides = [1, 1]} : vector<64x32xf32> to vector<64x31xf32>
    %316 = vector.extract_strided_slice %298 {offsets = [0, 0], sizes = [64, 1], strides = [1, 1]} : vector<64x32xf32> to vector<64x1xf32>
    %317 = tpu.concatenate %315, %316 in 1 : vector<64x31xf32>, vector<64x1xf32> -> vector<64x32xf32>
    %c15_i32 = arith.constant 15 : i32
    %318 = vector.broadcast %c15_i32 : i32 to vector<1x32xi32>
    %319 = arith.cmpi slt, %299, %318 : vector<1x32xi32>
    %cst_151 = arith.constant 0.000000e+00 : f32
    %320 = vector.shape_cast %319 : vector<1x32xi1> to vector<1x32xi1>
    %321 = vector.broadcast %320 : vector<1x32xi1> to vector<64x32xi1>
    %322 = vector.broadcast %cst_151 : f32 to vector<64x32xf32>
    %323 = arith.select %321, %317, %322 : vector<64x32xi1>, vector<64x32xf32>
    %324 = tpu.concatenate %314, %298, %323 in 0 : vector<64x32xf32>, vector<64x32xf32>, vector<64x32xf32> -> vector<192x32xf32>
    %325 = arith.truncf %324 : vector<192x32xf32> to vector<192x32xbf16>
    %cst_152 = arith.constant dense<0.000000e+00> : vector<64x32xf32>
    %326 = tpu.matmul %301, %325, %cst_152 {dimension_numbers = #tpu.dot_dimension_numbers<[1], [0], [0], [1], [0, 0, 1, 1], [], []>} : vector<64x192xbf16>, vector<192x32xbf16>, vector<64x32xf32> -> vector<64x32xf32>
    %327 = vector.broadcast %303 : vector<64x1xf32> to vector<64x32xf32>
    %328 = arith.mulf %326, %327 : vector<64x32xf32>
    %329 = vector.broadcast %305 : vector<64x1xf32> to vector<64x32xf32>
    %330 = arith.addf %328, %329 : vector<64x32xf32>
    %cst_153 = arith.constant 0.000000e+00 : f32
    %331 = vector.broadcast %cst_153 : f32 to vector<64x32xf32>
    %332 = arith.cmpf oge, %330, %331 : vector<64x32xf32>
    %cst_154 = arith.constant 3.000000e-01 : f32
    %333 = vector.broadcast %cst_154 : f32 to vector<64x32xf32>
    %334 = arith.mulf %333, %330 : vector<64x32xf32>
    %335 = arith.select %332, %330, %334 : vector<64x32xi1>, vector<64x32xf32>
    %c3_155 = arith.constant 3 : index
    %c1_156 = arith.constant 1 : index
    %c0_157 = arith.constant 0 : index
    %c0_158 = arith.constant 0 : index
    %336 = vector.load %arg4[%c3_155, %c1_156, %c0_157, %c0_158] : memref<7x2x64x192xbf16, #tpu.memory_space<vmem>>, vector<1x1x64x192xbf16>
    %337 = vector.shape_cast %336 : vector<1x1x64x192xbf16> to vector<64x192xbf16>
    %c3_159 = arith.constant 3 : index
    %c1_160 = arith.constant 1 : index
    %c0_161 = arith.constant 0 : index
    %c0_162 = arith.constant 0 : index
    %338 = vector.load %arg5[%c3_159, %c1_160, %c0_161, %c0_162] : memref<7x2x64x1xf32, #tpu.memory_space<vmem>>, vector<1x1x64x1xf32>
    %339 = vector.shape_cast %338 : vector<1x1x64x1xf32> to vector<64x1xf32>
    %c3_163 = arith.constant 3 : index
    %c1_164 = arith.constant 1 : index
    %c0_165 = arith.constant 0 : index
    %c0_166 = arith.constant 0 : index
    %340 = vector.load %arg6[%c3_163, %c1_164, %c0_165, %c0_166] : memref<7x2x64x1xf32, #tpu.memory_space<vmem>>, vector<1x1x64x1xf32>
    %341 = vector.shape_cast %340 : vector<1x1x64x1xf32> to vector<64x1xf32>
    %342 = vector.extract_strided_slice %335 {offsets = [0, 31], sizes = [64, 1], strides = [1, 1]} : vector<64x32xf32> to vector<64x1xf32>
    %343 = vector.extract_strided_slice %335 {offsets = [0, 0], sizes = [64, 31], strides = [1, 1]} : vector<64x32xf32> to vector<64x31xf32>
    %344 = tpu.concatenate %342, %343 in 1 : vector<64x1xf32>, vector<64x31xf32> -> vector<64x32xf32>
    %c1_i32_167 = arith.constant 1 : i32
    %345 = vector.broadcast %c1_i32_167 : i32 to vector<1x32xi32>
    %346 = arith.cmpi sge, %299, %345 : vector<1x32xi32>
    %cst_168 = arith.constant 0.000000e+00 : f32
    %347 = vector.shape_cast %346 : vector<1x32xi1> to vector<1x32xi1>
    %348 = vector.broadcast %347 : vector<1x32xi1> to vector<64x32xi1>
    %349 = vector.broadcast %cst_168 : f32 to vector<64x32xf32>
    %350 = arith.select %348, %344, %349 : vector<64x32xi1>, vector<64x32xf32>
    %351 = vector.extract_strided_slice %335 {offsets = [0, 1], sizes = [64, 31], strides = [1, 1]} : vector<64x32xf32> to vector<64x31xf32>
    %352 = vector.extract_strided_slice %335 {offsets = [0, 0], sizes = [64, 1], strides = [1, 1]} : vector<64x32xf32> to vector<64x1xf32>
    %353 = tpu.concatenate %351, %352 in 1 : vector<64x31xf32>, vector<64x1xf32> -> vector<64x32xf32>
    %c15_i32_169 = arith.constant 15 : i32
    %354 = vector.broadcast %c15_i32_169 : i32 to vector<1x32xi32>
    %355 = arith.cmpi slt, %299, %354 : vector<1x32xi32>
    %cst_170 = arith.constant 0.000000e+00 : f32
    %356 = vector.shape_cast %355 : vector<1x32xi1> to vector<1x32xi1>
    %357 = vector.broadcast %356 : vector<1x32xi1> to vector<64x32xi1>
    %358 = vector.broadcast %cst_170 : f32 to vector<64x32xf32>
    %359 = arith.select %357, %353, %358 : vector<64x32xi1>, vector<64x32xf32>
    %360 = tpu.concatenate %350, %335, %359 in 0 : vector<64x32xf32>, vector<64x32xf32>, vector<64x32xf32> -> vector<192x32xf32>
    %361 = arith.truncf %360 : vector<192x32xf32> to vector<192x32xbf16>
    %cst_171 = arith.constant dense<0.000000e+00> : vector<64x32xf32>
    %362 = tpu.matmul %337, %361, %cst_171 {dimension_numbers = #tpu.dot_dimension_numbers<[1], [0], [0], [1], [0, 0, 1, 1], [], []>} : vector<64x192xbf16>, vector<192x32xbf16>, vector<64x32xf32> -> vector<64x32xf32>
    %363 = vector.broadcast %339 : vector<64x1xf32> to vector<64x32xf32>
    %364 = arith.mulf %362, %363 : vector<64x32xf32>
    %365 = vector.broadcast %341 : vector<64x1xf32> to vector<64x32xf32>
    %366 = arith.addf %364, %365 : vector<64x32xf32>
    %367 = arith.addf %366, %298 : vector<64x32xf32>
    %c0_172 = arith.constant 0 : index
    %c0_173 = arith.constant 0 : index
    %368 = vector.load %arg20[%c0_172, %c0_173] : memref<32x16xf32, #tpu.memory_space<vmem>>, vector<32x16xf32>
    %cst_174 = arith.constant dense<0.000000e+00> : vector<64x16xf32>
    %369 = tpu.matmul %367, %368, %cst_174 {dimension_numbers = #tpu.dot_dimension_numbers<[1], [0], [0], [1], [0, 0, 1, 1], [], []>} : vector<64x32xf32>, vector<32x16xf32>, vector<64x16xf32> -> vector<64x16xf32>
    %c0_175 = arith.constant 0 : index
    %c0_176 = arith.constant 0 : index
    %370 = vector.load %arg14[%c0_175, %c0_176] : memref<1x16xi32, #tpu.memory_space<vmem>>, vector<1x16xi32>
    %c4 = arith.constant 4 : index
    %c0_177 = arith.constant 0 : index
    %c0_178 = arith.constant 0 : index
    %c0_179 = arith.constant 0 : index
    %371 = vector.load %arg4[%c4, %c0_177, %c0_178, %c0_179] : memref<7x2x64x192xbf16, #tpu.memory_space<vmem>>, vector<1x1x64x192xbf16>
    %372 = vector.shape_cast %371 : vector<1x1x64x192xbf16> to vector<64x192xbf16>
    %c4_180 = arith.constant 4 : index
    %c0_181 = arith.constant 0 : index
    %c0_182 = arith.constant 0 : index
    %c0_183 = arith.constant 0 : index
    %373 = vector.load %arg5[%c4_180, %c0_181, %c0_182, %c0_183] : memref<7x2x64x1xf32, #tpu.memory_space<vmem>>, vector<1x1x64x1xf32>
    %374 = vector.shape_cast %373 : vector<1x1x64x1xf32> to vector<64x1xf32>
    %c4_184 = arith.constant 4 : index
    %c0_185 = arith.constant 0 : index
    %c0_186 = arith.constant 0 : index
    %c0_187 = arith.constant 0 : index
    %375 = vector.load %arg6[%c4_184, %c0_185, %c0_186, %c0_187] : memref<7x2x64x1xf32, #tpu.memory_space<vmem>>, vector<1x1x64x1xf32>
    %376 = vector.shape_cast %375 : vector<1x1x64x1xf32> to vector<64x1xf32>
    %377 = vector.extract_strided_slice %369 {offsets = [0, 15], sizes = [64, 1], strides = [1, 1]} : vector<64x16xf32> to vector<64x1xf32>
    %378 = vector.extract_strided_slice %369 {offsets = [0, 0], sizes = [64, 15], strides = [1, 1]} : vector<64x16xf32> to vector<64x15xf32>
    %379 = tpu.concatenate %377, %378 in 1 : vector<64x1xf32>, vector<64x15xf32> -> vector<64x16xf32>
    %c1_i32_188 = arith.constant 1 : i32
    %380 = vector.broadcast %c1_i32_188 : i32 to vector<1x16xi32>
    %381 = arith.cmpi sge, %370, %380 : vector<1x16xi32>
    %cst_189 = arith.constant 0.000000e+00 : f32
    %382 = vector.shape_cast %381 : vector<1x16xi1> to vector<1x16xi1>
    %383 = vector.broadcast %382 : vector<1x16xi1> to vector<64x16xi1>
    %384 = vector.broadcast %cst_189 : f32 to vector<64x16xf32>
    %385 = arith.select %383, %379, %384 : vector<64x16xi1>, vector<64x16xf32>
    %386 = vector.extract_strided_slice %369 {offsets = [0, 1], sizes = [64, 15], strides = [1, 1]} : vector<64x16xf32> to vector<64x15xf32>
    %387 = vector.extract_strided_slice %369 {offsets = [0, 0], sizes = [64, 1], strides = [1, 1]} : vector<64x16xf32> to vector<64x1xf32>
    %388 = tpu.concatenate %386, %387 in 1 : vector<64x15xf32>, vector<64x1xf32> -> vector<64x16xf32>
    %c7_i32 = arith.constant 7 : i32
    %389 = vector.broadcast %c7_i32 : i32 to vector<1x16xi32>
    %390 = arith.cmpi slt, %370, %389 : vector<1x16xi32>
    %cst_190 = arith.constant 0.000000e+00 : f32
    %391 = vector.shape_cast %390 : vector<1x16xi1> to vector<1x16xi1>
    %392 = vector.broadcast %391 : vector<1x16xi1> to vector<64x16xi1>
    %393 = vector.broadcast %cst_190 : f32 to vector<64x16xf32>
    %394 = arith.select %392, %388, %393 : vector<64x16xi1>, vector<64x16xf32>
    %395 = tpu.concatenate %385, %369, %394 in 0 : vector<64x16xf32>, vector<64x16xf32>, vector<64x16xf32> -> vector<192x16xf32>
    %396 = arith.truncf %395 : vector<192x16xf32> to vector<192x16xbf16>
    %cst_191 = arith.constant dense<0.000000e+00> : vector<64x16xf32>
    %397 = tpu.matmul %372, %396, %cst_191 {dimension_numbers = #tpu.dot_dimension_numbers<[1], [0], [0], [1], [0, 0, 1, 1], [], []>} : vector<64x192xbf16>, vector<192x16xbf16>, vector<64x16xf32> -> vector<64x16xf32>
    %398 = vector.broadcast %374 : vector<64x1xf32> to vector<64x16xf32>
    %399 = arith.mulf %397, %398 : vector<64x16xf32>
    %400 = vector.broadcast %376 : vector<64x1xf32> to vector<64x16xf32>
    %401 = arith.addf %399, %400 : vector<64x16xf32>
    %cst_192 = arith.constant 0.000000e+00 : f32
    %402 = vector.broadcast %cst_192 : f32 to vector<64x16xf32>
    %403 = arith.cmpf oge, %401, %402 : vector<64x16xf32>
    %cst_193 = arith.constant 3.000000e-01 : f32
    %404 = vector.broadcast %cst_193 : f32 to vector<64x16xf32>
    %405 = arith.mulf %404, %401 : vector<64x16xf32>
    %406 = arith.select %403, %401, %405 : vector<64x16xi1>, vector<64x16xf32>
    %c4_194 = arith.constant 4 : index
    %c1_195 = arith.constant 1 : index
    %c0_196 = arith.constant 0 : index
    %c0_197 = arith.constant 0 : index
    %407 = vector.load %arg4[%c4_194, %c1_195, %c0_196, %c0_197] : memref<7x2x64x192xbf16, #tpu.memory_space<vmem>>, vector<1x1x64x192xbf16>
    %408 = vector.shape_cast %407 : vector<1x1x64x192xbf16> to vector<64x192xbf16>
    %c4_198 = arith.constant 4 : index
    %c1_199 = arith.constant 1 : index
    %c0_200 = arith.constant 0 : index
    %c0_201 = arith.constant 0 : index
    %409 = vector.load %arg5[%c4_198, %c1_199, %c0_200, %c0_201] : memref<7x2x64x1xf32, #tpu.memory_space<vmem>>, vector<1x1x64x1xf32>
    %410 = vector.shape_cast %409 : vector<1x1x64x1xf32> to vector<64x1xf32>
    %c4_202 = arith.constant 4 : index
    %c1_203 = arith.constant 1 : index
    %c0_204 = arith.constant 0 : index
    %c0_205 = arith.constant 0 : index
    %411 = vector.load %arg6[%c4_202, %c1_203, %c0_204, %c0_205] : memref<7x2x64x1xf32, #tpu.memory_space<vmem>>, vector<1x1x64x1xf32>
    %412 = vector.shape_cast %411 : vector<1x1x64x1xf32> to vector<64x1xf32>
    %413 = vector.extract_strided_slice %406 {offsets = [0, 15], sizes = [64, 1], strides = [1, 1]} : vector<64x16xf32> to vector<64x1xf32>
    %414 = vector.extract_strided_slice %406 {offsets = [0, 0], sizes = [64, 15], strides = [1, 1]} : vector<64x16xf32> to vector<64x15xf32>
    %415 = tpu.concatenate %413, %414 in 1 : vector<64x1xf32>, vector<64x15xf32> -> vector<64x16xf32>
    %c1_i32_206 = arith.constant 1 : i32
    %416 = vector.broadcast %c1_i32_206 : i32 to vector<1x16xi32>
    %417 = arith.cmpi sge, %370, %416 : vector<1x16xi32>
    %cst_207 = arith.constant 0.000000e+00 : f32
    %418 = vector.shape_cast %417 : vector<1x16xi1> to vector<1x16xi1>
    %419 = vector.broadcast %418 : vector<1x16xi1> to vector<64x16xi1>
    %420 = vector.broadcast %cst_207 : f32 to vector<64x16xf32>
    %421 = arith.select %419, %415, %420 : vector<64x16xi1>, vector<64x16xf32>
    %422 = vector.extract_strided_slice %406 {offsets = [0, 1], sizes = [64, 15], strides = [1, 1]} : vector<64x16xf32> to vector<64x15xf32>
    %423 = vector.extract_strided_slice %406 {offsets = [0, 0], sizes = [64, 1], strides = [1, 1]} : vector<64x16xf32> to vector<64x1xf32>
    %424 = tpu.concatenate %422, %423 in 1 : vector<64x15xf32>, vector<64x1xf32> -> vector<64x16xf32>
    %c7_i32_208 = arith.constant 7 : i32
    %425 = vector.broadcast %c7_i32_208 : i32 to vector<1x16xi32>
    %426 = arith.cmpi slt, %370, %425 : vector<1x16xi32>
    %cst_209 = arith.constant 0.000000e+00 : f32
    %427 = vector.shape_cast %426 : vector<1x16xi1> to vector<1x16xi1>
    %428 = vector.broadcast %427 : vector<1x16xi1> to vector<64x16xi1>
    %429 = vector.broadcast %cst_209 : f32 to vector<64x16xf32>
    %430 = arith.select %428, %424, %429 : vector<64x16xi1>, vector<64x16xf32>
    %431 = tpu.concatenate %421, %406, %430 in 0 : vector<64x16xf32>, vector<64x16xf32>, vector<64x16xf32> -> vector<192x16xf32>
    %432 = arith.truncf %431 : vector<192x16xf32> to vector<192x16xbf16>
    %cst_210 = arith.constant dense<0.000000e+00> : vector<64x16xf32>
    %433 = tpu.matmul %408, %432, %cst_210 {dimension_numbers = #tpu.dot_dimension_numbers<[1], [0], [0], [1], [0, 0, 1, 1], [], []>} : vector<64x192xbf16>, vector<192x16xbf16>, vector<64x16xf32> -> vector<64x16xf32>
    %434 = vector.broadcast %410 : vector<64x1xf32> to vector<64x16xf32>
    %435 = arith.mulf %433, %434 : vector<64x16xf32>
    %436 = vector.broadcast %412 : vector<64x1xf32> to vector<64x16xf32>
    %437 = arith.addf %435, %436 : vector<64x16xf32>
    %438 = arith.addf %437, %369 : vector<64x16xf32>
    %c0_211 = arith.constant 0 : index
    %c0_212 = arith.constant 0 : index
    %439 = vector.load %arg21[%c0_211, %c0_212] : memref<16x8xf32, #tpu.memory_space<vmem>>, vector<16x8xf32>
    %cst_213 = arith.constant dense<0.000000e+00> : vector<64x8xf32>
    %440 = tpu.matmul %438, %439, %cst_213 {dimension_numbers = #tpu.dot_dimension_numbers<[1], [0], [0], [1], [0, 0, 1, 1], [], []>} : vector<64x16xf32>, vector<16x8xf32>, vector<64x8xf32> -> vector<64x8xf32>
    %c0_214 = arith.constant 0 : index
    %c0_215 = arith.constant 0 : index
    %441 = vector.load %arg15[%c0_214, %c0_215] : memref<1x8xi32, #tpu.memory_space<vmem>>, vector<1x8xi32>
    %c5 = arith.constant 5 : index
    %c0_216 = arith.constant 0 : index
    %c0_217 = arith.constant 0 : index
    %c0_218 = arith.constant 0 : index
    %442 = vector.load %arg4[%c5, %c0_216, %c0_217, %c0_218] : memref<7x2x64x192xbf16, #tpu.memory_space<vmem>>, vector<1x1x64x192xbf16>
    %443 = vector.shape_cast %442 : vector<1x1x64x192xbf16> to vector<64x192xbf16>
    %c5_219 = arith.constant 5 : index
    %c0_220 = arith.constant 0 : index
    %c0_221 = arith.constant 0 : index
    %c0_222 = arith.constant 0 : index
    %444 = vector.load %arg5[%c5_219, %c0_220, %c0_221, %c0_222] : memref<7x2x64x1xf32, #tpu.memory_space<vmem>>, vector<1x1x64x1xf32>
    %445 = vector.shape_cast %444 : vector<1x1x64x1xf32> to vector<64x1xf32>
    %c5_223 = arith.constant 5 : index
    %c0_224 = arith.constant 0 : index
    %c0_225 = arith.constant 0 : index
    %c0_226 = arith.constant 0 : index
    %446 = vector.load %arg6[%c5_223, %c0_224, %c0_225, %c0_226] : memref<7x2x64x1xf32, #tpu.memory_space<vmem>>, vector<1x1x64x1xf32>
    %447 = vector.shape_cast %446 : vector<1x1x64x1xf32> to vector<64x1xf32>
    %448 = vector.extract_strided_slice %440 {offsets = [0, 7], sizes = [64, 1], strides = [1, 1]} : vector<64x8xf32> to vector<64x1xf32>
    %449 = vector.extract_strided_slice %440 {offsets = [0, 0], sizes = [64, 7], strides = [1, 1]} : vector<64x8xf32> to vector<64x7xf32>
    %450 = tpu.concatenate %448, %449 in 1 : vector<64x1xf32>, vector<64x7xf32> -> vector<64x8xf32>
    %c1_i32_227 = arith.constant 1 : i32
    %451 = vector.broadcast %c1_i32_227 : i32 to vector<1x8xi32>
    %452 = arith.cmpi sge, %441, %451 : vector<1x8xi32>
    %cst_228 = arith.constant 0.000000e+00 : f32
    %453 = vector.shape_cast %452 : vector<1x8xi1> to vector<1x8xi1>
    %454 = vector.broadcast %453 : vector<1x8xi1> to vector<64x8xi1>
    %455 = vector.broadcast %cst_228 : f32 to vector<64x8xf32>
    %456 = arith.select %454, %450, %455 : vector<64x8xi1>, vector<64x8xf32>
    %457 = vector.extract_strided_slice %440 {offsets = [0, 1], sizes = [64, 7], strides = [1, 1]} : vector<64x8xf32> to vector<64x7xf32>
    %458 = vector.extract_strided_slice %440 {offsets = [0, 0], sizes = [64, 1], strides = [1, 1]} : vector<64x8xf32> to vector<64x1xf32>
    %459 = tpu.concatenate %457, %458 in 1 : vector<64x7xf32>, vector<64x1xf32> -> vector<64x8xf32>
    %c3_i32_229 = arith.constant 3 : i32
    %460 = vector.broadcast %c3_i32_229 : i32 to vector<1x8xi32>
    %461 = arith.cmpi slt, %441, %460 : vector<1x8xi32>
    %cst_230 = arith.constant 0.000000e+00 : f32
    %462 = vector.shape_cast %461 : vector<1x8xi1> to vector<1x8xi1>
    %463 = vector.broadcast %462 : vector<1x8xi1> to vector<64x8xi1>
    %464 = vector.broadcast %cst_230 : f32 to vector<64x8xf32>
    %465 = arith.select %463, %459, %464 : vector<64x8xi1>, vector<64x8xf32>
    %466 = tpu.concatenate %456, %440, %465 in 0 : vector<64x8xf32>, vector<64x8xf32>, vector<64x8xf32> -> vector<192x8xf32>
    %467 = arith.truncf %466 : vector<192x8xf32> to vector<192x8xbf16>
    %cst_231 = arith.constant dense<0.000000e+00> : vector<64x8xf32>
    %468 = tpu.matmul %443, %467, %cst_231 {dimension_numbers = #tpu.dot_dimension_numbers<[1], [0], [0], [1], [0, 0, 1, 1], [], []>} : vector<64x192xbf16>, vector<192x8xbf16>, vector<64x8xf32> -> vector<64x8xf32>
    %469 = vector.broadcast %445 : vector<64x1xf32> to vector<64x8xf32>
    %470 = arith.mulf %468, %469 : vector<64x8xf32>
    %471 = vector.broadcast %447 : vector<64x1xf32> to vector<64x8xf32>
    %472 = arith.addf %470, %471 : vector<64x8xf32>
    %cst_232 = arith.constant 0.000000e+00 : f32
    %473 = vector.broadcast %cst_232 : f32 to vector<64x8xf32>
    %474 = arith.cmpf oge, %472, %473 : vector<64x8xf32>
    %cst_233 = arith.constant 3.000000e-01 : f32
    %475 = vector.broadcast %cst_233 : f32 to vector<64x8xf32>
    %476 = arith.mulf %475, %472 : vector<64x8xf32>
    %477 = arith.select %474, %472, %476 : vector<64x8xi1>, vector<64x8xf32>
    %c5_234 = arith.constant 5 : index
    %c1_235 = arith.constant 1 : index
    %c0_236 = arith.constant 0 : index
    %c0_237 = arith.constant 0 : index
    %478 = vector.load %arg4[%c5_234, %c1_235, %c0_236, %c0_237] : memref<7x2x64x192xbf16, #tpu.memory_space<vmem>>, vector<1x1x64x192xbf16>
    %479 = vector.shape_cast %478 : vector<1x1x64x192xbf16> to vector<64x192xbf16>
    %c5_238 = arith.constant 5 : index
    %c1_239 = arith.constant 1 : index
    %c0_240 = arith.constant 0 : index
    %c0_241 = arith.constant 0 : index
    %480 = vector.load %arg5[%c5_238, %c1_239, %c0_240, %c0_241] : memref<7x2x64x1xf32, #tpu.memory_space<vmem>>, vector<1x1x64x1xf32>
    %481 = vector.shape_cast %480 : vector<1x1x64x1xf32> to vector<64x1xf32>
    %c5_242 = arith.constant 5 : index
    %c1_243 = arith.constant 1 : index
    %c0_244 = arith.constant 0 : index
    %c0_245 = arith.constant 0 : index
    %482 = vector.load %arg6[%c5_242, %c1_243, %c0_244, %c0_245] : memref<7x2x64x1xf32, #tpu.memory_space<vmem>>, vector<1x1x64x1xf32>
    %483 = vector.shape_cast %482 : vector<1x1x64x1xf32> to vector<64x1xf32>
    %484 = vector.extract_strided_slice %477 {offsets = [0, 7], sizes = [64, 1], strides = [1, 1]} : vector<64x8xf32> to vector<64x1xf32>
    %485 = vector.extract_strided_slice %477 {offsets = [0, 0], sizes = [64, 7], strides = [1, 1]} : vector<64x8xf32> to vector<64x7xf32>
    %486 = tpu.concatenate %484, %485 in 1 : vector<64x1xf32>, vector<64x7xf32> -> vector<64x8xf32>
    %c1_i32_246 = arith.constant 1 : i32
    %487 = vector.broadcast %c1_i32_246 : i32 to vector<1x8xi32>
    %488 = arith.cmpi sge, %441, %487 : vector<1x8xi32>
    %cst_247 = arith.constant 0.000000e+00 : f32
    %489 = vector.shape_cast %488 : vector<1x8xi1> to vector<1x8xi1>
    %490 = vector.broadcast %489 : vector<1x8xi1> to vector<64x8xi1>
    %491 = vector.broadcast %cst_247 : f32 to vector<64x8xf32>
    %492 = arith.select %490, %486, %491 : vector<64x8xi1>, vector<64x8xf32>
    %493 = vector.extract_strided_slice %477 {offsets = [0, 1], sizes = [64, 7], strides = [1, 1]} : vector<64x8xf32> to vector<64x7xf32>
    %494 = vector.extract_strided_slice %477 {offsets = [0, 0], sizes = [64, 1], strides = [1, 1]} : vector<64x8xf32> to vector<64x1xf32>
    %495 = tpu.concatenate %493, %494 in 1 : vector<64x7xf32>, vector<64x1xf32> -> vector<64x8xf32>
    %c3_i32_248 = arith.constant 3 : i32
    %496 = vector.broadcast %c3_i32_248 : i32 to vector<1x8xi32>
    %497 = arith.cmpi slt, %441, %496 : vector<1x8xi32>
    %cst_249 = arith.constant 0.000000e+00 : f32
    %498 = vector.shape_cast %497 : vector<1x8xi1> to vector<1x8xi1>
    %499 = vector.broadcast %498 : vector<1x8xi1> to vector<64x8xi1>
    %500 = vector.broadcast %cst_249 : f32 to vector<64x8xf32>
    %501 = arith.select %499, %495, %500 : vector<64x8xi1>, vector<64x8xf32>
    %502 = tpu.concatenate %492, %477, %501 in 0 : vector<64x8xf32>, vector<64x8xf32>, vector<64x8xf32> -> vector<192x8xf32>
    %503 = arith.truncf %502 : vector<192x8xf32> to vector<192x8xbf16>
    %cst_250 = arith.constant dense<0.000000e+00> : vector<64x8xf32>
    %504 = tpu.matmul %479, %503, %cst_250 {dimension_numbers = #tpu.dot_dimension_numbers<[1], [0], [0], [1], [0, 0, 1, 1], [], []>} : vector<64x192xbf16>, vector<192x8xbf16>, vector<64x8xf32> -> vector<64x8xf32>
    %505 = vector.broadcast %481 : vector<64x1xf32> to vector<64x8xf32>
    %506 = arith.mulf %504, %505 : vector<64x8xf32>
    %507 = vector.broadcast %483 : vector<64x1xf32> to vector<64x8xf32>
    %508 = arith.addf %506, %507 : vector<64x8xf32>
    %509 = arith.addf %508, %440 : vector<64x8xf32>
    %c0_251 = arith.constant 0 : index
    %c0_252 = arith.constant 0 : index
    %510 = vector.load %arg22[%c0_251, %c0_252] : memref<8x4xf32, #tpu.memory_space<vmem>>, vector<8x4xf32>
    %cst_253 = arith.constant dense<0.000000e+00> : vector<64x4xf32>
    %511 = tpu.matmul %509, %510, %cst_253 {dimension_numbers = #tpu.dot_dimension_numbers<[1], [0], [0], [1], [0, 0, 1, 1], [], []>} : vector<64x8xf32>, vector<8x4xf32>, vector<64x4xf32> -> vector<64x4xf32>
    %c0_254 = arith.constant 0 : index
    %c0_255 = arith.constant 0 : index
    %512 = vector.load %arg16[%c0_254, %c0_255] : memref<1x4xi32, #tpu.memory_space<vmem>>, vector<1x4xi32>
    %c6 = arith.constant 6 : index
    %c0_256 = arith.constant 0 : index
    %c0_257 = arith.constant 0 : index
    %c0_258 = arith.constant 0 : index
    %513 = vector.load %arg4[%c6, %c0_256, %c0_257, %c0_258] : memref<7x2x64x192xbf16, #tpu.memory_space<vmem>>, vector<1x1x64x192xbf16>
    %514 = vector.shape_cast %513 : vector<1x1x64x192xbf16> to vector<64x192xbf16>
    %c6_259 = arith.constant 6 : index
    %c0_260 = arith.constant 0 : index
    %c0_261 = arith.constant 0 : index
    %c0_262 = arith.constant 0 : index
    %515 = vector.load %arg5[%c6_259, %c0_260, %c0_261, %c0_262] : memref<7x2x64x1xf32, #tpu.memory_space<vmem>>, vector<1x1x64x1xf32>
    %516 = vector.shape_cast %515 : vector<1x1x64x1xf32> to vector<64x1xf32>
    %c6_263 = arith.constant 6 : index
    %c0_264 = arith.constant 0 : index
    %c0_265 = arith.constant 0 : index
    %c0_266 = arith.constant 0 : index
    %517 = vector.load %arg6[%c6_263, %c0_264, %c0_265, %c0_266] : memref<7x2x64x1xf32, #tpu.memory_space<vmem>>, vector<1x1x64x1xf32>
    %518 = vector.shape_cast %517 : vector<1x1x64x1xf32> to vector<64x1xf32>
    %519 = vector.extract_strided_slice %511 {offsets = [0, 3], sizes = [64, 1], strides = [1, 1]} : vector<64x4xf32> to vector<64x1xf32>
    %520 = vector.extract_strided_slice %511 {offsets = [0, 0], sizes = [64, 3], strides = [1, 1]} : vector<64x4xf32> to vector<64x3xf32>
    %521 = tpu.concatenate %519, %520 in 1 : vector<64x1xf32>, vector<64x3xf32> -> vector<64x4xf32>
    %c1_i32_267 = arith.constant 1 : i32
    %522 = vector.broadcast %c1_i32_267 : i32 to vector<1x4xi32>
    %523 = arith.cmpi sge, %512, %522 : vector<1x4xi32>
    %cst_268 = arith.constant 0.000000e+00 : f32
    %524 = vector.shape_cast %523 : vector<1x4xi1> to vector<1x4xi1>
    %525 = vector.broadcast %524 : vector<1x4xi1> to vector<64x4xi1>
    %526 = vector.broadcast %cst_268 : f32 to vector<64x4xf32>
    %527 = arith.select %525, %521, %526 : vector<64x4xi1>, vector<64x4xf32>
    %528 = vector.extract_strided_slice %511 {offsets = [0, 1], sizes = [64, 3], strides = [1, 1]} : vector<64x4xf32> to vector<64x3xf32>
    %529 = vector.extract_strided_slice %511 {offsets = [0, 0], sizes = [64, 1], strides = [1, 1]} : vector<64x4xf32> to vector<64x1xf32>
    %530 = tpu.concatenate %528, %529 in 1 : vector<64x3xf32>, vector<64x1xf32> -> vector<64x4xf32>
    %c1_i32_269 = arith.constant 1 : i32
    %531 = vector.broadcast %c1_i32_269 : i32 to vector<1x4xi32>
    %532 = arith.cmpi slt, %512, %531 : vector<1x4xi32>
    %cst_270 = arith.constant 0.000000e+00 : f32
    %533 = vector.shape_cast %532 : vector<1x4xi1> to vector<1x4xi1>
    %534 = vector.broadcast %533 : vector<1x4xi1> to vector<64x4xi1>
    %535 = vector.broadcast %cst_270 : f32 to vector<64x4xf32>
    %536 = arith.select %534, %530, %535 : vector<64x4xi1>, vector<64x4xf32>
    %537 = tpu.concatenate %527, %511, %536 in 0 : vector<64x4xf32>, vector<64x4xf32>, vector<64x4xf32> -> vector<192x4xf32>
    %538 = arith.truncf %537 : vector<192x4xf32> to vector<192x4xbf16>
    %cst_271 = arith.constant dense<0.000000e+00> : vector<64x4xf32>
    %539 = tpu.matmul %514, %538, %cst_271 {dimension_numbers = #tpu.dot_dimension_numbers<[1], [0], [0], [1], [0, 0, 1, 1], [], []>} : vector<64x192xbf16>, vector<192x4xbf16>, vector<64x4xf32> -> vector<64x4xf32>
    %540 = vector.broadcast %516 : vector<64x1xf32> to vector<64x4xf32>
    %541 = arith.mulf %539, %540 : vector<64x4xf32>
    %542 = vector.broadcast %518 : vector<64x1xf32> to vector<64x4xf32>
    %543 = arith.addf %541, %542 : vector<64x4xf32>
    %cst_272 = arith.constant 0.000000e+00 : f32
    %544 = vector.broadcast %cst_272 : f32 to vector<64x4xf32>
    %545 = arith.cmpf oge, %543, %544 : vector<64x4xf32>
    %cst_273 = arith.constant 3.000000e-01 : f32
    %546 = vector.broadcast %cst_273 : f32 to vector<64x4xf32>
    %547 = arith.mulf %546, %543 : vector<64x4xf32>
    %548 = arith.select %545, %543, %547 : vector<64x4xi1>, vector<64x4xf32>
    %c6_274 = arith.constant 6 : index
    %c1_275 = arith.constant 1 : index
    %c0_276 = arith.constant 0 : index
    %c0_277 = arith.constant 0 : index
    %549 = vector.load %arg4[%c6_274, %c1_275, %c0_276, %c0_277] : memref<7x2x64x192xbf16, #tpu.memory_space<vmem>>, vector<1x1x64x192xbf16>
    %550 = vector.shape_cast %549 : vector<1x1x64x192xbf16> to vector<64x192xbf16>
    %c6_278 = arith.constant 6 : index
    %c1_279 = arith.constant 1 : index
    %c0_280 = arith.constant 0 : index
    %c0_281 = arith.constant 0 : index
    %551 = vector.load %arg5[%c6_278, %c1_279, %c0_280, %c0_281] : memref<7x2x64x1xf32, #tpu.memory_space<vmem>>, vector<1x1x64x1xf32>
    %552 = vector.shape_cast %551 : vector<1x1x64x1xf32> to vector<64x1xf32>
    %c6_282 = arith.constant 6 : index
    %c1_283 = arith.constant 1 : index
    %c0_284 = arith.constant 0 : index
    %c0_285 = arith.constant 0 : index
    %553 = vector.load %arg6[%c6_282, %c1_283, %c0_284, %c0_285] : memref<7x2x64x1xf32, #tpu.memory_space<vmem>>, vector<1x1x64x1xf32>
    %554 = vector.shape_cast %553 : vector<1x1x64x1xf32> to vector<64x1xf32>
    %555 = vector.extract_strided_slice %548 {offsets = [0, 3], sizes = [64, 1], strides = [1, 1]} : vector<64x4xf32> to vector<64x1xf32>
    %556 = vector.extract_strided_slice %548 {offsets = [0, 0], sizes = [64, 3], strides = [1, 1]} : vector<64x4xf32> to vector<64x3xf32>
    %557 = tpu.concatenate %555, %556 in 1 : vector<64x1xf32>, vector<64x3xf32> -> vector<64x4xf32>
    %c1_i32_286 = arith.constant 1 : i32
    %558 = vector.broadcast %c1_i32_286 : i32 to vector<1x4xi32>
    %559 = arith.cmpi sge, %512, %558 : vector<1x4xi32>
    %cst_287 = arith.constant 0.000000e+00 : f32
    %560 = vector.shape_cast %559 : vector<1x4xi1> to vector<1x4xi1>
    %561 = vector.broadcast %560 : vector<1x4xi1> to vector<64x4xi1>
    %562 = vector.broadcast %cst_287 : f32 to vector<64x4xf32>
    %563 = arith.select %561, %557, %562 : vector<64x4xi1>, vector<64x4xf32>
    %564 = vector.extract_strided_slice %548 {offsets = [0, 1], sizes = [64, 3], strides = [1, 1]} : vector<64x4xf32> to vector<64x3xf32>
    %565 = vector.extract_strided_slice %548 {offsets = [0, 0], sizes = [64, 1], strides = [1, 1]} : vector<64x4xf32> to vector<64x1xf32>
    %566 = tpu.concatenate %564, %565 in 1 : vector<64x3xf32>, vector<64x1xf32> -> vector<64x4xf32>
    %c1_i32_288 = arith.constant 1 : i32
    %567 = vector.broadcast %c1_i32_288 : i32 to vector<1x4xi32>
    %568 = arith.cmpi slt, %512, %567 : vector<1x4xi32>
    %cst_289 = arith.constant 0.000000e+00 : f32
    %569 = vector.shape_cast %568 : vector<1x4xi1> to vector<1x4xi1>
    %570 = vector.broadcast %569 : vector<1x4xi1> to vector<64x4xi1>
    %571 = vector.broadcast %cst_289 : f32 to vector<64x4xf32>
    %572 = arith.select %570, %566, %571 : vector<64x4xi1>, vector<64x4xf32>
    %573 = tpu.concatenate %563, %548, %572 in 0 : vector<64x4xf32>, vector<64x4xf32>, vector<64x4xf32> -> vector<192x4xf32>
    %574 = arith.truncf %573 : vector<192x4xf32> to vector<192x4xbf16>
    %cst_290 = arith.constant dense<0.000000e+00> : vector<64x4xf32>
    %575 = tpu.matmul %550, %574, %cst_290 {dimension_numbers = #tpu.dot_dimension_numbers<[1], [0], [0], [1], [0, 0, 1, 1], [], []>} : vector<64x192xbf16>, vector<192x4xbf16>, vector<64x4xf32> -> vector<64x4xf32>
    %576 = vector.broadcast %552 : vector<64x1xf32> to vector<64x4xf32>
    %577 = arith.mulf %575, %576 : vector<64x4xf32>
    %578 = vector.broadcast %554 : vector<64x1xf32> to vector<64x4xf32>
    %579 = arith.addf %577, %578 : vector<64x4xf32>
    %580 = arith.addf %579, %511 : vector<64x4xf32>
    %c0_291 = arith.constant 0 : index
    %c0_292 = arith.constant 0 : index
    %581 = vector.load %arg9[%c0_291, %c0_292] : memref<4x2xf32, #tpu.memory_space<vmem>>, vector<4x2xf32>
    %cst_293 = arith.constant dense<0.000000e+00> : vector<64x2xf32>
    %582 = tpu.matmul %580, %581, %cst_293 {dimension_numbers = #tpu.dot_dimension_numbers<[1], [0], [0], [1], [0, 0, 1, 1], [], []>} : vector<64x4xf32>, vector<4x2xf32>, vector<64x2xf32> -> vector<64x2xf32>
    %c0_294 = arith.constant 0 : index
    %c0_295 = arith.constant 0 : index
    %583 = vector.load %arg7[%c0_294, %c0_295] : memref<1x64xf32, #tpu.memory_space<vmem>>, vector<1x64xf32>
    %cst_296 = arith.constant dense<0.000000e+00> : vector<1x2xf32>
    %584 = tpu.matmul %583, %582, %cst_296 {dimension_numbers = #tpu.dot_dimension_numbers<[1], [0], [0], [1], [0, 0, 1, 1], [], []>} : vector<1x64xf32>, vector<64x2xf32>, vector<1x2xf32> -> vector<1x2xf32>
    %c0_297 = arith.constant 0 : index
    %c0_298 = arith.constant 0 : index
    %585 = vector.load %arg8[%c0_297, %c0_298] : memref<1x1xf32, #tpu.memory_space<vmem>>, vector<1x1xf32>
    %586 = vector.broadcast %585 : vector<1x1xf32> to vector<1x2xf32>
    %587 = arith.addf %584, %586 : vector<1x2xf32>
    %c0_299 = arith.constant 0 : index
    %c0_300 = arith.constant 0 : index
    %588 = vector.load %arg23[%c0_299, %c0_300] : memref<1x2xf32, #tpu.memory_space<vmem>>, vector<1x2xf32>
    tpu.vector_store %arg23[%c0_299, %c0_300], %587 {strides = array<i32>} : memref<1x2xf32, #tpu.memory_space<vmem>>, vector<1x2xf32>,
    return
  }
  func.func @transform_0(%arg0: i32) -> (i32, i32) {
    %c0_i32 = arith.constant 0 : i32
    %c0_i32_0 = arith.constant 0 : i32
    %c0_i32_1 = arith.constant 0 : i32
    return %c0_i32, %c0_i32_0 : i32, i32
  }
  func.func @transform_1(%arg0: i32) -> (i32, i32) {
    %c0_i32 = arith.constant 0 : i32
    %c0_i32_0 = arith.constant 0 : i32
    %c0_i32_1 = arith.constant 0 : i32
    return %c0_i32, %c0_i32_0 : i32, i32
  }
  func.func @transform_2(%arg0: i32) -> (i32, i32) {
    %c0_i32 = arith.constant 0 : i32
    %c0_i32_0 = arith.constant 0 : i32
    %c0_i32_1 = arith.constant 0 : i32
    return %c0_i32, %c0_i32_0 : i32, i32
  }
  func.func @transform_3(%arg0: i32) -> (i32, i32, i32, i32) {
    %c0_i32 = arith.constant 0 : i32
    %c0_i32_0 = arith.constant 0 : i32
    %c0_i32_1 = arith.constant 0 : i32
    %c0_i32_2 = arith.constant 0 : i32
    %c0_i32_3 = arith.constant 0 : i32
    return %c0_i32, %c0_i32_0, %c0_i32_1, %c0_i32_2 : i32, i32, i32, i32
  }
  func.func @transform_4(%arg0: i32) -> (i32, i32, i32, i32) {
    %c0_i32 = arith.constant 0 : i32
    %c0_i32_0 = arith.constant 0 : i32
    %c0_i32_1 = arith.constant 0 : i32
    %c0_i32_2 = arith.constant 0 : i32
    %c0_i32_3 = arith.constant 0 : i32
    return %c0_i32, %c0_i32_0, %c0_i32_1, %c0_i32_2 : i32, i32, i32, i32
  }
  func.func @transform_5(%arg0: i32) -> (i32, i32, i32, i32) {
    %c0_i32 = arith.constant 0 : i32
    %c0_i32_0 = arith.constant 0 : i32
    %c0_i32_1 = arith.constant 0 : i32
    %c0_i32_2 = arith.constant 0 : i32
    %c0_i32_3 = arith.constant 0 : i32
    return %c0_i32, %c0_i32_0, %c0_i32_1, %c0_i32_2 : i32, i32, i32, i32
  }
  func.func @transform_6(%arg0: i32) -> (i32, i32) {
    %c0_i32 = arith.constant 0 : i32
    %c0_i32_0 = arith.constant 0 : i32
    %c0_i32_1 = arith.constant 0 : i32
    return %c0_i32, %c0_i32_0 : i32, i32
  }
  func.func @transform_7(%arg0: i32) -> (i32, i32) {
    %c0_i32 = arith.constant 0 : i32
    %c0_i32_0 = arith.constant 0 : i32
    %c0_i32_1 = arith.constant 0 : i32
    return %c0_i32, %c0_i32_0 : i32, i32
  }
  func.func @transform_8(%arg0: i32) -> (i32, i32) {
    %c0_i32 = arith.constant 0 : i32
    %c0_i32_0 = arith.constant 0 : i32
    %c0_i32_1 = arith.constant 0 : i32
    return %c0_i32, %c0_i32_0 : i32, i32
  }
  func.func @transform_9(%arg0: i32) -> (i32, i32) {
    %c0_i32 = arith.constant 0 : i32
    %c0_i32_0 = arith.constant 0 : i32
    %c0_i32_1 = arith.constant 0 : i32
    return %c0_i32, %c0_i32_0 : i32, i32
  }
  func.func @transform_10(%arg0: i32) -> (i32, i32) {
    %c0_i32 = arith.constant 0 : i32
    %c0_i32_0 = arith.constant 0 : i32
    %c0_i32_1 = arith.constant 0 : i32
    return %c0_i32, %c0_i32_0 : i32, i32
  }
  func.func @transform_11(%arg0: i32) -> (i32, i32) {
    %c0_i32 = arith.constant 0 : i32
    %c0_i32_0 = arith.constant 0 : i32
    %c0_i32_1 = arith.constant 0 : i32
    return %c0_i32, %c0_i32_0 : i32, i32
  }
  func.func @transform_12(%arg0: i32) -> (i32, i32) {
    %c0_i32 = arith.constant 0 : i32
    %c0_i32_0 = arith.constant 0 : i32
    %c0_i32_1 = arith.constant 0 : i32
    return %c0_i32, %c0_i32_0 : i32, i32
  }
  func.func @transform_13(%arg0: i32) -> (i32, i32) {
    %c0_i32 = arith.constant 0 : i32
    %c0_i32_0 = arith.constant 0 : i32
    %c0_i32_1 = arith.constant 0 : i32
    return %c0_i32, %c0_i32_0 : i32, i32
  }
  func.func @transform_14(%arg0: i32) -> (i32, i32) {
    %c0_i32 = arith.constant 0 : i32
    %c0_i32_0 = arith.constant 0 : i32
    %c0_i32_1 = arith.constant 0 : i32
    return %c0_i32, %c0_i32_0 : i32, i32
  }
  func.func @transform_15(%arg0: i32) -> (i32, i32) {
    %c0_i32 = arith.constant 0 : i32
    %c0_i32_0 = arith.constant 0 : i32
    %c0_i32_1 = arith.constant 0 : i32
    return %c0_i32, %c0_i32_0 : i32, i32
  }
  func.func @transform_16(%arg0: i32) -> (i32, i32) {
    %c0_i32 = arith.constant 0 : i32
    %c0_i32_0 = arith.constant 0 : i32
    %c0_i32_1 = arith.constant 0 : i32
    return %c0_i32, %c0_i32_0 : i32, i32
  }
  func.func @transform_17(%arg0: i32) -> (i32, i32) {
    %c0_i32 = arith.constant 0 : i32
    %c0_i32_0 = arith.constant 0 : i32
    %c0_i32_1 = arith.constant 0 : i32
    return %c0_i32, %c0_i32_0 : i32, i32
  }
  func.func @transform_18(%arg0: i32) -> (i32, i32) {
    %c0_i32 = arith.constant 0 : i32
    %c0_i32_0 = arith.constant 0 : i32
    %c0_i32_1 = arith.constant 0 : i32
    return %c0_i32, %c0_i32_0 : i32, i32
  }
  func.func @transform_19(%arg0: i32) -> (i32, i32) {
    %c0_i32 = arith.constant 0 : i32
    %c0_i32_0 = arith.constant 0 : i32
    %c0_i32_1 = arith.constant 0 : i32
    return %c0_i32, %c0_i32_0 : i32, i32
  }
  func.func @transform_20(%arg0: i32) -> (i32, i32) {
    %c0_i32 = arith.constant 0 : i32
    %c0_i32_0 = arith.constant 0 : i32
    %c0_i32_1 = arith.constant 0 : i32
    return %c0_i32, %c0_i32_0 : i32, i32
  }
  func.func @transform_21(%arg0: i32) -> (i32, i32) {
    %c0_i32 = arith.constant 0 : i32
    %c0_i32_0 = arith.constant 0 : i32
    %c0_i32_1 = arith.constant 0 : i32
    return %c0_i32, %c0_i32_0 : i32, i32
  }
  func.func @transform_22(%arg0: i32) -> (i32, i32) {
    %c0_i32 = arith.constant 0 : i32
    %c0_i32_0 = arith.constant 0 : i32
    %c0_i32_1 = arith.constant 0 : i32
    return %c0_i32, %c0_i32_0 : i32, i32
  }
}

</mosaic_0001>

<llo_original>
// kernel: discriminator_forward.1
$region0: #{discriminator_forward.1}
  #allocation0 [shape = 'u32[]', space=smem, size = 0x4, offset = 0x4, fixed_abs, tag = 'smem constant byte address 0x4 - core index']
  #allocation1 [shape = 'u32[144,128]{1,0:T(1,128)}', space=vmem, size = 0x12000, scoped, tag = 'internal scratch']
  #allocation2 [shape = 'f32[1,1]{1,0:T(1,128)S(1)}', space=vmem, size = 0x200, scoped, tag = 'scoped memory for discriminator_forward.1']
  %s0 = inlined_call_operand.vmem [shape: f32[16,256], index: 0, kind: input, shape index: {}]
  %s1 = inlined_call_operand.vmem [shape: bf16[64,144], index: 1, kind: input, shape index: {}]
  %s2 = inlined_call_operand.vmem [shape: f32[64,1], index: 2, kind: input, shape index: {}]
  %s3 = inlined_call_operand.vmem [shape: bf16[7,2,64,192], index: 3, kind: input, shape index: {}]
  %s4 = inlined_call_operand.vmem [shape: f32[7,2,64,1], index: 4, kind: input, shape index: {}]
  %s5 = inlined_call_operand.vmem [shape: f32[7,2,64,1], index: 5, kind: input, shape index: {}]
  %s6 = inlined_call_operand.vmem [shape: f32[1,64], index: 6, kind: input, shape index: {}]
  %s7 = inlined_call_operand.<no memory space> [shape: f32[1,1], index: 7, kind: input, shape index: {}]
  %s8 = inlined_call_operand.vmem [shape: f32[4,2], index: 8, kind: input, shape index: {}]
  %s9 = inlined_call_operand.vmem [shape: s32[1,256], index: 9, kind: input, shape index: {}]
  %s10 = inlined_call_operand.vmem [shape: s32[1,128], index: 10, kind: input, shape index: {}]
  %s11 = inlined_call_operand.vmem [shape: s32[1,64], index: 11, kind: input, shape index: {}]
  %s12 = inlined_call_operand.vmem [shape: s32[1,32], index: 12, kind: input, shape index: {}]
  %s13 = inlined_call_operand.vmem [shape: s32[1,16], index: 13, kind: input, shape index: {}]
  %s14 = inlined_call_operand.vmem [shape: s32[1,8], index: 14, kind: input, shape index: {}]
  %s15 = inlined_call_operand.vmem [shape: s32[1,4], index: 15, kind: input, shape index: {}]
  %s16 = inlined_call_operand.vmem [shape: f32[256,128], index: 16, kind: input, shape index: {}]
  %s17 = inlined_call_operand.vmem [shape: f32[128,64], index: 17, kind: input, shape index: {}]
  %s18 = inlined_call_operand.vmem [shape: f32[64,32], index: 18, kind: input, shape index: {}]
  %s19 = inlined_call_operand.vmem [shape: f32[32,16], index: 19, kind: input, shape index: {}]
  %s20 = inlined_call_operand.vmem [shape: f32[16,8], index: 20, kind: input, shape index: {}]
  %s21 = inlined_call_operand.vmem [shape: f32[8,4], index: 21, kind: input, shape index: {}]
  %s22 = inlined_call_operand.hbm [shape: f32[1,2], index: 22, kind: output, shape index: {}]
  %s23 = sld [smem:[#allocation0]]
  $region98: #{discriminator_forward.1} parent=0
    _
  %s25 = ssub.s32 1, %s23
  %s26 = scalar_select 0, %s25, %s23
  %v27 = vstv %s7
  %28 = vst [vmem:[#allocation2] sm:$0x1] %v27
  $region1: #{discriminator_forward.1} parent=0
    #allocation3 [shape = 'u8[512]{0}', space=vmem, size = 0x400, scoped, tag = 'output window, operand 0, single buffered']
    #allocation4 [shape = 's32[1]{0}', space=sflag, size = 0x4, scoped, tag = 'scoped memory for discriminator_forward.1']
    %29 = vsyncpa [#allocation4], 0
    // Predicated region
    $region2: #{discriminator_forward.1} parent=1 // pred_check
      _
    $region3: #{discriminator_forward.1} parent=1 // pred_check_branch
      %31 = sbr.rel (0) target = $region5
    $region4: #{discriminator_forward.1} parent=1 // pred_region
      _
    $region5: #{discriminator_forward.1} parent=1 // pred_fallthru
      _
    // Predicated region
    $region6: #{discriminator_forward.1} parent=1 // pred_check
      _
    $region7: #{discriminator_forward.1} parent=1 // pred_check_branch
      %33 = sbr.rel (0) target = $region9
    $region8: #{discriminator_forward.1} parent=1 // pred_region
      _
    $region9: #{discriminator_forward.1} parent=1 // pred_fallthru
      _
    // Predicated region
    $region10: #{discriminator_forward.1} parent=1 // pred_check
      _
    $region11: #{discriminator_forward.1} parent=1 // pred_check_branch
      %35 = sbr.rel (0) target = $region13
    $region12: #{discriminator_forward.1} parent=1 // pred_region
      _
    $region13: #{discriminator_forward.1} parent=1 // pred_fallthru
      _
    // Predicated region
    $region14: #{discriminator_forward.1} parent=1 // pred_check
      _
    $region15: #{discriminator_forward.1} parent=1 // pred_check_branch
      %37 = sbr.rel (0) target = $region17
    $region16: #{discriminator_forward.1} parent=1 // pred_region
      _
    $region17: #{discriminator_forward.1} parent=1 // pred_fallthru
      _
    // Predicated region
    $region18: #{discriminator_forward.1} parent=1 // pred_check
      _
    $region19: #{discriminator_forward.1} parent=1 // pred_check_branch
      %39 = sbr.rel (0) target = $region21
    $region20: #{discriminator_forward.1} parent=1 // pred_region
      _
    $region21: #{discriminator_forward.1} parent=1 // pred_fallthru
      _
    // Predicated region
    $region22: #{discriminator_forward.1} parent=1 // pred_check
      _
    $region23: #{discriminator_forward.1} parent=1 // pred_check_branch
      %41 = sbr.rel (0) target = $region25
    $region24: #{discriminator_forward.1} parent=1 // pred_region
      _
    $region25: #{discriminator_forward.1} parent=1 // pred_fallthru
      _
    // Predicated region
    $region26: #{discriminator_forward.1} parent=1 // pred_check
      _
    $region27: #{discriminator_forward.1} parent=1 // pred_check_branch
      %43 = sbr.rel (0) target = $region29
    $region28: #{discriminator_forward.1} parent=1 // pred_region
      _
    $region29: #{discriminator_forward.1} parent=1 // pred_fallthru
      _
    // Predicated region
    $region30: #{discriminator_forward.1} parent=1 // pred_check
      _
    $region31: #{discriminator_forward.1} parent=1 // pred_check_branch
      %45 = sbr.rel (0) target = $region33
    $region32: #{discriminator_forward.1} parent=1 // pred_region
      _
    $region33: #{discriminator_forward.1} parent=1 // pred_fallthru
      _
    // Predicated region
    $region34: #{discriminator_forward.1} parent=1 // pred_check
      _
    $region35: #{discriminator_forward.1} parent=1 // pred_check_branch
      %47 = sbr.rel (0) target = $region37
    $region36: #{discriminator_forward.1} parent=1 // pred_region
      _
    $region37: #{discriminator_forward.1} parent=1 // pred_fallthru
      _
    // Predicated region
    $region38: #{discriminator_forward.1} parent=1 // pred_check
      _
    $region39: #{discriminator_forward.1} parent=1 // pred_check_branch
      %49 = sbr.rel (0) target = $region41
    $region40: #{discriminator_forward.1} parent=1 // pred_region
      _
    $region41: #{discriminator_forward.1} parent=1 // pred_fallthru
      _
    // Predicated region
    $region42: #{discriminator_forward.1} parent=1 // pred_check
      _
    $region43: #{discriminator_forward.1} parent=1 // pred_check_branch
      %51 = sbr.rel (0) target = $region45
    $region44: #{discriminator_forward.1} parent=1 // pred_region
      _
    $region45: #{discriminator_forward.1} parent=1 // pred_fallthru
      _
    // Predicated region
    $region46: #{discriminator_forward.1} parent=1 // pred_check
      _
    $region47: #{discriminator_forward.1} parent=1 // pred_check_branch
      %53 = sbr.rel (0) target = $region49
    $region48: #{discriminator_forward.1} parent=1 // pred_region
      _
    $region49: #{discriminator_forward.1} parent=1 // pred_fallthru
      _
    // Predicated region
    $region50: #{discriminator_forward.1} parent=1 // pred_check
      _
    $region51: #{discriminator_forward.1} parent=1 // pred_check_branch
      %55 = sbr.rel (0) target = $region53
    $region52: #{discriminator_forward.1} parent=1 // pred_region
      _
    $region53: #{discriminator_forward.1} parent=1 // pred_fallthru
      _
    // Predicated region
    $region54: #{discriminator_forward.1} parent=1 // pred_check
      _
    $region55: #{discriminator_forward.1} parent=1 // pred_check_branch
      %57 = sbr.rel (0) target = $region57
    $region56: #{discriminator_forward.1} parent=1 // pred_region
      _
    $region57: #{discriminator_forward.1} parent=1 // pred_fallthru
      _
    // Predicated region
    $region58: #{discriminator_forward.1} parent=1 // pred_check
      _
    $region59: #{discriminator_forward.1} parent=1 // pred_check_branch
      %59 = sbr.rel (0) target = $region61
    $region60: #{discriminator_forward.1} parent=1 // pred_region
      _
    $region61: #{discriminator_forward.1} parent=1 // pred_fallthru
      _
    // Predicated region
    $region62: #{discriminator_forward.1} parent=1 // pred_check
      _
    $region63: #{discriminator_forward.1} parent=1 // pred_check_branch
      %61 = sbr.rel (0) target = $region65
    $region64: #{discriminator_forward.1} parent=1 // pred_region
      _
    $region65: #{discriminator_forward.1} parent=1 // pred_fallthru
      _
    // Predicated region
    $region66: #{discriminator_forward.1} parent=1 // pred_check
      _
    $region67: #{discriminator_forward.1} parent=1 // pred_check_branch
      %63 = sbr.rel (0) target = $region69
    $region68: #{discriminator_forward.1} parent=1 // pred_region
      _
    $region69: #{discriminator_forward.1} parent=1 // pred_fallthru
      _
    // Predicated region
    $region70: #{discriminator_forward.1} parent=1 // pred_check
      _
    $region71: #{discriminator_forward.1} parent=1 // pred_check_branch
      %65 = sbr.rel (0) target = $region73
    $region72: #{discriminator_forward.1} parent=1 // pred_region
      _
    $region73: #{discriminator_forward.1} parent=1 // pred_fallthru
      _
    // Predicated region
    $region74: #{discriminator_forward.1} parent=1 // pred_check
      _
    $region75: #{discriminator_forward.1} parent=1 // pred_check_branch
      %67 = sbr.rel (0) target = $region77
    $region76: #{discriminator_forward.1} parent=1 // pred_region
      _
    $region77: #{discriminator_forward.1} parent=1 // pred_fallthru
      _
    // Predicated region
    $region78: #{discriminator_forward.1} parent=1 // pred_check
      _
    $region79: #{discriminator_forward.1} parent=1 // pred_check_branch
      %69 = sbr.rel (0) target = $region81
    $region80: #{discriminator_forward.1} parent=1 // pred_region
      _
    $region81: #{discriminator_forward.1} parent=1 // pred_fallthru
      _
    // Predicated region
    $region82: #{discriminator_forward.1} parent=1 // pred_check
      _
    $region83: #{discriminator_forward.1} parent=1 // pred_check_branch
      %71 = sbr.rel (0) target = $region85
    $region84: #{discriminator_forward.1} parent=1 // pred_region
      _
    $region85: #{discriminator_forward.1} parent=1 // pred_fallthru
      _
    // Predicated region
    $region86: #{discriminator_forward.1} parent=1 // pred_check
      _
    $region87: #{discriminator_forward.1} parent=1 // pred_check_branch
      %73 = sbr.rel (0) target = $region89
    $region88: #{discriminator_forward.1} parent=1 // pred_region
      _
    $region89: #{discriminator_forward.1} parent=1 // pred_fallthru
      _
    %v75 = vld [vmem:[%s0] sm:$0xff]
    %v76 = vld [vmem:[%s0 + $0x8] sm:$0xff]
    %v77 = vld [vmem:[%s0 + $0x10] sm:$0xff]
    %v78 = vld [vmem:[%s0 + $0x18] sm:$0xff]
    %v79 = vld [vmem:[%s9] sm:$0x3]
    %v80 = vld [vmem:[%s1] sm:$0xff]
    %v81 = vld [vmem:[%s1 + $0x8] sm:$0xff]
    %v82 = vld [vmem:[%s1 + $0x10] sm:$0xff]
    %v83 = vld [vmem:[%s1 + $0x18] sm:$0xff]
    %v84 = vld [vmem:[%s1 + $0x20] sm:$0xff]
    %v85 = vld [vmem:[%s1 + $0x28] sm:$0xff]
    %v86 = vld [vmem:[%s1 + $0x30] sm:$0xff]
    %v87 = vld [vmem:[%s1 + $0x38] sm:$0xff]
    %v88 = vld [vmem:[%s2] sm:$0xff]
    %v89 = vld [vmem:[%s2 + $0x8] sm:$0xff]
    %v90 = vld [vmem:[%s2 + $0x10] sm:$0xff]
    %v91 = vld [vmem:[%s2 + $0x18] sm:$0xff]
    %v92 = vld [vmem:[%s2 + $0x20] sm:$0xff]
    %v93 = vld [vmem:[%s2 + $0x28] sm:$0xff]
    %v94 = vld [vmem:[%s2 + $0x30] sm:$0xff]
    %v95 = vld [vmem:[%s2 + $0x38] sm:$0xff]
    %98 = vrot.lane.b32.xlu0 %v76, 4
    %v99 = vpop.permute.xlu0 %98
    %100 = vrot.lane.b32.xlu0 %v78, 4
    %v101 = vpop.permute.xlu0 %100
    %106 = vrot.lane.b32.xlu0 %v75, 4
    %v107 = vpop.permute.xlu0 %106
    %108 = vrot.lane.b32.xlu0 %v77, 4
    %v109 = vpop.permute.xlu0 %108
    %vm110 = vcmask 31744
    %v111 = vsel %vm110, %v107, %v99
    %v112 = vsel %vm110, %v109, %v101
    %v117 = vsel %vm110, %v99, %v107
    %v118 = vsel %vm110, %v101, %v109
    %vm119 = vcmp.ge.s32.totalorder %v79, 4
    %v120 = vsel %vm119, 1, 0
    %v121 = vlaneseq
    %v122 = vshrl.u32 %v121, 7
    %v123 = vsub.s32 0, %v122
    %v124 = vrot.slane %v120, %v123
    %v125 = vlaneseq
    %v126 = vshrl.u32 %v125, 7
    %v127 = vsub.s32 1, %v126
    %v128 = vrot.slane %v120, %v127
    %vm129 = vcmp.eq.s32.totalorder %v124, 1
    %vm130 = vcmp.eq.s32.totalorder %v128, 1
    %v131 = vsel %vm129, %v117, 0.0
    %v132 = vsel %vm130, %v111, 0.0
    %v133 = vsel %vm129, %v118, 0.0
    %v134 = vsel %vm130, %v112, 0.0
    %135 = vrot.lane.b32.xlu0 %v76, 3
    %v136 = vpop.permute.xlu0 %135
    %137 = vrot.lane.b32.xlu0 %v78, 3
    %v138 = vpop.permute.xlu0 %137
    %141 = vrot.lane.b32.xlu0 %v75, 3
    %v142 = vpop.permute.xlu0 %141
    %143 = vrot.lane.b32.xlu0 %v77, 3
    %v144 = vpop.permute.xlu0 %143
    %vm145 = vcmask 23552
    %v146 = vsel %vm145, %v142, %v136
    %v147 = vsel %vm145, %v144, %v138
    %v152 = vsel %vm145, %v136, %v142
    %v153 = vsel %vm145, %v138, %v144
    %vm154 = vcmp.ge.s32.totalorder %v79, 3
    %v155 = vsel %vm154, 1, 0
    %v156 = vlaneseq
    %v157 = vshrl.u32 %v156, 7
    %v158 = vsub.s32 0, %v157
    %v159 = vrot.slane %v155, %v158
    %v160 = vlaneseq
    %v161 = vshrl.u32 %v160, 7
    %v162 = vsub.s32 1, %v161
    %v163 = vrot.slane %v155, %v162
    %vm164 = vcmp.eq.s32.totalorder %v159, 1
    %vm165 = vcmp.eq.s32.totalorder %v163, 1
    %v166 = vsel %vm164, %v152, 0.0
    %v167 = vsel %vm165, %v146, 0.0
    %v168 = vsel %vm164, %v153, 0.0
    %v169 = vsel %vm165, %v147, 0.0
    %170 = vrot.lane.b32.xlu0 %v76, 2
    %v171 = vpop.permute.xlu0 %170
    %172 = vrot.lane.b32.xlu0 %v78, 2
    %v173 = vpop.permute.xlu0 %172
    %176 = vrot.lane.b32.xlu0 %v75, 2
    %v177 = vpop.permute.xlu0 %176
    %178 = vrot.lane.b32.xlu0 %v77, 2
    %v179 = vpop.permute.xlu0 %178
    %vm180 = vcmask 15360
    %v181 = vsel %vm180, %v177, %v171
    %v182 = vsel %vm180, %v179, %v173
    %v187 = vsel %vm180, %v171, %v177
    %v188 = vsel %vm180, %v173, %v179
    %vm189 = vcmp.ge.s32.totalorder %v79, 2
    %v190 = vsel %vm189, 1, 0
    %v191 = vlaneseq
    %v192 = vshrl.u32 %v191, 7
    %v193 = vsub.s32 0, %v192
    %v194 = vrot.slane %v190, %v193
    %v195 = vlaneseq
    %v196 = vshrl.u32 %v195, 7
    %v197 = vsub.s32 1, %v196
    %v198 = vrot.slane %v190, %v197
    %vm199 = vcmp.eq.s32.totalorder %v194, 1
    %vm200 = vcmp.eq.s32.totalorder %v198, 1
    %v201 = vsel %vm199, %v187, 0.0
    %v202 = vsel %vm200, %v181, 0.0
    %v203 = vsel %vm199, %v188, 0.0
    %v204 = vsel %vm200, %v182, 0.0
    %205 = vrot.lane.b32.xlu0 %v76, 1
    %v206 = vpop.permute.xlu0 %205
    %207 = vrot.lane.b32.xlu0 %v78, 1
    %v208 = vpop.permute.xlu0 %207
    %211 = vrot.lane.b32.xlu0 %v75, 1
    %v212 = vpop.permute.xlu0 %211
    %213 = vrot.lane.b32.xlu0 %v77, 1
    %v214 = vpop.permute.xlu0 %213
    %vm215 = vcmask 7168
    %v216 = vsel %vm215, %v212, %v206
    %v217 = vsel %vm215, %v214, %v208
    %v222 = vsel %vm215, %v206, %v212
    %v223 = vsel %vm215, %v208, %v214
    %vm224 = vcmp.ge.s32.totalorder %v79, 1
    %v225 = vsel %vm224, 1, 0
    %v226 = vlaneseq
    %v227 = vshrl.u32 %v226, 7
    %v228 = vsub.s32 0, %v227
    %v229 = vrot.slane %v225, %v228
    %v230 = vlaneseq
    %v231 = vshrl.u32 %v230, 7
    %v232 = vsub.s32 1, %v231
    %v233 = vrot.slane %v225, %v232
    %vm234 = vcmp.eq.s32.totalorder %v229, 1
    %vm235 = vcmp.eq.s32.totalorder %v233, 1
    %v236 = vsel %vm234, %v222, 0.0
    %v237 = vsel %vm235, %v216, 0.0
    %v238 = vsel %vm234, %v223, 0.0
    %v239 = vsel %vm235, %v217, 0.0
    %240 = vrot.lane.b32.xlu0 %v75, 127
    %v241 = vpop.permute.xlu0 %240
    %242 = vrot.lane.b32.xlu0 %v76, 127
    %v243 = vpop.permute.xlu0 %242
    %244 = vrot.lane.b32.xlu0 %v77, 127
    %v245 = vpop.permute.xlu0 %244
    %246 = vrot.lane.b32.xlu0 %v78, 127
    %v247 = vpop.permute.xlu0 %246
    %vm248 = vcmask 1039360
    %v249 = vsel %vm248, %v241, %v243
    %v250 = vsel %vm248, %v245, %v247
    %v257 = vsel %vm248, %v243, %v241
    %v258 = vsel %vm248, %v247, %v245
    %vm259 = vcmp.lt.s32.totalorder %v79, 127
    %v260 = vsel %vm259, 1, 0
    %v261 = vlaneseq
    %v262 = vshrl.u32 %v261, 7
    %v263 = vsub.s32 0, %v262
    %v264 = vrot.slane %v260, %v263
    %v265 = vlaneseq
    %v266 = vshrl.u32 %v265, 7
    %v267 = vsub.s32 1, %v266
    %v268 = vrot.slane %v260, %v267
    %vm269 = vcmp.eq.s32.totalorder %v264, 1
    %vm270 = vcmp.eq.s32.totalorder %v268, 1
    %v271 = vsel %vm269, %v249, 0.0
    %v272 = vsel %vm270, %v257, 0.0
    %v273 = vsel %vm269, %v250, 0.0
    %v274 = vsel %vm270, %v258, 0.0
    %275 = vrot.lane.b32.xlu0 %v75, 126
    %v276 = vpop.permute.xlu0 %275
    %277 = vrot.lane.b32.xlu0 %v76, 126
    %v278 = vpop.permute.xlu0 %277
    %279 = vrot.lane.b32.xlu0 %v77, 126
    %v280 = vpop.permute.xlu0 %279
    %281 = vrot.lane.b32.xlu0 %v78, 126
    %v282 = vpop.permute.xlu0 %281
    %vm283 = vcmask 1031168
    %v284 = vsel %vm283, %v276, %v278
    %v285 = vsel %vm283, %v280, %v282
    %v292 = vsel %vm283, %v278, %v276
    %v293 = vsel %vm283, %v282, %v280
    %vm294 = vcmp.lt.s32.totalorder %v79, 126
    %v295 = vsel %vm294, 1, 0
    %v296 = vlaneseq
    %v297 = vshrl.u32 %v296, 7
    %v298 = vsub.s32 0, %v297
    %v299 = vrot.slane %v295, %v298
    %v300 = vlaneseq
    %v301 = vshrl.u32 %v300, 7
    %v302 = vsub.s32 1, %v301
    %v303 = vrot.slane %v295, %v302
    %vm304 = vcmp.eq.s32.totalorder %v299, 1
    %vm305 = vcmp.eq.s32.totalorder %v303, 1
    %v306 = vsel %vm304, %v284, 0.0
    %v307 = vsel %vm305, %v292, 0.0
    %v308 = vsel %vm304, %v285, 0.0
    %v309 = vsel %vm305, %v293, 0.0
    %310 = vrot.lane.b32.xlu0 %v75, 125
    %v311 = vpop.permute.xlu0 %310
    %312 = vrot.lane.b32.xlu0 %v76, 125
    %v313 = vpop.permute.xlu0 %312
    %314 = vrot.lane.b32.xlu0 %v77, 125
    %v315 = vpop.permute.xlu0 %314
    %316 = vrot.lane.b32.xlu0 %v78, 125
    %v317 = vpop.permute.xlu0 %316
    %vm318 = vcmask 1022976
    %v319 = vsel %vm318, %v311, %v313
    %v320 = vsel %vm318, %v315, %v317
    %v327 = vsel %vm318, %v313, %v311
    %v328 = vsel %vm318, %v317, %v315
    %vm329 = vcmp.lt.s32.totalorder %v79, 125
    %v330 = vsel %vm329, 1, 0
    %v331 = vlaneseq
    %v332 = vshrl.u32 %v331, 7
    %v333 = vsub.s32 0, %v332
    %v334 = vrot.slane %v330, %v333
    %v335 = vlaneseq
    %v336 = vshrl.u32 %v335, 7
    %v337 = vsub.s32 1, %v336
    %v338 = vrot.slane %v330, %v337
    %vm339 = vcmp.eq.s32.totalorder %v334, 1
    %vm340 = vcmp.eq.s32.totalorder %v338, 1
    %v341 = vsel %vm339, %v319, 0.0
    %v342 = vsel %vm340, %v327, 0.0
    %v343 = vsel %vm339, %v320, 0.0
    %v344 = vsel %vm340, %v328, 0.0
    %345 = vrot.lane.b32.xlu0 %v75, 124
    %v346 = vpop.permute.xlu0 %345
    %347 = vrot.lane.b32.xlu0 %v76, 124
    %v348 = vpop.permute.xlu0 %347
    %349 = vrot.lane.b32.xlu0 %v77, 124
    %v350 = vpop.permute.xlu0 %349
    %351 = vrot.lane.b32.xlu0 %v78, 124
    %v352 = vpop.permute.xlu0 %351
    %vm353 = vcmask 1014784
    %v354 = vsel %vm353, %v346, %v348
    %v355 = vsel %vm353, %v350, %v352
    %v362 = vsel %vm353, %v348, %v346
    %v363 = vsel %vm353, %v352, %v350
    %vm364 = vcmp.lt.s32.totalorder %v79, 124
    %v365 = vsel %vm364, 1, 0
    %v366 = vlaneseq
    %v367 = vshrl.u32 %v366, 7
    %v368 = vsub.s32 0, %v367
    %v369 = vrot.slane %v365, %v368
    %v370 = vlaneseq
    %v371 = vshrl.u32 %v370, 7
    %v372 = vsub.s32 1, %v371
    %v373 = vrot.slane %v365, %v372
    %vm374 = vcmp.eq.s32.totalorder %v369, 1
    %vm375 = vcmp.eq.s32.totalorder %v373, 1
    %v376 = vsel %vm374, %v354, 0.0
    %v377 = vsel %vm375, %v362, 0.0
    %v378 = vsel %vm374, %v355, 0.0
    %v379 = vsel %vm375, %v363, 0.0
    %v380 = vpack.c.bf16 %v133, %v131
    %v381 = vpack.c.bf16 %v134, %v132
    %v382 = vpack.c.bf16 %v168, %v166
    %v383 = vpack.c.bf16 %v169, %v167
    %v384 = vpack.c.bf16 %v203, %v201
    %v385 = vpack.c.bf16 %v204, %v202
    %v386 = vpack.c.bf16 %v238, %v236
    %v387 = vpack.c.bf16 %v239, %v237
    %v388 = vpack.c.bf16 %v77, %v75
    %v389 = vpack.c.bf16 %v78, %v76
    %v390 = vpack.c.bf16 %v273, %v271
    %v391 = vpack.c.bf16 %v274, %v272
    %v392 = vpack.c.bf16 %v308, %v306
    %v393 = vpack.c.bf16 %v309, %v307
    %v394 = vpack.c.bf16 %v343, %v341
    %v395 = vpack.c.bf16 %v344, %v342
    %v396 = vpack.c.bf16 %v378, %v376
    %v397 = vpack.c.bf16 %v379, %v377
    %399 = vset.pattern.permute.xlu0 0
    %400 = vperm.xlu0 %399, %v88
    %v401 = vpop.permute.xlu0 %400
    %404 = vset.pattern.permute.xlu0 0
    %405 = vperm.xlu0 %404, %v89
    %v406 = vpop.permute.xlu0 %405
    %409 = vset.pattern.permute.xlu0 0
    %410 = vperm.xlu0 %409, %v90
    %v411 = vpop.permute.xlu0 %410
    %414 = vset.pattern.permute.xlu0 0
    %415 = vperm.xlu0 %414, %v91
    %v416 = vpop.permute.xlu0 %415
    %419 = vset.pattern.permute.xlu0 0
    %420 = vperm.xlu0 %419, %v92
    %v421 = vpop.permute.xlu0 %420
    %424 = vset.pattern.permute.xlu0 0
    %425 = vperm.xlu0 %424, %v93
    %v426 = vpop.permute.xlu0 %425
    %429 = vset.pattern.permute.xlu0 0
    %430 = vperm.xlu0 %429, %v94
    %v431 = vpop.permute.xlu0 %430
    %434 = vset.pattern.permute.xlu0 0
    %435 = vperm.xlu0 %434, %v95
    %v436 = vpop.permute.xlu0 %435
    %v446 = vunpack.c.l.b16 %v80
    %v447 = vunpack.c.h.b16 %v80
    %v448 = vunpack.c.l.b16 %v81
    %v449 = vunpack.c.h.b16 %v81
    %v450 = vunpack.c.l.b16 %v82
    %v451 = vunpack.c.h.b16 %v82
    %v452 = vunpack.c.l.b16 %v83
    %v453 = vunpack.c.h.b16 %v83
    %v454 = vunpack.c.l.b16 %v84
    %v455 = vunpack.c.h.b16 %v84
    %v456 = vunpack.c.l.b16 %v85
    %v457 = vunpack.c.h.b16 %v85
    %v458 = vunpack.c.l.b16 %v86
    %v459 = vunpack.c.h.b16 %v86
    %v460 = vunpack.c.l.b16 %v87
    %v461 = vunpack.c.h.b16 %v87
    %v462 = vpack.c.b16 %v448, %v446
    %v463 = vpack.c.b16 %v449, %v447
    %v464 = vpack.c.b16 %v452, %v450
    %v465 = vpack.c.b16 %v453, %v451
    %v466 = vpack.c.b16 %v456, %v454
    %v467 = vpack.c.b16 %v457, %v455
    %v468 = vpack.c.b16 %v460, %v458
    %v469 = vpack.c.b16 %v461, %v459
    %vm474 = vcmask 130048
    %v476 = vsel %vm474, %v463, 0
    %v479 = vsel %vm474, %v465, 0
    %v482 = vsel %vm474, %v467, 0
    %v485 = vsel %vm474, %v469, 0
    %487 = vmatprep.subr.bf16.mxu0 %v381
    %488 = vmatpush1.bf16.msra.mxu0 %v380
    %489 = vmatprep.subr.bf16.mxu0 %v383
    %490 = vmatpush1.bf16.msra.mxu0 %v382
    %491 = vmatprep.subr.bf16.mxu0 %v385
    %492 = vmatpush1.bf16.msra.mxu0 %v384
    %493 = vmatprep.subr.bf16.mxu0 %v387
    %494 = vmatpush1.bf16.msra.mxu0 %v386
    %495 = vmatprep.subr.bf16.mxu0 %v389
    %496 = vmatpush1.bf16.msra.mxu0 %v388
    %497 = vmatprep.subr.bf16.mxu0 %v391
    %498 = vmatpush1.bf16.msra.mxu0 %v390
    %499 = vmatprep.subr.bf16.mxu0 %v393
    %500 = vmatpush1.bf16.msra.mxu0 %v392
    %501 = vmatprep.subr.bf16.mxu0 %v395
    %502 = vmatpush1.bf16.msra.mxu0 %v394
    %503 = vmatprep.subr.bf16.mxu0 %v397
    %504 = vmatpush1.bf16.msra.mxu0 %v396
    %505 = vmatprep.subr.bf16.mxu0 0
    %506 = vmatpush1.bf16.msra.mxu0 0
    %507 = vmatprep.subr.bf16.mxu0 0
    %508 = vmatpush1.bf16.msra.mxu0 0
    %509 = vmatprep.subr.bf16.mxu0 0
    %510 = vmatpush1.bf16.msra.mxu0 0
    %511 = vmatprep.subr.bf16.mxu0 0
    %512 = vmatpush1.bf16.msra.mxu0 0
    %513 = vmatprep.subr.bf16.mxu0 0
    %514 = vmatpush1.bf16.msra.mxu0 0
    %515 = vmatprep.subr.bf16.mxu0 0
    %516 = vmatpush1.bf16.msra.mxu0 0
    %517 = vmatprep.subr.bf16.mxu0 0
    %518 = vmatpush1.bf16.msra.mxu0 0
    %519 = vmatprep.mubr.bf16.mxu0 %v476
    %520 = vmatmul.mubr.bf16.gmra.mrb[0].mxu0 %v462
    %v521 = vpop.f32.mrb[0].mxu0
    %v522 = vadd.f32 %v401, %v521
    %v523 = vpop.f32.mrb[0].mxu0
    %v524 = vadd.f32 %v401, %v523
    %v525 = vpop.f32.mrb[0].mxu0
    %v526 = vadd.f32 %v406, %v525
    %v527 = vpop.f32.mrb[0].mxu0
    %v528 = vadd.f32 %v406, %v527
    %529 = vmatprep.mubr.bf16.mxu0 %v479
    %530 = vmatmul.mubr.bf16.gmra.mrb[0].mxu0 %v464
    %v531 = vpop.f32.mrb[0].mxu0
    %v532 = vadd.f32 %v411, %v531
    %v533 = vpop.f32.mrb[0].mxu0
    %v534 = vadd.f32 %v411, %v533
    %v535 = vpop.f32.mrb[0].mxu0
    %v536 = vadd.f32 %v416, %v535
    %v537 = vpop.f32.mrb[0].mxu0
    %v538 = vadd.f32 %v416, %v537
    %539 = vmatprep.mubr.bf16.mxu0 %v482
    %540 = vmatmul.mubr.bf16.gmra.mrb[0].mxu0 %v466
    %v541 = vpop.f32.mrb[0].mxu0
    %v542 = vadd.f32 %v421, %v541
    %v543 = vpop.f32.mrb[0].mxu0
    %v544 = vadd.f32 %v421, %v543
    %v545 = vpop.f32.mrb[0].mxu0
    %v546 = vadd.f32 %v426, %v545
    %v547 = vpop.f32.mrb[0].mxu0
    %v548 = vadd.f32 %v426, %v547
    %549 = vmatprep.mubr.bf16.mxu0 %v485
    %550 = vmatmul.mubr.bf16.gmra.mrb[0].mxu0 %v468
    %v551 = vpop.f32.mrb[0].mxu0
    %v552 = vadd.f32 %v431, %v551
    %v553 = vpop.f32.mrb[0].mxu0
    %v554 = vadd.f32 %v431, %v553
    %v555 = vpop.f32.mrb[0].mxu0
    %v556 = vadd.f32 %v436, %v555
    %v557 = vpop.f32.mrb[0].mxu0
    %v558 = vadd.f32 %v436, %v557
    %559 = vdwg.mxu0
    %vm560 = vcmp.ge.f32.partialorder %v522, 0.0
    %vm561 = vcmp.ge.f32.partialorder %v524, 0.0
    %vm562 = vcmp.ge.f32.partialorder %v526, 0.0
    %vm563 = vcmp.ge.f32.partialorder %v528, 0.0
    %vm564 = vcmp.ge.f32.partialorder %v532, 0.0
    %vm565 = vcmp.ge.f32.partialorder %v534, 0.0
    %vm566 = vcmp.ge.f32.partialorder %v536, 0.0
    %vm567 = vcmp.ge.f32.partialorder %v538, 0.0
    %vm568 = vcmp.ge.f32.partialorder %v542, 0.0
    %vm569 = vcmp.ge.f32.partialorder %v544, 0.0
    %vm570 = vcmp.ge.f32.partialorder %v546, 0.0
    %vm571 = vcmp.ge.f32.partialorder %v548, 0.0
    %vm572 = vcmp.ge.f32.partialorder %v552, 0.0
    %vm573 = vcmp.ge.f32.partialorder %v554, 0.0
    %vm574 = vcmp.ge.f32.partialorder %v556, 0.0
    %vm575 = vcmp.ge.f32.partialorder %v558, 0.0
    %v576 = vmul.f32 %v522, 0.3
    %v577 = vmul.f32 %v524, 0.3
    %v578 = vmul.f32 %v526, 0.3
    %v579 = vmul.f32 %v528, 0.3
    %v580 = vmul.f32 %v532, 0.3
    %v581 = vmul.f32 %v534, 0.3
    %v582 = vmul.f32 %v536, 0.3
    %v583 = vmul.f32 %v538, 0.3
    %v584 = vmul.f32 %v542, 0.3
    %v585 = vmul.f32 %v544, 0.3
    %v586 = vmul.f32 %v546, 0.3
    %v587 = vmul.f32 %v548, 0.3
    %v588 = vmul.f32 %v552, 0.3
    %v589 = vmul.f32 %v554, 0.3
    %v590 = vmul.f32 %v556, 0.3
    %v591 = vmul.f32 %v558, 0.3
    %v592 = vsel %vm560, %v522, %v576
    %v593 = vsel %vm561, %v524, %v577
    %v594 = vsel %vm562, %v526, %v578
    %v595 = vsel %vm563, %v528, %v579
    %v596 = vsel %vm564, %v532, %v580
    %v597 = vsel %vm565, %v534, %v581
    %v598 = vsel %vm566, %v536, %v582
    %v599 = vsel %vm567, %v538, %v583
    %v600 = vsel %vm568, %v542, %v584
    %v601 = vsel %vm569, %v544, %v585
    %v602 = vsel %vm570, %v546, %v586
    %v603 = vsel %vm571, %v548, %v587
    %v604 = vsel %vm572, %v552, %v588
    %v605 = vsel %vm573, %v554, %v589
    %v606 = vsel %vm574, %v556, %v590
    %v607 = vsel %vm575, %v558, %v591
    %v608 = vld [vmem:[%s3] sm:$0xff]
    %v609 = vld [vmem:[%s3 + $0x8] sm:$0xff]
    %v610 = vld [vmem:[%s3 + $0x10] sm:$0xff]
    %v611 = vld [vmem:[%s3 + $0x18] sm:$0xff]
    %v612 = vld [vmem:[%s3 + $0x20] sm:$0xff]
    %v613 = vld [vmem:[%s3 + $0x28] sm:$0xff]
    %v614 = vld [vmem:[%s3 + $0x30] sm:$0xff]
    %v615 = vld [vmem:[%s3 + $0x38] sm:$0xff]
    %v616 = vld [vmem:[%s4] sm:$0xff]
    %v617 = vld [vmem:[%s4 + $0x8] sm:$0xff]
    %v618 = vld [vmem:[%s4 + $0x10] sm:$0xff]
    %v619 = vld [vmem:[%s4 + $0x18] sm:$0xff]
    %v620 = vld [vmem:[%s4 + $0x20] sm:$0xff]
    %v621 = vld [vmem:[%s4 + $0x28] sm:$0xff]
    %v622 = vld [vmem:[%s4 + $0x30] sm:$0xff]
    %v623 = vld [vmem:[%s4 + $0x38] sm:$0xff]
    %v624 = vld [vmem:[%s5] sm:$0xff]
    %v625 = vld [vmem:[%s5 + $0x8] sm:$0xff]
    %v626 = vld [vmem:[%s5 + $0x10] sm:$0xff]
    %v627 = vld [vmem:[%s5 + $0x18] sm:$0xff]
    %v628 = vld [vmem:[%s5 + $0x20] sm:$0xff]
    %v629 = vld [vmem:[%s5 + $0x28] sm:$0xff]
    %v630 = vld [vmem:[%s5 + $0x30] sm:$0xff]
    %v631 = vld [vmem:[%s5 + $0x38] sm:$0xff]
    %640 = vrot.lane.b32.xlu0 %v593, 1
    %v641 = vpop.permute.xlu0 %640
    %642 = vrot.lane.b32.xlu0 %v595, 1
    %v643 = vpop.permute.xlu0 %642
    %644 = vrot.lane.b32.xlu0 %v597, 1
    %v645 = vpop.permute.xlu0 %644
    %646 = vrot.lane.b32.xlu0 %v599, 1
    %v647 = vpop.permute.xlu0 %646
    %648 = vrot.lane.b32.xlu0 %v601, 1
    %v649 = vpop.permute.xlu0 %648
    %650 = vrot.lane.b32.xlu0 %v603, 1
    %v651 = vpop.permute.xlu0 %650
    %652 = vrot.lane.b32.xlu0 %v605, 1
    %v653 = vpop.permute.xlu0 %652
    %654 = vrot.lane.b32.xlu0 %v607, 1
    %v655 = vpop.permute.xlu0 %654
    %672 = vrot.lane.b32.xlu0 %v592, 1
    %v673 = vpop.permute.xlu0 %672
    %674 = vrot.lane.b32.xlu0 %v594, 1
    %v675 = vpop.permute.xlu0 %674
    %676 = vrot.lane.b32.xlu0 %v596, 1
    %v677 = vpop.permute.xlu0 %676
    %678 = vrot.lane.b32.xlu0 %v598, 1
    %v679 = vpop.permute.xlu0 %678
    %680 = vrot.lane.b32.xlu0 %v600, 1
    %v681 = vpop.permute.xlu0 %680
    %682 = vrot.lane.b32.xlu0 %v602, 1
    %v683 = vpop.permute.xlu0 %682
    %684 = vrot.lane.b32.xlu0 %v604, 1
    %v685 = vpop.permute.xlu0 %684
    %686 = vrot.lane.b32.xlu0 %v606, 1
    %v687 = vpop.permute.xlu0 %686
    %v688 = vsel %vm215, %v673, %v641
    %v689 = vsel %vm215, %v675, %v643
    %v690 = vsel %vm215, %v677, %v645
    %v691 = vsel %vm215, %v679, %v647
    %v692 = vsel %vm215, %v681, %v649
    %v693 = vsel %vm215, %v683, %v651
    %v694 = vsel %vm215, %v685, %v653
    %v695 = vsel %vm215, %v687, %v655
    %v712 = vsel %vm215, %v641, %v673
    %v713 = vsel %vm215, %v643, %v675
    %v714 = vsel %vm215, %v645, %v677
    %v715 = vsel %vm215, %v647, %v679
    %v716 = vsel %vm215, %v649, %v681
    %v717 = vsel %vm215, %v651, %v683
    %v718 = vsel %vm215, %v653, %v685
    %v719 = vsel %vm215, %v655, %v687
    %v720 = vsel %vm234, %v712, 0.0
    %v721 = vsel %vm235, %v688, 0.0
    %v722 = vsel %vm234, %v713, 0.0
    %v723 = vsel %vm235, %v689, 0.0
    %v724 = vsel %vm234, %v714, 0.0
    %v725 = vsel %vm235, %v690, 0.0
    %v726 = vsel %vm234, %v715, 0.0
    %v727 = vsel %vm235, %v691, 0.0
    %v728 = vsel %vm234, %v716, 0.0
    %v729 = vsel %vm235, %v692, 0.0
    %v730 = vsel %vm234, %v717, 0.0
    %v731 = vsel %vm235, %v693, 0.0
    %v732 = vsel %vm234, %v718, 0.0
    %v733 = vsel %vm235, %v694, 0.0
    %v734 = vsel %vm234, %v719, 0.0
    %v735 = vsel %vm235, %v695, 0.0
    %736 = vrot.lane.b32.xlu0 %v592, 127
    %v737 = vpop.permute.xlu0 %736
    %738 = vrot.lane.b32.xlu0 %v593, 127
    %v739 = vpop.permute.xlu0 %738
    %740 = vrot.lane.b32.xlu0 %v594, 127
    %v741 = vpop.permute.xlu0 %740
    %742 = vrot.lane.b32.xlu0 %v595, 127
    %v743 = vpop.permute.xlu0 %742
    %744 = vrot.lane.b32.xlu0 %v596, 127
    %v745 = vpop.permute.xlu0 %744
    %746 = vrot.lane.b32.xlu0 %v597, 127
    %v747 = vpop.permute.xlu0 %746
    %748 = vrot.lane.b32.xlu0 %v598, 127
    %v749 = vpop.permute.xlu0 %748
    %750 = vrot.lane.b32.xlu0 %v599, 127
    %v751 = vpop.permute.xlu0 %750
    %752 = vrot.lane.b32.xlu0 %v600, 127
    %v753 = vpop.permute.xlu0 %752
    %754 = vrot.lane.b32.xlu0 %v601, 127
    %v755 = vpop.permute.xlu0 %754
    %756 = vrot.lane.b32.xlu0 %v602, 127
    %v757 = vpop.permute.xlu0 %756
    %758 = vrot.lane.b32.xlu0 %v603, 127
    %v759 = vpop.permute.xlu0 %758
    %760 = vrot.lane.b32.xlu0 %v604, 127
    %v761 = vpop.permute.xlu0 %760
    %762 = vrot.lane.b32.xlu0 %v605, 127
    %v763 = vpop.permute.xlu0 %762
    %764 = vrot.lane.b32.xlu0 %v606, 127
    %v765 = vpop.permute.xlu0 %764
    %766 = vrot.lane.b32.xlu0 %v607, 127
    %v767 = vpop.permute.xlu0 %766
    %v768 = vsel %vm248, %v737, %v739
    %v769 = vsel %vm248, %v741, %v743
    %v770 = vsel %vm248, %v745, %v747
    %v771 = vsel %vm248, %v749, %v751
    %v772 = vsel %vm248, %v753, %v755
    %v773 = vsel %vm248, %v757, %v759
    %v774 = vsel %vm248, %v761, %v763
    %v775 = vsel %vm248, %v765, %v767
    %v800 = vsel %vm248, %v739, %v737
    %v801 = vsel %vm248, %v743, %v741
    %v802 = vsel %vm248, %v747, %v745
    %v803 = vsel %vm248, %v751, %v749
    %v804 = vsel %vm248, %v755, %v753
    %v805 = vsel %vm248, %v759, %v757
    %v806 = vsel %vm248, %v763, %v761
    %v807 = vsel %vm248, %v767, %v765
    %v808 = vsel %vm269, %v768, 0.0
    %v809 = vsel %vm270, %v800, 0.0
    %v810 = vsel %vm269, %v769, 0.0
    %v811 = vsel %vm270, %v801, 0.0
    %v812 = vsel %vm269, %v770, 0.0
    %v813 = vsel %vm270, %v802, 0.0
    %v814 = vsel %vm269, %v771, 0.0
    %v815 = vsel %vm270, %v803, 0.0
    %v816 = vsel %vm269, %v772, 0.0
    %v817 = vsel %vm270, %v804, 0.0
    %v818 = vsel %vm269, %v773, 0.0
    %v819 = vsel %vm270, %v805, 0.0
    %v820 = vsel %vm269, %v774, 0.0
    %v821 = vsel %vm270, %v806, 0.0
    %v822 = vsel %vm269, %v775, 0.0
    %v823 = vsel %vm270, %v807, 0.0
    %v824 = vpack.c.bf16 %v722, %v720
    %v825 = vpack.c.bf16 %v723, %v721
    %v826 = vpack.c.bf16 %v726, %v724
    %v827 = vpack.c.bf16 %v727, %v725
    %v828 = vpack.c.bf16 %v730, %v728
    %v829 = vpack.c.bf16 %v731, %v729
    %v830 = vpack.c.bf16 %v734, %v732
    %v831 = vpack.c.bf16 %v735, %v733
    %v832 = vpack.c.bf16 %v594, %v592
    %v833 = vpack.c.bf16 %v595, %v593
    %v834 = vpack.c.bf16 %v598, %v596
    %v835 = vpack.c.bf16 %v599, %v597
    %v836 = vpack.c.bf16 %v602, %v600
    %v837 = vpack.c.bf16 %v603, %v601
    %v838 = vpack.c.bf16 %v606, %v604
    %v839 = vpack.c.bf16 %v607, %v605
    %v840 = vpack.c.bf16 %v810, %v808
    %v841 = vpack.c.bf16 %v811, %v809
    %v842 = vpack.c.bf16 %v814, %v812
    %v843 = vpack.c.bf16 %v815, %v813
    %v844 = vpack.c.bf16 %v818, %v816
    %v845 = vpack.c.bf16 %v819, %v817
    %v846 = vpack.c.bf16 %v822, %v820
    %v847 = vpack.c.bf16 %v823, %v821
    %v856 = vunpack.c.l.b16 %v608
    %v857 = vunpack.c.h.b16 %v608
    %v858 = vunpack.c.l.b16 %v609
    %v859 = vunpack.c.h.b16 %v609
    %v860 = vunpack.c.l.b16 %v610
    %v861 = vunpack.c.h.b16 %v610
    %v862 = vunpack.c.l.b16 %v611
    %v863 = vunpack.c.h.b16 %v611
    %v864 = vunpack.c.l.b16 %v612
    %v865 = vunpack.c.h.b16 %v612
    %v866 = vunpack.c.l.b16 %v613
    %v867 = vunpack.c.h.b16 %v613
    %v868 = vunpack.c.l.b16 %v614
    %v869 = vunpack.c.h.b16 %v614
    %v870 = vunpack.c.l.b16 %v615
    %v871 = vunpack.c.h.b16 %v615
    %v872 = vpack.c.b16 %v858, %v856
    %v873 = vpack.c.b16 %v859, %v857
    %v874 = vpack.c.b16 %v862, %v860
    %v875 = vpack.c.b16 %v863, %v861
    %v876 = vpack.c.b16 %v866, %v864
    %v877 = vpack.c.b16 %v867, %v865
    %v878 = vpack.c.b16 %v870, %v868
    %v879 = vpack.c.b16 %v871, %v869
    %vm884 = vcmask 523264
    %v886 = vsel %vm884, %v873, 0
    %v889 = vsel %vm884, %v875, 0
    %v892 = vsel %vm884, %v877, 0
    %v895 = vsel %vm884, %v879, 0
    %897 = vmatprep.subr.bf16.mxu0 %v825
    %898 = vmatpush1.bf16.msra.mxu0 %v824
    %899 = vmatprep.subr.bf16.mxu0 %v827
    %900 = vmatpush1.bf16.msra.mxu0 %v826
    %901 = vmatprep.subr.bf16.mxu0 %v829
    %902 = vmatpush1.bf16.msra.mxu0 %v828
    %903 = vmatprep.subr.bf16.mxu0 %v831
    %904 = vmatpush1.bf16.msra.mxu0 %v830
    %905 = vmatprep.subr.bf16.mxu0 %v833
    %906 = vmatpush1.bf16.msra.mxu0 %v832
    %907 = vmatprep.subr.bf16.mxu0 %v835
    %908 = vmatpush1.bf16.msra.mxu0 %v834
    %909 = vmatprep.subr.bf16.mxu0 %v837
    %910 = vmatpush1.bf16.msra.mxu0 %v836
    %911 = vmatprep.subr.bf16.mxu0 %v839
    %912 = vmatpush1.bf16.msra.mxu0 %v838
    %913 = vmatprep.subr.bf16.mxu0 %v841
    %914 = vmatpush1.bf16.msra.mxu0 %v840
    %915 = vmatprep.subr.bf16.mxu0 %v843
    %916 = vmatpush1.bf16.msra.mxu0 %v842
    %917 = vmatprep.subr.bf16.mxu0 %v845
    %918 = vmatpush1.bf16.msra.mxu0 %v844
    %919 = vmatprep.subr.bf16.mxu0 %v847
    %920 = vmatpush1.bf16.msra.mxu0 %v846
    %921 = vmatprep.subr.bf16.mxu0 0
    %922 = vmatpush1.bf16.msra.mxu0 0
    %923 = vmatprep.subr.bf16.mxu0 0
    %924 = vmatpush1.bf16.msra.mxu0 0
    %925 = vmatprep.subr.bf16.mxu0 0
    %926 = vmatpush1.bf16.msra.mxu0 0
    %927 = vmatprep.subr.bf16.mxu0 0
    %928 = vmatpush1.bf16.msra.mxu0 0
    %929 = vmatprep.mubr.bf16.mxu0 %v886
    %930 = vmatmul.mubr.bf16.gmra.mrb[0].mxu0 %v872
    %v931 = vpop.f32.mrb[0].mxu0
    %v932 = vadd.f32 0.0, %v931
    %v933 = vpop.f32.mrb[0].mxu0
    %v934 = vadd.f32 0.0, %v933
    %v935 = vpop.f32.mrb[0].mxu0
    %v936 = vadd.f32 0.0, %v935
    %v937 = vpop.f32.mrb[0].mxu0
    %v938 = vadd.f32 0.0, %v937
    %939 = vmatprep.mubr.bf16.mxu0 %v889
    %940 = vmatmul.mubr.bf16.gmra.mrb[0].mxu0 %v874
    %v941 = vpop.f32.mrb[0].mxu0
    %v942 = vadd.f32 0.0, %v941
    %v943 = vpop.f32.mrb[0].mxu0
    %v944 = vadd.f32 0.0, %v943
    %v945 = vpop.f32.mrb[0].mxu0
    %v946 = vadd.f32 0.0, %v945
    %v947 = vpop.f32.mrb[0].mxu0
    %v948 = vadd.f32 0.0, %v947
    %949 = vmatprep.mubr.bf16.mxu0 %v892
    %950 = vmatmul.mubr.bf16.gmra.mrb[0].mxu0 %v876
    %v951 = vpop.f32.mrb[0].mxu0
    %v952 = vadd.f32 0.0, %v951
    %v953 = vpop.f32.mrb[0].mxu0
    %v954 = vadd.f32 0.0, %v953
    %v955 = vpop.f32.mrb[0].mxu0
    %v956 = vadd.f32 0.0, %v955
    %v957 = vpop.f32.mrb[0].mxu0
    %v958 = vadd.f32 0.0, %v957
    %959 = vmatprep.mubr.bf16.mxu0 %v895
    %960 = vmatmul.mubr.bf16.gmra.mrb[0].mxu0 %v878
    %v961 = vpop.f32.mrb[0].mxu0
    %v962 = vadd.f32 0.0, %v961
    %v963 = vpop.f32.mrb[0].mxu0
    %v964 = vadd.f32 0.0, %v963
    %v965 = vpop.f32.mrb[0].mxu0
    %v966 = vadd.f32 0.0, %v965
    %v967 = vpop.f32.mrb[0].mxu0
    %v968 = vadd.f32 0.0, %v967
    %969 = vdwg.mxu0
    %971 = vset.pattern.permute.xlu0 0
    %972 = vperm.xlu0 %971, %v616
    %v973 = vpop.permute.xlu0 %972
    %976 = vset.pattern.permute.xlu0 0
    %977 = vperm.xlu0 %976, %v617
    %v978 = vpop.permute.xlu0 %977
    %981 = vset.pattern.permute.xlu0 0
    %982 = vperm.xlu0 %981, %v618
    %v983 = vpop.permute.xlu0 %982
    %986 = vset.pattern.permute.xlu0 0
    %987 = vperm.xlu0 %986, %v619
    %v988 = vpop.permute.xlu0 %987
    %991 = vset.pattern.permute.xlu0 0
    %992 = vperm.xlu0 %991, %v620
    %v993 = vpop.permute.xlu0 %992
    %996 = vset.pattern.permute.xlu0 0
    %997 = vperm.xlu0 %996, %v621
    %v998 = vpop.permute.xlu0 %997
    %1001 = vset.pattern.permute.xlu0 0
    %1002 = vperm.xlu0 %1001, %v622
    %v1003 = vpop.permute.xlu0 %1002
    %1006 = vset.pattern.permute.xlu0 0
    %1007 = vperm.xlu0 %1006, %v623
    %v1008 = vpop.permute.xlu0 %1007
    %v1010 = vmul.f32 %v932, %v973
    %v1011 = vmul.f32 %v934, %v973
    %v1012 = vmul.f32 %v936, %v978
    %v1013 = vmul.f32 %v938, %v978
    %v1014 = vmul.f32 %v942, %v983
    %v1015 = vmul.f32 %v944, %v983
    %v1016 = vmul.f32 %v946, %v988
    %v1017 = vmul.f32 %v948, %v988
    %v1018 = vmul.f32 %v952, %v993
    %v1019 = vmul.f32 %v954, %v993
    %v1020 = vmul.f32 %v956, %v998
    %v1021 = vmul.f32 %v958, %v998
    %v1022 = vmul.f32 %v962, %v1003
    %v1023 = vmul.f32 %v964, %v1003
    %v1024 = vmul.f32 %v966, %v1008
    %v1025 = vmul.f32 %v968, %v1008
    %1027 = vset.pattern.permute.xlu0 0
    %1028 = vperm.xlu0 %1027, %v624
    %v1029 = vpop.permute.xlu0 %1028
    %1032 = vset.pattern.permute.xlu0 0
    %1033 = vperm.xlu0 %1032, %v625
    %v1034 = vpop.permute.xlu0 %1033
    %1037 = vset.pattern.permute.xlu0 0
    %1038 = vperm.xlu0 %1037, %v626
    %v1039 = vpop.permute.xlu0 %1038
    %1042 = vset.pattern.permute.xlu0 0
    %1043 = vperm.xlu0 %1042, %v627
    %v1044 = vpop.permute.xlu0 %1043
    %1047 = vset.pattern.permute.xlu0 0
    %1048 = vperm.xlu0 %1047, %v628
    %v1049 = vpop.permute.xlu0 %1048
    %1052 = vset.pattern.permute.xlu0 0
    %1053 = vperm.xlu0 %1052, %v629
    %v1054 = vpop.permute.xlu0 %1053
    %1057 = vset.pattern.permute.xlu0 0
    %1058 = vperm.xlu0 %1057, %v630
    %v1059 = vpop.permute.xlu0 %1058
    %1062 = vset.pattern.permute.xlu0 0
    %1063 = vperm.xlu0 %1062, %v631
    %v1064 = vpop.permute.xlu0 %1063
    %v1066 = vadd.f32 %v1010, %v1029
    %v1067 = vadd.f32 %v1011, %v1029
    %v1068 = vadd.f32 %v1012, %v1034
    %v1069 = vadd.f32 %v1013, %v1034
    %v1070 = vadd.f32 %v1014, %v1039
    %v1071 = vadd.f32 %v1015, %v1039
    %v1072 = vadd.f32 %v1016, %v1044
    %v1073 = vadd.f32 %v1017, %v1044
    %v1074 = vadd.f32 %v1018, %v1049
    %v1075 = vadd.f32 %v1019, %v1049
    %v1076 = vadd.f32 %v1020, %v1054
    %v1077 = vadd.f32 %v1021, %v1054
    %v1078 = vadd.f32 %v1022, %v1059
    %v1079 = vadd.f32 %v1023, %v1059
    %v1080 = vadd.f32 %v1024, %v1064
    %v1081 = vadd.f32 %v1025, %v1064
    %vm1082 = vcmp.ge.f32.partialorder %v1066, 0.0
    %vm1083 = vcmp.ge.f32.partialorder %v1067, 0.0
    %vm1084 = vcmp.ge.f32.partialorder %v1068, 0.0
    %vm1085 = vcmp.ge.f32.partialorder %v1069, 0.0
    %vm1086 = vcmp.ge.f32.partialorder %v1070, 0.0
    %vm1087 = vcmp.ge.f32.partialorder %v1071, 0.0
    %vm1088 = vcmp.ge.f32.partialorder %v1072, 0.0
    %vm1089 = vcmp.ge.f32.partialorder %v1073, 0.0
    %vm1090 = vcmp.ge.f32.partialorder %v1074, 0.0
    %vm1091 = vcmp.ge.f32.partialorder %v1075, 0.0
    %vm1092 = vcmp.ge.f32.partialorder %v1076, 0.0
    %vm1093 = vcmp.ge.f32.partialorder %v1077, 0.0
    %vm1094 = vcmp.ge.f32.partialorder %v1078, 0.0
    %vm1095 = vcmp.ge.f32.partialorder %v1079, 0.0
    %vm1096 = vcmp.ge.f32.partialorder %v1080, 0.0
    %vm1097 = vcmp.ge.f32.partialorder %v1081, 0.0
    %v1098 = vmul.f32 %v1066, 0.3
    %v1099 = vmul.f32 %v1067, 0.3
    %v1100 = vmul.f32 %v1068, 0.3
    %v1101 = vmul.f32 %v1069, 0.3
    %v1102 = vmul.f32 %v1070, 0.3
    %v1103 = vmul.f32 %v1071, 0.3
    %v1104 = vmul.f32 %v1072, 0.3
    %v1105 = vmul.f32 %v1073, 0.3
    %v1106 = vmul.f32 %v1074, 0.3
    %v1107 = vmul.f32 %v1075, 0.3
    %v1108 = vmul.f32 %v1076, 0.3
    %v1109 = vmul.f32 %v1077, 0.3
    %v1110 = vmul.f32 %v1078, 0.3
    %v1111 = vmul.f32 %v1079, 0.3
    %v1112 = vmul.f32 %v1080, 0.3
    %v1113 = vmul.f32 %v1081, 0.3
    %v1114 = vsel %vm1082, %v1066, %v1098
    %v1115 = vsel %vm1083, %v1067, %v1099
    %v1116 = vsel %vm1084, %v1068, %v1100
    %v1117 = vsel %vm1085, %v1069, %v1101
    %v1118 = vsel %vm1086, %v1070, %v1102
    %v1119 = vsel %vm1087, %v1071, %v1103
    %v1120 = vsel %vm1088, %v1072, %v1104
    %v1121 = vsel %vm1089, %v1073, %v1105
    %v1122 = vsel %vm1090, %v1074, %v1106
    %v1123 = vsel %vm1091, %v1075, %v1107
    %v1124 = vsel %vm1092, %v1076, %v1108
    %v1125 = vsel %vm1093, %v1077, %v1109
    %v1126 = vsel %vm1094, %v1078, %v1110
    %v1127 = vsel %vm1095, %v1079, %v1111
    %v1128 = vsel %vm1096, %v1080, %v1112
    %v1129 = vsel %vm1097, %v1081, %v1113
    %s1130 = scalar_lea.vmem %s3, 64
    %v1131 = vld [vmem:[%s1130] sm:$0xff]
    %v1132 = vld [vmem:[%s1130 + $0x8] sm:$0xff]
    %v1133 = vld [vmem:[%s1130 + $0x10] sm:$0xff]
    %v1134 = vld [vmem:[%s1130 + $0x18] sm:$0xff]
    %v1135 = vld [vmem:[%s1130 + $0x20] sm:$0xff]
    %v1136 = vld [vmem:[%s1130 + $0x28] sm:$0xff]
    %v1137 = vld [vmem:[%s1130 + $0x30] sm:$0xff]
    %v1138 = vld [vmem:[%s1130 + $0x38] sm:$0xff]
    %s1139 = scalar_lea.vmem %s4, 64
    %v1140 = vld [vmem:[%s1139] sm:$0xff]
    %v1141 = vld [vmem:[%s1139 + $0x8] sm:$0xff]
    %v1142 = vld [vmem:[%s1139 + $0x10] sm:$0xff]
    %v1143 = vld [vmem:[%s1139 + $0x18] sm:$0xff]
    %v1144 = vld [vmem:[%s1139 + $0x20] sm:$0xff]
    %v1145 = vld [vmem:[%s1139 + $0x28] sm:$0xff]
    %v1146 = vld [vmem:[%s1139 + $0x30] sm:$0xff]
    %v1147 = vld [vmem:[%s1139 + $0x38] sm:$0xff]
    %s1148 = scalar_lea.vmem %s5, 64
    %v1149 = vld [vmem:[%s1148] sm:$0xff]
    %v1150 = vld [vmem:[%s1148 + $0x8] sm:$0xff]
    %v1151 = vld [vmem:[%s1148 + $0x10] sm:$0xff]
    %v1152 = vld [vmem:[%s1148 + $0x18] sm:$0xff]
    %v1153 = vld [vmem:[%s1148 + $0x20] sm:$0xff]
    %v1154 = vld [vmem:[%s1148 + $0x28] sm:$0xff]
    %v1155 = vld [vmem:[%s1148 + $0x30] sm:$0xff]
    %v1156 = vld [vmem:[%s1148 + $0x38] sm:$0xff]
    %1165 = vrot.lane.b32.xlu0 %v1115, 1
    %v1166 = vpop.permute.xlu0 %1165
    %1167 = vrot.lane.b32.xlu0 %v1117, 1
    %v1168 = vpop.permute.xlu0 %1167
    %1169 = vrot.lane.b32.xlu0 %v1119, 1
    %v1170 = vpop.permute.xlu0 %1169
    %1171 = vrot.lane.b32.xlu0 %v1121, 1
    %v1172 = vpop.permute.xlu0 %1171
    %1173 = vrot.lane.b32.xlu0 %v1123, 1
    %v1174 = vpop.permute.xlu0 %1173
    %1175 = vrot.lane.b32.xlu0 %v1125, 1
    %v1176 = vpop.permute.xlu0 %1175
    %1177 = vrot.lane.b32.xlu0 %v1127, 1
    %v1178 = vpop.permute.xlu0 %1177
    %1179 = vrot.lane.b32.xlu0 %v1129, 1
    %v1180 = vpop.permute.xlu0 %1179
    %1197 = vrot.lane.b32.xlu0 %v1114, 1
    %v1198 = vpop.permute.xlu0 %1197
    %1199 = vrot.lane.b32.xlu0 %v1116, 1
    %v1200 = vpop.permute.xlu0 %1199
    %1201 = vrot.lane.b32.xlu0 %v1118, 1
    %v1202 = vpop.permute.xlu0 %1201
    %1203 = vrot.lane.b32.xlu0 %v1120, 1
    %v1204 = vpop.permute.xlu0 %1203
    %1205 = vrot.lane.b32.xlu0 %v1122, 1
    %v1206 = vpop.permute.xlu0 %1205
    %1207 = vrot.lane.b32.xlu0 %v1124, 1
    %v1208 = vpop.permute.xlu0 %1207
    %1209 = vrot.lane.b32.xlu0 %v1126, 1
    %v1210 = vpop.permute.xlu0 %1209
    %1211 = vrot.lane.b32.xlu0 %v1128, 1
    %v1212 = vpop.permute.xlu0 %1211
    %v1213 = vsel %vm215, %v1198, %v1166
    %v1214 = vsel %vm215, %v1200, %v1168
    %v1215 = vsel %vm215, %v1202, %v1170
    %v1216 = vsel %vm215, %v1204, %v1172
    %v1217 = vsel %vm215, %v1206, %v1174
    %v1218 = vsel %vm215, %v1208, %v1176
    %v1219 = vsel %vm215, %v1210, %v1178
    %v1220 = vsel %vm215, %v1212, %v1180
    %v1237 = vsel %vm215, %v1166, %v1198
    %v1238 = vsel %vm215, %v1168, %v1200
    %v1239 = vsel %vm215, %v1170, %v1202
    %v1240 = vsel %vm215, %v1172, %v1204
    %v1241 = vsel %vm215, %v1174, %v1206
    %v1242 = vsel %vm215, %v1176, %v1208
    %v1243 = vsel %vm215, %v1178, %v1210
    %v1244 = vsel %vm215, %v1180, %v1212
    %v1245 = vsel %vm234, %v1237, 0.0
    %v1246 = vsel %vm235, %v1213, 0.0
    %v1247 = vsel %vm234, %v1238, 0.0
    %v1248 = vsel %vm235, %v1214, 0.0
    %v1249 = vsel %vm234, %v1239, 0.0
    %v1250 = vsel %vm235, %v1215, 0.0
    %v1251 = vsel %vm234, %v1240, 0.0
    %v1252 = vsel %vm235, %v1216, 0.0
    %v1253 = vsel %vm234, %v1241, 0.0
    %v1254 = vsel %vm235, %v1217, 0.0
    %v1255 = vsel %vm234, %v1242, 0.0
    %v1256 = vsel %vm235, %v1218, 0.0
    %v1257 = vsel %vm234, %v1243, 0.0
    %v1258 = vsel %vm235, %v1219, 0.0
    %v1259 = vsel %vm234, %v1244, 0.0
    %v1260 = vsel %vm235, %v1220, 0.0
    %1261 = vrot.lane.b32.xlu0 %v1114, 127
    %v1262 = vpop.permute.xlu0 %1261
    %1263 = vrot.lane.b32.xlu0 %v1115, 127
    %v1264 = vpop.permute.xlu0 %1263
    %1265 = vrot.lane.b32.xlu0 %v1116, 127
    %v1266 = vpop.permute.xlu0 %1265
    %1267 = vrot.lane.b32.xlu0 %v1117, 127
    %v1268 = vpop.permute.xlu0 %1267
    %1269 = vrot.lane.b32.xlu0 %v1118, 127
    %v1270 = vpop.permute.xlu0 %1269
    %1271 = vrot.lane.b32.xlu0 %v1119, 127
    %v1272 = vpop.permute.xlu0 %1271
    %1273 = vrot.lane.b32.xlu0 %v1120, 127
    %v1274 = vpop.permute.xlu0 %1273
    %1275 = vrot.lane.b32.xlu0 %v1121, 127
    %v1276 = vpop.permute.xlu0 %1275
    %1277 = vrot.lane.b32.xlu0 %v1122, 127
    %v1278 = vpop.permute.xlu0 %1277
    %1279 = vrot.lane.b32.xlu0 %v1123, 127
    %v1280 = vpop.permute.xlu0 %1279
    %1281 = vrot.lane.b32.xlu0 %v1124, 127
    %v1282 = vpop.permute.xlu0 %1281
    %1283 = vrot.lane.b32.xlu0 %v1125, 127
    %v1284 = vpop.permute.xlu0 %1283
    %1285 = vrot.lane.b32.xlu0 %v1126, 127
    %v1286 = vpop.permute.xlu0 %1285
    %1287 = vrot.lane.b32.xlu0 %v1127, 127
    %v1288 = vpop.permute.xlu0 %1287
    %1289 = vrot.lane.b32.xlu0 %v1128, 127
    %v1290 = vpop.permute.xlu0 %1289
    %1291 = vrot.lane.b32.xlu0 %v1129, 127
    %v1292 = vpop.permute.xlu0 %1291
    %v1293 = vsel %vm248, %v1262, %v1264
    %v1294 = vsel %vm248, %v1266, %v1268
    %v1295 = vsel %vm248, %v1270, %v1272
    %v1296 = vsel %vm248, %v1274, %v1276
    %v1297 = vsel %vm248, %v1278, %v1280
    %v1298 = vsel %vm248, %v1282, %v1284
    %v1299 = vsel %vm248, %v1286, %v1288
    %v1300 = vsel %vm248, %v1290, %v1292
    %v1325 = vsel %vm248, %v1264, %v1262
    %v1326 = vsel %vm248, %v1268, %v1266
    %v1327 = vsel %vm248, %v1272, %v1270
    %v1328 = vsel %vm248, %v1276, %v1274
    %v1329 = vsel %vm248, %v1280, %v1278
    %v1330 = vsel %vm248, %v1284, %v1282
    %v1331 = vsel %vm248, %v1288, %v1286
    %v1332 = vsel %vm248, %v1292, %v1290
    %v1333 = vsel %vm269, %v1293, 0.0
    %v1334 = vsel %vm270, %v1325, 0.0
    %v1335 = vsel %vm269, %v1294, 0.0
    %v1336 = vsel %vm270, %v1326, 0.0
    %v1337 = vsel %vm269, %v1295, 0.0
    %v1338 = vsel %vm270, %v1327, 0.0
    %v1339 = vsel %vm269, %v1296, 0.0
    %v1340 = vsel %vm270, %v1328, 0.0
    %v1341 = vsel %vm269, %v1297, 0.0
    %v1342 = vsel %vm270, %v1329, 0.0
    %v1343 = vsel %vm269, %v1298, 0.0
    %v1344 = vsel %vm270, %v1330, 0.0
    %v1345 = vsel %vm269, %v1299, 0.0
    %v1346 = vsel %vm270, %v1331, 0.0
    %v1347 = vsel %vm269, %v1300, 0.0
    %v1348 = vsel %vm270, %v1332, 0.0
    %v1349 = vpack.c.bf16 %v1247, %v1245
    %v1350 = vpack.c.bf16 %v1248, %v1246
    %v1351 = vpack.c.bf16 %v1251, %v1249
    %v1352 = vpack.c.bf16 %v1252, %v1250
    %v1353 = vpack.c.bf16 %v1255, %v1253
    %v1354 = vpack.c.bf16 %v1256, %v1254
    %v1355 = vpack.c.bf16 %v1259, %v1257
    %v1356 = vpack.c.bf16 %v1260, %v1258
    %v1357 = vpack.c.bf16 %v1116, %v1114
    %v1358 = vpack.c.bf16 %v1117, %v1115
    %v1359 = vpack.c.bf16 %v1120, %v1118
    %v1360 = vpack.c.bf16 %v1121, %v1119
    %v1361 = vpack.c.bf16 %v1124, %v1122
    %v1362 = vpack.c.bf16 %v1125, %v1123
    %v1363 = vpack.c.bf16 %v1128, %v1126
    %v1364 = vpack.c.bf16 %v1129, %v1127
    %v1365 = vpack.c.bf16 %v1335, %v1333
    %v1366 = vpack.c.bf16 %v1336, %v1334
    %v1367 = vpack.c.bf16 %v1339, %v1337
    %v1368 = vpack.c.bf16 %v1340, %v1338
    %v1369 = vpack.c.bf16 %v1343, %v1341
    %v1370 = vpack.c.bf16 %v1344, %v1342
    %v1371 = vpack.c.bf16 %v1347, %v1345
    %v1372 = vpack.c.bf16 %v1348, %v1346
    %v1381 = vunpack.c.l.b16 %v1131
    %v1382 = vunpack.c.h.b16 %v1131
    %v1383 = vunpack.c.l.b16 %v1132
    %v1384 = vunpack.c.h.b16 %v1132
    %v1385 = vunpack.c.l.b16 %v1133
    %v1386 = vunpack.c.h.b16 %v1133
    %v1387 = vunpack.c.l.b16 %v1134
    %v1388 = vunpack.c.h.b16 %v1134
    %v1389 = vunpack.c.l.b16 %v1135
    %v1390 = vunpack.c.h.b16 %v1135
    %v1391 = vunpack.c.l.b16 %v1136
    %v1392 = vunpack.c.h.b16 %v1136
    %v1393 = vunpack.c.l.b16 %v1137
    %v1394 = vunpack.c.h.b16 %v1137
    %v1395 = vunpack.c.l.b16 %v1138
    %v1396 = vunpack.c.h.b16 %v1138
    %v1397 = vpack.c.b16 %v1383, %v1381
    %v1398 = vpack.c.b16 %v1384, %v1382
    %v1399 = vpack.c.b16 %v1387, %v1385
    %v1400 = vpack.c.b16 %v1388, %v1386
    %v1401 = vpack.c.b16 %v1391, %v1389
    %v1402 = vpack.c.b16 %v1392, %v1390
    %v1403 = vpack.c.b16 %v1395, %v1393
    %v1404 = vpack.c.b16 %v1396, %v1394
    %v1410 = vsel %vm884, %v1398, 0
    %v1413 = vsel %vm884, %v1400, 0
    %v1416 = vsel %vm884, %v1402, 0
    %v1419 = vsel %vm884, %v1404, 0
    %1421 = vmatprep.subr.bf16.mxu0 %v1350
    %1422 = vmatpush1.bf16.msra.mxu0 %v1349
    %1423 = vmatprep.subr.bf16.mxu0 %v1352
    %1424 = vmatpush1.bf16.msra.mxu0 %v1351
    %1425 = vmatprep.subr.bf16.mxu0 %v1354
    %1426 = vmatpush1.bf16.msra.mxu0 %v1353
    %1427 = vmatprep.subr.bf16.mxu0 %v1356
    %1428 = vmatpush1.bf16.msra.mxu0 %v1355
    %1429 = vmatprep.subr.bf16.mxu0 %v1358
    %1430 = vmatpush1.bf16.msra.mxu0 %v1357
    %1431 = vmatprep.subr.bf16.mxu0 %v1360
    %1432 = vmatpush1.bf16.msra.mxu0 %v1359
    %1433 = vmatprep.subr.bf16.mxu0 %v1362
    %1434 = vmatpush1.bf16.msra.mxu0 %v1361
    %1435 = vmatprep.subr.bf16.mxu0 %v1364
    %1436 = vmatpush1.bf16.msra.mxu0 %v1363
    %1437 = vmatprep.subr.bf16.mxu0 %v1366
    %1438 = vmatpush1.bf16.msra.mxu0 %v1365
    %1439 = vmatprep.subr.bf16.mxu0 %v1368
    %1440 = vmatpush1.bf16.msra.mxu0 %v1367
    %1441 = vmatprep.subr.bf16.mxu0 %v1370
    %1442 = vmatpush1.bf16.msra.mxu0 %v1369
    %1443 = vmatprep.subr.bf16.mxu0 %v1372
    %1444 = vmatpush1.bf16.msra.mxu0 %v1371
    %1445 = vmatprep.subr.bf16.mxu0 0
    %1446 = vmatpush1.bf16.msra.mxu0 0
    %1447 = vmatprep.subr.bf16.mxu0 0
    %1448 = vmatpush1.bf16.msra.mxu0 0
    %1449 = vmatprep.subr.bf16.mxu0 0
    %1450 = vmatpush1.bf16.msra.mxu0 0
    %1451 = vmatprep.subr.bf16.mxu0 0
    %1452 = vmatpush1.bf16.msra.mxu0 0
    %1453 = vmatprep.mubr.bf16.mxu0 %v1410
    %1454 = vmatmul.mubr.bf16.gmra.mrb[0].mxu0 %v1397
    %v1455 = vpop.f32.mrb[0].mxu0
    %v1456 = vadd.f32 0.0, %v1455
    %v1457 = vpop.f32.mrb[0].mxu0
    %v1458 = vadd.f32 0.0, %v1457
    %v1459 = vpop.f32.mrb[0].mxu0
    %v1460 = vadd.f32 0.0, %v1459
    %v1461 = vpop.f32.mrb[0].mxu0
    %v1462 = vadd.f32 0.0, %v1461
    %1463 = vmatprep.mubr.bf16.mxu0 %v1413
    %1464 = vmatmul.mubr.bf16.gmra.mrb[0].mxu0 %v1399
    %v1465 = vpop.f32.mrb[0].mxu0
    %v1466 = vadd.f32 0.0, %v1465
    %v1467 = vpop.f32.mrb[0].mxu0
    %v1468 = vadd.f32 0.0, %v1467
    %v1469 = vpop.f32.mrb[0].mxu0
    %v1470 = vadd.f32 0.0, %v1469
    %v1471 = vpop.f32.mrb[0].mxu0
    %v1472 = vadd.f32 0.0, %v1471
    %1473 = vmatprep.mubr.bf16.mxu0 %v1416
    %1474 = vmatmul.mubr.bf16.gmra.mrb[0].mxu0 %v1401
    %v1475 = vpop.f32.mrb[0].mxu0
    %v1476 = vadd.f32 0.0, %v1475
    %v1477 = vpop.f32.mrb[0].mxu0
    %v1478 = vadd.f32 0.0, %v1477
    %v1479 = vpop.f32.mrb[0].mxu0
    %v1480 = vadd.f32 0.0, %v1479
    %v1481 = vpop.f32.mrb[0].mxu0
    %v1482 = vadd.f32 0.0, %v1481
    %1483 = vmatprep.mubr.bf16.mxu0 %v1419
    %1484 = vmatmul.mubr.bf16.gmra.mrb[0].mxu0 %v1403
    %v1485 = vpop.f32.mrb[0].mxu0
    %v1486 = vadd.f32 0.0, %v1485
    %v1487 = vpop.f32.mrb[0].mxu0
    %v1488 = vadd.f32 0.0, %v1487
    %v1489 = vpop.f32.mrb[0].mxu0
    %v1490 = vadd.f32 0.0, %v1489
    %v1491 = vpop.f32.mrb[0].mxu0
    %v1492 = vadd.f32 0.0, %v1491
    %1493 = vdwg.mxu0
    %1495 = vset.pattern.permute.xlu0 0
    %1496 = vperm.xlu0 %1495, %v1140
    %v1497 = vpop.permute.xlu0 %1496
    %1500 = vset.pattern.permute.xlu0 0
    %1501 = vperm.xlu0 %1500, %v1141
    %v1502 = vpop.permute.xlu0 %1501
    %1505 = vset.pattern.permute.xlu0 0
    %1506 = vperm.xlu0 %1505, %v1142
    %v1507 = vpop.permute.xlu0 %1506
    %1510 = vset.pattern.permute.xlu0 0
    %1511 = vperm.xlu0 %1510, %v1143
    %v1512 = vpop.permute.xlu0 %1511
    %1515 = vset.pattern.permute.xlu0 0
    %1516 = vperm.xlu0 %1515, %v1144
    %v1517 = vpop.permute.xlu0 %1516
    %1520 = vset.pattern.permute.xlu0 0
    %1521 = vperm.xlu0 %1520, %v1145
    %v1522 = vpop.permute.xlu0 %1521
    %1525 = vset.pattern.permute.xlu0 0
    %1526 = vperm.xlu0 %1525, %v1146
    %v1527 = vpop.permute.xlu0 %1526
    %1530 = vset.pattern.permute.xlu0 0
    %1531 = vperm.xlu0 %1530, %v1147
    %v1532 = vpop.permute.xlu0 %1531
    %v1534 = vmul.f32 %v1456, %v1497
    %v1535 = vmul.f32 %v1458, %v1497
    %v1536 = vmul.f32 %v1460, %v1502
    %v1537 = vmul.f32 %v1462, %v1502
    %v1538 = vmul.f32 %v1466, %v1507
    %v1539 = vmul.f32 %v1468, %v1507
    %v1540 = vmul.f32 %v1470, %v1512
    %v1541 = vmul.f32 %v1472, %v1512
    %v1542 = vmul.f32 %v1476, %v1517
    %v1543 = vmul.f32 %v1478, %v1517
    %v1544 = vmul.f32 %v1480, %v1522
    %v1545 = vmul.f32 %v1482, %v1522
    %v1546 = vmul.f32 %v1486, %v1527
    %v1547 = vmul.f32 %v1488, %v1527
    %v1548 = vmul.f32 %v1490, %v1532
    %v1549 = vmul.f32 %v1492, %v1532
    %1551 = vset.pattern.permute.xlu0 0
    %1552 = vperm.xlu0 %1551, %v1149
    %v1553 = vpop.permute.xlu0 %1552
    %1556 = vset.pattern.permute.xlu0 0
    %1557 = vperm.xlu0 %1556, %v1150
    %v1558 = vpop.permute.xlu0 %1557
    %1561 = vset.pattern.permute.xlu0 0
    %1562 = vperm.xlu0 %1561, %v1151
    %v1563 = vpop.permute.xlu0 %1562
    %1566 = vset.pattern.permute.xlu0 0
    %1567 = vperm.xlu0 %1566, %v1152
    %v1568 = vpop.permute.xlu0 %1567
    %1571 = vset.pattern.permute.xlu0 0
    %1572 = vperm.xlu0 %1571, %v1153
    %v1573 = vpop.permute.xlu0 %1572
    %1576 = vset.pattern.permute.xlu0 0
    %1577 = vperm.xlu0 %1576, %v1154
    %v1578 = vpop.permute.xlu0 %1577
    %1581 = vset.pattern.permute.xlu0 0
    %1582 = vperm.xlu0 %1581, %v1155
    %v1583 = vpop.permute.xlu0 %1582
    %1586 = vset.pattern.permute.xlu0 0
    %1587 = vperm.xlu0 %1586, %v1156
    %v1588 = vpop.permute.xlu0 %1587
    %v1590 = vadd.f32 %v1534, %v1553
    %v1591 = vadd.f32 %v1535, %v1553
    %v1592 = vadd.f32 %v1536, %v1558
    %v1593 = vadd.f32 %v1537, %v1558
    %v1594 = vadd.f32 %v1538, %v1563
    %v1595 = vadd.f32 %v1539, %v1563
    %v1596 = vadd.f32 %v1540, %v1568
    %v1597 = vadd.f32 %v1541, %v1568
    %v1598 = vadd.f32 %v1542, %v1573
    %v1599 = vadd.f32 %v1543, %v1573
    %v1600 = vadd.f32 %v1544, %v1578
    %v1601 = vadd.f32 %v1545, %v1578
    %v1602 = vadd.f32 %v1546, %v1583
    %v1603 = vadd.f32 %v1547, %v1583
    %v1604 = vadd.f32 %v1548, %v1588
    %v1605 = vadd.f32 %v1549, %v1588
    %v1606 = vadd.f32 %v1590, %v592
    %v1607 = vadd.f32 %v1591, %v593
    %v1608 = vadd.f32 %v1592, %v594
    %v1609 = vadd.f32 %v1593, %v595
    %v1610 = vadd.f32 %v1594, %v596
    %v1611 = vadd.f32 %v1595, %v597
    %v1612 = vadd.f32 %v1596, %v598
    %v1613 = vadd.f32 %v1597, %v599
    %v1614 = vadd.f32 %v1598, %v600
    %v1615 = vadd.f32 %v1599, %v601
    %v1616 = vadd.f32 %v1600, %v602
    %v1617 = vadd.f32 %v1601, %v603
    %v1618 = vadd.f32 %v1602, %v604
    %v1619 = vadd.f32 %v1603, %v605
    %v1620 = vadd.f32 %v1604, %v606
    %v1621 = vadd.f32 %v1605, %v607
    %v1622 = vld [vmem:[%s16] sm:$0xff]
    %v1623 = vld [vmem:[%s16 + $0x8] sm:$0xff]
    %v1624 = vld [vmem:[%s16 + $0x10] sm:$0xff]
    %v1625 = vld [vmem:[%s16 + $0x18] sm:$0xff]
    %v1626 = vld [vmem:[%s16 + $0x20] sm:$0xff]
    %v1627 = vld [vmem:[%s16 + $0x28] sm:$0xff]
    %v1628 = vld [vmem:[%s16 + $0x30] sm:$0xff]
    %v1629 = vld [vmem:[%s16 + $0x38] sm:$0xff]
    %v1630 = vld [vmem:[%s16 + $0x40] sm:$0xff]
    %v1631 = vld [vmem:[%s16 + $0x48] sm:$0xff]
    %v1632 = vld [vmem:[%s16 + $0x50] sm:$0xff]
    %v1633 = vld [vmem:[%s16 + $0x58] sm:$0xff]
    %v1634 = vld [vmem:[%s16 + $0x60] sm:$0xff]
    %v1635 = vld [vmem:[%s16 + $0x68] sm:$0xff]
    %v1636 = vld [vmem:[%s16 + $0x70] sm:$0xff]
    %v1637 = vld [vmem:[%s16 + $0x78] sm:$0xff]
    %v1638 = vld [vmem:[%s16 + $0x80] sm:$0xff]
    %v1639 = vld [vmem:[%s16 + $0x88] sm:$0xff]
    %v1640 = vld [vmem:[%s16 + $0x90] sm:$0xff]
    %v1641 = vld [vmem:[%s16 + $0x98] sm:$0xff]
    %v1642 = vld [vmem:[%s16 + $0xa0] sm:$0xff]
    %v1643 = vld [vmem:[%s16 + $0xa8] sm:$0xff]
    %v1644 = vld [vmem:[%s16 + $0xb0] sm:$0xff]
    %v1645 = vld [vmem:[%s16 + $0xb8] sm:$0xff]
    %v1646 = vld [vmem:[%s16 + $0xc0] sm:$0xff]
    %v1647 = vld [vmem:[%s16 + $0xc8] sm:$0xff]
    %v1648 = vld [vmem:[%s16 + $0xd0] sm:$0xff]
    %v1649 = vld [vmem:[%s16 + $0xd8] sm:$0xff]
    %v1650 = vld [vmem:[%s16 + $0xe0] sm:$0xff]
    %v1651 = vld [vmem:[%s16 + $0xe8] sm:$0xff]
    %v1652 = vld [vmem:[%s16 + $0xf0] sm:$0xff]
    %v1653 = vld [vmem:[%s16 + $0xf8] sm:$0xff]
    %1654 = vmatprep.subr.mxu0 0.0
    %1655 = vmatpush1.msra.mxu0 %v1622
    %1656 = vmatprep.subr.mxu0 0.0
    %1657 = vmatpush1.msra.mxu0 %v1623
    %1658 = vmatprep.subr.mxu0 0.0
    %1659 = vmatpush1.msra.mxu0 %v1624
    %1660 = vmatprep.subr.mxu0 0.0
    %1661 = vmatpush1.msra.mxu0 %v1625
    %1662 = vmatprep.subr.mxu0 0.0
    %1663 = vmatpush1.msra.mxu0 %v1626
    %1664 = vmatprep.subr.mxu0 0.0
    %1665 = vmatpush1.msra.mxu0 %v1627
    %1666 = vmatprep.subr.mxu0 0.0
    %1667 = vmatpush1.msra.mxu0 %v1628
    %1668 = vmatprep.subr.mxu0 0.0
    %1669 = vmatpush1.msra.mxu0 %v1629
    %1670 = vmatprep.subr.mxu0 0.0
    %1671 = vmatpush1.msra.mxu0 %v1630
    %1672 = vmatprep.subr.mxu0 0.0
    %1673 = vmatpush1.msra.mxu0 %v1631
    %1674 = vmatprep.subr.mxu0 0.0
    %1675 = vmatpush1.msra.mxu0 %v1632
    %1676 = vmatprep.subr.mxu0 0.0
    %1677 = vmatpush1.msra.mxu0 %v1633
    %1678 = vmatprep.subr.mxu0 0.0
    %1679 = vmatpush1.msra.mxu0 %v1634
    %1680 = vmatprep.subr.mxu0 0.0
    %1681 = vmatpush1.msra.mxu0 %v1635
    %1682 = vmatprep.subr.mxu0 0.0
    %1683 = vmatpush1.msra.mxu0 %v1636
    %1684 = vmatprep.subr.mxu0 0.0
    %1685 = vmatpush1.msra.mxu0 %v1637
    %1686 = vmatprep.subr.mxu0 0.0
    %1687 = vmatpush1.msra.mxu0 %v1638
    %1688 = vmatprep.subr.mxu0 0.0
    %1689 = vmatpush1.msra.mxu0 %v1639
    %1690 = vmatprep.subr.mxu0 0.0
    %1691 = vmatpush1.msra.mxu0 %v1640
    %1692 = vmatprep.subr.mxu0 0.0
    %1693 = vmatpush1.msra.mxu0 %v1641
    %1694 = vmatprep.subr.mxu0 0.0
    %1695 = vmatpush1.msra.mxu0 %v1642
    %1696 = vmatprep.subr.mxu0 0.0
    %1697 = vmatpush1.msra.mxu0 %v1643
    %1698 = vmatprep.subr.mxu0 0.0
    %1699 = vmatpush1.msra.mxu0 %v1644
    %1700 = vmatprep.subr.mxu0 0.0
    %1701 = vmatpush1.msra.mxu0 %v1645
    %1702 = vmatprep.subr.mxu0 0.0
    %1703 = vmatpush1.msra.mxu0 %v1646
    %1704 = vmatprep.subr.mxu0 0.0
    %1705 = vmatpush1.msra.mxu0 %v1647
    %1706 = vmatprep.subr.mxu0 0.0
    %1707 = vmatpush1.msra.mxu0 %v1648
    %1708 = vmatprep.subr.mxu0 0.0
    %1709 = vmatpush1.msra.mxu0 %v1649
    %1710 = vmatprep.subr.mxu0 0.0
    %1711 = vmatpush1.msra.mxu0 %v1650
    %1712 = vmatprep.subr.mxu0 0.0
    %1713 = vmatpush1.msra.mxu0 %v1651
    %1714 = vmatprep.subr.mxu0 0.0
    %1715 = vmatpush1.msra.mxu0 %v1652
    %1716 = vmatprep.subr.mxu0 0.0
    %1717 = vmatpush1.msra.mxu0 %v1653
    %1718 = vmatprep.mubr.f32.mxu0 %v1607
    %1719 = vmatmul.mubr.f32.gmra.mrb[0].mxu0 %v1606
    %v1720 = vpop.f32.mrb[0].mxu0
    %v1721 = vadd.f32 0.0, %v1720
    %v1722 = vpop.f32.mrb[0].mxu0
    %1723 = vmatprep.mubr.f32.mxu0 %v1609
    %1724 = vmatmul.mubr.f32.gmra.mrb[0].mxu0 %v1608
    %v1725 = vpop.f32.mrb[0].mxu0
    %v1726 = vadd.f32 0.0, %v1725
    %v1727 = vpop.f32.mrb[0].mxu0
    %1728 = vmatprep.mubr.f32.mxu0 %v1611
    %1729 = vmatmul.mubr.f32.gmra.mrb[0].mxu0 %v1610
    %v1730 = vpop.f32.mrb[0].mxu0
    %v1731 = vadd.f32 0.0, %v1730
    %v1732 = vpop.f32.mrb[0].mxu0
    %1733 = vmatprep.mubr.f32.mxu0 %v1613
    %1734 = vmatmul.mubr.f32.gmra.mrb[0].mxu0 %v1612
    %v1735 = vpop.f32.mrb[0].mxu0
    %v1736 = vadd.f32 0.0, %v1735
    %v1737 = vpop.f32.mrb[0].mxu0
    %1738 = vmatprep.mubr.f32.mxu0 %v1615
    %1739 = vmatmul.mubr.f32.gmra.mrb[0].mxu0 %v1614
    %v1740 = vpop.f32.mrb[0].mxu0
    %v1741 = vadd.f32 0.0, %v1740
    %v1742 = vpop.f32.mrb[0].mxu0
    %1743 = vmatprep.mubr.f32.mxu0 %v1617
    %1744 = vmatmul.mubr.f32.gmra.mrb[0].mxu0 %v1616
    %v1745 = vpop.f32.mrb[0].mxu0
    %v1746 = vadd.f32 0.0, %v1745
    %v1747 = vpop.f32.mrb[0].mxu0
    %1748 = vmatprep.mubr.f32.mxu0 %v1619
    %1749 = vmatmul.mubr.f32.gmra.mrb[0].mxu0 %v1618
    %v1750 = vpop.f32.mrb[0].mxu0
    %v1751 = vadd.f32 0.0, %v1750
    %v1752 = vpop.f32.mrb[0].mxu0
    %1753 = vmatprep.mubr.f32.mxu0 %v1621
    %1754 = vmatmul.mubr.f32.gmra.mrb[0].mxu0 %v1620
    %v1755 = vpop.f32.mrb[0].mxu0
    %v1756 = vadd.f32 0.0, %v1755
    %v1757 = vpop.f32.mrb[0].mxu0
    %1758 = vdwg.mxu0
    %v1759 = vld [vmem:[%s10] sm:$0x1]
    %s1760 = scalar_lea.vmem %s3, 128
    %v1761 = vld [vmem:[%s1760] sm:$0xff]
    %v1762 = vld [vmem:[%s1760 + $0x8] sm:$0xff]
    %v1763 = vld [vmem:[%s1760 + $0x10] sm:$0xff]
    %v1764 = vld [vmem:[%s1760 + $0x18] sm:$0xff]
    %v1765 = vld [vmem:[%s1760 + $0x20] sm:$0xff]
    %v1766 = vld [vmem:[%s1760 + $0x28] sm:$0xff]
    %v1767 = vld [vmem:[%s1760 + $0x30] sm:$0xff]
    %v1768 = vld [vmem:[%s1760 + $0x38] sm:$0xff]
    %s1769 = scalar_lea.vmem %s4, 128
    %v1770 = vld [vmem:[%s1769] sm:$0xff]
    %v1771 = vld [vmem:[%s1769 + $0x8] sm:$0xff]
    %v1772 = vld [vmem:[%s1769 + $0x10] sm:$0xff]
    %v1773 = vld [vmem:[%s1769 + $0x18] sm:$0xff]
    %v1774 = vld [vmem:[%s1769 + $0x20] sm:$0xff]
    %v1775 = vld [vmem:[%s1769 + $0x28] sm:$0xff]
    %v1776 = vld [vmem:[%s1769 + $0x30] sm:$0xff]
    %v1777 = vld [vmem:[%s1769 + $0x38] sm:$0xff]
    %s1778 = scalar_lea.vmem %s5, 128
    %v1779 = vld [vmem:[%s1778] sm:$0xff]
    %v1780 = vld [vmem:[%s1778 + $0x8] sm:$0xff]
    %v1781 = vld [vmem:[%s1778 + $0x10] sm:$0xff]
    %v1782 = vld [vmem:[%s1778 + $0x18] sm:$0xff]
    %v1783 = vld [vmem:[%s1778 + $0x20] sm:$0xff]
    %v1784 = vld [vmem:[%s1778 + $0x28] sm:$0xff]
    %v1785 = vld [vmem:[%s1778 + $0x30] sm:$0xff]
    %v1786 = vld [vmem:[%s1778 + $0x38] sm:$0xff]
    %1795 = vrot.lane.b32.xlu0 %v1721, 1
    %v1796 = vpop.permute.xlu0 %1795
    %1797 = vrot.lane.b32.xlu0 %v1726, 1
    %v1798 = vpop.permute.xlu0 %1797
    %1799 = vrot.lane.b32.xlu0 %v1731, 1
    %v1800 = vpop.permute.xlu0 %1799
    %1801 = vrot.lane.b32.xlu0 %v1736, 1
    %v1802 = vpop.permute.xlu0 %1801
    %1803 = vrot.lane.b32.xlu0 %v1741, 1
    %v1804 = vpop.permute.xlu0 %1803
    %1805 = vrot.lane.b32.xlu0 %v1746, 1
    %v1806 = vpop.permute.xlu0 %1805
    %1807 = vrot.lane.b32.xlu0 %v1751, 1
    %v1808 = vpop.permute.xlu0 %1807
    %1809 = vrot.lane.b32.xlu0 %v1756, 1
    %v1810 = vpop.permute.xlu0 %1809
    %vm1819 = vcmp.ge.s32.totalorder %v1759, 1
    %v1820 = vsel %vm1819, 1, 0
    %v1821 = vlaneseq
    %v1822 = vshrl.u32 %v1821, 7
    %v1823 = vsub.s32 0, %v1822
    %v1824 = vrot.slane %v1820, %v1823
    %vm1825 = vcmp.eq.s32.totalorder %v1824, 1
    %v1826 = vsel %vm1825, %v1796, 0.0
    %v1827 = vsel %vm1825, %v1798, 0.0
    %v1828 = vsel %vm1825, %v1800, 0.0
    %v1829 = vsel %vm1825, %v1802, 0.0
    %v1830 = vsel %vm1825, %v1804, 0.0
    %v1831 = vsel %vm1825, %v1806, 0.0
    %v1832 = vsel %vm1825, %v1808, 0.0
    %v1833 = vsel %vm1825, %v1810, 0.0
    %1834 = vrot.lane.b32.xlu0 %v1721, 127
    %v1835 = vpop.permute.xlu0 %1834
    %1836 = vrot.lane.b32.xlu0 %v1726, 127
    %v1837 = vpop.permute.xlu0 %1836
    %1838 = vrot.lane.b32.xlu0 %v1731, 127
    %v1839 = vpop.permute.xlu0 %1838
    %1840 = vrot.lane.b32.xlu0 %v1736, 127
    %v1841 = vpop.permute.xlu0 %1840
    %1842 = vrot.lane.b32.xlu0 %v1741, 127
    %v1843 = vpop.permute.xlu0 %1842
    %1844 = vrot.lane.b32.xlu0 %v1746, 127
    %v1845 = vpop.permute.xlu0 %1844
    %1846 = vrot.lane.b32.xlu0 %v1751, 127
    %v1847 = vpop.permute.xlu0 %1846
    %1848 = vrot.lane.b32.xlu0 %v1756, 127
    %v1849 = vpop.permute.xlu0 %1848
    %vm1858 = vcmp.lt.s32.totalorder %v1759, 63
    %v1859 = vsel %vm1858, 1, 0
    %v1860 = vlaneseq
    %v1861 = vshrl.u32 %v1860, 7
    %v1862 = vsub.s32 0, %v1861
    %v1863 = vrot.slane %v1859, %v1862
    %vm1864 = vcmp.eq.s32.totalorder %v1863, 1
    %v1865 = vsel %vm1864, %v1835, 0.0
    %v1866 = vsel %vm1864, %v1837, 0.0
    %v1867 = vsel %vm1864, %v1839, 0.0
    %v1868 = vsel %vm1864, %v1841, 0.0
    %v1869 = vsel %vm1864, %v1843, 0.0
    %v1870 = vsel %vm1864, %v1845, 0.0
    %v1871 = vsel %vm1864, %v1847, 0.0
    %v1872 = vsel %vm1864, %v1849, 0.0
    %v1873 = vpack.c.bf16 %v1827, %v1826
    %v1874 = vpack.c.bf16 %v1829, %v1828
    %v1875 = vpack.c.bf16 %v1831, %v1830
    %v1876 = vpack.c.bf16 %v1833, %v1832
    %v1877 = vpack.c.bf16 %v1726, %v1721
    %v1878 = vpack.c.bf16 %v1736, %v1731
    %v1879 = vpack.c.bf16 %v1746, %v1741
    %v1880 = vpack.c.bf16 %v1756, %v1751
    %v1881 = vpack.c.bf16 %v1866, %v1865
    %v1882 = vpack.c.bf16 %v1868, %v1867
    %v1883 = vpack.c.bf16 %v1870, %v1869
    %v1884 = vpack.c.bf16 %v1872, %v1871
    %v1893 = vunpack.c.l.b16 %v1761
    %v1894 = vunpack.c.h.b16 %v1761
    %v1895 = vunpack.c.l.b16 %v1762
    %v1896 = vunpack.c.h.b16 %v1762
    %v1897 = vunpack.c.l.b16 %v1763
    %v1898 = vunpack.c.h.b16 %v1763
    %v1899 = vunpack.c.l.b16 %v1764
    %v1900 = vunpack.c.h.b16 %v1764
    %v1901 = vunpack.c.l.b16 %v1765
    %v1902 = vunpack.c.h.b16 %v1765
    %v1903 = vunpack.c.l.b16 %v1766
    %v1904 = vunpack.c.h.b16 %v1766
    %v1905 = vunpack.c.l.b16 %v1767
    %v1906 = vunpack.c.h.b16 %v1767
    %v1907 = vunpack.c.l.b16 %v1768
    %v1908 = vunpack.c.h.b16 %v1768
    %v1909 = vpack.c.b16 %v1895, %v1893
    %v1910 = vpack.c.b16 %v1896, %v1894
    %v1911 = vpack.c.b16 %v1899, %v1897
    %v1912 = vpack.c.b16 %v1900, %v1898
    %v1913 = vpack.c.b16 %v1903, %v1901
    %v1914 = vpack.c.b16 %v1904, %v1902
    %v1915 = vpack.c.b16 %v1907, %v1905
    %v1916 = vpack.c.b16 %v1908, %v1906
    %v1922 = vsel %vm884, %v1910, 0
    %v1925 = vsel %vm884, %v1912, 0
    %v1928 = vsel %vm884, %v1914, 0
    %v1931 = vsel %vm884, %v1916, 0
    %1933 = vmatprep.subr.bf16.mxu0 0
    %1934 = vmatpush1.bf16.msra.mxu0 %v1873
    %1935 = vmatprep.subr.bf16.mxu0 0
    %1936 = vmatpush1.bf16.msra.mxu0 %v1874
    %1937 = vmatprep.subr.bf16.mxu0 0
    %1938 = vmatpush1.bf16.msra.mxu0 %v1875
    %1939 = vmatprep.subr.bf16.mxu0 0
    %1940 = vmatpush1.bf16.msra.mxu0 %v1876
    %1941 = vmatprep.subr.bf16.mxu0 0
    %1942 = vmatpush1.bf16.msra.mxu0 %v1877
    %1943 = vmatprep.subr.bf16.mxu0 0
    %1944 = vmatpush1.bf16.msra.mxu0 %v1878
    %1945 = vmatprep.subr.bf16.mxu0 0
    %1946 = vmatpush1.bf16.msra.mxu0 %v1879
    %1947 = vmatprep.subr.bf16.mxu0 0
    %1948 = vmatpush1.bf16.msra.mxu0 %v1880
    %1949 = vmatprep.subr.bf16.mxu0 0
    %1950 = vmatpush1.bf16.msra.mxu0 %v1881
    %1951 = vmatprep.subr.bf16.mxu0 0
    %1952 = vmatpush1.bf16.msra.mxu0 %v1882
    %1953 = vmatprep.subr.bf16.mxu0 0
    %1954 = vmatpush1.bf16.msra.mxu0 %v1883
    %1955 = vmatprep.subr.bf16.mxu0 0
    %1956 = vmatpush1.bf16.msra.mxu0 %v1884
    %1957 = vmatprep.subr.bf16.mxu0 0
    %1958 = vmatpush1.bf16.msra.mxu0 0
    %1959 = vmatprep.subr.bf16.mxu0 0
    %1960 = vmatpush1.bf16.msra.mxu0 0
    %1961 = vmatprep.subr.bf16.mxu0 0
    %1962 = vmatpush1.bf16.msra.mxu0 0
    %1963 = vmatprep.subr.bf16.mxu0 0
    %1964 = vmatpush1.bf16.msra.mxu0 0
    %1965 = vmatprep.mubr.bf16.mxu0 %v1922
    %1966 = vmatmul.mubr.bf16.gmra.mrb[0].mxu0 %v1909
    %v1967 = vpop.f32.mrb[0].mxu0
    %v1968 = vadd.f32 0.0, %v1967
    %v1969 = vpop.f32.mrb[0].mxu0
    %v1970 = vpop.f32.mrb[0].mxu0
    %v1971 = vadd.f32 0.0, %v1970
    %v1972 = vpop.f32.mrb[0].mxu0
    %1973 = vmatprep.mubr.bf16.mxu0 %v1925
    %1974 = vmatmul.mubr.bf16.gmra.mrb[0].mxu0 %v1911
    %v1975 = vpop.f32.mrb[0].mxu0
    %v1976 = vadd.f32 0.0, %v1975
    %v1977 = vpop.f32.mrb[0].mxu0
    %v1978 = vpop.f32.mrb[0].mxu0
    %v1979 = vadd.f32 0.0, %v1978
    %v1980 = vpop.f32.mrb[0].mxu0
    %1981 = vmatprep.mubr.bf16.mxu0 %v1928
    %1982 = vmatmul.mubr.bf16.gmra.mrb[0].mxu0 %v1913
    %v1983 = vpop.f32.mrb[0].mxu0
    %v1984 = vadd.f32 0.0, %v1983
    %v1985 = vpop.f32.mrb[0].mxu0
    %v1986 = vpop.f32.mrb[0].mxu0
    %v1987 = vadd.f32 0.0, %v1986
    %v1988 = vpop.f32.mrb[0].mxu0
    %1989 = vmatprep.mubr.bf16.mxu0 %v1931
    %1990 = vmatmul.mubr.bf16.gmra.mrb[0].mxu0 %v1915
    %v1991 = vpop.f32.mrb[0].mxu0
    %v1992 = vadd.f32 0.0, %v1991
    %v1993 = vpop.f32.mrb[0].mxu0
    %v1994 = vpop.f32.mrb[0].mxu0
    %v1995 = vadd.f32 0.0, %v1994
    %v1996 = vpop.f32.mrb[0].mxu0
    %1997 = vdwg.mxu0
    %1999 = vset.pattern.permute.xlu0 0
    %2000 = vperm.xlu0 %1999, %v1770
    %v2001 = vpop.permute.xlu0 %2000
    %2004 = vset.pattern.permute.xlu0 0
    %2005 = vperm.xlu0 %2004, %v1771
    %v2006 = vpop.permute.xlu0 %2005
    %2009 = vset.pattern.permute.xlu0 0
    %2010 = vperm.xlu0 %2009, %v1772
    %v2011 = vpop.permute.xlu0 %2010
    %2014 = vset.pattern.permute.xlu0 0
    %2015 = vperm.xlu0 %2014, %v1773
    %v2016 = vpop.permute.xlu0 %2015
    %2019 = vset.pattern.permute.xlu0 0
    %2020 = vperm.xlu0 %2019, %v1774
    %v2021 = vpop.permute.xlu0 %2020
    %2024 = vset.pattern.permute.xlu0 0
    %2025 = vperm.xlu0 %2024, %v1775
    %v2026 = vpop.permute.xlu0 %2025
    %2029 = vset.pattern.permute.xlu0 0
    %2030 = vperm.xlu0 %2029, %v1776
    %v2031 = vpop.permute.xlu0 %2030
    %2034 = vset.pattern.permute.xlu0 0
    %2035 = vperm.xlu0 %2034, %v1777
    %v2036 = vpop.permute.xlu0 %2035
    %v2038 = vmul.f32 %v1968, %v2001
    %v2039 = vmul.f32 %v1971, %v2006
    %v2040 = vmul.f32 %v1976, %v2011
    %v2041 = vmul.f32 %v1979, %v2016
    %v2042 = vmul.f32 %v1984, %v2021
    %v2043 = vmul.f32 %v1987, %v2026
    %v2044 = vmul.f32 %v1992, %v2031
    %v2045 = vmul.f32 %v1995, %v2036
    %2047 = vset.pattern.permute.xlu0 0
    %2048 = vperm.xlu0 %2047, %v1779
    %v2049 = vpop.permute.xlu0 %2048
    %2052 = vset.pattern.permute.xlu0 0
    %2053 = vperm.xlu0 %2052, %v1780
    %v2054 = vpop.permute.xlu0 %2053
    %2057 = vset.pattern.permute.xlu0 0
    %2058 = vperm.xlu0 %2057, %v1781
    %v2059 = vpop.permute.xlu0 %2058
    %2062 = vset.pattern.permute.xlu0 0
    %2063 = vperm.xlu0 %2062, %v1782
    %v2064 = vpop.permute.xlu0 %2063
    %2067 = vset.pattern.permute.xlu0 0
    %2068 = vperm.xlu0 %2067, %v1783
    %v2069 = vpop.permute.xlu0 %2068
    %2072 = vset.pattern.permute.xlu0 0
    %2073 = vperm.xlu0 %2072, %v1784
    %v2074 = vpop.permute.xlu0 %2073
    %2077 = vset.pattern.permute.xlu0 0
    %2078 = vperm.xlu0 %2077, %v1785
    %v2079 = vpop.permute.xlu0 %2078
    %2082 = vset.pattern.permute.xlu0 0
    %2083 = vperm.xlu0 %2082, %v1786
    %v2084 = vpop.permute.xlu0 %2083
    %v2086 = vadd.f32 %v2038, %v2049
    %v2087 = vadd.f32 %v2039, %v2054
    %v2088 = vadd.f32 %v2040, %v2059
    %v2089 = vadd.f32 %v2041, %v2064
    %v2090 = vadd.f32 %v2042, %v2069
    %v2091 = vadd.f32 %v2043, %v2074
    %v2092 = vadd.f32 %v2044, %v2079
    %v2093 = vadd.f32 %v2045, %v2084
    %vm2094 = vcmp.ge.f32.partialorder %v2086, 0.0
    %vm2095 = vcmp.ge.f32.partialorder %v2087, 0.0
    %vm2096 = vcmp.ge.f32.partialorder %v2088, 0.0
    %vm2097 = vcmp.ge.f32.partialorder %v2089, 0.0
    %vm2098 = vcmp.ge.f32.partialorder %v2090, 0.0
    %vm2099 = vcmp.ge.f32.partialorder %v2091, 0.0
    %vm2100 = vcmp.ge.f32.partialorder %v2092, 0.0
    %vm2101 = vcmp.ge.f32.partialorder %v2093, 0.0
    %v2102 = vmul.f32 %v2086, 0.3
    %v2103 = vmul.f32 %v2087, 0.3
    %v2104 = vmul.f32 %v2088, 0.3
    %v2105 = vmul.f32 %v2089, 0.3
    %v2106 = vmul.f32 %v2090, 0.3
    %v2107 = vmul.f32 %v2091, 0.3
    %v2108 = vmul.f32 %v2092, 0.3
    %v2109 = vmul.f32 %v2093, 0.3
    %v2110 = vsel %vm2094, %v2086, %v2102
    %v2111 = vsel %vm2095, %v2087, %v2103
    %v2112 = vsel %vm2096, %v2088, %v2104
    %v2113 = vsel %vm2097, %v2089, %v2105
    %v2114 = vsel %vm2098, %v2090, %v2106
    %v2115 = vsel %vm2099, %v2091, %v2107
    %v2116 = vsel %vm2100, %v2092, %v2108
    %v2117 = vsel %vm2101, %v2093, %v2109
    %s2118 = scalar_lea.vmem %s3, 192
    %v2119 = vld [vmem:[%s2118] sm:$0xff]
    %v2120 = vld [vmem:[%s2118 + $0x8] sm:$0xff]
    %v2121 = vld [vmem:[%s2118 + $0x10] sm:$0xff]
    %v2122 = vld [vmem:[%s2118 + $0x18] sm:$0xff]
    %v2123 = vld [vmem:[%s2118 + $0x20] sm:$0xff]
    %v2124 = vld [vmem:[%s2118 + $0x28] sm:$0xff]
    %v2125 = vld [vmem:[%s2118 + $0x30] sm:$0xff]
    %v2126 = vld [vmem:[%s2118 + $0x38] sm:$0xff]
    %s2127 = scalar_lea.vmem %s4, 192
    %v2128 = vld [vmem:[%s2127] sm:$0xff]
    %v2129 = vld [vmem:[%s2127 + $0x8] sm:$0xff]
    %v2130 = vld [vmem:[%s2127 + $0x10] sm:$0xff]
    %v2131 = vld [vmem:[%s2127 + $0x18] sm:$0xff]
    %v2132 = vld [vmem:[%s2127 + $0x20] sm:$0xff]
    %v2133 = vld [vmem:[%s2127 + $0x28] sm:$0xff]
    %v2134 = vld [vmem:[%s2127 + $0x30] sm:$0xff]
    %v2135 = vld [vmem:[%s2127 + $0x38] sm:$0xff]
    %s2136 = scalar_lea.vmem %s5, 192
    %v2137 = vld [vmem:[%s2136] sm:$0xff]
    %v2138 = vld [vmem:[%s2136 + $0x8] sm:$0xff]
    %v2139 = vld [vmem:[%s2136 + $0x10] sm:$0xff]
    %v2140 = vld [vmem:[%s2136 + $0x18] sm:$0xff]
    %v2141 = vld [vmem:[%s2136 + $0x20] sm:$0xff]
    %v2142 = vld [vmem:[%s2136 + $0x28] sm:$0xff]
    %v2143 = vld [vmem:[%s2136 + $0x30] sm:$0xff]
    %v2144 = vld [vmem:[%s2136 + $0x38] sm:$0xff]
    %2153 = vrot.lane.b32.xlu0 %v2110, 1
    %v2154 = vpop.permute.xlu0 %2153
    %2155 = vrot.lane.b32.xlu0 %v2111, 1
    %v2156 = vpop.permute.xlu0 %2155
    %2157 = vrot.lane.b32.xlu0 %v2112, 1
    %v2158 = vpop.permute.xlu0 %2157
    %2159 = vrot.lane.b32.xlu0 %v2113, 1
    %v2160 = vpop.permute.xlu0 %2159
    %2161 = vrot.lane.b32.xlu0 %v2114, 1
    %v2162 = vpop.permute.xlu0 %2161
    %2163 = vrot.lane.b32.xlu0 %v2115, 1
    %v2164 = vpop.permute.xlu0 %2163
    %2165 = vrot.lane.b32.xlu0 %v2116, 1
    %v2166 = vpop.permute.xlu0 %2165
    %2167 = vrot.lane.b32.xlu0 %v2117, 1
    %v2168 = vpop.permute.xlu0 %2167
    %v2177 = vsel %vm1825, %v2154, 0.0
    %v2178 = vsel %vm1825, %v2156, 0.0
    %v2179 = vsel %vm1825, %v2158, 0.0
    %v2180 = vsel %vm1825, %v2160, 0.0
    %v2181 = vsel %vm1825, %v2162, 0.0
    %v2182 = vsel %vm1825, %v2164, 0.0
    %v2183 = vsel %vm1825, %v2166, 0.0
    %v2184 = vsel %vm1825, %v2168, 0.0
    %2185 = vrot.lane.b32.xlu0 %v2110, 127
    %v2186 = vpop.permute.xlu0 %2185
    %2187 = vrot.lane.b32.xlu0 %v2111, 127
    %v2188 = vpop.permute.xlu0 %2187
    %2189 = vrot.lane.b32.xlu0 %v2112, 127
    %v2190 = vpop.permute.xlu0 %2189
    %2191 = vrot.lane.b32.xlu0 %v2113, 127
    %v2192 = vpop.permute.xlu0 %2191
    %2193 = vrot.lane.b32.xlu0 %v2114, 127
    %v2194 = vpop.permute.xlu0 %2193
    %2195 = vrot.lane.b32.xlu0 %v2115, 127
    %v2196 = vpop.permute.xlu0 %2195
    %2197 = vrot.lane.b32.xlu0 %v2116, 127
    %v2198 = vpop.permute.xlu0 %2197
    %2199 = vrot.lane.b32.xlu0 %v2117, 127
    %v2200 = vpop.permute.xlu0 %2199
    %v2209 = vsel %vm1864, %v2186, 0.0
    %v2210 = vsel %vm1864, %v2188, 0.0
    %v2211 = vsel %vm1864, %v2190, 0.0
    %v2212 = vsel %vm1864, %v2192, 0.0
    %v2213 = vsel %vm1864, %v2194, 0.0
    %v2214 = vsel %vm1864, %v2196, 0.0
    %v2215 = vsel %vm1864, %v2198, 0.0
    %v2216 = vsel %vm1864, %v2200, 0.0
    %v2217 = vpack.c.bf16 %v2178, %v2177
    %v2218 = vpack.c.bf16 %v2180, %v2179
    %v2219 = vpack.c.bf16 %v2182, %v2181
    %v2220 = vpack.c.bf16 %v2184, %v2183
    %v2221 = vpack.c.bf16 %v2111, %v2110
    %v2222 = vpack.c.bf16 %v2113, %v2112
    %v2223 = vpack.c.bf16 %v2115, %v2114
    %v2224 = vpack.c.bf16 %v2117, %v2116
    %v2225 = vpack.c.bf16 %v2210, %v2209
    %v2226 = vpack.c.bf16 %v2212, %v2211
    %v2227 = vpack.c.bf16 %v2214, %v2213
    %v2228 = vpack.c.bf16 %v2216, %v2215
    %v2237 = vunpack.c.l.b16 %v2119
    %v2238 = vunpack.c.h.b16 %v2119
    %v2239 = vunpack.c.l.b16 %v2120
    %v2240 = vunpack.c.h.b16 %v2120
    %v2241 = vunpack.c.l.b16 %v2121
    %v2242 = vunpack.c.h.b16 %v2121
    %v2243 = vunpack.c.l.b16 %v2122
    %v2244 = vunpack.c.h.b16 %v2122
    %v2245 = vunpack.c.l.b16 %v2123
    %v2246 = vunpack.c.h.b16 %v2123
    %v2247 = vunpack.c.l.b16 %v2124
    %v2248 = vunpack.c.h.b16 %v2124
    %v2249 = vunpack.c.l.b16 %v2125
    %v2250 = vunpack.c.h.b16 %v2125
    %v2251 = vunpack.c.l.b16 %v2126
    %v2252 = vunpack.c.h.b16 %v2126
    %v2253 = vpack.c.b16 %v2239, %v2237
    %v2254 = vpack.c.b16 %v2240, %v2238
    %v2255 = vpack.c.b16 %v2243, %v2241
    %v2256 = vpack.c.b16 %v2244, %v2242
    %v2257 = vpack.c.b16 %v2247, %v2245
    %v2258 = vpack.c.b16 %v2248, %v2246
    %v2259 = vpack.c.b16 %v2251, %v2249
    %v2260 = vpack.c.b16 %v2252, %v2250
    %v2266 = vsel %vm884, %v2254, 0
    %v2269 = vsel %vm884, %v2256, 0
    %v2272 = vsel %vm884, %v2258, 0
    %v2275 = vsel %vm884, %v2260, 0
    %2277 = vmatprep.subr.bf16.mxu0 0
    %2278 = vmatpush1.bf16.msra.mxu0 %v2217
    %2279 = vmatprep.subr.bf16.mxu0 0
    %2280 = vmatpush1.bf16.msra.mxu0 %v2218
    %2281 = vmatprep.subr.bf16.mxu0 0
    %2282 = vmatpush1.bf16.msra.mxu0 %v2219
    %2283 = vmatprep.subr.bf16.mxu0 0
    %2284 = vmatpush1.bf16.msra.mxu0 %v2220
    %2285 = vmatprep.subr.bf16.mxu0 0
    %2286 = vmatpush1.bf16.msra.mxu0 %v2221
    %2287 = vmatprep.subr.bf16.mxu0 0
    %2288 = vmatpush1.bf16.msra.mxu0 %v2222
    %2289 = vmatprep.subr.bf16.mxu0 0
    %2290 = vmatpush1.bf16.msra.mxu0 %v2223
    %2291 = vmatprep.subr.bf16.mxu0 0
    %2292 = vmatpush1.bf16.msra.mxu0 %v2224
    %2293 = vmatprep.subr.bf16.mxu0 0
    %2294 = vmatpush1.bf16.msra.mxu0 %v2225
    %2295 = vmatprep.subr.bf16.mxu0 0
    %2296 = vmatpush1.bf16.msra.mxu0 %v2226
    %2297 = vmatprep.subr.bf16.mxu0 0
    %2298 = vmatpush1.bf16.msra.mxu0 %v2227
    %2299 = vmatprep.subr.bf16.mxu0 0
    %2300 = vmatpush1.bf16.msra.mxu0 %v2228
    %2301 = vmatprep.subr.bf16.mxu0 0
    %2302 = vmatpush1.bf16.msra.mxu0 0
    %2303 = vmatprep.subr.bf16.mxu0 0
    %2304 = vmatpush1.bf16.msra.mxu0 0
    %2305 = vmatprep.subr.bf16.mxu0 0
    %2306 = vmatpush1.bf16.msra.mxu0 0
    %2307 = vmatprep.subr.bf16.mxu0 0
    %2308 = vmatpush1.bf16.msra.mxu0 0
    %2309 = vmatprep.mubr.bf16.mxu0 %v2266
    %2310 = vmatmul.mubr.bf16.gmra.mrb[0].mxu0 %v2253
    %v2311 = vpop.f32.mrb[0].mxu0
    %v2312 = vadd.f32 0.0, %v2311
    %v2313 = vpop.f32.mrb[0].mxu0
    %v2314 = vpop.f32.mrb[0].mxu0
    %v2315 = vadd.f32 0.0, %v2314
    %v2316 = vpop.f32.mrb[0].mxu0
    %2317 = vmatprep.mubr.bf16.mxu0 %v2269
    %2318 = vmatmul.mubr.bf16.gmra.mrb[0].mxu0 %v2255
    %v2319 = vpop.f32.mrb[0].mxu0
    %v2320 = vadd.f32 0.0, %v2319
    %v2321 = vpop.f32.mrb[0].mxu0
    %v2322 = vpop.f32.mrb[0].mxu0
    %v2323 = vadd.f32 0.0, %v2322
    %v2324 = vpop.f32.mrb[0].mxu0
    %2325 = vmatprep.mubr.bf16.mxu0 %v2272
    %2326 = vmatmul.mubr.bf16.gmra.mrb[0].mxu0 %v2257
    %v2327 = vpop.f32.mrb[0].mxu0
    %v2328 = vadd.f32 0.0, %v2327
    %v2329 = vpop.f32.mrb[0].mxu0
    %v2330 = vpop.f32.mrb[0].mxu0
    %v2331 = vadd.f32 0.0, %v2330
    %v2332 = vpop.f32.mrb[0].mxu0
    %2333 = vmatprep.mubr.bf16.mxu0 %v2275
    %2334 = vmatmul.mubr.bf16.gmra.mrb[0].mxu0 %v2259
    %v2335 = vpop.f32.mrb[0].mxu0
    %v2336 = vadd.f32 0.0, %v2335
    %v2337 = vpop.f32.mrb[0].mxu0
    %v2338 = vpop.f32.mrb[0].mxu0
    %v2339 = vadd.f32 0.0, %v2338
    %v2340 = vpop.f32.mrb[0].mxu0
    %2341 = vdwg.mxu0
    %2343 = vset.pattern.permute.xlu0 0
    %2344 = vperm.xlu0 %2343, %v2128
    %v2345 = vpop.permute.xlu0 %2344
    %2348 = vset.pattern.permute.xlu0 0
    %2349 = vperm.xlu0 %2348, %v2129
    %v2350 = vpop.permute.xlu0 %2349
    %2353 = vset.pattern.permute.xlu0 0
    %2354 = vperm.xlu0 %2353, %v2130
    %v2355 = vpop.permute.xlu0 %2354
    %2358 = vset.pattern.permute.xlu0 0
    %2359 = vperm.xlu0 %2358, %v2131
    %v2360 = vpop.permute.xlu0 %2359
    %2363 = vset.pattern.permute.xlu0 0
    %2364 = vperm.xlu0 %2363, %v2132
    %v2365 = vpop.permute.xlu0 %2364
    %2368 = vset.pattern.permute.xlu0 0
    %2369 = vperm.xlu0 %2368, %v2133
    %v2370 = vpop.permute.xlu0 %2369
    %2373 = vset.pattern.permute.xlu0 0
    %2374 = vperm.xlu0 %2373, %v2134
    %v2375 = vpop.permute.xlu0 %2374
    %2378 = vset.pattern.permute.xlu0 0
    %2379 = vperm.xlu0 %2378, %v2135
    %v2380 = vpop.permute.xlu0 %2379
    %v2382 = vmul.f32 %v2312, %v2345
    %v2383 = vmul.f32 %v2315, %v2350
    %v2384 = vmul.f32 %v2320, %v2355
    %v2385 = vmul.f32 %v2323, %v2360
    %v2386 = vmul.f32 %v2328, %v2365
    %v2387 = vmul.f32 %v2331, %v2370
    %v2388 = vmul.f32 %v2336, %v2375
    %v2389 = vmul.f32 %v2339, %v2380
    %2391 = vset.pattern.permute.xlu0 0
    %2392 = vperm.xlu0 %2391, %v2137
    %v2393 = vpop.permute.xlu0 %2392
    %2396 = vset.pattern.permute.xlu0 0
    %2397 = vperm.xlu0 %2396, %v2138
    %v2398 = vpop.permute.xlu0 %2397
    %2401 = vset.pattern.permute.xlu0 0
    %2402 = vperm.xlu0 %2401, %v2139
    %v2403 = vpop.permute.xlu0 %2402
    %2406 = vset.pattern.permute.xlu0 0
    %2407 = vperm.xlu0 %2406, %v2140
    %v2408 = vpop.permute.xlu0 %2407
    %2411 = vset.pattern.permute.xlu0 0
    %2412 = vperm.xlu0 %2411, %v2141
    %v2413 = vpop.permute.xlu0 %2412
    %2416 = vset.pattern.permute.xlu0 0
    %2417 = vperm.xlu0 %2416, %v2142
    %v2418 = vpop.permute.xlu0 %2417
    %2421 = vset.pattern.permute.xlu0 0
    %2422 = vperm.xlu0 %2421, %v2143
    %v2423 = vpop.permute.xlu0 %2422
    %2426 = vset.pattern.permute.xlu0 0
    %2427 = vperm.xlu0 %2426, %v2144
    %v2428 = vpop.permute.xlu0 %2427
    %v2430 = vadd.f32 %v2382, %v2393
    %v2431 = vadd.f32 %v2383, %v2398
    %v2432 = vadd.f32 %v2384, %v2403
    %v2433 = vadd.f32 %v2385, %v2408
    %v2434 = vadd.f32 %v2386, %v2413
    %v2435 = vadd.f32 %v2387, %v2418
    %v2436 = vadd.f32 %v2388, %v2423
    %v2437 = vadd.f32 %v2389, %v2428
    %v2438 = vadd.f32 %v2430, %v1721
    %v2439 = vadd.f32 %v2431, %v1726
    %v2440 = vadd.f32 %v2432, %v1731
    %v2441 = vadd.f32 %v2433, %v1736
    %v2442 = vadd.f32 %v2434, %v1741
    %v2443 = vadd.f32 %v2435, %v1746
    %v2444 = vadd.f32 %v2436, %v1751
    %v2445 = vadd.f32 %v2437, %v1756
    %v2446 = vld [vmem:[%s17] sm:$0xff]
    %v2447 = vld [vmem:[%s17 + $0x8] sm:$0xff]
    %v2448 = vld [vmem:[%s17 + $0x10] sm:$0xff]
    %v2449 = vld [vmem:[%s17 + $0x18] sm:$0xff]
    %v2450 = vld [vmem:[%s17 + $0x20] sm:$0xff]
    %v2451 = vld [vmem:[%s17 + $0x28] sm:$0xff]
    %v2452 = vld [vmem:[%s17 + $0x30] sm:$0xff]
    %v2453 = vld [vmem:[%s17 + $0x38] sm:$0xff]
    %v2454 = vld [vmem:[%s17 + $0x40] sm:$0xff]
    %v2455 = vld [vmem:[%s17 + $0x48] sm:$0xff]
    %v2456 = vld [vmem:[%s17 + $0x50] sm:$0xff]
    %v2457 = vld [vmem:[%s17 + $0x58] sm:$0xff]
    %v2458 = vld [vmem:[%s17 + $0x60] sm:$0xff]
    %v2459 = vld [vmem:[%s17 + $0x68] sm:$0xff]
    %v2460 = vld [vmem:[%s17 + $0x70] sm:$0xff]
    %v2461 = vld [vmem:[%s17 + $0x78] sm:$0xff]
    %2462 = vmatprep.subr.mxu0 0.0
    %2463 = vmatpush1.msra.mxu0 %v2446
    %2464 = vmatprep.subr.mxu0 0.0
    %2465 = vmatpush1.msra.mxu0 %v2447
    %2466 = vmatprep.subr.mxu0 0.0
    %2467 = vmatpush1.msra.mxu0 %v2448
    %2468 = vmatprep.subr.mxu0 0.0
    %2469 = vmatpush1.msra.mxu0 %v2449
    %2470 = vmatprep.subr.mxu0 0.0
    %2471 = vmatpush1.msra.mxu0 %v2450
    %2472 = vmatprep.subr.mxu0 0.0
    %2473 = vmatpush1.msra.mxu0 %v2451
    %2474 = vmatprep.subr.mxu0 0.0
    %2475 = vmatpush1.msra.mxu0 %v2452
    %2476 = vmatprep.subr.mxu0 0.0
    %2477 = vmatpush1.msra.mxu0 %v2453
    %2478 = vmatprep.subr.mxu0 0.0
    %2479 = vmatpush1.msra.mxu0 %v2454
    %2480 = vmatprep.subr.mxu0 0.0
    %2481 = vmatpush1.msra.mxu0 %v2455
    %2482 = vmatprep.subr.mxu0 0.0
    %2483 = vmatpush1.msra.mxu0 %v2456
    %2484 = vmatprep.subr.mxu0 0.0
    %2485 = vmatpush1.msra.mxu0 %v2457
    %2486 = vmatprep.subr.mxu0 0.0
    %2487 = vmatpush1.msra.mxu0 %v2458
    %2488 = vmatprep.subr.mxu0 0.0
    %2489 = vmatpush1.msra.mxu0 %v2459
    %2490 = vmatprep.subr.mxu0 0.0
    %2491 = vmatpush1.msra.mxu0 %v2460
    %2492 = vmatprep.subr.mxu0 0.0
    %2493 = vmatpush1.msra.mxu0 %v2461
    %2494 = vmatprep.subr.mxu0 0.0
    %2495 = vmatpush1.msra.mxu0 0.0
    %2496 = vmatprep.subr.mxu0 0.0
    %2497 = vmatpush1.msra.mxu0 0.0
    %2498 = vmatprep.subr.mxu0 0.0
    %2499 = vmatpush1.msra.mxu0 0.0
    %2500 = vmatprep.subr.mxu0 0.0
    %2501 = vmatpush1.msra.mxu0 0.0
    %2502 = vmatprep.subr.mxu0 0.0
    %2503 = vmatpush1.msra.mxu0 0.0
    %2504 = vmatprep.subr.mxu0 0.0
    %2505 = vmatpush1.msra.mxu0 0.0
    %2506 = vmatprep.subr.mxu0 0.0
    %2507 = vmatpush1.msra.mxu0 0.0
    %2508 = vmatprep.subr.mxu0 0.0
    %2509 = vmatpush1.msra.mxu0 0.0
    %2510 = vmatprep.subr.mxu0 0.0
    %2511 = vmatpush1.msra.mxu0 0.0
    %2512 = vmatprep.subr.mxu0 0.0
    %2513 = vmatpush1.msra.mxu0 0.0
    %2514 = vmatprep.subr.mxu0 0.0
    %2515 = vmatpush1.msra.mxu0 0.0
    %2516 = vmatprep.subr.mxu0 0.0
    %2517 = vmatpush1.msra.mxu0 0.0
    %2518 = vmatprep.subr.mxu0 0.0
    %2519 = vmatpush1.msra.mxu0 0.0
    %2520 = vmatprep.subr.mxu0 0.0
    %2521 = vmatpush1.msra.mxu0 0.0
    %2522 = vmatprep.subr.mxu0 0.0
    %2523 = vmatpush1.msra.mxu0 0.0
    %2524 = vmatprep.subr.mxu0 0.0
    %2525 = vmatpush1.msra.mxu0 0.0
    %2526 = vmatprep.mubr.f32.mxu0 0.0
    %2527 = vmatmul.mubr.f32.gmra.mrb[0].mxu0 %v2438
    %v2528 = vpop.f32.mrb[0].mxu0
    %v2529 = vadd.f32 0.0, %v2528
    %v2530 = vpop.f32.mrb[0].mxu0
    %2531 = vmatprep.mubr.f32.mxu0 0.0
    %2532 = vmatmul.mubr.f32.gmra.mrb[0].mxu0 %v2439
    %v2533 = vpop.f32.mrb[0].mxu0
    %v2534 = vadd.f32 0.0, %v2533
    %v2535 = vpop.f32.mrb[0].mxu0
    %2536 = vmatprep.mubr.f32.mxu0 0.0
    %2537 = vmatmul.mubr.f32.gmra.mrb[0].mxu0 %v2440
    %v2538 = vpop.f32.mrb[0].mxu0
    %v2539 = vadd.f32 0.0, %v2538
    %v2540 = vpop.f32.mrb[0].mxu0
    %2541 = vmatprep.mubr.f32.mxu0 0.0
    %2542 = vmatmul.mubr.f32.gmra.mrb[0].mxu0 %v2441
    %v2543 = vpop.f32.mrb[0].mxu0
    %v2544 = vadd.f32 0.0, %v2543
    %v2545 = vpop.f32.mrb[0].mxu0
    %2546 = vmatprep.mubr.f32.mxu0 0.0
    %2547 = vmatmul.mubr.f32.gmra.mrb[0].mxu0 %v2442
    %v2548 = vpop.f32.mrb[0].mxu0
    %v2549 = vadd.f32 0.0, %v2548
    %v2550 = vpop.f32.mrb[0].mxu0
    %2551 = vmatprep.mubr.f32.mxu0 0.0
    %2552 = vmatmul.mubr.f32.gmra.mrb[0].mxu0 %v2443
    %v2553 = vpop.f32.mrb[0].mxu0
    %v2554 = vadd.f32 0.0, %v2553
    %v2555 = vpop.f32.mrb[0].mxu0
    %2556 = vmatprep.mubr.f32.mxu0 0.0
    %2557 = vmatmul.mubr.f32.gmra.mrb[0].mxu0 %v2444
    %v2558 = vpop.f32.mrb[0].mxu0
    %v2559 = vadd.f32 0.0, %v2558
    %v2560 = vpop.f32.mrb[0].mxu0
    %2561 = vmatprep.mubr.f32.mxu0 0.0
    %2562 = vmatmul.mubr.f32.gmra.mrb[0].mxu0 %v2445
    %v2563 = vpop.f32.mrb[0].mxu0
    %v2564 = vadd.f32 0.0, %v2563
    %v2565 = vpop.f32.mrb[0].mxu0
    %2566 = vdwg.mxu0
    %v2567 = vld [vmem:[%s11] sm:$0x1]
    %s2568 = scalar_lea.vmem %s3, 256
    %v2569 = vld [vmem:[%s2568] sm:$0xff]
    %v2570 = vld [vmem:[%s2568 + $0x8] sm:$0xff]
    %v2571 = vld [vmem:[%s2568 + $0x10] sm:$0xff]
    %v2572 = vld [vmem:[%s2568 + $0x18] sm:$0xff]
    %v2573 = vld [vmem:[%s2568 + $0x20] sm:$0xff]
    %v2574 = vld [vmem:[%s2568 + $0x28] sm:$0xff]
    %v2575 = vld [vmem:[%s2568 + $0x30] sm:$0xff]
    %v2576 = vld [vmem:[%s2568 + $0x38] sm:$0xff]
    %s2577 = scalar_lea.vmem %s4, 256
    %v2578 = vld [vmem:[%s2577] sm:$0xff]
    %v2579 = vld [vmem:[%s2577 + $0x8] sm:$0xff]
    %v2580 = vld [vmem:[%s2577 + $0x10] sm:$0xff]
    %v2581 = vld [vmem:[%s2577 + $0x18] sm:$0xff]
    %v2582 = vld [vmem:[%s2577 + $0x20] sm:$0xff]
    %v2583 = vld [vmem:[%s2577 + $0x28] sm:$0xff]
    %v2584 = vld [vmem:[%s2577 + $0x30] sm:$0xff]
    %v2585 = vld [vmem:[%s2577 + $0x38] sm:$0xff]
    %s2586 = scalar_lea.vmem %s5, 256
    %v2587 = vld [vmem:[%s2586] sm:$0xff]
    %v2588 = vld [vmem:[%s2586 + $0x8] sm:$0xff]
    %v2589 = vld [vmem:[%s2586 + $0x10] sm:$0xff]
    %v2590 = vld [vmem:[%s2586 + $0x18] sm:$0xff]
    %v2591 = vld [vmem:[%s2586 + $0x20] sm:$0xff]
    %v2592 = vld [vmem:[%s2586 + $0x28] sm:$0xff]
    %v2593 = vld [vmem:[%s2586 + $0x30] sm:$0xff]
    %v2594 = vld [vmem:[%s2586 + $0x38] sm:$0xff]
    %2603 = vrot.lane.b32.xlu0 %v2529, 65
    %v2604 = vpop.permute.xlu0 %2603
    %2605 = vrot.lane.b32.xlu0 %v2534, 65
    %v2606 = vpop.permute.xlu0 %2605
    %2607 = vrot.lane.b32.xlu0 %v2539, 65
    %v2608 = vpop.permute.xlu0 %2607
    %2609 = vrot.lane.b32.xlu0 %v2544, 65
    %v2610 = vpop.permute.xlu0 %2609
    %2611 = vrot.lane.b32.xlu0 %v2549, 65
    %v2612 = vpop.permute.xlu0 %2611
    %2613 = vrot.lane.b32.xlu0 %v2554, 65
    %v2614 = vpop.permute.xlu0 %2613
    %2615 = vrot.lane.b32.xlu0 %v2559, 65
    %v2616 = vpop.permute.xlu0 %2615
    %2617 = vrot.lane.b32.xlu0 %v2564, 65
    %v2618 = vpop.permute.xlu0 %2617
    %2627 = vrot.lane.b32.xlu0 %v2529, 1
    %v2628 = vpop.permute.xlu0 %2627
    %2629 = vrot.lane.b32.xlu0 %v2534, 1
    %v2630 = vpop.permute.xlu0 %2629
    %2631 = vrot.lane.b32.xlu0 %v2539, 1
    %v2632 = vpop.permute.xlu0 %2631
    %2633 = vrot.lane.b32.xlu0 %v2544, 1
    %v2634 = vpop.permute.xlu0 %2633
    %2635 = vrot.lane.b32.xlu0 %v2549, 1
    %v2636 = vpop.permute.xlu0 %2635
    %2637 = vrot.lane.b32.xlu0 %v2554, 1
    %v2638 = vpop.permute.xlu0 %2637
    %2639 = vrot.lane.b32.xlu0 %v2559, 1
    %v2640 = vpop.permute.xlu0 %2639
    %2641 = vrot.lane.b32.xlu0 %v2564, 1
    %v2642 = vpop.permute.xlu0 %2641
    %v2651 = vsel %vm215, %v2604, %v2628
    %v2652 = vsel %vm215, %v2606, %v2630
    %v2653 = vsel %vm215, %v2608, %v2632
    %v2654 = vsel %vm215, %v2610, %v2634
    %v2655 = vsel %vm215, %v2612, %v2636
    %v2656 = vsel %vm215, %v2614, %v2638
    %v2657 = vsel %vm215, %v2616, %v2640
    %v2658 = vsel %vm215, %v2618, %v2642
    %vm2659 = vcmp.ge.s32.totalorder %v2567, 1
    %v2660 = vsel %vm2659, 1, 0
    %v2661 = vlaneseq
    %v2662 = vshrl.u32 %v2661, 7
    %v2663 = vsub.s32 0, %v2662
    %v2664 = vrot.slane %v2660, %v2663
    %vm2665 = vcmp.eq.s32.totalorder %v2664, 1
    %v2666 = vsel %vm2665, %v2651, 0.0
    %v2667 = vsel %vm2665, %v2652, 0.0
    %v2668 = vsel %vm2665, %v2653, 0.0
    %v2669 = vsel %vm2665, %v2654, 0.0
    %v2670 = vsel %vm2665, %v2655, 0.0
    %v2671 = vsel %vm2665, %v2656, 0.0
    %v2672 = vsel %vm2665, %v2657, 0.0
    %v2673 = vsel %vm2665, %v2658, 0.0
    %2674 = vrot.lane.b32.xlu0 %v2529, 127
    %v2675 = vpop.permute.xlu0 %2674
    %2676 = vrot.lane.b32.xlu0 %v2534, 127
    %v2677 = vpop.permute.xlu0 %2676
    %2678 = vrot.lane.b32.xlu0 %v2539, 127
    %v2679 = vpop.permute.xlu0 %2678
    %2680 = vrot.lane.b32.xlu0 %v2544, 127
    %v2681 = vpop.permute.xlu0 %2680
    %2682 = vrot.lane.b32.xlu0 %v2549, 127
    %v2683 = vpop.permute.xlu0 %2682
    %2684 = vrot.lane.b32.xlu0 %v2554, 127
    %v2685 = vpop.permute.xlu0 %2684
    %2686 = vrot.lane.b32.xlu0 %v2559, 127
    %v2687 = vpop.permute.xlu0 %2686
    %2688 = vrot.lane.b32.xlu0 %v2564, 127
    %v2689 = vpop.permute.xlu0 %2688
    %2698 = vrot.lane.b32.xlu0 %v2529, 63
    %v2699 = vpop.permute.xlu0 %2698
    %2700 = vrot.lane.b32.xlu0 %v2534, 63
    %v2701 = vpop.permute.xlu0 %2700
    %2702 = vrot.lane.b32.xlu0 %v2539, 63
    %v2703 = vpop.permute.xlu0 %2702
    %2704 = vrot.lane.b32.xlu0 %v2544, 63
    %v2705 = vpop.permute.xlu0 %2704
    %2706 = vrot.lane.b32.xlu0 %v2549, 63
    %v2707 = vpop.permute.xlu0 %2706
    %2708 = vrot.lane.b32.xlu0 %v2554, 63
    %v2709 = vpop.permute.xlu0 %2708
    %2710 = vrot.lane.b32.xlu0 %v2559, 63
    %v2711 = vpop.permute.xlu0 %2710
    %2712 = vrot.lane.b32.xlu0 %v2564, 63
    %v2713 = vpop.permute.xlu0 %2712
    %vm2722 = vcmask 515072
    %v2723 = vsel %vm2722, %v2675, %v2699
    %v2724 = vsel %vm2722, %v2677, %v2701
    %v2725 = vsel %vm2722, %v2679, %v2703
    %v2726 = vsel %vm2722, %v2681, %v2705
    %v2727 = vsel %vm2722, %v2683, %v2707
    %v2728 = vsel %vm2722, %v2685, %v2709
    %v2729 = vsel %vm2722, %v2687, %v2711
    %v2730 = vsel %vm2722, %v2689, %v2713
    %vm2731 = vcmp.lt.s32.totalorder %v2567, 31
    %v2732 = vsel %vm2731, 1, 0
    %v2733 = vlaneseq
    %v2734 = vshrl.u32 %v2733, 7
    %v2735 = vsub.s32 0, %v2734
    %v2736 = vrot.slane %v2732, %v2735
    %vm2737 = vcmp.eq.s32.totalorder %v2736, 1
    %v2738 = vsel %vm2737, %v2723, 0.0
    %v2739 = vsel %vm2737, %v2724, 0.0
    %v2740 = vsel %vm2737, %v2725, 0.0
    %v2741 = vsel %vm2737, %v2726, 0.0
    %v2742 = vsel %vm2737, %v2727, 0.0
    %v2743 = vsel %vm2737, %v2728, 0.0
    %v2744 = vsel %vm2737, %v2729, 0.0
    %v2745 = vsel %vm2737, %v2730, 0.0
    %v2746 = vpack.c.bf16 %v2667, %v2666
    %v2747 = vpack.c.bf16 %v2669, %v2668
    %v2748 = vpack.c.bf16 %v2671, %v2670
    %v2749 = vpack.c.bf16 %v2673, %v2672
    %v2750 = vpack.c.bf16 %v2534, %v2529
    %v2751 = vpack.c.bf16 %v2544, %v2539
    %v2752 = vpack.c.bf16 %v2554, %v2549
    %v2753 = vpack.c.bf16 %v2564, %v2559
    %v2754 = vpack.c.bf16 %v2739, %v2738
    %v2755 = vpack.c.bf16 %v2741, %v2740
    %v2756 = vpack.c.bf16 %v2743, %v2742
    %v2757 = vpack.c.bf16 %v2745, %v2744
    %v2766 = vunpack.c.l.b16 %v2569
    %v2767 = vunpack.c.h.b16 %v2569
    %v2768 = vunpack.c.l.b16 %v2570
    %v2769 = vunpack.c.h.b16 %v2570
    %v2770 = vunpack.c.l.b16 %v2571
    %v2771 = vunpack.c.h.b16 %v2571
    %v2772 = vunpack.c.l.b16 %v2572
    %v2773 = vunpack.c.h.b16 %v2572
    %v2774 = vunpack.c.l.b16 %v2573
    %v2775 = vunpack.c.h.b16 %v2573
    %v2776 = vunpack.c.l.b16 %v2574
    %v2777 = vunpack.c.h.b16 %v2574
    %v2778 = vunpack.c.l.b16 %v2575
    %v2779 = vunpack.c.h.b16 %v2575
    %v2780 = vunpack.c.l.b16 %v2576
    %v2781 = vunpack.c.h.b16 %v2576
    %v2782 = vpack.c.b16 %v2768, %v2766
    %v2783 = vpack.c.b16 %v2769, %v2767
    %v2784 = vpack.c.b16 %v2772, %v2770
    %v2785 = vpack.c.b16 %v2773, %v2771
    %v2786 = vpack.c.b16 %v2776, %v2774
    %v2787 = vpack.c.b16 %v2777, %v2775
    %v2788 = vpack.c.b16 %v2780, %v2778
    %v2789 = vpack.c.b16 %v2781, %v2779
    %v2795 = vsel %vm884, %v2783, 0
    %v2798 = vsel %vm884, %v2785, 0
    %v2801 = vsel %vm884, %v2787, 0
    %v2804 = vsel %vm884, %v2789, 0
    %2806 = vmatprep.subr.bf16.mxu0 0
    %2807 = vmatpush1.bf16.msra.mxu0 %v2746
    %2808 = vmatprep.subr.bf16.mxu0 0
    %2809 = vmatpush1.bf16.msra.mxu0 %v2747
    %2810 = vmatprep.subr.bf16.mxu0 0
    %2811 = vmatpush1.bf16.msra.mxu0 %v2748
    %2812 = vmatprep.subr.bf16.mxu0 0
    %2813 = vmatpush1.bf16.msra.mxu0 %v2749
    %2814 = vmatprep.subr.bf16.mxu0 0
    %2815 = vmatpush1.bf16.msra.mxu0 %v2750
    %2816 = vmatprep.subr.bf16.mxu0 0
    %2817 = vmatpush1.bf16.msra.mxu0 %v2751
    %2818 = vmatprep.subr.bf16.mxu0 0
    %2819 = vmatpush1.bf16.msra.mxu0 %v2752
    %2820 = vmatprep.subr.bf16.mxu0 0
    %2821 = vmatpush1.bf16.msra.mxu0 %v2753
    %2822 = vmatprep.subr.bf16.mxu0 0
    %2823 = vmatpush1.bf16.msra.mxu0 %v2754
    %2824 = vmatprep.subr.bf16.mxu0 0
    %2825 = vmatpush1.bf16.msra.mxu0 %v2755
    %2826 = vmatprep.subr.bf16.mxu0 0
    %2827 = vmatpush1.bf16.msra.mxu0 %v2756
    %2828 = vmatprep.subr.bf16.mxu0 0
    %2829 = vmatpush1.bf16.msra.mxu0 %v2757
    %2830 = vmatprep.subr.bf16.mxu0 0
    %2831 = vmatpush1.bf16.msra.mxu0 0
    %2832 = vmatprep.subr.bf16.mxu0 0
    %2833 = vmatpush1.bf16.msra.mxu0 0
    %2834 = vmatprep.subr.bf16.mxu0 0
    %2835 = vmatpush1.bf16.msra.mxu0 0
    %2836 = vmatprep.subr.bf16.mxu0 0
    %2837 = vmatpush1.bf16.msra.mxu0 0
    %2838 = vmatprep.mubr.bf16.mxu0 %v2795
    %2839 = vmatmul.mubr.bf16.gmra.mrb[0].mxu0 %v2782
    %v2840 = vpop.f32.mrb[0].mxu0
    %v2841 = vadd.f32 0.0, %v2840
    %v2842 = vpop.f32.mrb[0].mxu0
    %v2843 = vpop.f32.mrb[0].mxu0
    %v2844 = vadd.f32 0.0, %v2843
    %v2845 = vpop.f32.mrb[0].mxu0
    %2846 = vmatprep.mubr.bf16.mxu0 %v2798
    %2847 = vmatmul.mubr.bf16.gmra.mrb[0].mxu0 %v2784
    %v2848 = vpop.f32.mrb[0].mxu0
    %v2849 = vadd.f32 0.0, %v2848
    %v2850 = vpop.f32.mrb[0].mxu0
    %v2851 = vpop.f32.mrb[0].mxu0
    %v2852 = vadd.f32 0.0, %v2851
    %v2853 = vpop.f32.mrb[0].mxu0
    %2854 = vmatprep.mubr.bf16.mxu0 %v2801
    %2855 = vmatmul.mubr.bf16.gmra.mrb[0].mxu0 %v2786
    %v2856 = vpop.f32.mrb[0].mxu0
    %v2857 = vadd.f32 0.0, %v2856
    %v2858 = vpop.f32.mrb[0].mxu0
    %v2859 = vpop.f32.mrb[0].mxu0
    %v2860 = vadd.f32 0.0, %v2859
    %v2861 = vpop.f32.mrb[0].mxu0
    %2862 = vmatprep.mubr.bf16.mxu0 %v2804
    %2863 = vmatmul.mubr.bf16.gmra.mrb[0].mxu0 %v2788
    %v2864 = vpop.f32.mrb[0].mxu0
    %v2865 = vadd.f32 0.0, %v2864
    %v2866 = vpop.f32.mrb[0].mxu0
    %v2867 = vpop.f32.mrb[0].mxu0
    %v2868 = vadd.f32 0.0, %v2867
    %v2869 = vpop.f32.mrb[0].mxu0
    %2870 = vdwg.mxu0
    %2872 = vset.pattern.permute.xlu0 0
    %2873 = vperm.xlu0 %2872, %v2578
    %v2874 = vpop.permute.xlu0 %2873
    %2877 = vset.pattern.permute.xlu0 0
    %2878 = vperm.xlu0 %2877, %v2579
    %v2879 = vpop.permute.xlu0 %2878
    %2882 = vset.pattern.permute.xlu0 0
    %2883 = vperm.xlu0 %2882, %v2580
    %v2884 = vpop.permute.xlu0 %2883
    %2887 = vset.pattern.permute.xlu0 0
    %2888 = vperm.xlu0 %2887, %v2581
    %v2889 = vpop.permute.xlu0 %2888
    %2892 = vset.pattern.permute.xlu0 0
    %2893 = vperm.xlu0 %2892, %v2582
    %v2894 = vpop.permute.xlu0 %2893
    %2897 = vset.pattern.permute.xlu0 0
    %2898 = vperm.xlu0 %2897, %v2583
    %v2899 = vpop.permute.xlu0 %2898
    %2902 = vset.pattern.permute.xlu0 0
    %2903 = vperm.xlu0 %2902, %v2584
    %v2904 = vpop.permute.xlu0 %2903
    %2907 = vset.pattern.permute.xlu0 0
    %2908 = vperm.xlu0 %2907, %v2585
    %v2909 = vpop.permute.xlu0 %2908
    %v2911 = vmul.f32 %v2841, %v2874
    %v2912 = vmul.f32 %v2844, %v2879
    %v2913 = vmul.f32 %v2849, %v2884
    %v2914 = vmul.f32 %v2852, %v2889
    %v2915 = vmul.f32 %v2857, %v2894
    %v2916 = vmul.f32 %v2860, %v2899
    %v2917 = vmul.f32 %v2865, %v2904
    %v2918 = vmul.f32 %v2868, %v2909
    %2920 = vset.pattern.permute.xlu0 0
    %2921 = vperm.xlu0 %2920, %v2587
    %v2922 = vpop.permute.xlu0 %2921
    %2925 = vset.pattern.permute.xlu0 0
    %2926 = vperm.xlu0 %2925, %v2588
    %v2927 = vpop.permute.xlu0 %2926
    %2930 = vset.pattern.permute.xlu0 0
    %2931 = vperm.xlu0 %2930, %v2589
    %v2932 = vpop.permute.xlu0 %2931
    %2935 = vset.pattern.permute.xlu0 0
    %2936 = vperm.xlu0 %2935, %v2590
    %v2937 = vpop.permute.xlu0 %2936
    %2940 = vset.pattern.permute.xlu0 0
    %2941 = vperm.xlu0 %2940, %v2591
    %v2942 = vpop.permute.xlu0 %2941
    %2945 = vset.pattern.permute.xlu0 0
    %2946 = vperm.xlu0 %2945, %v2592
    %v2947 = vpop.permute.xlu0 %2946
    %2950 = vset.pattern.permute.xlu0 0
    %2951 = vperm.xlu0 %2950, %v2593
    %v2952 = vpop.permute.xlu0 %2951
    %2955 = vset.pattern.permute.xlu0 0
    %2956 = vperm.xlu0 %2955, %v2594
    %v2957 = vpop.permute.xlu0 %2956
    %v2959 = vadd.f32 %v2911, %v2922
    %v2960 = vadd.f32 %v2912, %v2927
    %v2961 = vadd.f32 %v2913, %v2932
    %v2962 = vadd.f32 %v2914, %v2937
    %v2963 = vadd.f32 %v2915, %v2942
    %v2964 = vadd.f32 %v2916, %v2947
    %v2965 = vadd.f32 %v2917, %v2952
    %v2966 = vadd.f32 %v2918, %v2957
    %vm2967 = vcmp.ge.f32.partialorder %v2959, 0.0
    %vm2968 = vcmp.ge.f32.partialorder %v2960, 0.0
    %vm2969 = vcmp.ge.f32.partialorder %v2961, 0.0
    %vm2970 = vcmp.ge.f32.partialorder %v2962, 0.0
    %vm2971 = vcmp.ge.f32.partialorder %v2963, 0.0
    %vm2972 = vcmp.ge.f32.partialorder %v2964, 0.0
    %vm2973 = vcmp.ge.f32.partialorder %v2965, 0.0
    %vm2974 = vcmp.ge.f32.partialorder %v2966, 0.0
    %v2975 = vmul.f32 %v2959, 0.3
    %v2976 = vmul.f32 %v2960, 0.3
    %v2977 = vmul.f32 %v2961, 0.3
    %v2978 = vmul.f32 %v2962, 0.3
    %v2979 = vmul.f32 %v2963, 0.3
    %v2980 = vmul.f32 %v2964, 0.3
    %v2981 = vmul.f32 %v2965, 0.3
    %v2982 = vmul.f32 %v2966, 0.3
    %v2983 = vsel %vm2967, %v2959, %v2975
    %v2984 = vsel %vm2968, %v2960, %v2976
    %v2985 = vsel %vm2969, %v2961, %v2977
    %v2986 = vsel %vm2970, %v2962, %v2978
    %v2987 = vsel %vm2971, %v2963, %v2979
    %v2988 = vsel %vm2972, %v2964, %v2980
    %v2989 = vsel %vm2973, %v2965, %v2981
    %v2990 = vsel %vm2974, %v2966, %v2982
    %s2991 = scalar_lea.vmem %s3, 320
    %v2992 = vld [vmem:[%s2991] sm:$0xff]
    %v2993 = vld [vmem:[%s2991 + $0x8] sm:$0xff]
    %v2994 = vld [vmem:[%s2991 + $0x10] sm:$0xff]
    %v2995 = vld [vmem:[%s2991 + $0x18] sm:$0xff]
    %v2996 = vld [vmem:[%s2991 + $0x20] sm:$0xff]
    %v2997 = vld [vmem:[%s2991 + $0x28] sm:$0xff]
    %v2998 = vld [vmem:[%s2991 + $0x30] sm:$0xff]
    %v2999 = vld [vmem:[%s2991 + $0x38] sm:$0xff]
    %s3000 = scalar_lea.vmem %s4, 320
    %v3001 = vld [vmem:[%s3000] sm:$0xff]
    %v3002 = vld [vmem:[%s3000 + $0x8] sm:$0xff]
    %v3003 = vld [vmem:[%s3000 + $0x10] sm:$0xff]
    %v3004 = vld [vmem:[%s3000 + $0x18] sm:$0xff]
    %v3005 = vld [vmem:[%s3000 + $0x20] sm:$0xff]
    %v3006 = vld [vmem:[%s3000 + $0x28] sm:$0xff]
    %v3007 = vld [vmem:[%s3000 + $0x30] sm:$0xff]
    %v3008 = vld [vmem:[%s3000 + $0x38] sm:$0xff]
    %s3009 = scalar_lea.vmem %s5, 320
    %v3010 = vld [vmem:[%s3009] sm:$0xff]
    %v3011 = vld [vmem:[%s3009 + $0x8] sm:$0xff]
    %v3012 = vld [vmem:[%s3009 + $0x10] sm:$0xff]
    %v3013 = vld [vmem:[%s3009 + $0x18] sm:$0xff]
    %v3014 = vld [vmem:[%s3009 + $0x20] sm:$0xff]
    %v3015 = vld [vmem:[%s3009 + $0x28] sm:$0xff]
    %v3016 = vld [vmem:[%s3009 + $0x30] sm:$0xff]
    %v3017 = vld [vmem:[%s3009 + $0x38] sm:$0xff]
    %3026 = vrot.lane.b32.xlu0 %v2983, 65
    %v3027 = vpop.permute.xlu0 %3026
    %3028 = vrot.lane.b32.xlu0 %v2984, 65
    %v3029 = vpop.permute.xlu0 %3028
    %3030 = vrot.lane.b32.xlu0 %v2985, 65
    %v3031 = vpop.permute.xlu0 %3030
    %3032 = vrot.lane.b32.xlu0 %v2986, 65
    %v3033 = vpop.permute.xlu0 %3032
    %3034 = vrot.lane.b32.xlu0 %v2987, 65
    %v3035 = vpop.permute.xlu0 %3034
    %3036 = vrot.lane.b32.xlu0 %v2988, 65
    %v3037 = vpop.permute.xlu0 %3036
    %3038 = vrot.lane.b32.xlu0 %v2989, 65
    %v3039 = vpop.permute.xlu0 %3038
    %3040 = vrot.lane.b32.xlu0 %v2990, 65
    %v3041 = vpop.permute.xlu0 %3040
    %3050 = vrot.lane.b32.xlu0 %v2983, 1
    %v3051 = vpop.permute.xlu0 %3050
    %3052 = vrot.lane.b32.xlu0 %v2984, 1
    %v3053 = vpop.permute.xlu0 %3052
    %3054 = vrot.lane.b32.xlu0 %v2985, 1
    %v3055 = vpop.permute.xlu0 %3054
    %3056 = vrot.lane.b32.xlu0 %v2986, 1
    %v3057 = vpop.permute.xlu0 %3056
    %3058 = vrot.lane.b32.xlu0 %v2987, 1
    %v3059 = vpop.permute.xlu0 %3058
    %3060 = vrot.lane.b32.xlu0 %v2988, 1
    %v3061 = vpop.permute.xlu0 %3060
    %3062 = vrot.lane.b32.xlu0 %v2989, 1
    %v3063 = vpop.permute.xlu0 %3062
    %3064 = vrot.lane.b32.xlu0 %v2990, 1
    %v3065 = vpop.permute.xlu0 %3064
    %v3074 = vsel %vm215, %v3027, %v3051
    %v3075 = vsel %vm215, %v3029, %v3053
    %v3076 = vsel %vm215, %v3031, %v3055
    %v3077 = vsel %vm215, %v3033, %v3057
    %v3078 = vsel %vm215, %v3035, %v3059
    %v3079 = vsel %vm215, %v3037, %v3061
    %v3080 = vsel %vm215, %v3039, %v3063
    %v3081 = vsel %vm215, %v3041, %v3065
    %v3082 = vsel %vm2665, %v3074, 0.0
    %v3083 = vsel %vm2665, %v3075, 0.0
    %v3084 = vsel %vm2665, %v3076, 0.0
    %v3085 = vsel %vm2665, %v3077, 0.0
    %v3086 = vsel %vm2665, %v3078, 0.0
    %v3087 = vsel %vm2665, %v3079, 0.0
    %v3088 = vsel %vm2665, %v3080, 0.0
    %v3089 = vsel %vm2665, %v3081, 0.0
    %3090 = vrot.lane.b32.xlu0 %v2983, 127
    %v3091 = vpop.permute.xlu0 %3090
    %3092 = vrot.lane.b32.xlu0 %v2984, 127
    %v3093 = vpop.permute.xlu0 %3092
    %3094 = vrot.lane.b32.xlu0 %v2985, 127
    %v3095 = vpop.permute.xlu0 %3094
    %3096 = vrot.lane.b32.xlu0 %v2986, 127
    %v3097 = vpop.permute.xlu0 %3096
    %3098 = vrot.lane.b32.xlu0 %v2987, 127
    %v3099 = vpop.permute.xlu0 %3098
    %3100 = vrot.lane.b32.xlu0 %v2988, 127
    %v3101 = vpop.permute.xlu0 %3100
    %3102 = vrot.lane.b32.xlu0 %v2989, 127
    %v3103 = vpop.permute.xlu0 %3102
    %3104 = vrot.lane.b32.xlu0 %v2990, 127
    %v3105 = vpop.permute.xlu0 %3104
    %3114 = vrot.lane.b32.xlu0 %v2983, 63
    %v3115 = vpop.permute.xlu0 %3114
    %3116 = vrot.lane.b32.xlu0 %v2984, 63
    %v3117 = vpop.permute.xlu0 %3116
    %3118 = vrot.lane.b32.xlu0 %v2985, 63
    %v3119 = vpop.permute.xlu0 %3118
    %3120 = vrot.lane.b32.xlu0 %v2986, 63
    %v3121 = vpop.permute.xlu0 %3120
    %3122 = vrot.lane.b32.xlu0 %v2987, 63
    %v3123 = vpop.permute.xlu0 %3122
    %3124 = vrot.lane.b32.xlu0 %v2988, 63
    %v3125 = vpop.permute.xlu0 %3124
    %3126 = vrot.lane.b32.xlu0 %v2989, 63
    %v3127 = vpop.permute.xlu0 %3126
    %3128 = vrot.lane.b32.xlu0 %v2990, 63
    %v3129 = vpop.permute.xlu0 %3128
    %v3138 = vsel %vm2722, %v3091, %v3115
    %v3139 = vsel %vm2722, %v3093, %v3117
    %v3140 = vsel %vm2722, %v3095, %v3119
    %v3141 = vsel %vm2722, %v3097, %v3121
    %v3142 = vsel %vm2722, %v3099, %v3123
    %v3143 = vsel %vm2722, %v3101, %v3125
    %v3144 = vsel %vm2722, %v3103, %v3127
    %v3145 = vsel %vm2722, %v3105, %v3129
    %v3146 = vsel %vm2737, %v3138, 0.0
    %v3147 = vsel %vm2737, %v3139, 0.0
    %v3148 = vsel %vm2737, %v3140, 0.0
    %v3149 = vsel %vm2737, %v3141, 0.0
    %v3150 = vsel %vm2737, %v3142, 0.0
    %v3151 = vsel %vm2737, %v3143, 0.0
    %v3152 = vsel %vm2737, %v3144, 0.0
    %v3153 = vsel %vm2737, %v3145, 0.0
    %v3154 = vpack.c.bf16 %v3083, %v3082
    %v3155 = vpack.c.bf16 %v3085, %v3084
    %v3156 = vpack.c.bf16 %v3087, %v3086
    %v3157 = vpack.c.bf16 %v3089, %v3088
    %v3158 = vpack.c.bf16 %v2984, %v2983
    %v3159 = vpack.c.bf16 %v2986, %v2985
    %v3160 = vpack.c.bf16 %v2988, %v2987
    %v3161 = vpack.c.bf16 %v2990, %v2989
    %v3162 = vpack.c.bf16 %v3147, %v3146
    %v3163 = vpack.c.bf16 %v3149, %v3148
    %v3164 = vpack.c.bf16 %v3151, %v3150
    %v3165 = vpack.c.bf16 %v3153, %v3152
    %v3174 = vunpack.c.l.b16 %v2992
    %v3175 = vunpack.c.h.b16 %v2992
    %v3176 = vunpack.c.l.b16 %v2993
    %v3177 = vunpack.c.h.b16 %v2993
    %v3178 = vunpack.c.l.b16 %v2994
    %v3179 = vunpack.c.h.b16 %v2994
    %v3180 = vunpack.c.l.b16 %v2995
    %v3181 = vunpack.c.h.b16 %v2995
    %v3182 = vunpack.c.l.b16 %v2996
    %v3183 = vunpack.c.h.b16 %v2996
    %v3184 = vunpack.c.l.b16 %v2997
    %v3185 = vunpack.c.h.b16 %v2997
    %v3186 = vunpack.c.l.b16 %v2998
    %v3187 = vunpack.c.h.b16 %v2998
    %v3188 = vunpack.c.l.b16 %v2999
    %v3189 = vunpack.c.h.b16 %v2999
    %v3190 = vpack.c.b16 %v3176, %v3174
    %v3191 = vpack.c.b16 %v3177, %v3175
    %v3192 = vpack.c.b16 %v3180, %v3178
    %v3193 = vpack.c.b16 %v3181, %v3179
    %v3194 = vpack.c.b16 %v3184, %v3182
    %v3195 = vpack.c.b16 %v3185, %v3183
    %v3196 = vpack.c.b16 %v3188, %v3186
    %v3197 = vpack.c.b16 %v3189, %v3187
    %v3203 = vsel %vm884, %v3191, 0
    %v3206 = vsel %vm884, %v3193, 0
    %v3209 = vsel %vm884, %v3195, 0
    %v3212 = vsel %vm884, %v3197, 0
    %3214 = vmatprep.subr.bf16.mxu0 0
    %3215 = vmatpush1.bf16.msra.mxu0 %v3154
    %3216 = vmatprep.subr.bf16.mxu0 0
    %3217 = vmatpush1.bf16.msra.mxu0 %v3155
    %3218 = vmatprep.subr.bf16.mxu0 0
    %3219 = vmatpush1.bf16.msra.mxu0 %v3156
    %3220 = vmatprep.subr.bf16.mxu0 0
    %3221 = vmatpush1.bf16.msra.mxu0 %v3157
    %3222 = vmatprep.subr.bf16.mxu0 0
    %3223 = vmatpush1.bf16.msra.mxu0 %v3158
    %3224 = vmatprep.subr.bf16.mxu0 0
    %3225 = vmatpush1.bf16.msra.mxu0 %v3159
    %3226 = vmatprep.subr.bf16.mxu0 0
    %3227 = vmatpush1.bf16.msra.mxu0 %v3160
    %3228 = vmatprep.subr.bf16.mxu0 0
    %3229 = vmatpush1.bf16.msra.mxu0 %v3161
    %3230 = vmatprep.subr.bf16.mxu0 0
    %3231 = vmatpush1.bf16.msra.mxu0 %v3162
    %3232 = vmatprep.subr.bf16.mxu0 0
    %3233 = vmatpush1.bf16.msra.mxu0 %v3163
    %3234 = vmatprep.subr.bf16.mxu0 0
    %3235 = vmatpush1.bf16.msra.mxu0 %v3164
    %3236 = vmatprep.subr.bf16.mxu0 0
    %3237 = vmatpush1.bf16.msra.mxu0 %v3165
    %3238 = vmatprep.subr.bf16.mxu0 0
    %3239 = vmatpush1.bf16.msra.mxu0 0
    %3240 = vmatprep.subr.bf16.mxu0 0
    %3241 = vmatpush1.bf16.msra.mxu0 0
    %3242 = vmatprep.subr.bf16.mxu0 0
    %3243 = vmatpush1.bf16.msra.mxu0 0
    %3244 = vmatprep.subr.bf16.mxu0 0
    %3245 = vmatpush1.bf16.msra.mxu0 0
    %3246 = vmatprep.mubr.bf16.mxu0 %v3203
    %3247 = vmatmul.mubr.bf16.gmra.mrb[0].mxu0 %v3190
    %v3248 = vpop.f32.mrb[0].mxu0
    %v3249 = vadd.f32 0.0, %v3248
    %v3250 = vpop.f32.mrb[0].mxu0
    %v3251 = vpop.f32.mrb[0].mxu0
    %v3252 = vadd.f32 0.0, %v3251
    %v3253 = vpop.f32.mrb[0].mxu0
    %3254 = vmatprep.mubr.bf16.mxu0 %v3206
    %3255 = vmatmul.mubr.bf16.gmra.mrb[0].mxu0 %v3192
    %v3256 = vpop.f32.mrb[0].mxu0
    %v3257 = vadd.f32 0.0, %v3256
    %v3258 = vpop.f32.mrb[0].mxu0
    %v3259 = vpop.f32.mrb[0].mxu0
    %v3260 = vadd.f32 0.0, %v3259
    %v3261 = vpop.f32.mrb[0].mxu0
    %3262 = vmatprep.mubr.bf16.mxu0 %v3209
    %3263 = vmatmul.mubr.bf16.gmra.mrb[0].mxu0 %v3194
    %v3264 = vpop.f32.mrb[0].mxu0
    %v3265 = vadd.f32 0.0, %v3264
    %v3266 = vpop.f32.mrb[0].mxu0
    %v3267 = vpop.f32.mrb[0].mxu0
    %v3268 = vadd.f32 0.0, %v3267
    %v3269 = vpop.f32.mrb[0].mxu0
    %3270 = vmatprep.mubr.bf16.mxu0 %v3212
    %3271 = vmatmul.mubr.bf16.gmra.mrb[0].mxu0 %v3196
    %v3272 = vpop.f32.mrb[0].mxu0
    %v3273 = vadd.f32 0.0, %v3272
    %v3274 = vpop.f32.mrb[0].mxu0
    %v3275 = vpop.f32.mrb[0].mxu0
    %v3276 = vadd.f32 0.0, %v3275
    %v3277 = vpop.f32.mrb[0].mxu0
    %3278 = vdwg.mxu0
    %3280 = vset.pattern.permute.xlu0 0
    %3281 = vperm.xlu0 %3280, %v3001
    %v3282 = vpop.permute.xlu0 %3281
    %3285 = vset.pattern.permute.xlu0 0
    %3286 = vperm.xlu0 %3285, %v3002
    %v3287 = vpop.permute.xlu0 %3286
    %3290 = vset.pattern.permute.xlu0 0
    %3291 = vperm.xlu0 %3290, %v3003
    %v3292 = vpop.permute.xlu0 %3291
    %3295 = vset.pattern.permute.xlu0 0
    %3296 = vperm.xlu0 %3295, %v3004
    %v3297 = vpop.permute.xlu0 %3296
    %3300 = vset.pattern.permute.xlu0 0
    %3301 = vperm.xlu0 %3300, %v3005
    %v3302 = vpop.permute.xlu0 %3301
    %3305 = vset.pattern.permute.xlu0 0
    %3306 = vperm.xlu0 %3305, %v3006
    %v3307 = vpop.permute.xlu0 %3306
    %3310 = vset.pattern.permute.xlu0 0
    %3311 = vperm.xlu0 %3310, %v3007
    %v3312 = vpop.permute.xlu0 %3311
    %3315 = vset.pattern.permute.xlu0 0
    %3316 = vperm.xlu0 %3315, %v3008
    %v3317 = vpop.permute.xlu0 %3316
    %v3319 = vmul.f32 %v3249, %v3282
    %v3320 = vmul.f32 %v3252, %v3287
    %v3321 = vmul.f32 %v3257, %v3292
    %v3322 = vmul.f32 %v3260, %v3297
    %v3323 = vmul.f32 %v3265, %v3302
    %v3324 = vmul.f32 %v3268, %v3307
    %v3325 = vmul.f32 %v3273, %v3312
    %v3326 = vmul.f32 %v3276, %v3317
    %3328 = vset.pattern.permute.xlu0 0
    %3329 = vperm.xlu0 %3328, %v3010
    %v3330 = vpop.permute.xlu0 %3329
    %3333 = vset.pattern.permute.xlu0 0
    %3334 = vperm.xlu0 %3333, %v3011
    %v3335 = vpop.permute.xlu0 %3334
    %3338 = vset.pattern.permute.xlu0 0
    %3339 = vperm.xlu0 %3338, %v3012
    %v3340 = vpop.permute.xlu0 %3339
    %3343 = vset.pattern.permute.xlu0 0
    %3344 = vperm.xlu0 %3343, %v3013
    %v3345 = vpop.permute.xlu0 %3344
    %3348 = vset.pattern.permute.xlu0 0
    %3349 = vperm.xlu0 %3348, %v3014
    %v3350 = vpop.permute.xlu0 %3349
    %3353 = vset.pattern.permute.xlu0 0
    %3354 = vperm.xlu0 %3353, %v3015
    %v3355 = vpop.permute.xlu0 %3354
    %3358 = vset.pattern.permute.xlu0 0
    %3359 = vperm.xlu0 %3358, %v3016
    %v3360 = vpop.permute.xlu0 %3359
    %3363 = vset.pattern.permute.xlu0 0
    %3364 = vperm.xlu0 %3363, %v3017
    %v3365 = vpop.permute.xlu0 %3364
    %v3367 = vadd.f32 %v3319, %v3330
    %v3368 = vadd.f32 %v3320, %v3335
    %v3369 = vadd.f32 %v3321, %v3340
    %v3370 = vadd.f32 %v3322, %v3345
    %v3371 = vadd.f32 %v3323, %v3350
    %v3372 = vadd.f32 %v3324, %v3355
    %v3373 = vadd.f32 %v3325, %v3360
    %v3374 = vadd.f32 %v3326, %v3365
    %v3375 = vadd.f32 %v3367, %v2529
    %v3376 = vadd.f32 %v3368, %v2534
    %v3377 = vadd.f32 %v3369, %v2539
    %v3378 = vadd.f32 %v3370, %v2544
    %v3379 = vadd.f32 %v3371, %v2549
    %v3380 = vadd.f32 %v3372, %v2554
    %v3381 = vadd.f32 %v3373, %v2559
    %v3382 = vadd.f32 %v3374, %v2564
    %v3383 = vld [vmem:[%s18] sm:$0xff]
    %v3384 = vld [vmem:[%s18 + $0x8] sm:$0xff]
    %v3385 = vld [vmem:[%s18 + $0x10] sm:$0xff]
    %v3386 = vld [vmem:[%s18 + $0x18] sm:$0xff]
    %v3387 = vld [vmem:[%s18 + $0x20] sm:$0xff]
    %v3388 = vld [vmem:[%s18 + $0x28] sm:$0xff]
    %v3389 = vld [vmem:[%s18 + $0x30] sm:$0xff]
    %v3390 = vld [vmem:[%s18 + $0x38] sm:$0xff]
    %v3392 = vsel %vm884, %v3375, 0
    %v3395 = vsel %vm884, %v3376, 0
    %v3398 = vsel %vm884, %v3377, 0
    %v3401 = vsel %vm884, %v3378, 0
    %v3404 = vsel %vm884, %v3379, 0
    %v3407 = vsel %vm884, %v3380, 0
    %v3410 = vsel %vm884, %v3381, 0
    %v3413 = vsel %vm884, %v3382, 0
    %3415 = vmatprep.subr.mxu0 0.0
    %3416 = vmatpush1.msra.mxu0 %v3383
    %3417 = vmatprep.subr.mxu0 0.0
    %3418 = vmatpush1.msra.mxu0 %v3384
    %3419 = vmatprep.subr.mxu0 0.0
    %3420 = vmatpush1.msra.mxu0 %v3385
    %3421 = vmatprep.subr.mxu0 0.0
    %3422 = vmatpush1.msra.mxu0 %v3386
    %3423 = vmatprep.subr.mxu0 0.0
    %3424 = vmatpush1.msra.mxu0 %v3387
    %3425 = vmatprep.subr.mxu0 0.0
    %3426 = vmatpush1.msra.mxu0 %v3388
    %3427 = vmatprep.subr.mxu0 0.0
    %3428 = vmatpush1.msra.mxu0 %v3389
    %3429 = vmatprep.subr.mxu0 0.0
    %3430 = vmatpush1.msra.mxu0 %v3390
    %3431 = vmatprep.subr.mxu0 0.0
    %3432 = vmatpush1.msra.mxu0 0.0
    %3433 = vmatprep.subr.mxu0 0.0
    %3434 = vmatpush1.msra.mxu0 0.0
    %3435 = vmatprep.subr.mxu0 0.0
    %3436 = vmatpush1.msra.mxu0 0.0
    %3437 = vmatprep.subr.mxu0 0.0
    %3438 = vmatpush1.msra.mxu0 0.0
    %3439 = vmatprep.subr.mxu0 0.0
    %3440 = vmatpush1.msra.mxu0 0.0
    %3441 = vmatprep.subr.mxu0 0.0
    %3442 = vmatpush1.msra.mxu0 0.0
    %3443 = vmatprep.subr.mxu0 0.0
    %3444 = vmatpush1.msra.mxu0 0.0
    %3445 = vmatprep.subr.mxu0 0.0
    %3446 = vmatpush1.msra.mxu0 0.0
    %3447 = vmatprep.subr.mxu0 0.0
    %3448 = vmatpush1.msra.mxu0 0.0
    %3449 = vmatprep.subr.mxu0 0.0
    %3450 = vmatpush1.msra.mxu0 0.0
    %3451 = vmatprep.subr.mxu0 0.0
    %3452 = vmatpush1.msra.mxu0 0.0
    %3453 = vmatprep.subr.mxu0 0.0
    %3454 = vmatpush1.msra.mxu0 0.0
    %3455 = vmatprep.subr.mxu0 0.0
    %3456 = vmatpush1.msra.mxu0 0.0
    %3457 = vmatprep.subr.mxu0 0.0
    %3458 = vmatpush1.msra.mxu0 0.0
    %3459 = vmatprep.subr.mxu0 0.0
    %3460 = vmatpush1.msra.mxu0 0.0
    %3461 = vmatprep.subr.mxu0 0.0
    %3462 = vmatpush1.msra.mxu0 0.0
    %3463 = vmatprep.subr.mxu0 0.0
    %3464 = vmatpush1.msra.mxu0 0.0
    %3465 = vmatprep.subr.mxu0 0.0
    %3466 = vmatpush1.msra.mxu0 0.0
    %3467 = vmatprep.subr.mxu0 0.0
    %3468 = vmatpush1.msra.mxu0 0.0
    %3469 = vmatprep.subr.mxu0 0.0
    %3470 = vmatpush1.msra.mxu0 0.0
    %3471 = vmatprep.subr.mxu0 0.0
    %3472 = vmatpush1.msra.mxu0 0.0
    %3473 = vmatprep.subr.mxu0 0.0
    %3474 = vmatpush1.msra.mxu0 0.0
    %3475 = vmatprep.subr.mxu0 0.0
    %3476 = vmatpush1.msra.mxu0 0.0
    %3477 = vmatprep.subr.mxu0 0.0
    %3478 = vmatpush1.msra.mxu0 0.0
    %3479 = vmatprep.mubr.f32.mxu0 0.0
    %3480 = vmatmul.mubr.f32.gmra.mrb[0].mxu0 %v3392
    %v3481 = vpop.f32.mrb[0].mxu0
    %v3482 = vadd.f32 0.0, %v3481
    %v3483 = vpop.f32.mrb[0].mxu0
    %3484 = vmatprep.mubr.f32.mxu0 0.0
    %3485 = vmatmul.mubr.f32.gmra.mrb[0].mxu0 %v3395
    %v3486 = vpop.f32.mrb[0].mxu0
    %v3487 = vadd.f32 0.0, %v3486
    %v3488 = vpop.f32.mrb[0].mxu0
    %3489 = vmatprep.mubr.f32.mxu0 0.0
    %3490 = vmatmul.mubr.f32.gmra.mrb[0].mxu0 %v3398
    %v3491 = vpop.f32.mrb[0].mxu0
    %v3492 = vadd.f32 0.0, %v3491
    %v3493 = vpop.f32.mrb[0].mxu0
    %3494 = vmatprep.mubr.f32.mxu0 0.0
    %3495 = vmatmul.mubr.f32.gmra.mrb[0].mxu0 %v3401
    %v3496 = vpop.f32.mrb[0].mxu0
    %v3497 = vadd.f32 0.0, %v3496
    %v3498 = vpop.f32.mrb[0].mxu0
    %3499 = vmatprep.mubr.f32.mxu0 0.0
    %3500 = vmatmul.mubr.f32.gmra.mrb[0].mxu0 %v3404
    %v3501 = vpop.f32.mrb[0].mxu0
    %v3502 = vadd.f32 0.0, %v3501
    %v3503 = vpop.f32.mrb[0].mxu0
    %3504 = vmatprep.mubr.f32.mxu0 0.0
    %3505 = vmatmul.mubr.f32.gmra.mrb[0].mxu0 %v3407
    %v3506 = vpop.f32.mrb[0].mxu0
    %v3507 = vadd.f32 0.0, %v3506
    %v3508 = vpop.f32.mrb[0].mxu0
    %3509 = vmatprep.mubr.f32.mxu0 0.0
    %3510 = vmatmul.mubr.f32.gmra.mrb[0].mxu0 %v3410
    %v3511 = vpop.f32.mrb[0].mxu0
    %v3512 = vadd.f32 0.0, %v3511
    %v3513 = vpop.f32.mrb[0].mxu0
    %3514 = vmatprep.mubr.f32.mxu0 0.0
    %3515 = vmatmul.mubr.f32.gmra.mrb[0].mxu0 %v3413
    %v3516 = vpop.f32.mrb[0].mxu0
    %v3517 = vadd.f32 0.0, %v3516
    %v3518 = vpop.f32.mrb[0].mxu0
    %3519 = vdwg.mxu0
    %v3520 = vld [vmem:[%s12] sm:$0x1]
    %s3521 = scalar_lea.vmem %s3, 384
    %v3522 = vld [vmem:[%s3521] sm:$0xff]
    %v3523 = vld [vmem:[%s3521 + $0x8] sm:$0xff]
    %v3524 = vld [vmem:[%s3521 + $0x10] sm:$0xff]
    %v3525 = vld [vmem:[%s3521 + $0x18] sm:$0xff]
    %v3526 = vld [vmem:[%s3521 + $0x20] sm:$0xff]
    %v3527 = vld [vmem:[%s3521 + $0x28] sm:$0xff]
    %v3528 = vld [vmem:[%s3521 + $0x30] sm:$0xff]
    %v3529 = vld [vmem:[%s3521 + $0x38] sm:$0xff]
    %s3530 = scalar_lea.vmem %s4, 384
    %v3531 = vld [vmem:[%s3530] sm:$0xff]
    %v3532 = vld [vmem:[%s3530 + $0x8] sm:$0xff]
    %v3533 = vld [vmem:[%s3530 + $0x10] sm:$0xff]
    %v3534 = vld [vmem:[%s3530 + $0x18] sm:$0xff]
    %v3535 = vld [vmem:[%s3530 + $0x20] sm:$0xff]
    %v3536 = vld [vmem:[%s3530 + $0x28] sm:$0xff]
    %v3537 = vld [vmem:[%s3530 + $0x30] sm:$0xff]
    %v3538 = vld [vmem:[%s3530 + $0x38] sm:$0xff]
    %s3539 = scalar_lea.vmem %s5, 384
    %v3540 = vld [vmem:[%s3539] sm:$0xff]
    %v3541 = vld [vmem:[%s3539 + $0x8] sm:$0xff]
    %v3542 = vld [vmem:[%s3539 + $0x10] sm:$0xff]
    %v3543 = vld [vmem:[%s3539 + $0x18] sm:$0xff]
    %v3544 = vld [vmem:[%s3539 + $0x20] sm:$0xff]
    %v3545 = vld [vmem:[%s3539 + $0x28] sm:$0xff]
    %v3546 = vld [vmem:[%s3539 + $0x30] sm:$0xff]
    %v3547 = vld [vmem:[%s3539 + $0x38] sm:$0xff]
    %3556 = vrot.lane.b32.xlu0 %v3482, 97
    %v3557 = vpop.permute.xlu0 %3556
    %3558 = vrot.lane.b32.xlu0 %v3487, 97
    %v3559 = vpop.permute.xlu0 %3558
    %3560 = vrot.lane.b32.xlu0 %v3492, 97
    %v3561 = vpop.permute.xlu0 %3560
    %3562 = vrot.lane.b32.xlu0 %v3497, 97
    %v3563 = vpop.permute.xlu0 %3562
    %3564 = vrot.lane.b32.xlu0 %v3502, 97
    %v3565 = vpop.permute.xlu0 %3564
    %3566 = vrot.lane.b32.xlu0 %v3507, 97
    %v3567 = vpop.permute.xlu0 %3566
    %3568 = vrot.lane.b32.xlu0 %v3512, 97
    %v3569 = vpop.permute.xlu0 %3568
    %3570 = vrot.lane.b32.xlu0 %v3517, 97
    %v3571 = vpop.permute.xlu0 %3570
    %3580 = vrot.lane.b32.xlu0 %v3482, 1
    %v3581 = vpop.permute.xlu0 %3580
    %3582 = vrot.lane.b32.xlu0 %v3487, 1
    %v3583 = vpop.permute.xlu0 %3582
    %3584 = vrot.lane.b32.xlu0 %v3492, 1
    %v3585 = vpop.permute.xlu0 %3584
    %3586 = vrot.lane.b32.xlu0 %v3497, 1
    %v3587 = vpop.permute.xlu0 %3586
    %3588 = vrot.lane.b32.xlu0 %v3502, 1
    %v3589 = vpop.permute.xlu0 %3588
    %3590 = vrot.lane.b32.xlu0 %v3507, 1
    %v3591 = vpop.permute.xlu0 %3590
    %3592 = vrot.lane.b32.xlu0 %v3512, 1
    %v3593 = vpop.permute.xlu0 %3592
    %3594 = vrot.lane.b32.xlu0 %v3517, 1
    %v3595 = vpop.permute.xlu0 %3594
    %v3604 = vsel %vm215, %v3557, %v3581
    %v3605 = vsel %vm215, %v3559, %v3583
    %v3606 = vsel %vm215, %v3561, %v3585
    %v3607 = vsel %vm215, %v3563, %v3587
    %v3608 = vsel %vm215, %v3565, %v3589
    %v3609 = vsel %vm215, %v3567, %v3591
    %v3610 = vsel %vm215, %v3569, %v3593
    %v3611 = vsel %vm215, %v3571, %v3595
    %vm3612 = vcmp.ge.s32.totalorder %v3520, 1
    %v3613 = vsel %vm3612, 1, 0
    %v3614 = vlaneseq
    %v3615 = vshrl.u32 %v3614, 7
    %v3616 = vsub.s32 0, %v3615
    %v3617 = vrot.slane %v3613, %v3616
    %vm3618 = vcmp.eq.s32.totalorder %v3617, 1
    %v3619 = vsel %vm3618, %v3604, 0.0
    %v3620 = vsel %vm3618, %v3605, 0.0
    %v3621 = vsel %vm3618, %v3606, 0.0
    %v3622 = vsel %vm3618, %v3607, 0.0
    %v3623 = vsel %vm3618, %v3608, 0.0
    %v3624 = vsel %vm3618, %v3609, 0.0
    %v3625 = vsel %vm3618, %v3610, 0.0
    %v3626 = vsel %vm3618, %v3611, 0.0
    %3627 = vrot.lane.b32.xlu0 %v3482, 127
    %v3628 = vpop.permute.xlu0 %3627
    %3629 = vrot.lane.b32.xlu0 %v3487, 127
    %v3630 = vpop.permute.xlu0 %3629
    %3631 = vrot.lane.b32.xlu0 %v3492, 127
    %v3632 = vpop.permute.xlu0 %3631
    %3633 = vrot.lane.b32.xlu0 %v3497, 127
    %v3634 = vpop.permute.xlu0 %3633
    %3635 = vrot.lane.b32.xlu0 %v3502, 127
    %v3636 = vpop.permute.xlu0 %3635
    %3637 = vrot.lane.b32.xlu0 %v3507, 127
    %v3638 = vpop.permute.xlu0 %3637
    %3639 = vrot.lane.b32.xlu0 %v3512, 127
    %v3640 = vpop.permute.xlu0 %3639
    %3641 = vrot.lane.b32.xlu0 %v3517, 127
    %v3642 = vpop.permute.xlu0 %3641
    %3651 = vrot.lane.b32.xlu0 %v3482, 31
    %v3652 = vpop.permute.xlu0 %3651
    %3653 = vrot.lane.b32.xlu0 %v3487, 31
    %v3654 = vpop.permute.xlu0 %3653
    %3655 = vrot.lane.b32.xlu0 %v3492, 31
    %v3656 = vpop.permute.xlu0 %3655
    %3657 = vrot.lane.b32.xlu0 %v3497, 31
    %v3658 = vpop.permute.xlu0 %3657
    %3659 = vrot.lane.b32.xlu0 %v3502, 31
    %v3660 = vpop.permute.xlu0 %3659
    %3661 = vrot.lane.b32.xlu0 %v3507, 31
    %v3662 = vpop.permute.xlu0 %3661
    %3663 = vrot.lane.b32.xlu0 %v3512, 31
    %v3664 = vpop.permute.xlu0 %3663
    %3665 = vrot.lane.b32.xlu0 %v3517, 31
    %v3666 = vpop.permute.xlu0 %3665
    %vm3675 = vcmask 252928
    %v3676 = vsel %vm3675, %v3628, %v3652
    %v3677 = vsel %vm3675, %v3630, %v3654
    %v3678 = vsel %vm3675, %v3632, %v3656
    %v3679 = vsel %vm3675, %v3634, %v3658
    %v3680 = vsel %vm3675, %v3636, %v3660
    %v3681 = vsel %vm3675, %v3638, %v3662
    %v3682 = vsel %vm3675, %v3640, %v3664
    %v3683 = vsel %vm3675, %v3642, %v3666
    %vm3684 = vcmp.lt.s32.totalorder %v3520, 15
    %v3685 = vsel %vm3684, 1, 0
    %v3686 = vlaneseq
    %v3687 = vshrl.u32 %v3686, 7
    %v3688 = vsub.s32 0, %v3687
    %v3689 = vrot.slane %v3685, %v3688
    %vm3690 = vcmp.eq.s32.totalorder %v3689, 1
    %v3691 = vsel %vm3690, %v3676, 0.0
    %v3692 = vsel %vm3690, %v3677, 0.0
    %v3693 = vsel %vm3690, %v3678, 0.0
    %v3694 = vsel %vm3690, %v3679, 0.0
    %v3695 = vsel %vm3690, %v3680, 0.0
    %v3696 = vsel %vm3690, %v3681, 0.0
    %v3697 = vsel %vm3690, %v3682, 0.0
    %v3698 = vsel %vm3690, %v3683, 0.0
    %v3699 = vpack.c.bf16 %v3620, %v3619
    %v3700 = vpack.c.bf16 %v3622, %v3621
    %v3701 = vpack.c.bf16 %v3624, %v3623
    %v3702 = vpack.c.bf16 %v3626, %v3625
    %v3703 = vpack.c.bf16 %v3487, %v3482
    %v3704 = vpack.c.bf16 %v3497, %v3492
    %v3705 = vpack.c.bf16 %v3507, %v3502
    %v3706 = vpack.c.bf16 %v3517, %v3512
    %v3707 = vpack.c.bf16 %v3692, %v3691
    %v3708 = vpack.c.bf16 %v3694, %v3693
    %v3709 = vpack.c.bf16 %v3696, %v3695
    %v3710 = vpack.c.bf16 %v3698, %v3697
    %v3719 = vunpack.c.l.b16 %v3522
    %v3720 = vunpack.c.h.b16 %v3522
    %v3721 = vunpack.c.l.b16 %v3523
    %v3722 = vunpack.c.h.b16 %v3523
    %v3723 = vunpack.c.l.b16 %v3524
    %v3724 = vunpack.c.h.b16 %v3524
    %v3725 = vunpack.c.l.b16 %v3525
    %v3726 = vunpack.c.h.b16 %v3525
    %v3727 = vunpack.c.l.b16 %v3526
    %v3728 = vunpack.c.h.b16 %v3526
    %v3729 = vunpack.c.l.b16 %v3527
    %v3730 = vunpack.c.h.b16 %v3527
    %v3731 = vunpack.c.l.b16 %v3528
    %v3732 = vunpack.c.h.b16 %v3528
    %v3733 = vunpack.c.l.b16 %v3529
    %v3734 = vunpack.c.h.b16 %v3529
    %v3735 = vpack.c.b16 %v3721, %v3719
    %v3736 = vpack.c.b16 %v3722, %v3720
    %v3737 = vpack.c.b16 %v3725, %v3723
    %v3738 = vpack.c.b16 %v3726, %v3724
    %v3739 = vpack.c.b16 %v3729, %v3727
    %v3740 = vpack.c.b16 %v3730, %v3728
    %v3741 = vpack.c.b16 %v3733, %v3731
    %v3742 = vpack.c.b16 %v3734, %v3732
    %v3748 = vsel %vm884, %v3736, 0
    %v3751 = vsel %vm884, %v3738, 0
    %v3754 = vsel %vm884, %v3740, 0
    %v3757 = vsel %vm884, %v3742, 0
    %3759 = vmatprep.subr.bf16.mxu0 0
    %3760 = vmatpush1.bf16.msra.mxu0 %v3699
    %3761 = vmatprep.subr.bf16.mxu0 0
    %3762 = vmatpush1.bf16.msra.mxu0 %v3700
    %3763 = vmatprep.subr.bf16.mxu0 0
    %3764 = vmatpush1.bf16.msra.mxu0 %v3701
    %3765 = vmatprep.subr.bf16.mxu0 0
    %3766 = vmatpush1.bf16.msra.mxu0 %v3702
    %3767 = vmatprep.subr.bf16.mxu0 0
    %3768 = vmatpush1.bf16.msra.mxu0 %v3703
    %3769 = vmatprep.subr.bf16.mxu0 0
    %3770 = vmatpush1.bf16.msra.mxu0 %v3704
    %3771 = vmatprep.subr.bf16.mxu0 0
    %3772 = vmatpush1.bf16.msra.mxu0 %v3705
    %3773 = vmatprep.subr.bf16.mxu0 0
    %3774 = vmatpush1.bf16.msra.mxu0 %v3706
    %3775 = vmatprep.subr.bf16.mxu0 0
    %3776 = vmatpush1.bf16.msra.mxu0 %v3707
    %3777 = vmatprep.subr.bf16.mxu0 0
    %3778 = vmatpush1.bf16.msra.mxu0 %v3708
    %3779 = vmatprep.subr.bf16.mxu0 0
    %3780 = vmatpush1.bf16.msra.mxu0 %v3709
    %3781 = vmatprep.subr.bf16.mxu0 0
    %3782 = vmatpush1.bf16.msra.mxu0 %v3710
    %3783 = vmatprep.subr.bf16.mxu0 0
    %3784 = vmatpush1.bf16.msra.mxu0 0
    %3785 = vmatprep.subr.bf16.mxu0 0
    %3786 = vmatpush1.bf16.msra.mxu0 0
    %3787 = vmatprep.subr.bf16.mxu0 0
    %3788 = vmatpush1.bf16.msra.mxu0 0
    %3789 = vmatprep.subr.bf16.mxu0 0
    %3790 = vmatpush1.bf16.msra.mxu0 0
    %3791 = vmatprep.mubr.bf16.mxu0 %v3748
    %3792 = vmatmul.mubr.bf16.gmra.mrb[0].mxu0 %v3735
    %v3793 = vpop.f32.mrb[0].mxu0
    %v3794 = vadd.f32 0.0, %v3793
    %v3795 = vpop.f32.mrb[0].mxu0
    %v3796 = vpop.f32.mrb[0].mxu0
    %v3797 = vadd.f32 0.0, %v3796
    %v3798 = vpop.f32.mrb[0].mxu0
    %3799 = vmatprep.mubr.bf16.mxu0 %v3751
    %3800 = vmatmul.mubr.bf16.gmra.mrb[0].mxu0 %v3737
    %v3801 = vpop.f32.mrb[0].mxu0
    %v3802 = vadd.f32 0.0, %v3801
    %v3803 = vpop.f32.mrb[0].mxu0
    %v3804 = vpop.f32.mrb[0].mxu0
    %v3805 = vadd.f32 0.0, %v3804
    %v3806 = vpop.f32.mrb[0].mxu0
    %3807 = vmatprep.mubr.bf16.mxu0 %v3754
    %3808 = vmatmul.mubr.bf16.gmra.mrb[0].mxu0 %v3739
    %v3809 = vpop.f32.mrb[0].mxu0
    %v3810 = vadd.f32 0.0, %v3809
    %v3811 = vpop.f32.mrb[0].mxu0
    %v3812 = vpop.f32.mrb[0].mxu0
    %v3813 = vadd.f32 0.0, %v3812
    %v3814 = vpop.f32.mrb[0].mxu0
    %3815 = vmatprep.mubr.bf16.mxu0 %v3757
    %3816 = vmatmul.mubr.bf16.gmra.mrb[0].mxu0 %v3741
    %v3817 = vpop.f32.mrb[0].mxu0
    %v3818 = vadd.f32 0.0, %v3817
    %v3819 = vpop.f32.mrb[0].mxu0
    %v3820 = vpop.f32.mrb[0].mxu0
    %v3821 = vadd.f32 0.0, %v3820
    %v3822 = vpop.f32.mrb[0].mxu0
    %3823 = vdwg.mxu0
    %3825 = vset.pattern.permute.xlu0 0
    %3826 = vperm.xlu0 %3825, %v3531
    %v3827 = vpop.permute.xlu0 %3826
    %3830 = vset.pattern.permute.xlu0 0
    %3831 = vperm.xlu0 %3830, %v3532
    %v3832 = vpop.permute.xlu0 %3831
    %3835 = vset.pattern.permute.xlu0 0
    %3836 = vperm.xlu0 %3835, %v3533
    %v3837 = vpop.permute.xlu0 %3836
    %3840 = vset.pattern.permute.xlu0 0
    %3841 = vperm.xlu0 %3840, %v3534
    %v3842 = vpop.permute.xlu0 %3841
    %3845 = vset.pattern.permute.xlu0 0
    %3846 = vperm.xlu0 %3845, %v3535
    %v3847 = vpop.permute.xlu0 %3846
    %3850 = vset.pattern.permute.xlu0 0
    %3851 = vperm.xlu0 %3850, %v3536
    %v3852 = vpop.permute.xlu0 %3851
    %3855 = vset.pattern.permute.xlu0 0
    %3856 = vperm.xlu0 %3855, %v3537
    %v3857 = vpop.permute.xlu0 %3856
    %3860 = vset.pattern.permute.xlu0 0
    %3861 = vperm.xlu0 %3860, %v3538
    %v3862 = vpop.permute.xlu0 %3861
    %v3864 = vmul.f32 %v3794, %v3827
    %v3865 = vmul.f32 %v3797, %v3832
    %v3866 = vmul.f32 %v3802, %v3837
    %v3867 = vmul.f32 %v3805, %v3842
    %v3868 = vmul.f32 %v3810, %v3847
    %v3869 = vmul.f32 %v3813, %v3852
    %v3870 = vmul.f32 %v3818, %v3857
    %v3871 = vmul.f32 %v3821, %v3862
    %3873 = vset.pattern.permute.xlu0 0
    %3874 = vperm.xlu0 %3873, %v3540
    %v3875 = vpop.permute.xlu0 %3874
    %3878 = vset.pattern.permute.xlu0 0
    %3879 = vperm.xlu0 %3878, %v3541
    %v3880 = vpop.permute.xlu0 %3879
    %3883 = vset.pattern.permute.xlu0 0
    %3884 = vperm.xlu0 %3883, %v3542
    %v3885 = vpop.permute.xlu0 %3884
    %3888 = vset.pattern.permute.xlu0 0
    %3889 = vperm.xlu0 %3888, %v3543
    %v3890 = vpop.permute.xlu0 %3889
    %3893 = vset.pattern.permute.xlu0 0
    %3894 = vperm.xlu0 %3893, %v3544
    %v3895 = vpop.permute.xlu0 %3894
    %3898 = vset.pattern.permute.xlu0 0
    %3899 = vperm.xlu0 %3898, %v3545
    %v3900 = vpop.permute.xlu0 %3899
    %3903 = vset.pattern.permute.xlu0 0
    %3904 = vperm.xlu0 %3903, %v3546
    %v3905 = vpop.permute.xlu0 %3904
    %3908 = vset.pattern.permute.xlu0 0
    %3909 = vperm.xlu0 %3908, %v3547
    %v3910 = vpop.permute.xlu0 %3909
    %v3912 = vadd.f32 %v3864, %v3875
    %v3913 = vadd.f32 %v3865, %v3880
    %v3914 = vadd.f32 %v3866, %v3885
    %v3915 = vadd.f32 %v3867, %v3890
    %v3916 = vadd.f32 %v3868, %v3895
    %v3917 = vadd.f32 %v3869, %v3900
    %v3918 = vadd.f32 %v3870, %v3905
    %v3919 = vadd.f32 %v3871, %v3910
    %vm3920 = vcmp.ge.f32.partialorder %v3912, 0.0
    %vm3921 = vcmp.ge.f32.partialorder %v3913, 0.0
    %vm3922 = vcmp.ge.f32.partialorder %v3914, 0.0
    %vm3923 = vcmp.ge.f32.partialorder %v3915, 0.0
    %vm3924 = vcmp.ge.f32.partialorder %v3916, 0.0
    %vm3925 = vcmp.ge.f32.partialorder %v3917, 0.0
    %vm3926 = vcmp.ge.f32.partialorder %v3918, 0.0
    %vm3927 = vcmp.ge.f32.partialorder %v3919, 0.0
    %v3928 = vmul.f32 %v3912, 0.3
    %v3929 = vmul.f32 %v3913, 0.3
    %v3930 = vmul.f32 %v3914, 0.3
    %v3931 = vmul.f32 %v3915, 0.3
    %v3932 = vmul.f32 %v3916, 0.3
    %v3933 = vmul.f32 %v3917, 0.3
    %v3934 = vmul.f32 %v3918, 0.3
    %v3935 = vmul.f32 %v3919, 0.3
    %v3936 = vsel %vm3920, %v3912, %v3928
    %v3937 = vsel %vm3921, %v3913, %v3929
    %v3938 = vsel %vm3922, %v3914, %v3930
    %v3939 = vsel %vm3923, %v3915, %v3931
    %v3940 = vsel %vm3924, %v3916, %v3932
    %v3941 = vsel %vm3925, %v3917, %v3933
    %v3942 = vsel %vm3926, %v3918, %v3934
    %v3943 = vsel %vm3927, %v3919, %v3935
    %s3944 = scalar_lea.vmem %s3, 448
    %v3945 = vld [vmem:[%s3944] sm:$0xff]
    %v3946 = vld [vmem:[%s3944 + $0x8] sm:$0xff]
    %v3947 = vld [vmem:[%s3944 + $0x10] sm:$0xff]
    %v3948 = vld [vmem:[%s3944 + $0x18] sm:$0xff]
    %v3949 = vld [vmem:[%s3944 + $0x20] sm:$0xff]
    %v3950 = vld [vmem:[%s3944 + $0x28] sm:$0xff]
    %v3951 = vld [vmem:[%s3944 + $0x30] sm:$0xff]
    %v3952 = vld [vmem:[%s3944 + $0x38] sm:$0xff]
    %s3953 = scalar_lea.vmem %s4, 448
    %v3954 = vld [vmem:[%s3953] sm:$0xff]
    %v3955 = vld [vmem:[%s3953 + $0x8] sm:$0xff]
    %v3956 = vld [vmem:[%s3953 + $0x10] sm:$0xff]
    %v3957 = vld [vmem:[%s3953 + $0x18] sm:$0xff]
    %v3958 = vld [vmem:[%s3953 + $0x20] sm:$0xff]
    %v3959 = vld [vmem:[%s3953 + $0x28] sm:$0xff]
    %v3960 = vld [vmem:[%s3953 + $0x30] sm:$0xff]
    %v3961 = vld [vmem:[%s3953 + $0x38] sm:$0xff]
    %s3962 = scalar_lea.vmem %s5, 448
    %v3963 = vld [vmem:[%s3962] sm:$0xff]
    %v3964 = vld [vmem:[%s3962 + $0x8] sm:$0xff]
    %v3965 = vld [vmem:[%s3962 + $0x10] sm:$0xff]
    %v3966 = vld [vmem:[%s3962 + $0x18] sm:$0xff]
    %v3967 = vld [vmem:[%s3962 + $0x20] sm:$0xff]
    %v3968 = vld [vmem:[%s3962 + $0x28] sm:$0xff]
    %v3969 = vld [vmem:[%s3962 + $0x30] sm:$0xff]
    %v3970 = vld [vmem:[%s3962 + $0x38] sm:$0xff]
    %3979 = vrot.lane.b32.xlu0 %v3936, 97
    %v3980 = vpop.permute.xlu0 %3979
    %3981 = vrot.lane.b32.xlu0 %v3937, 97
    %v3982 = vpop.permute.xlu0 %3981
    %3983 = vrot.lane.b32.xlu0 %v3938, 97
    %v3984 = vpop.permute.xlu0 %3983
    %3985 = vrot.lane.b32.xlu0 %v3939, 97
    %v3986 = vpop.permute.xlu0 %3985
    %3987 = vrot.lane.b32.xlu0 %v3940, 97
    %v3988 = vpop.permute.xlu0 %3987
    %3989 = vrot.lane.b32.xlu0 %v3941, 97
    %v3990 = vpop.permute.xlu0 %3989
    %3991 = vrot.lane.b32.xlu0 %v3942, 97
    %v3992 = vpop.permute.xlu0 %3991
    %3993 = vrot.lane.b32.xlu0 %v3943, 97
    %v3994 = vpop.permute.xlu0 %3993
    %4003 = vrot.lane.b32.xlu0 %v3936, 1
    %v4004 = vpop.permute.xlu0 %4003
    %4005 = vrot.lane.b32.xlu0 %v3937, 1
    %v4006 = vpop.permute.xlu0 %4005
    %4007 = vrot.lane.b32.xlu0 %v3938, 1
    %v4008 = vpop.permute.xlu0 %4007
    %4009 = vrot.lane.b32.xlu0 %v3939, 1
    %v4010 = vpop.permute.xlu0 %4009
    %4011 = vrot.lane.b32.xlu0 %v3940, 1
    %v4012 = vpop.permute.xlu0 %4011
    %4013 = vrot.lane.b32.xlu0 %v3941, 1
    %v4014 = vpop.permute.xlu0 %4013
    %4015 = vrot.lane.b32.xlu0 %v3942, 1
    %v4016 = vpop.permute.xlu0 %4015
    %4017 = vrot.lane.b32.xlu0 %v3943, 1
    %v4018 = vpop.permute.xlu0 %4017
    %v4027 = vsel %vm215, %v3980, %v4004
    %v4028 = vsel %vm215, %v3982, %v4006
    %v4029 = vsel %vm215, %v3984, %v4008
    %v4030 = vsel %vm215, %v3986, %v4010
    %v4031 = vsel %vm215, %v3988, %v4012
    %v4032 = vsel %vm215, %v3990, %v4014
    %v4033 = vsel %vm215, %v3992, %v4016
    %v4034 = vsel %vm215, %v3994, %v4018
    %v4035 = vsel %vm3618, %v4027, 0.0
    %v4036 = vsel %vm3618, %v4028, 0.0
    %v4037 = vsel %vm3618, %v4029, 0.0
    %v4038 = vsel %vm3618, %v4030, 0.0
    %v4039 = vsel %vm3618, %v4031, 0.0
    %v4040 = vsel %vm3618, %v4032, 0.0
    %v4041 = vsel %vm3618, %v4033, 0.0
    %v4042 = vsel %vm3618, %v4034, 0.0
    %4043 = vrot.lane.b32.xlu0 %v3936, 127
    %v4044 = vpop.permute.xlu0 %4043
    %4045 = vrot.lane.b32.xlu0 %v3937, 127
    %v4046 = vpop.permute.xlu0 %4045
    %4047 = vrot.lane.b32.xlu0 %v3938, 127
    %v4048 = vpop.permute.xlu0 %4047
    %4049 = vrot.lane.b32.xlu0 %v3939, 127
    %v4050 = vpop.permute.xlu0 %4049
    %4051 = vrot.lane.b32.xlu0 %v3940, 127
    %v4052 = vpop.permute.xlu0 %4051
    %4053 = vrot.lane.b32.xlu0 %v3941, 127
    %v4054 = vpop.permute.xlu0 %4053
    %4055 = vrot.lane.b32.xlu0 %v3942, 127
    %v4056 = vpop.permute.xlu0 %4055
    %4057 = vrot.lane.b32.xlu0 %v3943, 127
    %v4058 = vpop.permute.xlu0 %4057
    %4067 = vrot.lane.b32.xlu0 %v3936, 31
    %v4068 = vpop.permute.xlu0 %4067
    %4069 = vrot.lane.b32.xlu0 %v3937, 31
    %v4070 = vpop.permute.xlu0 %4069
    %4071 = vrot.lane.b32.xlu0 %v3938, 31
    %v4072 = vpop.permute.xlu0 %4071
    %4073 = vrot.lane.b32.xlu0 %v3939, 31
    %v4074 = vpop.permute.xlu0 %4073
    %4075 = vrot.lane.b32.xlu0 %v3940, 31
    %v4076 = vpop.permute.xlu0 %4075
    %4077 = vrot.lane.b32.xlu0 %v3941, 31
    %v4078 = vpop.permute.xlu0 %4077
    %4079 = vrot.lane.b32.xlu0 %v3942, 31
    %v4080 = vpop.permute.xlu0 %4079
    %4081 = vrot.lane.b32.xlu0 %v3943, 31
    %v4082 = vpop.permute.xlu0 %4081
    %v4091 = vsel %vm3675, %v4044, %v4068
    %v4092 = vsel %vm3675, %v4046, %v4070
    %v4093 = vsel %vm3675, %v4048, %v4072
    %v4094 = vsel %vm3675, %v4050, %v4074
    %v4095 = vsel %vm3675, %v4052, %v4076
    %v4096 = vsel %vm3675, %v4054, %v4078
    %v4097 = vsel %vm3675, %v4056, %v4080
    %v4098 = vsel %vm3675, %v4058, %v4082
    %v4099 = vsel %vm3690, %v4091, 0.0
    %v4100 = vsel %vm3690, %v4092, 0.0
    %v4101 = vsel %vm3690, %v4093, 0.0
    %v4102 = vsel %vm3690, %v4094, 0.0
    %v4103 = vsel %vm3690, %v4095, 0.0
    %v4104 = vsel %vm3690, %v4096, 0.0
    %v4105 = vsel %vm3690, %v4097, 0.0
    %v4106 = vsel %vm3690, %v4098, 0.0
    %v4107 = vpack.c.bf16 %v4036, %v4035
    %v4108 = vpack.c.bf16 %v4038, %v4037
    %v4109 = vpack.c.bf16 %v4040, %v4039
    %v4110 = vpack.c.bf16 %v4042, %v4041
    %v4111 = vpack.c.bf16 %v3937, %v3936
    %v4112 = vpack.c.bf16 %v3939, %v3938
    %v4113 = vpack.c.bf16 %v3941, %v3940
    %v4114 = vpack.c.bf16 %v3943, %v3942
    %v4115 = vpack.c.bf16 %v4100, %v4099
    %v4116 = vpack.c.bf16 %v4102, %v4101
    %v4117 = vpack.c.bf16 %v4104, %v4103
    %v4118 = vpack.c.bf16 %v4106, %v4105
    %v4127 = vunpack.c.l.b16 %v3945
    %v4128 = vunpack.c.h.b16 %v3945
    %v4129 = vunpack.c.l.b16 %v3946
    %v4130 = vunpack.c.h.b16 %v3946
    %v4131 = vunpack.c.l.b16 %v3947
    %v4132 = vunpack.c.h.b16 %v3947
    %v4133 = vunpack.c.l.b16 %v3948
    %v4134 = vunpack.c.h.b16 %v3948
    %v4135 = vunpack.c.l.b16 %v3949
    %v4136 = vunpack.c.h.b16 %v3949
    %v4137 = vunpack.c.l.b16 %v3950
    %v4138 = vunpack.c.h.b16 %v3950
    %v4139 = vunpack.c.l.b16 %v3951
    %v4140 = vunpack.c.h.b16 %v3951
    %v4141 = vunpack.c.l.b16 %v3952
    %v4142 = vunpack.c.h.b16 %v3952
    %v4143 = vpack.c.b16 %v4129, %v4127
    %v4144 = vpack.c.b16 %v4130, %v4128
    %v4145 = vpack.c.b16 %v4133, %v4131
    %v4146 = vpack.c.b16 %v4134, %v4132
    %v4147 = vpack.c.b16 %v4137, %v4135
    %v4148 = vpack.c.b16 %v4138, %v4136
    %v4149 = vpack.c.b16 %v4141, %v4139
    %v4150 = vpack.c.b16 %v4142, %v4140
    %v4156 = vsel %vm884, %v4144, 0
    %v4159 = vsel %vm884, %v4146, 0
    %v4162 = vsel %vm884, %v4148, 0
    %v4165 = vsel %vm884, %v4150, 0
    %4167 = vmatprep.subr.bf16.mxu0 0
    %4168 = vmatpush1.bf16.msra.mxu0 %v4107
    %4169 = vmatprep.subr.bf16.mxu0 0
    %4170 = vmatpush1.bf16.msra.mxu0 %v4108
    %4171 = vmatprep.subr.bf16.mxu0 0
    %4172 = vmatpush1.bf16.msra.mxu0 %v4109
    %4173 = vmatprep.subr.bf16.mxu0 0
    %4174 = vmatpush1.bf16.msra.mxu0 %v4110
    %4175 = vmatprep.subr.bf16.mxu0 0
    %4176 = vmatpush1.bf16.msra.mxu0 %v4111
    %4177 = vmatprep.subr.bf16.mxu0 0
    %4178 = vmatpush1.bf16.msra.mxu0 %v4112
    %4179 = vmatprep.subr.bf16.mxu0 0
    %4180 = vmatpush1.bf16.msra.mxu0 %v4113
    %4181 = vmatprep.subr.bf16.mxu0 0
    %4182 = vmatpush1.bf16.msra.mxu0 %v4114
    %4183 = vmatprep.subr.bf16.mxu0 0
    %4184 = vmatpush1.bf16.msra.mxu0 %v4115
    %4185 = vmatprep.subr.bf16.mxu0 0
    %4186 = vmatpush1.bf16.msra.mxu0 %v4116
    %4187 = vmatprep.subr.bf16.mxu0 0
    %4188 = vmatpush1.bf16.msra.mxu0 %v4117
    %4189 = vmatprep.subr.bf16.mxu0 0
    %4190 = vmatpush1.bf16.msra.mxu0 %v4118
    %4191 = vmatprep.subr.bf16.mxu0 0
    %4192 = vmatpush1.bf16.msra.mxu0 0
    %4193 = vmatprep.subr.bf16.mxu0 0
    %4194 = vmatpush1.bf16.msra.mxu0 0
    %4195 = vmatprep.subr.bf16.mxu0 0
    %4196 = vmatpush1.bf16.msra.mxu0 0
    %4197 = vmatprep.subr.bf16.mxu0 0
    %4198 = vmatpush1.bf16.msra.mxu0 0
    %4199 = vmatprep.mubr.bf16.mxu0 %v4156
    %4200 = vmatmul.mubr.bf16.gmra.mrb[0].mxu0 %v4143
    %v4201 = vpop.f32.mrb[0].mxu0
    %v4202 = vadd.f32 0.0, %v4201
    %v4203 = vpop.f32.mrb[0].mxu0
    %v4204 = vpop.f32.mrb[0].mxu0
    %v4205 = vadd.f32 0.0, %v4204
    %v4206 = vpop.f32.mrb[0].mxu0
    %4207 = vmatprep.mubr.bf16.mxu0 %v4159
    %4208 = vmatmul.mubr.bf16.gmra.mrb[0].mxu0 %v4145
    %v4209 = vpop.f32.mrb[0].mxu0
    %v4210 = vadd.f32 0.0, %v4209
    %v4211 = vpop.f32.mrb[0].mxu0
    %v4212 = vpop.f32.mrb[0].mxu0
    %v4213 = vadd.f32 0.0, %v4212
    %v4214 = vpop.f32.mrb[0].mxu0
    %4215 = vmatprep.mubr.bf16.mxu0 %v4162
    %4216 = vmatmul.mubr.bf16.gmra.mrb[0].mxu0 %v4147
    %v4217 = vpop.f32.mrb[0].mxu0
    %v4218 = vadd.f32 0.0, %v4217
    %v4219 = vpop.f32.mrb[0].mxu0
    %v4220 = vpop.f32.mrb[0].mxu0
    %v4221 = vadd.f32 0.0, %v4220
    %v4222 = vpop.f32.mrb[0].mxu0
    %4223 = vmatprep.mubr.bf16.mxu0 %v4165
    %4224 = vmatmul.mubr.bf16.gmra.mrb[0].mxu0 %v4149
    %v4225 = vpop.f32.mrb[0].mxu0
    %v4226 = vadd.f32 0.0, %v4225
    %v4227 = vpop.f32.mrb[0].mxu0
    %v4228 = vpop.f32.mrb[0].mxu0
    %v4229 = vadd.f32 0.0, %v4228
    %v4230 = vpop.f32.mrb[0].mxu0
    %4231 = vdwg.mxu0
    %4233 = vset.pattern.permute.xlu0 0
    %4234 = vperm.xlu0 %4233, %v3954
    %v4235 = vpop.permute.xlu0 %4234
    %4238 = vset.pattern.permute.xlu0 0
    %4239 = vperm.xlu0 %4238, %v3955
    %v4240 = vpop.permute.xlu0 %4239
    %4243 = vset.pattern.permute.xlu0 0
    %4244 = vperm.xlu0 %4243, %v3956
    %v4245 = vpop.permute.xlu0 %4244
    %4248 = vset.pattern.permute.xlu0 0
    %4249 = vperm.xlu0 %4248, %v3957
    %v4250 = vpop.permute.xlu0 %4249
    %4253 = vset.pattern.permute.xlu0 0
    %4254 = vperm.xlu0 %4253, %v3958
    %v4255 = vpop.permute.xlu0 %4254
    %4258 = vset.pattern.permute.xlu0 0
    %4259 = vperm.xlu0 %4258, %v3959
    %v4260 = vpop.permute.xlu0 %4259
    %4263 = vset.pattern.permute.xlu0 0
    %4264 = vperm.xlu0 %4263, %v3960
    %v4265 = vpop.permute.xlu0 %4264
    %4268 = vset.pattern.permute.xlu0 0
    %4269 = vperm.xlu0 %4268, %v3961
    %v4270 = vpop.permute.xlu0 %4269
    %v4272 = vmul.f32 %v4202, %v4235
    %v4273 = vmul.f32 %v4205, %v4240
    %v4274 = vmul.f32 %v4210, %v4245
    %v4275 = vmul.f32 %v4213, %v4250
    %v4276 = vmul.f32 %v4218, %v4255
    %v4277 = vmul.f32 %v4221, %v4260
    %v4278 = vmul.f32 %v4226, %v4265
    %v4279 = vmul.f32 %v4229, %v4270
    %4281 = vset.pattern.permute.xlu0 0
    %4282 = vperm.xlu0 %4281, %v3963
    %v4283 = vpop.permute.xlu0 %4282
    %4286 = vset.pattern.permute.xlu0 0
    %4287 = vperm.xlu0 %4286, %v3964
    %v4288 = vpop.permute.xlu0 %4287
    %4291 = vset.pattern.permute.xlu0 0
    %4292 = vperm.xlu0 %4291, %v3965
    %v4293 = vpop.permute.xlu0 %4292
    %4296 = vset.pattern.permute.xlu0 0
    %4297 = vperm.xlu0 %4296, %v3966
    %v4298 = vpop.permute.xlu0 %4297
    %4301 = vset.pattern.permute.xlu0 0
    %4302 = vperm.xlu0 %4301, %v3967
    %v4303 = vpop.permute.xlu0 %4302
    %4306 = vset.pattern.permute.xlu0 0
    %4307 = vperm.xlu0 %4306, %v3968
    %v4308 = vpop.permute.xlu0 %4307
    %4311 = vset.pattern.permute.xlu0 0
    %4312 = vperm.xlu0 %4311, %v3969
    %v4313 = vpop.permute.xlu0 %4312
    %4316 = vset.pattern.permute.xlu0 0
    %4317 = vperm.xlu0 %4316, %v3970
    %v4318 = vpop.permute.xlu0 %4317
    %v4320 = vadd.f32 %v4272, %v4283
    %v4321 = vadd.f32 %v4273, %v4288
    %v4322 = vadd.f32 %v4274, %v4293
    %v4323 = vadd.f32 %v4275, %v4298
    %v4324 = vadd.f32 %v4276, %v4303
    %v4325 = vadd.f32 %v4277, %v4308
    %v4326 = vadd.f32 %v4278, %v4313
    %v4327 = vadd.f32 %v4279, %v4318
    %v4328 = vadd.f32 %v4320, %v3482
    %v4329 = vadd.f32 %v4321, %v3487
    %v4330 = vadd.f32 %v4322, %v3492
    %v4331 = vadd.f32 %v4323, %v3497
    %v4332 = vadd.f32 %v4324, %v3502
    %v4333 = vadd.f32 %v4325, %v3507
    %v4334 = vadd.f32 %v4326, %v3512
    %v4335 = vadd.f32 %v4327, %v3517
    %v4336 = vld [vmem:[%s19] sm:$0xff]
    %v4337 = vld [vmem:[%s19 + $0x8] sm:$0xff]
    %v4338 = vld [vmem:[%s19 + $0x10] sm:$0xff]
    %v4339 = vld [vmem:[%s19 + $0x18] sm:$0xff]
    %vm4340 = vcmask 261120
    %v4342 = vsel %vm4340, %v4328, 0
    %v4345 = vsel %vm4340, %v4329, 0
    %v4348 = vsel %vm4340, %v4330, 0
    %v4351 = vsel %vm4340, %v4331, 0
    %v4354 = vsel %vm4340, %v4332, 0
    %v4357 = vsel %vm4340, %v4333, 0
    %v4360 = vsel %vm4340, %v4334, 0
    %v4363 = vsel %vm4340, %v4335, 0
    %4365 = vmatprep.subr.mxu0 0.0
    %4366 = vmatpush1.msra.mxu0 %v4336
    %4367 = vmatprep.subr.mxu0 0.0
    %4368 = vmatpush1.msra.mxu0 %v4337
    %4369 = vmatprep.subr.mxu0 0.0
    %4370 = vmatpush1.msra.mxu0 %v4338
    %4371 = vmatprep.subr.mxu0 0.0
    %4372 = vmatpush1.msra.mxu0 %v4339
    %4373 = vmatprep.subr.mxu0 0.0
    %4374 = vmatpush1.msra.mxu0 0.0
    %4375 = vmatprep.subr.mxu0 0.0
    %4376 = vmatpush1.msra.mxu0 0.0
    %4377 = vmatprep.subr.mxu0 0.0
    %4378 = vmatpush1.msra.mxu0 0.0
    %4379 = vmatprep.subr.mxu0 0.0
    %4380 = vmatpush1.msra.mxu0 0.0
    %4381 = vmatprep.subr.mxu0 0.0
    %4382 = vmatpush1.msra.mxu0 0.0
    %4383 = vmatprep.subr.mxu0 0.0
    %4384 = vmatpush1.msra.mxu0 0.0
    %4385 = vmatprep.subr.mxu0 0.0
    %4386 = vmatpush1.msra.mxu0 0.0
    %4387 = vmatprep.subr.mxu0 0.0
    %4388 = vmatpush1.msra.mxu0 0.0
    %4389 = vmatprep.subr.mxu0 0.0
    %4390 = vmatpush1.msra.mxu0 0.0
    %4391 = vmatprep.subr.mxu0 0.0
    %4392 = vmatpush1.msra.mxu0 0.0
    %4393 = vmatprep.subr.mxu0 0.0
    %4394 = vmatpush1.msra.mxu0 0.0
    %4395 = vmatprep.subr.mxu0 0.0
    %4396 = vmatpush1.msra.mxu0 0.0
    %4397 = vmatprep.subr.mxu0 0.0
    %4398 = vmatpush1.msra.mxu0 0.0
    %4399 = vmatprep.subr.mxu0 0.0
    %4400 = vmatpush1.msra.mxu0 0.0
    %4401 = vmatprep.subr.mxu0 0.0
    %4402 = vmatpush1.msra.mxu0 0.0
    %4403 = vmatprep.subr.mxu0 0.0
    %4404 = vmatpush1.msra.mxu0 0.0
    %4405 = vmatprep.subr.mxu0 0.0
    %4406 = vmatpush1.msra.mxu0 0.0
    %4407 = vmatprep.subr.mxu0 0.0
    %4408 = vmatpush1.msra.mxu0 0.0
    %4409 = vmatprep.subr.mxu0 0.0
    %4410 = vmatpush1.msra.mxu0 0.0
    %4411 = vmatprep.subr.mxu0 0.0
    %4412 = vmatpush1.msra.mxu0 0.0
    %4413 = vmatprep.subr.mxu0 0.0
    %4414 = vmatpush1.msra.mxu0 0.0
    %4415 = vmatprep.subr.mxu0 0.0
    %4416 = vmatpush1.msra.mxu0 0.0
    %4417 = vmatprep.subr.mxu0 0.0
    %4418 = vmatpush1.msra.mxu0 0.0
    %4419 = vmatprep.subr.mxu0 0.0
    %4420 = vmatpush1.msra.mxu0 0.0
    %4421 = vmatprep.subr.mxu0 0.0
    %4422 = vmatpush1.msra.mxu0 0.0
    %4423 = vmatprep.subr.mxu0 0.0
    %4424 = vmatpush1.msra.mxu0 0.0
    %4425 = vmatprep.subr.mxu0 0.0
    %4426 = vmatpush1.msra.mxu0 0.0
    %4427 = vmatprep.subr.mxu0 0.0
    %4428 = vmatpush1.msra.mxu0 0.0
    %4429 = vmatprep.mubr.f32.mxu0 0.0
    %4430 = vmatmul.mubr.f32.gmra.mrb[0].mxu0 %v4342
    %v4431 = vpop.f32.mrb[0].mxu0
    %v4432 = vadd.f32 0.0, %v4431
    %v4433 = vpop.f32.mrb[0].mxu0
    %4434 = vmatprep.mubr.f32.mxu0 0.0
    %4435 = vmatmul.mubr.f32.gmra.mrb[0].mxu0 %v4345
    %v4436 = vpop.f32.mrb[0].mxu0
    %v4437 = vadd.f32 0.0, %v4436
    %v4438 = vpop.f32.mrb[0].mxu0
    %4439 = vmatprep.mubr.f32.mxu0 0.0
    %4440 = vmatmul.mubr.f32.gmra.mrb[0].mxu0 %v4348
    %v4441 = vpop.f32.mrb[0].mxu0
    %v4442 = vadd.f32 0.0, %v4441
    %v4443 = vpop.f32.mrb[0].mxu0
    %4444 = vmatprep.mubr.f32.mxu0 0.0
    %4445 = vmatmul.mubr.f32.gmra.mrb[0].mxu0 %v4351
    %v4446 = vpop.f32.mrb[0].mxu0
    %v4447 = vadd.f32 0.0, %v4446
    %v4448 = vpop.f32.mrb[0].mxu0
    %4449 = vmatprep.mubr.f32.mxu0 0.0
    %4450 = vmatmul.mubr.f32.gmra.mrb[0].mxu0 %v4354
    %v4451 = vpop.f32.mrb[0].mxu0
    %v4452 = vadd.f32 0.0, %v4451
    %v4453 = vpop.f32.mrb[0].mxu0
    %4454 = vmatprep.mubr.f32.mxu0 0.0
    %4455 = vmatmul.mubr.f32.gmra.mrb[0].mxu0 %v4357
    %v4456 = vpop.f32.mrb[0].mxu0
    %v4457 = vadd.f32 0.0, %v4456
    %v4458 = vpop.f32.mrb[0].mxu0
    %4459 = vmatprep.mubr.f32.mxu0 0.0
    %4460 = vmatmul.mubr.f32.gmra.mrb[0].mxu0 %v4360
    %v4461 = vpop.f32.mrb[0].mxu0
    %v4462 = vadd.f32 0.0, %v4461
    %v4463 = vpop.f32.mrb[0].mxu0
    %4464 = vmatprep.mubr.f32.mxu0 0.0
    %4465 = vmatmul.mubr.f32.gmra.mrb[0].mxu0 %v4363
    %v4466 = vpop.f32.mrb[0].mxu0
    %v4467 = vadd.f32 0.0, %v4466
    %v4468 = vpop.f32.mrb[0].mxu0
    %4469 = vdwg.mxu0
    %v4470 = vld [vmem:[%s13] sm:$0x1]
    %s4471 = scalar_lea.vmem %s3, 512
    %v4472 = vld [vmem:[%s4471] sm:$0xff]
    %v4473 = vld [vmem:[%s4471 + $0x8] sm:$0xff]
    %v4474 = vld [vmem:[%s4471 + $0x10] sm:$0xff]
    %v4475 = vld [vmem:[%s4471 + $0x18] sm:$0xff]
    %v4476 = vld [vmem:[%s4471 + $0x20] sm:$0xff]
    %v4477 = vld [vmem:[%s4471 + $0x28] sm:$0xff]
    %v4478 = vld [vmem:[%s4471 + $0x30] sm:$0xff]
    %v4479 = vld [vmem:[%s4471 + $0x38] sm:$0xff]
    %s4480 = scalar_lea.vmem %s4, 512
    %v4481 = vld [vmem:[%s4480] sm:$0xff]
    %v4482 = vld [vmem:[%s4480 + $0x8] sm:$0xff]
    %v4483 = vld [vmem:[%s4480 + $0x10] sm:$0xff]
    %v4484 = vld [vmem:[%s4480 + $0x18] sm:$0xff]
    %v4485 = vld [vmem:[%s4480 + $0x20] sm:$0xff]
    %v4486 = vld [vmem:[%s4480 + $0x28] sm:$0xff]
    %v4487 = vld [vmem:[%s4480 + $0x30] sm:$0xff]
    %v4488 = vld [vmem:[%s4480 + $0x38] sm:$0xff]
    %s4489 = scalar_lea.vmem %s5, 512
    %v4490 = vld [vmem:[%s4489] sm:$0xff]
    %v4491 = vld [vmem:[%s4489 + $0x8] sm:$0xff]
    %v4492 = vld [vmem:[%s4489 + $0x10] sm:$0xff]
    %v4493 = vld [vmem:[%s4489 + $0x18] sm:$0xff]
    %v4494 = vld [vmem:[%s4489 + $0x20] sm:$0xff]
    %v4495 = vld [vmem:[%s4489 + $0x28] sm:$0xff]
    %v4496 = vld [vmem:[%s4489 + $0x30] sm:$0xff]
    %v4497 = vld [vmem:[%s4489 + $0x38] sm:$0xff]
    %4506 = vrot.lane.b32.xlu0 %v4432, 113
    %v4507 = vpop.permute.xlu0 %4506
    %4508 = vrot.lane.b32.xlu0 %v4437, 113
    %v4509 = vpop.permute.xlu0 %4508
    %4510 = vrot.lane.b32.xlu0 %v4442, 113
    %v4511 = vpop.permute.xlu0 %4510
    %4512 = vrot.lane.b32.xlu0 %v4447, 113
    %v4513 = vpop.permute.xlu0 %4512
    %4514 = vrot.lane.b32.xlu0 %v4452, 113
    %v4515 = vpop.permute.xlu0 %4514
    %4516 = vrot.lane.b32.xlu0 %v4457, 113
    %v4517 = vpop.permute.xlu0 %4516
    %4518 = vrot.lane.b32.xlu0 %v4462, 113
    %v4519 = vpop.permute.xlu0 %4518
    %4520 = vrot.lane.b32.xlu0 %v4467, 113
    %v4521 = vpop.permute.xlu0 %4520
    %4530 = vrot.lane.b32.xlu0 %v4432, 1
    %v4531 = vpop.permute.xlu0 %4530
    %4532 = vrot.lane.b32.xlu0 %v4437, 1
    %v4533 = vpop.permute.xlu0 %4532
    %4534 = vrot.lane.b32.xlu0 %v4442, 1
    %v4535 = vpop.permute.xlu0 %4534
    %4536 = vrot.lane.b32.xlu0 %v4447, 1
    %v4537 = vpop.permute.xlu0 %4536
    %4538 = vrot.lane.b32.xlu0 %v4452, 1
    %v4539 = vpop.permute.xlu0 %4538
    %4540 = vrot.lane.b32.xlu0 %v4457, 1
    %v4541 = vpop.permute.xlu0 %4540
    %4542 = vrot.lane.b32.xlu0 %v4462, 1
    %v4543 = vpop.permute.xlu0 %4542
    %4544 = vrot.lane.b32.xlu0 %v4467, 1
    %v4545 = vpop.permute.xlu0 %4544
    %v4554 = vsel %vm215, %v4507, %v4531
    %v4555 = vsel %vm215, %v4509, %v4533
    %v4556 = vsel %vm215, %v4511, %v4535
    %v4557 = vsel %vm215, %v4513, %v4537
    %v4558 = vsel %vm215, %v4515, %v4539
    %v4559 = vsel %vm215, %v4517, %v4541
    %v4560 = vsel %vm215, %v4519, %v4543
    %v4561 = vsel %vm215, %v4521, %v4545
    %vm4562 = vcmp.ge.s32.totalorder %v4470, 1
    %v4563 = vsel %vm4562, 1, 0
    %v4564 = vlaneseq
    %v4565 = vshrl.u32 %v4564, 7
    %v4566 = vsub.s32 0, %v4565
    %v4567 = vrot.slane %v4563, %v4566
    %vm4568 = vcmp.eq.s32.totalorder %v4567, 1
    %v4569 = vsel %vm4568, %v4554, 0.0
    %v4570 = vsel %vm4568, %v4555, 0.0
    %v4571 = vsel %vm4568, %v4556, 0.0
    %v4572 = vsel %vm4568, %v4557, 0.0
    %v4573 = vsel %vm4568, %v4558, 0.0
    %v4574 = vsel %vm4568, %v4559, 0.0
    %v4575 = vsel %vm4568, %v4560, 0.0
    %v4576 = vsel %vm4568, %v4561, 0.0
    %4577 = vrot.lane.b32.xlu0 %v4432, 127
    %v4578 = vpop.permute.xlu0 %4577
    %4579 = vrot.lane.b32.xlu0 %v4437, 127
    %v4580 = vpop.permute.xlu0 %4579
    %4581 = vrot.lane.b32.xlu0 %v4442, 127
    %v4582 = vpop.permute.xlu0 %4581
    %4583 = vrot.lane.b32.xlu0 %v4447, 127
    %v4584 = vpop.permute.xlu0 %4583
    %4585 = vrot.lane.b32.xlu0 %v4452, 127
    %v4586 = vpop.permute.xlu0 %4585
    %4587 = vrot.lane.b32.xlu0 %v4457, 127
    %v4588 = vpop.permute.xlu0 %4587
    %4589 = vrot.lane.b32.xlu0 %v4462, 127
    %v4590 = vpop.permute.xlu0 %4589
    %4591 = vrot.lane.b32.xlu0 %v4467, 127
    %v4592 = vpop.permute.xlu0 %4591
    %4601 = vrot.lane.b32.xlu0 %v4432, 15
    %v4602 = vpop.permute.xlu0 %4601
    %4603 = vrot.lane.b32.xlu0 %v4437, 15
    %v4604 = vpop.permute.xlu0 %4603
    %4605 = vrot.lane.b32.xlu0 %v4442, 15
    %v4606 = vpop.permute.xlu0 %4605
    %4607 = vrot.lane.b32.xlu0 %v4447, 15
    %v4608 = vpop.permute.xlu0 %4607
    %4609 = vrot.lane.b32.xlu0 %v4452, 15
    %v4610 = vpop.permute.xlu0 %4609
    %4611 = vrot.lane.b32.xlu0 %v4457, 15
    %v4612 = vpop.permute.xlu0 %4611
    %4613 = vrot.lane.b32.xlu0 %v4462, 15
    %v4614 = vpop.permute.xlu0 %4613
    %4615 = vrot.lane.b32.xlu0 %v4467, 15
    %v4616 = vpop.permute.xlu0 %4615
    %vm4625 = vcmask 121856
    %v4626 = vsel %vm4625, %v4578, %v4602
    %v4627 = vsel %vm4625, %v4580, %v4604
    %v4628 = vsel %vm4625, %v4582, %v4606
    %v4629 = vsel %vm4625, %v4584, %v4608
    %v4630 = vsel %vm4625, %v4586, %v4610
    %v4631 = vsel %vm4625, %v4588, %v4612
    %v4632 = vsel %vm4625, %v4590, %v4614
    %v4633 = vsel %vm4625, %v4592, %v4616
    %vm4634 = vcmp.lt.s32.totalorder %v4470, 7
    %v4635 = vsel %vm4634, 1, 0
    %v4636 = vlaneseq
    %v4637 = vshrl.u32 %v4636, 7
    %v4638 = vsub.s32 0, %v4637
    %v4639 = vrot.slane %v4635, %v4638
    %vm4640 = vcmp.eq.s32.totalorder %v4639, 1
    %v4641 = vsel %vm4640, %v4626, 0.0
    %v4642 = vsel %vm4640, %v4627, 0.0
    %v4643 = vsel %vm4640, %v4628, 0.0
    %v4644 = vsel %vm4640, %v4629, 0.0
    %v4645 = vsel %vm4640, %v4630, 0.0
    %v4646 = vsel %vm4640, %v4631, 0.0
    %v4647 = vsel %vm4640, %v4632, 0.0
    %v4648 = vsel %vm4640, %v4633, 0.0
    %v4649 = vpack.c.bf16 %v4570, %v4569
    %v4650 = vpack.c.bf16 %v4572, %v4571
    %v4651 = vpack.c.bf16 %v4574, %v4573
    %v4652 = vpack.c.bf16 %v4576, %v4575
    %v4653 = vpack.c.bf16 %v4437, %v4432
    %v4654 = vpack.c.bf16 %v4447, %v4442
    %v4655 = vpack.c.bf16 %v4457, %v4452
    %v4656 = vpack.c.bf16 %v4467, %v4462
    %v4657 = vpack.c.bf16 %v4642, %v4641
    %v4658 = vpack.c.bf16 %v4644, %v4643
    %v4659 = vpack.c.bf16 %v4646, %v4645
    %v4660 = vpack.c.bf16 %v4648, %v4647
    %v4669 = vunpack.c.l.b16 %v4472
    %v4670 = vunpack.c.h.b16 %v4472
    %v4671 = vunpack.c.l.b16 %v4473
    %v4672 = vunpack.c.h.b16 %v4473
    %v4673 = vunpack.c.l.b16 %v4474
    %v4674 = vunpack.c.h.b16 %v4474
    %v4675 = vunpack.c.l.b16 %v4475
    %v4676 = vunpack.c.h.b16 %v4475
    %v4677 = vunpack.c.l.b16 %v4476
    %v4678 = vunpack.c.h.b16 %v4476
    %v4679 = vunpack.c.l.b16 %v4477
    %v4680 = vunpack.c.h.b16 %v4477
    %v4681 = vunpack.c.l.b16 %v4478
    %v4682 = vunpack.c.h.b16 %v4478
    %v4683 = vunpack.c.l.b16 %v4479
    %v4684 = vunpack.c.h.b16 %v4479
    %v4685 = vpack.c.b16 %v4671, %v4669
    %v4686 = vpack.c.b16 %v4672, %v4670
    %v4687 = vpack.c.b16 %v4675, %v4673
    %v4688 = vpack.c.b16 %v4676, %v4674
    %v4689 = vpack.c.b16 %v4679, %v4677
    %v4690 = vpack.c.b16 %v4680, %v4678
    %v4691 = vpack.c.b16 %v4683, %v4681
    %v4692 = vpack.c.b16 %v4684, %v4682
    %v4698 = vsel %vm884, %v4686, 0
    %v4701 = vsel %vm884, %v4688, 0
    %v4704 = vsel %vm884, %v4690, 0
    %v4707 = vsel %vm884, %v4692, 0
    %4709 = vmatprep.subr.bf16.mxu0 0
    %4710 = vmatpush1.bf16.msra.mxu0 %v4649
    %4711 = vmatprep.subr.bf16.mxu0 0
    %4712 = vmatpush1.bf16.msra.mxu0 %v4650
    %4713 = vmatprep.subr.bf16.mxu0 0
    %4714 = vmatpush1.bf16.msra.mxu0 %v4651
    %4715 = vmatprep.subr.bf16.mxu0 0
    %4716 = vmatpush1.bf16.msra.mxu0 %v4652
    %4717 = vmatprep.subr.bf16.mxu0 0
    %4718 = vmatpush1.bf16.msra.mxu0 %v4653
    %4719 = vmatprep.subr.bf16.mxu0 0
    %4720 = vmatpush1.bf16.msra.mxu0 %v4654
    %4721 = vmatprep.subr.bf16.mxu0 0
    %4722 = vmatpush1.bf16.msra.mxu0 %v4655
    %4723 = vmatprep.subr.bf16.mxu0 0
    %4724 = vmatpush1.bf16.msra.mxu0 %v4656
    %4725 = vmatprep.subr.bf16.mxu0 0
    %4726 = vmatpush1.bf16.msra.mxu0 %v4657
    %4727 = vmatprep.subr.bf16.mxu0 0
    %4728 = vmatpush1.bf16.msra.mxu0 %v4658
    %4729 = vmatprep.subr.bf16.mxu0 0
    %4730 = vmatpush1.bf16.msra.mxu0 %v4659
    %4731 = vmatprep.subr.bf16.mxu0 0
    %4732 = vmatpush1.bf16.msra.mxu0 %v4660
    %4733 = vmatprep.subr.bf16.mxu0 0
    %4734 = vmatpush1.bf16.msra.mxu0 0
    %4735 = vmatprep.subr.bf16.mxu0 0
    %4736 = vmatpush1.bf16.msra.mxu0 0
    %4737 = vmatprep.subr.bf16.mxu0 0
    %4738 = vmatpush1.bf16.msra.mxu0 0
    %4739 = vmatprep.subr.bf16.mxu0 0
    %4740 = vmatpush1.bf16.msra.mxu0 0
    %4741 = vmatprep.mubr.bf16.mxu0 %v4698
    %4742 = vmatmul.mubr.bf16.gmra.mrb[0].mxu0 %v4685
    %v4743 = vpop.f32.mrb[0].mxu0
    %v4744 = vadd.f32 0.0, %v4743
    %v4745 = vpop.f32.mrb[0].mxu0
    %v4746 = vpop.f32.mrb[0].mxu0
    %v4747 = vadd.f32 0.0, %v4746
    %v4748 = vpop.f32.mrb[0].mxu0
    %4749 = vmatprep.mubr.bf16.mxu0 %v4701
    %4750 = vmatmul.mubr.bf16.gmra.mrb[0].mxu0 %v4687
    %v4751 = vpop.f32.mrb[0].mxu0
    %v4752 = vadd.f32 0.0, %v4751
    %v4753 = vpop.f32.mrb[0].mxu0
    %v4754 = vpop.f32.mrb[0].mxu0
    %v4755 = vadd.f32 0.0, %v4754
    %v4756 = vpop.f32.mrb[0].mxu0
    %4757 = vmatprep.mubr.bf16.mxu0 %v4704
    %4758 = vmatmul.mubr.bf16.gmra.mrb[0].mxu0 %v4689
    %v4759 = vpop.f32.mrb[0].mxu0
    %v4760 = vadd.f32 0.0, %v4759
    %v4761 = vpop.f32.mrb[0].mxu0
    %v4762 = vpop.f32.mrb[0].mxu0
    %v4763 = vadd.f32 0.0, %v4762
    %v4764 = vpop.f32.mrb[0].mxu0
    %4765 = vmatprep.mubr.bf16.mxu0 %v4707
    %4766 = vmatmul.mubr.bf16.gmra.mrb[0].mxu0 %v4691
    %v4767 = vpop.f32.mrb[0].mxu0
    %v4768 = vadd.f32 0.0, %v4767
    %v4769 = vpop.f32.mrb[0].mxu0
    %v4770 = vpop.f32.mrb[0].mxu0
    %v4771 = vadd.f32 0.0, %v4770
    %v4772 = vpop.f32.mrb[0].mxu0
    %4773 = vdwg.mxu0
    %4775 = vset.pattern.permute.xlu0 0
    %4776 = vperm.xlu0 %4775, %v4481
    %v4777 = vpop.permute.xlu0 %4776
    %4780 = vset.pattern.permute.xlu0 0
    %4781 = vperm.xlu0 %4780, %v4482
    %v4782 = vpop.permute.xlu0 %4781
    %4785 = vset.pattern.permute.xlu0 0
    %4786 = vperm.xlu0 %4785, %v4483
    %v4787 = vpop.permute.xlu0 %4786
    %4790 = vset.pattern.permute.xlu0 0
    %4791 = vperm.xlu0 %4790, %v4484
    %v4792 = vpop.permute.xlu0 %4791
    %4795 = vset.pattern.permute.xlu0 0
    %4796 = vperm.xlu0 %4795, %v4485
    %v4797 = vpop.permute.xlu0 %4796
    %4800 = vset.pattern.permute.xlu0 0
    %4801 = vperm.xlu0 %4800, %v4486
    %v4802 = vpop.permute.xlu0 %4801
    %4805 = vset.pattern.permute.xlu0 0
    %4806 = vperm.xlu0 %4805, %v4487
    %v4807 = vpop.permute.xlu0 %4806
    %4810 = vset.pattern.permute.xlu0 0
    %4811 = vperm.xlu0 %4810, %v4488
    %v4812 = vpop.permute.xlu0 %4811
    %v4814 = vmul.f32 %v4744, %v4777
    %v4815 = vmul.f32 %v4747, %v4782
    %v4816 = vmul.f32 %v4752, %v4787
    %v4817 = vmul.f32 %v4755, %v4792
    %v4818 = vmul.f32 %v4760, %v4797
    %v4819 = vmul.f32 %v4763, %v4802
    %v4820 = vmul.f32 %v4768, %v4807
    %v4821 = vmul.f32 %v4771, %v4812
    %4823 = vset.pattern.permute.xlu0 0
    %4824 = vperm.xlu0 %4823, %v4490
    %v4825 = vpop.permute.xlu0 %4824
    %4828 = vset.pattern.permute.xlu0 0
    %4829 = vperm.xlu0 %4828, %v4491
    %v4830 = vpop.permute.xlu0 %4829
    %4833 = vset.pattern.permute.xlu0 0
    %4834 = vperm.xlu0 %4833, %v4492
    %v4835 = vpop.permute.xlu0 %4834
    %4838 = vset.pattern.permute.xlu0 0
    %4839 = vperm.xlu0 %4838, %v4493
    %v4840 = vpop.permute.xlu0 %4839
    %4843 = vset.pattern.permute.xlu0 0
    %4844 = vperm.xlu0 %4843, %v4494
    %v4845 = vpop.permute.xlu0 %4844
    %4848 = vset.pattern.permute.xlu0 0
    %4849 = vperm.xlu0 %4848, %v4495
    %v4850 = vpop.permute.xlu0 %4849
    %4853 = vset.pattern.permute.xlu0 0
    %4854 = vperm.xlu0 %4853, %v4496
    %v4855 = vpop.permute.xlu0 %4854
    %4858 = vset.pattern.permute.xlu0 0
    %4859 = vperm.xlu0 %4858, %v4497
    %v4860 = vpop.permute.xlu0 %4859
    %v4862 = vadd.f32 %v4814, %v4825
    %v4863 = vadd.f32 %v4815, %v4830
    %v4864 = vadd.f32 %v4816, %v4835
    %v4865 = vadd.f32 %v4817, %v4840
    %v4866 = vadd.f32 %v4818, %v4845
    %v4867 = vadd.f32 %v4819, %v4850
    %v4868 = vadd.f32 %v4820, %v4855
    %v4869 = vadd.f32 %v4821, %v4860
    %vm4870 = vcmp.ge.f32.partialorder %v4862, 0.0
    %vm4871 = vcmp.ge.f32.partialorder %v4863, 0.0
    %vm4872 = vcmp.ge.f32.partialorder %v4864, 0.0
    %vm4873 = vcmp.ge.f32.partialorder %v4865, 0.0
    %vm4874 = vcmp.ge.f32.partialorder %v4866, 0.0
    %vm4875 = vcmp.ge.f32.partialorder %v4867, 0.0
    %vm4876 = vcmp.ge.f32.partialorder %v4868, 0.0
    %vm4877 = vcmp.ge.f32.partialorder %v4869, 0.0
    %v4878 = vmul.f32 %v4862, 0.3
    %v4879 = vmul.f32 %v4863, 0.3
    %v4880 = vmul.f32 %v4864, 0.3
    %v4881 = vmul.f32 %v4865, 0.3
    %v4882 = vmul.f32 %v4866, 0.3
    %v4883 = vmul.f32 %v4867, 0.3
    %v4884 = vmul.f32 %v4868, 0.3
    %v4885 = vmul.f32 %v4869, 0.3
    %v4886 = vsel %vm4870, %v4862, %v4878
    %v4887 = vsel %vm4871, %v4863, %v4879
    %v4888 = vsel %vm4872, %v4864, %v4880
    %v4889 = vsel %vm4873, %v4865, %v4881
    %v4890 = vsel %vm4874, %v4866, %v4882
    %v4891 = vsel %vm4875, %v4867, %v4883
    %v4892 = vsel %vm4876, %v4868, %v4884
    %v4893 = vsel %vm4877, %v4869, %v4885
    %s4894 = scalar_lea.vmem %s3, 576
    %v4895 = vld [vmem:[%s4894] sm:$0xff]
    %v4896 = vld [vmem:[%s4894 + $0x8] sm:$0xff]
    %v4897 = vld [vmem:[%s4894 + $0x10] sm:$0xff]
    %v4898 = vld [vmem:[%s4894 + $0x18] sm:$0xff]
    %v4899 = vld [vmem:[%s4894 + $0x20] sm:$0xff]
    %v4900 = vld [vmem:[%s4894 + $0x28] sm:$0xff]
    %v4901 = vld [vmem:[%s4894 + $0x30] sm:$0xff]
    %v4902 = vld [vmem:[%s4894 + $0x38] sm:$0xff]
    %s4903 = scalar_lea.vmem %s4, 576
    %v4904 = vld [vmem:[%s4903] sm:$0xff]
    %v4905 = vld [vmem:[%s4903 + $0x8] sm:$0xff]
    %v4906 = vld [vmem:[%s4903 + $0x10] sm:$0xff]
    %v4907 = vld [vmem:[%s4903 + $0x18] sm:$0xff]
    %v4908 = vld [vmem:[%s4903 + $0x20] sm:$0xff]
    %v4909 = vld [vmem:[%s4903 + $0x28] sm:$0xff]
    %v4910 = vld [vmem:[%s4903 + $0x30] sm:$0xff]
    %v4911 = vld [vmem:[%s4903 + $0x38] sm:$0xff]
    %s4912 = scalar_lea.vmem %s5, 576
    %v4913 = vld [vmem:[%s4912] sm:$0xff]
    %v4914 = vld [vmem:[%s4912 + $0x8] sm:$0xff]
    %v4915 = vld [vmem:[%s4912 + $0x10] sm:$0xff]
    %v4916 = vld [vmem:[%s4912 + $0x18] sm:$0xff]
    %v4917 = vld [vmem:[%s4912 + $0x20] sm:$0xff]
    %v4918 = vld [vmem:[%s4912 + $0x28] sm:$0xff]
    %v4919 = vld [vmem:[%s4912 + $0x30] sm:$0xff]
    %v4920 = vld [vmem:[%s4912 + $0x38] sm:$0xff]
    %4929 = vrot.lane.b32.xlu0 %v4886, 113
    %v4930 = vpop.permute.xlu0 %4929
    %4931 = vrot.lane.b32.xlu0 %v4887, 113
    %v4932 = vpop.permute.xlu0 %4931
    %4933 = vrot.lane.b32.xlu0 %v4888, 113
    %v4934 = vpop.permute.xlu0 %4933
    %4935 = vrot.lane.b32.xlu0 %v4889, 113
    %v4936 = vpop.permute.xlu0 %4935
    %4937 = vrot.lane.b32.xlu0 %v4890, 113
    %v4938 = vpop.permute.xlu0 %4937
    %4939 = vrot.lane.b32.xlu0 %v4891, 113
    %v4940 = vpop.permute.xlu0 %4939
    %4941 = vrot.lane.b32.xlu0 %v4892, 113
    %v4942 = vpop.permute.xlu0 %4941
    %4943 = vrot.lane.b32.xlu0 %v4893, 113
    %v4944 = vpop.permute.xlu0 %4943
    %4953 = vrot.lane.b32.xlu0 %v4886, 1
    %v4954 = vpop.permute.xlu0 %4953
    %4955 = vrot.lane.b32.xlu0 %v4887, 1
    %v4956 = vpop.permute.xlu0 %4955
    %4957 = vrot.lane.b32.xlu0 %v4888, 1
    %v4958 = vpop.permute.xlu0 %4957
    %4959 = vrot.lane.b32.xlu0 %v4889, 1
    %v4960 = vpop.permute.xlu0 %4959
    %4961 = vrot.lane.b32.xlu0 %v4890, 1
    %v4962 = vpop.permute.xlu0 %4961
    %4963 = vrot.lane.b32.xlu0 %v4891, 1
    %v4964 = vpop.permute.xlu0 %4963
    %4965 = vrot.lane.b32.xlu0 %v4892, 1
    %v4966 = vpop.permute.xlu0 %4965
    %4967 = vrot.lane.b32.xlu0 %v4893, 1
    %v4968 = vpop.permute.xlu0 %4967
    %v4977 = vsel %vm215, %v4930, %v4954
    %v4978 = vsel %vm215, %v4932, %v4956
    %v4979 = vsel %vm215, %v4934, %v4958
    %v4980 = vsel %vm215, %v4936, %v4960
    %v4981 = vsel %vm215, %v4938, %v4962
    %v4982 = vsel %vm215, %v4940, %v4964
    %v4983 = vsel %vm215, %v4942, %v4966
    %v4984 = vsel %vm215, %v4944, %v4968
    %v4985 = vsel %vm4568, %v4977, 0.0
    %v4986 = vsel %vm4568, %v4978, 0.0
    %v4987 = vsel %vm4568, %v4979, 0.0
    %v4988 = vsel %vm4568, %v4980, 0.0
    %v4989 = vsel %vm4568, %v4981, 0.0
    %v4990 = vsel %vm4568, %v4982, 0.0
    %v4991 = vsel %vm4568, %v4983, 0.0
    %v4992 = vsel %vm4568, %v4984, 0.0
    %4993 = vrot.lane.b32.xlu0 %v4886, 127
    %v4994 = vpop.permute.xlu0 %4993
    %4995 = vrot.lane.b32.xlu0 %v4887, 127
    %v4996 = vpop.permute.xlu0 %4995
    %4997 = vrot.lane.b32.xlu0 %v4888, 127
    %v4998 = vpop.permute.xlu0 %4997
    %4999 = vrot.lane.b32.xlu0 %v4889, 127
    %v5000 = vpop.permute.xlu0 %4999
    %5001 = vrot.lane.b32.xlu0 %v4890, 127
    %v5002 = vpop.permute.xlu0 %5001
    %5003 = vrot.lane.b32.xlu0 %v4891, 127
    %v5004 = vpop.permute.xlu0 %5003
    %5005 = vrot.lane.b32.xlu0 %v4892, 127
    %v5006 = vpop.permute.xlu0 %5005
    %5007 = vrot.lane.b32.xlu0 %v4893, 127
    %v5008 = vpop.permute.xlu0 %5007
    %5017 = vrot.lane.b32.xlu0 %v4886, 15
    %v5018 = vpop.permute.xlu0 %5017
    %5019 = vrot.lane.b32.xlu0 %v4887, 15
    %v5020 = vpop.permute.xlu0 %5019
    %5021 = vrot.lane.b32.xlu0 %v4888, 15
    %v5022 = vpop.permute.xlu0 %5021
    %5023 = vrot.lane.b32.xlu0 %v4889, 15
    %v5024 = vpop.permute.xlu0 %5023
    %5025 = vrot.lane.b32.xlu0 %v4890, 15
    %v5026 = vpop.permute.xlu0 %5025
    %5027 = vrot.lane.b32.xlu0 %v4891, 15
    %v5028 = vpop.permute.xlu0 %5027
    %5029 = vrot.lane.b32.xlu0 %v4892, 15
    %v5030 = vpop.permute.xlu0 %5029
    %5031 = vrot.lane.b32.xlu0 %v4893, 15
    %v5032 = vpop.permute.xlu0 %5031
    %v5041 = vsel %vm4625, %v4994, %v5018
    %v5042 = vsel %vm4625, %v4996, %v5020
    %v5043 = vsel %vm4625, %v4998, %v5022
    %v5044 = vsel %vm4625, %v5000, %v5024
    %v5045 = vsel %vm4625, %v5002, %v5026
    %v5046 = vsel %vm4625, %v5004, %v5028
    %v5047 = vsel %vm4625, %v5006, %v5030
    %v5048 = vsel %vm4625, %v5008, %v5032
    %v5049 = vsel %vm4640, %v5041, 0.0
    %v5050 = vsel %vm4640, %v5042, 0.0
    %v5051 = vsel %vm4640, %v5043, 0.0
    %v5052 = vsel %vm4640, %v5044, 0.0
    %v5053 = vsel %vm4640, %v5045, 0.0
    %v5054 = vsel %vm4640, %v5046, 0.0
    %v5055 = vsel %vm4640, %v5047, 0.0
    %v5056 = vsel %vm4640, %v5048, 0.0
    %v5057 = vpack.c.bf16 %v4986, %v4985
    %v5058 = vpack.c.bf16 %v4988, %v4987
    %v5059 = vpack.c.bf16 %v4990, %v4989
    %v5060 = vpack.c.bf16 %v4992, %v4991
    %v5061 = vpack.c.bf16 %v4887, %v4886
    %v5062 = vpack.c.bf16 %v4889, %v4888
    %v5063 = vpack.c.bf16 %v4891, %v4890
    %v5064 = vpack.c.bf16 %v4893, %v4892
    %v5065 = vpack.c.bf16 %v5050, %v5049
    %v5066 = vpack.c.bf16 %v5052, %v5051
    %v5067 = vpack.c.bf16 %v5054, %v5053
    %v5068 = vpack.c.bf16 %v5056, %v5055
    %v5077 = vunpack.c.l.b16 %v4895
    %v5078 = vunpack.c.h.b16 %v4895
    %v5079 = vunpack.c.l.b16 %v4896
    %v5080 = vunpack.c.h.b16 %v4896
    %v5081 = vunpack.c.l.b16 %v4897
    %v5082 = vunpack.c.h.b16 %v4897
    %v5083 = vunpack.c.l.b16 %v4898
    %v5084 = vunpack.c.h.b16 %v4898
    %v5085 = vunpack.c.l.b16 %v4899
    %v5086 = vunpack.c.h.b16 %v4899
    %v5087 = vunpack.c.l.b16 %v4900
    %v5088 = vunpack.c.h.b16 %v4900
    %v5089 = vunpack.c.l.b16 %v4901
    %v5090 = vunpack.c.h.b16 %v4901
    %v5091 = vunpack.c.l.b16 %v4902
    %v5092 = vunpack.c.h.b16 %v4902
    %v5093 = vpack.c.b16 %v5079, %v5077
    %v5094 = vpack.c.b16 %v5080, %v5078
    %v5095 = vpack.c.b16 %v5083, %v5081
    %v5096 = vpack.c.b16 %v5084, %v5082
    %v5097 = vpack.c.b16 %v5087, %v5085
    %v5098 = vpack.c.b16 %v5088, %v5086
    %v5099 = vpack.c.b16 %v5091, %v5089
    %v5100 = vpack.c.b16 %v5092, %v5090
    %v5106 = vsel %vm884, %v5094, 0
    %v5109 = vsel %vm884, %v5096, 0
    %v5112 = vsel %vm884, %v5098, 0
    %v5115 = vsel %vm884, %v5100, 0
    %5117 = vmatprep.subr.bf16.mxu0 0
    %5118 = vmatpush1.bf16.msra.mxu0 %v5057
    %5119 = vmatprep.subr.bf16.mxu0 0
    %5120 = vmatpush1.bf16.msra.mxu0 %v5058
    %5121 = vmatprep.subr.bf16.mxu0 0
    %5122 = vmatpush1.bf16.msra.mxu0 %v5059
    %5123 = vmatprep.subr.bf16.mxu0 0
    %5124 = vmatpush1.bf16.msra.mxu0 %v5060
    %5125 = vmatprep.subr.bf16.mxu0 0
    %5126 = vmatpush1.bf16.msra.mxu0 %v5061
    %5127 = vmatprep.subr.bf16.mxu0 0
    %5128 = vmatpush1.bf16.msra.mxu0 %v5062
    %5129 = vmatprep.subr.bf16.mxu0 0
    %5130 = vmatpush1.bf16.msra.mxu0 %v5063
    %5131 = vmatprep.subr.bf16.mxu0 0
    %5132 = vmatpush1.bf16.msra.mxu0 %v5064
    %5133 = vmatprep.subr.bf16.mxu0 0
    %5134 = vmatpush1.bf16.msra.mxu0 %v5065
    %5135 = vmatprep.subr.bf16.mxu0 0
    %5136 = vmatpush1.bf16.msra.mxu0 %v5066
    %5137 = vmatprep.subr.bf16.mxu0 0
    %5138 = vmatpush1.bf16.msra.mxu0 %v5067
    %5139 = vmatprep.subr.bf16.mxu0 0
    %5140 = vmatpush1.bf16.msra.mxu0 %v5068
    %5141 = vmatprep.subr.bf16.mxu0 0
    %5142 = vmatpush1.bf16.msra.mxu0 0
    %5143 = vmatprep.subr.bf16.mxu0 0
    %5144 = vmatpush1.bf16.msra.mxu0 0
    %5145 = vmatprep.subr.bf16.mxu0 0
    %5146 = vmatpush1.bf16.msra.mxu0 0
    %5147 = vmatprep.subr.bf16.mxu0 0
    %5148 = vmatpush1.bf16.msra.mxu0 0
    %5149 = vmatprep.mubr.bf16.mxu0 %v5106
    %5150 = vmatmul.mubr.bf16.gmra.mrb[0].mxu0 %v5093
    %v5151 = vpop.f32.mrb[0].mxu0
    %v5152 = vadd.f32 0.0, %v5151
    %v5153 = vpop.f32.mrb[0].mxu0
    %v5154 = vpop.f32.mrb[0].mxu0
    %v5155 = vadd.f32 0.0, %v5154
    %v5156 = vpop.f32.mrb[0].mxu0
    %5157 = vmatprep.mubr.bf16.mxu0 %v5109
    %5158 = vmatmul.mubr.bf16.gmra.mrb[0].mxu0 %v5095
    %v5159 = vpop.f32.mrb[0].mxu0
    %v5160 = vadd.f32 0.0, %v5159
    %v5161 = vpop.f32.mrb[0].mxu0
    %v5162 = vpop.f32.mrb[0].mxu0
    %v5163 = vadd.f32 0.0, %v5162
    %v5164 = vpop.f32.mrb[0].mxu0
    %5165 = vmatprep.mubr.bf16.mxu0 %v5112
    %5166 = vmatmul.mubr.bf16.gmra.mrb[0].mxu0 %v5097
    %v5167 = vpop.f32.mrb[0].mxu0
    %v5168 = vadd.f32 0.0, %v5167
    %v5169 = vpop.f32.mrb[0].mxu0
    %v5170 = vpop.f32.mrb[0].mxu0
    %v5171 = vadd.f32 0.0, %v5170
    %v5172 = vpop.f32.mrb[0].mxu0
    %5173 = vmatprep.mubr.bf16.mxu0 %v5115
    %5174 = vmatmul.mubr.bf16.gmra.mrb[0].mxu0 %v5099
    %v5175 = vpop.f32.mrb[0].mxu0
    %v5176 = vadd.f32 0.0, %v5175
    %v5177 = vpop.f32.mrb[0].mxu0
    %v5178 = vpop.f32.mrb[0].mxu0
    %v5179 = vadd.f32 0.0, %v5178
    %v5180 = vpop.f32.mrb[0].mxu0
    %5181 = vdwg.mxu0
    %5183 = vset.pattern.permute.xlu0 0
    %5184 = vperm.xlu0 %5183, %v4904
    %v5185 = vpop.permute.xlu0 %5184
    %5188 = vset.pattern.permute.xlu0 0
    %5189 = vperm.xlu0 %5188, %v4905
    %v5190 = vpop.permute.xlu0 %5189
    %5193 = vset.pattern.permute.xlu0 0
    %5194 = vperm.xlu0 %5193, %v4906
    %v5195 = vpop.permute.xlu0 %5194
    %5198 = vset.pattern.permute.xlu0 0
    %5199 = vperm.xlu0 %5198, %v4907
    %v5200 = vpop.permute.xlu0 %5199
    %5203 = vset.pattern.permute.xlu0 0
    %5204 = vperm.xlu0 %5203, %v4908
    %v5205 = vpop.permute.xlu0 %5204
    %5208 = vset.pattern.permute.xlu0 0
    %5209 = vperm.xlu0 %5208, %v4909
    %v5210 = vpop.permute.xlu0 %5209
    %5213 = vset.pattern.permute.xlu0 0
    %5214 = vperm.xlu0 %5213, %v4910
    %v5215 = vpop.permute.xlu0 %5214
    %5218 = vset.pattern.permute.xlu0 0
    %5219 = vperm.xlu0 %5218, %v4911
    %v5220 = vpop.permute.xlu0 %5219
    %v5222 = vmul.f32 %v5152, %v5185
    %v5223 = vmul.f32 %v5155, %v5190
    %v5224 = vmul.f32 %v5160, %v5195
    %v5225 = vmul.f32 %v5163, %v5200
    %v5226 = vmul.f32 %v5168, %v5205
    %v5227 = vmul.f32 %v5171, %v5210
    %v5228 = vmul.f32 %v5176, %v5215
    %v5229 = vmul.f32 %v5179, %v5220
    %5231 = vset.pattern.permute.xlu0 0
    %5232 = vperm.xlu0 %5231, %v4913
    %v5233 = vpop.permute.xlu0 %5232
    %5236 = vset.pattern.permute.xlu0 0
    %5237 = vperm.xlu0 %5236, %v4914
    %v5238 = vpop.permute.xlu0 %5237
    %5241 = vset.pattern.permute.xlu0 0
    %5242 = vperm.xlu0 %5241, %v4915
    %v5243 = vpop.permute.xlu0 %5242
    %5246 = vset.pattern.permute.xlu0 0
    %5247 = vperm.xlu0 %5246, %v4916
    %v5248 = vpop.permute.xlu0 %5247
    %5251 = vset.pattern.permute.xlu0 0
    %5252 = vperm.xlu0 %5251, %v4917
    %v5253 = vpop.permute.xlu0 %5252
    %5256 = vset.pattern.permute.xlu0 0
    %5257 = vperm.xlu0 %5256, %v4918
    %v5258 = vpop.permute.xlu0 %5257
    %5261 = vset.pattern.permute.xlu0 0
    %5262 = vperm.xlu0 %5261, %v4919
    %v5263 = vpop.permute.xlu0 %5262
    %5266 = vset.pattern.permute.xlu0 0
    %5267 = vperm.xlu0 %5266, %v4920
    %v5268 = vpop.permute.xlu0 %5267
    %v5270 = vadd.f32 %v5222, %v5233
    %v5271 = vadd.f32 %v5223, %v5238
    %v5272 = vadd.f32 %v5224, %v5243
    %v5273 = vadd.f32 %v5225, %v5248
    %v5274 = vadd.f32 %v5226, %v5253
    %v5275 = vadd.f32 %v5227, %v5258
    %v5276 = vadd.f32 %v5228, %v5263
    %v5277 = vadd.f32 %v5229, %v5268
    %v5278 = vadd.f32 %v5270, %v4432
    %v5279 = vadd.f32 %v5271, %v4437
    %v5280 = vadd.f32 %v5272, %v4442
    %v5281 = vadd.f32 %v5273, %v4447
    %v5282 = vadd.f32 %v5274, %v4452
    %v5283 = vadd.f32 %v5275, %v4457
    %v5284 = vadd.f32 %v5276, %v4462
    %v5285 = vadd.f32 %v5277, %v4467
    %v5286 = vld [vmem:[%s20] sm:$0xff]
    %v5287 = vld [vmem:[%s20 + $0x8] sm:$0xff]
    %v5289 = vsel %vm474, %v5278, 0
    %v5292 = vsel %vm474, %v5279, 0
    %v5295 = vsel %vm474, %v5280, 0
    %v5298 = vsel %vm474, %v5281, 0
    %v5301 = vsel %vm474, %v5282, 0
    %v5304 = vsel %vm474, %v5283, 0
    %v5307 = vsel %vm474, %v5284, 0
    %v5310 = vsel %vm474, %v5285, 0
    %5312 = vmatprep.subr.mxu0 0.0
    %5313 = vmatpush1.msra.mxu0 %v5286
    %5314 = vmatprep.subr.mxu0 0.0
    %5315 = vmatpush1.msra.mxu0 %v5287
    %5316 = vmatprep.subr.mxu0 0.0
    %5317 = vmatpush1.msra.mxu0 0.0
    %5318 = vmatprep.subr.mxu0 0.0
    %5319 = vmatpush1.msra.mxu0 0.0
    %5320 = vmatprep.subr.mxu0 0.0
    %5321 = vmatpush1.msra.mxu0 0.0
    %5322 = vmatprep.subr.mxu0 0.0
    %5323 = vmatpush1.msra.mxu0 0.0
    %5324 = vmatprep.subr.mxu0 0.0
    %5325 = vmatpush1.msra.mxu0 0.0
    %5326 = vmatprep.subr.mxu0 0.0
    %5327 = vmatpush1.msra.mxu0 0.0
    %5328 = vmatprep.subr.mxu0 0.0
    %5329 = vmatpush1.msra.mxu0 0.0
    %5330 = vmatprep.subr.mxu0 0.0
    %5331 = vmatpush1.msra.mxu0 0.0
    %5332 = vmatprep.subr.mxu0 0.0
    %5333 = vmatpush1.msra.mxu0 0.0
    %5334 = vmatprep.subr.mxu0 0.0
    %5335 = vmatpush1.msra.mxu0 0.0
    %5336 = vmatprep.subr.mxu0 0.0
    %5337 = vmatpush1.msra.mxu0 0.0
    %5338 = vmatprep.subr.mxu0 0.0
    %5339 = vmatpush1.msra.mxu0 0.0
    %5340 = vmatprep.subr.mxu0 0.0
    %5341 = vmatpush1.msra.mxu0 0.0
    %5342 = vmatprep.subr.mxu0 0.0
    %5343 = vmatpush1.msra.mxu0 0.0
    %5344 = vmatprep.subr.mxu0 0.0
    %5345 = vmatpush1.msra.mxu0 0.0
    %5346 = vmatprep.subr.mxu0 0.0
    %5347 = vmatpush1.msra.mxu0 0.0
    %5348 = vmatprep.subr.mxu0 0.0
    %5349 = vmatpush1.msra.mxu0 0.0
    %5350 = vmatprep.subr.mxu0 0.0
    %5351 = vmatpush1.msra.mxu0 0.0
    %5352 = vmatprep.subr.mxu0 0.0
    %5353 = vmatpush1.msra.mxu0 0.0
    %5354 = vmatprep.subr.mxu0 0.0
    %5355 = vmatpush1.msra.mxu0 0.0
    %5356 = vmatprep.subr.mxu0 0.0
    %5357 = vmatpush1.msra.mxu0 0.0
    %5358 = vmatprep.subr.mxu0 0.0
    %5359 = vmatpush1.msra.mxu0 0.0
    %5360 = vmatprep.subr.mxu0 0.0
    %5361 = vmatpush1.msra.mxu0 0.0
    %5362 = vmatprep.subr.mxu0 0.0
    %5363 = vmatpush1.msra.mxu0 0.0
    %5364 = vmatprep.subr.mxu0 0.0
    %5365 = vmatpush1.msra.mxu0 0.0
    %5366 = vmatprep.subr.mxu0 0.0
    %5367 = vmatpush1.msra.mxu0 0.0
    %5368 = vmatprep.subr.mxu0 0.0
    %5369 = vmatpush1.msra.mxu0 0.0
    %5370 = vmatprep.subr.mxu0 0.0
    %5371 = vmatpush1.msra.mxu0 0.0
    %5372 = vmatprep.subr.mxu0 0.0
    %5373 = vmatpush1.msra.mxu0 0.0
    %5374 = vmatprep.subr.mxu0 0.0
    %5375 = vmatpush1.msra.mxu0 0.0
    %5376 = vmatprep.mubr.f32.mxu0 0.0
    %5377 = vmatmul.mubr.f32.gmra.mrb[0].mxu0 %v5289
    %v5378 = vpop.f32.mrb[0].mxu0
    %v5379 = vadd.f32 0.0, %v5378
    %v5380 = vpop.f32.mrb[0].mxu0
    %5381 = vmatprep.mubr.f32.mxu0 0.0
    %5382 = vmatmul.mubr.f32.gmra.mrb[0].mxu0 %v5292
    %v5383 = vpop.f32.mrb[0].mxu0
    %v5384 = vadd.f32 0.0, %v5383
    %v5385 = vpop.f32.mrb[0].mxu0
    %5386 = vmatprep.mubr.f32.mxu0 0.0
    %5387 = vmatmul.mubr.f32.gmra.mrb[0].mxu0 %v5295
    %v5388 = vpop.f32.mrb[0].mxu0
    %v5389 = vadd.f32 0.0, %v5388
    %v5390 = vpop.f32.mrb[0].mxu0
    %5391 = vmatprep.mubr.f32.mxu0 0.0
    %5392 = vmatmul.mubr.f32.gmra.mrb[0].mxu0 %v5298
    %v5393 = vpop.f32.mrb[0].mxu0
    %v5394 = vadd.f32 0.0, %v5393
    %v5395 = vpop.f32.mrb[0].mxu0
    %5396 = vmatprep.mubr.f32.mxu0 0.0
    %5397 = vmatmul.mubr.f32.gmra.mrb[0].mxu0 %v5301
    %v5398 = vpop.f32.mrb[0].mxu0
    %v5399 = vadd.f32 0.0, %v5398
    %v5400 = vpop.f32.mrb[0].mxu0
    %5401 = vmatprep.mubr.f32.mxu0 0.0
    %5402 = vmatmul.mubr.f32.gmra.mrb[0].mxu0 %v5304
    %v5403 = vpop.f32.mrb[0].mxu0
    %v5404 = vadd.f32 0.0, %v5403
    %v5405 = vpop.f32.mrb[0].mxu0
    %5406 = vmatprep.mubr.f32.mxu0 0.0
    %5407 = vmatmul.mubr.f32.gmra.mrb[0].mxu0 %v5307
    %v5408 = vpop.f32.mrb[0].mxu0
    %v5409 = vadd.f32 0.0, %v5408
    %v5410 = vpop.f32.mrb[0].mxu0
    %5411 = vmatprep.mubr.f32.mxu0 0.0
    %5412 = vmatmul.mubr.f32.gmra.mrb[0].mxu0 %v5310
    %v5413 = vpop.f32.mrb[0].mxu0
    %v5414 = vadd.f32 0.0, %v5413
    %v5415 = vpop.f32.mrb[0].mxu0
    %5416 = vdwg.mxu0
    %v5417 = vld [vmem:[%s14] sm:$0x1]
    %s5418 = scalar_lea.vmem %s3, 640
    %v5419 = vld [vmem:[%s5418] sm:$0xff]
    %v5420 = vld [vmem:[%s5418 + $0x8] sm:$0xff]
    %v5421 = vld [vmem:[%s5418 + $0x10] sm:$0xff]
    %v5422 = vld [vmem:[%s5418 + $0x18] sm:$0xff]
    %v5423 = vld [vmem:[%s5418 + $0x20] sm:$0xff]
    %v5424 = vld [vmem:[%s5418 + $0x28] sm:$0xff]
    %v5425 = vld [vmem:[%s5418 + $0x30] sm:$0xff]
    %v5426 = vld [vmem:[%s5418 + $0x38] sm:$0xff]
    %s5427 = scalar_lea.vmem %s4, 640
    %v5428 = vld [vmem:[%s5427] sm:$0xff]
    %v5429 = vld [vmem:[%s5427 + $0x8] sm:$0xff]
    %v5430 = vld [vmem:[%s5427 + $0x10] sm:$0xff]
    %v5431 = vld [vmem:[%s5427 + $0x18] sm:$0xff]
    %v5432 = vld [vmem:[%s5427 + $0x20] sm:$0xff]
    %v5433 = vld [vmem:[%s5427 + $0x28] sm:$0xff]
    %v5434 = vld [vmem:[%s5427 + $0x30] sm:$0xff]
    %v5435 = vld [vmem:[%s5427 + $0x38] sm:$0xff]
    %s5436 = scalar_lea.vmem %s5, 640
    %v5437 = vld [vmem:[%s5436] sm:$0xff]
    %v5438 = vld [vmem:[%s5436 + $0x8] sm:$0xff]
    %v5439 = vld [vmem:[%s5436 + $0x10] sm:$0xff]
    %v5440 = vld [vmem:[%s5436 + $0x18] sm:$0xff]
    %v5441 = vld [vmem:[%s5436 + $0x20] sm:$0xff]
    %v5442 = vld [vmem:[%s5436 + $0x28] sm:$0xff]
    %v5443 = vld [vmem:[%s5436 + $0x30] sm:$0xff]
    %v5444 = vld [vmem:[%s5436 + $0x38] sm:$0xff]
    %5453 = vrot.lane.b32.xlu0 %v5379, 121
    %v5454 = vpop.permute.xlu0 %5453
    %5455 = vrot.lane.b32.xlu0 %v5384, 121
    %v5456 = vpop.permute.xlu0 %5455
    %5457 = vrot.lane.b32.xlu0 %v5389, 121
    %v5458 = vpop.permute.xlu0 %5457
    %5459 = vrot.lane.b32.xlu0 %v5394, 121
    %v5460 = vpop.permute.xlu0 %5459
    %5461 = vrot.lane.b32.xlu0 %v5399, 121
    %v5462 = vpop.permute.xlu0 %5461
    %5463 = vrot.lane.b32.xlu0 %v5404, 121
    %v5464 = vpop.permute.xlu0 %5463
    %5465 = vrot.lane.b32.xlu0 %v5409, 121
    %v5466 = vpop.permute.xlu0 %5465
    %5467 = vrot.lane.b32.xlu0 %v5414, 121
    %v5468 = vpop.permute.xlu0 %5467
    %5477 = vrot.lane.b32.xlu0 %v5379, 1
    %v5478 = vpop.permute.xlu0 %5477
    %5479 = vrot.lane.b32.xlu0 %v5384, 1
    %v5480 = vpop.permute.xlu0 %5479
    %5481 = vrot.lane.b32.xlu0 %v5389, 1
    %v5482 = vpop.permute.xlu0 %5481
    %5483 = vrot.lane.b32.xlu0 %v5394, 1
    %v5484 = vpop.permute.xlu0 %5483
    %5485 = vrot.lane.b32.xlu0 %v5399, 1
    %v5486 = vpop.permute.xlu0 %5485
    %5487 = vrot.lane.b32.xlu0 %v5404, 1
    %v5488 = vpop.permute.xlu0 %5487
    %5489 = vrot.lane.b32.xlu0 %v5409, 1
    %v5490 = vpop.permute.xlu0 %5489
    %5491 = vrot.lane.b32.xlu0 %v5414, 1
    %v5492 = vpop.permute.xlu0 %5491
    %v5501 = vsel %vm215, %v5454, %v5478
    %v5502 = vsel %vm215, %v5456, %v5480
    %v5503 = vsel %vm215, %v5458, %v5482
    %v5504 = vsel %vm215, %v5460, %v5484
    %v5505 = vsel %vm215, %v5462, %v5486
    %v5506 = vsel %vm215, %v5464, %v5488
    %v5507 = vsel %vm215, %v5466, %v5490
    %v5508 = vsel %vm215, %v5468, %v5492
    %vm5509 = vcmp.ge.s32.totalorder %v5417, 1
    %v5510 = vsel %vm5509, 1, 0
    %v5511 = vlaneseq
    %v5512 = vshrl.u32 %v5511, 7
    %v5513 = vsub.s32 0, %v5512
    %v5514 = vrot.slane %v5510, %v5513
    %vm5515 = vcmp.eq.s32.totalorder %v5514, 1
    %v5516 = vsel %vm5515, %v5501, 0.0
    %v5517 = vsel %vm5515, %v5502, 0.0
    %v5518 = vsel %vm5515, %v5503, 0.0
    %v5519 = vsel %vm5515, %v5504, 0.0
    %v5520 = vsel %vm5515, %v5505, 0.0
    %v5521 = vsel %vm5515, %v5506, 0.0
    %v5522 = vsel %vm5515, %v5507, 0.0
    %v5523 = vsel %vm5515, %v5508, 0.0
    %5524 = vrot.lane.b32.xlu0 %v5379, 127
    %v5525 = vpop.permute.xlu0 %5524
    %5526 = vrot.lane.b32.xlu0 %v5384, 127
    %v5527 = vpop.permute.xlu0 %5526
    %5528 = vrot.lane.b32.xlu0 %v5389, 127
    %v5529 = vpop.permute.xlu0 %5528
    %5530 = vrot.lane.b32.xlu0 %v5394, 127
    %v5531 = vpop.permute.xlu0 %5530
    %5532 = vrot.lane.b32.xlu0 %v5399, 127
    %v5533 = vpop.permute.xlu0 %5532
    %5534 = vrot.lane.b32.xlu0 %v5404, 127
    %v5535 = vpop.permute.xlu0 %5534
    %5536 = vrot.lane.b32.xlu0 %v5409, 127
    %v5537 = vpop.permute.xlu0 %5536
    %5538 = vrot.lane.b32.xlu0 %v5414, 127
    %v5539 = vpop.permute.xlu0 %5538
    %5548 = vrot.lane.b32.xlu0 %v5379, 7
    %v5549 = vpop.permute.xlu0 %5548
    %5550 = vrot.lane.b32.xlu0 %v5384, 7
    %v5551 = vpop.permute.xlu0 %5550
    %5552 = vrot.lane.b32.xlu0 %v5389, 7
    %v5553 = vpop.permute.xlu0 %5552
    %5554 = vrot.lane.b32.xlu0 %v5394, 7
    %v5555 = vpop.permute.xlu0 %5554
    %5556 = vrot.lane.b32.xlu0 %v5399, 7
    %v5557 = vpop.permute.xlu0 %5556
    %5558 = vrot.lane.b32.xlu0 %v5404, 7
    %v5559 = vpop.permute.xlu0 %5558
    %5560 = vrot.lane.b32.xlu0 %v5409, 7
    %v5561 = vpop.permute.xlu0 %5560
    %5562 = vrot.lane.b32.xlu0 %v5414, 7
    %v5563 = vpop.permute.xlu0 %5562
    %vm5572 = vcmask 56320
    %v5573 = vsel %vm5572, %v5525, %v5549
    %v5574 = vsel %vm5572, %v5527, %v5551
    %v5575 = vsel %vm5572, %v5529, %v5553
    %v5576 = vsel %vm5572, %v5531, %v5555
    %v5577 = vsel %vm5572, %v5533, %v5557
    %v5578 = vsel %vm5572, %v5535, %v5559
    %v5579 = vsel %vm5572, %v5537, %v5561
    %v5580 = vsel %vm5572, %v5539, %v5563
    %vm5581 = vcmp.lt.s32.totalorder %v5417, 3
    %v5582 = vsel %vm5581, 1, 0
    %v5583 = vlaneseq
    %v5584 = vshrl.u32 %v5583, 7
    %v5585 = vsub.s32 0, %v5584
    %v5586 = vrot.slane %v5582, %v5585
    %vm5587 = vcmp.eq.s32.totalorder %v5586, 1
    %v5588 = vsel %vm5587, %v5573, 0.0
    %v5589 = vsel %vm5587, %v5574, 0.0
    %v5590 = vsel %vm5587, %v5575, 0.0
    %v5591 = vsel %vm5587, %v5576, 0.0
    %v5592 = vsel %vm5587, %v5577, 0.0
    %v5593 = vsel %vm5587, %v5578, 0.0
    %v5594 = vsel %vm5587, %v5579, 0.0
    %v5595 = vsel %vm5587, %v5580, 0.0
    %v5596 = vpack.c.bf16 %v5517, %v5516
    %v5597 = vpack.c.bf16 %v5519, %v5518
    %v5598 = vpack.c.bf16 %v5521, %v5520
    %v5599 = vpack.c.bf16 %v5523, %v5522
    %v5600 = vpack.c.bf16 %v5384, %v5379
    %v5601 = vpack.c.bf16 %v5394, %v5389
    %v5602 = vpack.c.bf16 %v5404, %v5399
    %v5603 = vpack.c.bf16 %v5414, %v5409
    %v5604 = vpack.c.bf16 %v5589, %v5588
    %v5605 = vpack.c.bf16 %v5591, %v5590
    %v5606 = vpack.c.bf16 %v5593, %v5592
    %v5607 = vpack.c.bf16 %v5595, %v5594
    %v5616 = vunpack.c.l.b16 %v5419
    %v5617 = vunpack.c.h.b16 %v5419
    %v5618 = vunpack.c.l.b16 %v5420
    %v5619 = vunpack.c.h.b16 %v5420
    %v5620 = vunpack.c.l.b16 %v5421
    %v5621 = vunpack.c.h.b16 %v5421
    %v5622 = vunpack.c.l.b16 %v5422
    %v5623 = vunpack.c.h.b16 %v5422
    %v5624 = vunpack.c.l.b16 %v5423
    %v5625 = vunpack.c.h.b16 %v5423
    %v5626 = vunpack.c.l.b16 %v5424
    %v5627 = vunpack.c.h.b16 %v5424
    %v5628 = vunpack.c.l.b16 %v5425
    %v5629 = vunpack.c.h.b16 %v5425
    %v5630 = vunpack.c.l.b16 %v5426
    %v5631 = vunpack.c.h.b16 %v5426
    %v5632 = vpack.c.b16 %v5618, %v5616
    %v5633 = vpack.c.b16 %v5619, %v5617
    %v5634 = vpack.c.b16 %v5622, %v5620
    %v5635 = vpack.c.b16 %v5623, %v5621
    %v5636 = vpack.c.b16 %v5626, %v5624
    %v5637 = vpack.c.b16 %v5627, %v5625
    %v5638 = vpack.c.b16 %v5630, %v5628
    %v5639 = vpack.c.b16 %v5631, %v5629
    %v5645 = vsel %vm884, %v5633, 0
    %v5648 = vsel %vm884, %v5635, 0
    %v5651 = vsel %vm884, %v5637, 0
    %v5654 = vsel %vm884, %v5639, 0
    %5656 = vmatprep.subr.bf16.mxu0 0
    %5657 = vmatpush1.bf16.msra.mxu0 %v5596
    %5658 = vmatprep.subr.bf16.mxu0 0
    %5659 = vmatpush1.bf16.msra.mxu0 %v5597
    %5660 = vmatprep.subr.bf16.mxu0 0
    %5661 = vmatpush1.bf16.msra.mxu0 %v5598
    %5662 = vmatprep.subr.bf16.mxu0 0
    %5663 = vmatpush1.bf16.msra.mxu0 %v5599
    %5664 = vmatprep.subr.bf16.mxu0 0
    %5665 = vmatpush1.bf16.msra.mxu0 %v5600
    %5666 = vmatprep.subr.bf16.mxu0 0
    %5667 = vmatpush1.bf16.msra.mxu0 %v5601
    %5668 = vmatprep.subr.bf16.mxu0 0
    %5669 = vmatpush1.bf16.msra.mxu0 %v5602
    %5670 = vmatprep.subr.bf16.mxu0 0
    %5671 = vmatpush1.bf16.msra.mxu0 %v5603
    %5672 = vmatprep.subr.bf16.mxu0 0
    %5673 = vmatpush1.bf16.msra.mxu0 %v5604
    %5674 = vmatprep.subr.bf16.mxu0 0
    %5675 = vmatpush1.bf16.msra.mxu0 %v5605
    %5676 = vmatprep.subr.bf16.mxu0 0
    %5677 = vmatpush1.bf16.msra.mxu0 %v5606
    %5678 = vmatprep.subr.bf16.mxu0 0
    %5679 = vmatpush1.bf16.msra.mxu0 %v5607
    %5680 = vmatprep.subr.bf16.mxu0 0
    %5681 = vmatpush1.bf16.msra.mxu0 0
    %5682 = vmatprep.subr.bf16.mxu0 0
    %5683 = vmatpush1.bf16.msra.mxu0 0
    %5684 = vmatprep.subr.bf16.mxu0 0
    %5685 = vmatpush1.bf16.msra.mxu0 0
    %5686 = vmatprep.subr.bf16.mxu0 0
    %5687 = vmatpush1.bf16.msra.mxu0 0
    %5688 = vmatprep.mubr.bf16.mxu0 %v5645
    %5689 = vmatmul.mubr.bf16.gmra.mrb[0].mxu0 %v5632
    %v5690 = vpop.f32.mrb[0].mxu0
    %v5691 = vadd.f32 0.0, %v5690
    %v5692 = vpop.f32.mrb[0].mxu0
    %v5693 = vpop.f32.mrb[0].mxu0
    %v5694 = vadd.f32 0.0, %v5693
    %v5695 = vpop.f32.mrb[0].mxu0
    %5696 = vmatprep.mubr.bf16.mxu0 %v5648
    %5697 = vmatmul.mubr.bf16.gmra.mrb[0].mxu0 %v5634
    %v5698 = vpop.f32.mrb[0].mxu0
    %v5699 = vadd.f32 0.0, %v5698
    %v5700 = vpop.f32.mrb[0].mxu0
    %v5701 = vpop.f32.mrb[0].mxu0
    %v5702 = vadd.f32 0.0, %v5701
    %v5703 = vpop.f32.mrb[0].mxu0
    %5704 = vmatprep.mubr.bf16.mxu0 %v5651
    %5705 = vmatmul.mubr.bf16.gmra.mrb[0].mxu0 %v5636
    %v5706 = vpop.f32.mrb[0].mxu0
    %v5707 = vadd.f32 0.0, %v5706
    %v5708 = vpop.f32.mrb[0].mxu0
    %v5709 = vpop.f32.mrb[0].mxu0
    %v5710 = vadd.f32 0.0, %v5709
    %v5711 = vpop.f32.mrb[0].mxu0
    %5712 = vmatprep.mubr.bf16.mxu0 %v5654
    %5713 = vmatmul.mubr.bf16.gmra.mrb[0].mxu0 %v5638
    %v5714 = vpop.f32.mrb[0].mxu0
    %v5715 = vadd.f32 0.0, %v5714
    %v5716 = vpop.f32.mrb[0].mxu0
    %v5717 = vpop.f32.mrb[0].mxu0
    %v5718 = vadd.f32 0.0, %v5717
    %v5719 = vpop.f32.mrb[0].mxu0
    %5720 = vdwg.mxu0
    %5722 = vset.pattern.permute.xlu0 0
    %5723 = vperm.xlu0 %5722, %v5428
    %v5724 = vpop.permute.xlu0 %5723
    %5727 = vset.pattern.permute.xlu0 0
    %5728 = vperm.xlu0 %5727, %v5429
    %v5729 = vpop.permute.xlu0 %5728
    %5732 = vset.pattern.permute.xlu0 0
    %5733 = vperm.xlu0 %5732, %v5430
    %v5734 = vpop.permute.xlu0 %5733
    %5737 = vset.pattern.permute.xlu0 0
    %5738 = vperm.xlu0 %5737, %v5431
    %v5739 = vpop.permute.xlu0 %5738
    %5742 = vset.pattern.permute.xlu0 0
    %5743 = vperm.xlu0 %5742, %v5432
    %v5744 = vpop.permute.xlu0 %5743
    %5747 = vset.pattern.permute.xlu0 0
    %5748 = vperm.xlu0 %5747, %v5433
    %v5749 = vpop.permute.xlu0 %5748
    %5752 = vset.pattern.permute.xlu0 0
    %5753 = vperm.xlu0 %5752, %v5434
    %v5754 = vpop.permute.xlu0 %5753
    %5757 = vset.pattern.permute.xlu0 0
    %5758 = vperm.xlu0 %5757, %v5435
    %v5759 = vpop.permute.xlu0 %5758
    %v5761 = vmul.f32 %v5691, %v5724
    %v5762 = vmul.f32 %v5694, %v5729
    %v5763 = vmul.f32 %v5699, %v5734
    %v5764 = vmul.f32 %v5702, %v5739
    %v5765 = vmul.f32 %v5707, %v5744
    %v5766 = vmul.f32 %v5710, %v5749
    %v5767 = vmul.f32 %v5715, %v5754
    %v5768 = vmul.f32 %v5718, %v5759
    %5770 = vset.pattern.permute.xlu0 0
    %5771 = vperm.xlu0 %5770, %v5437
    %v5772 = vpop.permute.xlu0 %5771
    %5775 = vset.pattern.permute.xlu0 0
    %5776 = vperm.xlu0 %5775, %v5438
    %v5777 = vpop.permute.xlu0 %5776
    %5780 = vset.pattern.permute.xlu0 0
    %5781 = vperm.xlu0 %5780, %v5439
    %v5782 = vpop.permute.xlu0 %5781
    %5785 = vset.pattern.permute.xlu0 0
    %5786 = vperm.xlu0 %5785, %v5440
    %v5787 = vpop.permute.xlu0 %5786
    %5790 = vset.pattern.permute.xlu0 0
    %5791 = vperm.xlu0 %5790, %v5441
    %v5792 = vpop.permute.xlu0 %5791
    %5795 = vset.pattern.permute.xlu0 0
    %5796 = vperm.xlu0 %5795, %v5442
    %v5797 = vpop.permute.xlu0 %5796
    %5800 = vset.pattern.permute.xlu0 0
    %5801 = vperm.xlu0 %5800, %v5443
    %v5802 = vpop.permute.xlu0 %5801
    %5805 = vset.pattern.permute.xlu0 0
    %5806 = vperm.xlu0 %5805, %v5444
    %v5807 = vpop.permute.xlu0 %5806
    %v5809 = vadd.f32 %v5761, %v5772
    %v5810 = vadd.f32 %v5762, %v5777
    %v5811 = vadd.f32 %v5763, %v5782
    %v5812 = vadd.f32 %v5764, %v5787
    %v5813 = vadd.f32 %v5765, %v5792
    %v5814 = vadd.f32 %v5766, %v5797
    %v5815 = vadd.f32 %v5767, %v5802
    %v5816 = vadd.f32 %v5768, %v5807
    %vm5817 = vcmp.ge.f32.partialorder %v5809, 0.0
    %vm5818 = vcmp.ge.f32.partialorder %v5810, 0.0
    %vm5819 = vcmp.ge.f32.partialorder %v5811, 0.0
    %vm5820 = vcmp.ge.f32.partialorder %v5812, 0.0
    %vm5821 = vcmp.ge.f32.partialorder %v5813, 0.0
    %vm5822 = vcmp.ge.f32.partialorder %v5814, 0.0
    %vm5823 = vcmp.ge.f32.partialorder %v5815, 0.0
    %vm5824 = vcmp.ge.f32.partialorder %v5816, 0.0
    %v5825 = vmul.f32 %v5809, 0.3
    %v5826 = vmul.f32 %v5810, 0.3
    %v5827 = vmul.f32 %v5811, 0.3
    %v5828 = vmul.f32 %v5812, 0.3
    %v5829 = vmul.f32 %v5813, 0.3
    %v5830 = vmul.f32 %v5814, 0.3
    %v5831 = vmul.f32 %v5815, 0.3
    %v5832 = vmul.f32 %v5816, 0.3
    %v5833 = vsel %vm5817, %v5809, %v5825
    %v5834 = vsel %vm5818, %v5810, %v5826
    %v5835 = vsel %vm5819, %v5811, %v5827
    %v5836 = vsel %vm5820, %v5812, %v5828
    %v5837 = vsel %vm5821, %v5813, %v5829
    %v5838 = vsel %vm5822, %v5814, %v5830
    %v5839 = vsel %vm5823, %v5815, %v5831
    %v5840 = vsel %vm5824, %v5816, %v5832
    %s5841 = scalar_lea.vmem %s3, 704
    %v5842 = vld [vmem:[%s5841] sm:$0xff]
    %v5843 = vld [vmem:[%s5841 + $0x8] sm:$0xff]
    %v5844 = vld [vmem:[%s5841 + $0x10] sm:$0xff]
    %v5845 = vld [vmem:[%s5841 + $0x18] sm:$0xff]
    %v5846 = vld [vmem:[%s5841 + $0x20] sm:$0xff]
    %v5847 = vld [vmem:[%s5841 + $0x28] sm:$0xff]
    %v5848 = vld [vmem:[%s5841 + $0x30] sm:$0xff]
    %v5849 = vld [vmem:[%s5841 + $0x38] sm:$0xff]
    %s5850 = scalar_lea.vmem %s4, 704
    %v5851 = vld [vmem:[%s5850] sm:$0xff]
    %v5852 = vld [vmem:[%s5850 + $0x8] sm:$0xff]
    %v5853 = vld [vmem:[%s5850 + $0x10] sm:$0xff]
    %v5854 = vld [vmem:[%s5850 + $0x18] sm:$0xff]
    %v5855 = vld [vmem:[%s5850 + $0x20] sm:$0xff]
    %v5856 = vld [vmem:[%s5850 + $0x28] sm:$0xff]
    %v5857 = vld [vmem:[%s5850 + $0x30] sm:$0xff]
    %v5858 = vld [vmem:[%s5850 + $0x38] sm:$0xff]
    %s5859 = scalar_lea.vmem %s5, 704
    %v5860 = vld [vmem:[%s5859] sm:$0xff]
    %v5861 = vld [vmem:[%s5859 + $0x8] sm:$0xff]
    %v5862 = vld [vmem:[%s5859 + $0x10] sm:$0xff]
    %v5863 = vld [vmem:[%s5859 + $0x18] sm:$0xff]
    %v5864 = vld [vmem:[%s5859 + $0x20] sm:$0xff]
    %v5865 = vld [vmem:[%s5859 + $0x28] sm:$0xff]
    %v5866 = vld [vmem:[%s5859 + $0x30] sm:$0xff]
    %v5867 = vld [vmem:[%s5859 + $0x38] sm:$0xff]
    %5876 = vrot.lane.b32.xlu0 %v5833, 121
    %v5877 = vpop.permute.xlu0 %5876
    %5878 = vrot.lane.b32.xlu0 %v5834, 121
    %v5879 = vpop.permute.xlu0 %5878
    %5880 = vrot.lane.b32.xlu0 %v5835, 121
    %v5881 = vpop.permute.xlu0 %5880
    %5882 = vrot.lane.b32.xlu0 %v5836, 121
    %v5883 = vpop.permute.xlu0 %5882
    %5884 = vrot.lane.b32.xlu0 %v5837, 121
    %v5885 = vpop.permute.xlu0 %5884
    %5886 = vrot.lane.b32.xlu0 %v5838, 121
    %v5887 = vpop.permute.xlu0 %5886
    %5888 = vrot.lane.b32.xlu0 %v5839, 121
    %v5889 = vpop.permute.xlu0 %5888
    %5890 = vrot.lane.b32.xlu0 %v5840, 121
    %v5891 = vpop.permute.xlu0 %5890
    %5900 = vrot.lane.b32.xlu0 %v5833, 1
    %v5901 = vpop.permute.xlu0 %5900
    %5902 = vrot.lane.b32.xlu0 %v5834, 1
    %v5903 = vpop.permute.xlu0 %5902
    %5904 = vrot.lane.b32.xlu0 %v5835, 1
    %v5905 = vpop.permute.xlu0 %5904
    %5906 = vrot.lane.b32.xlu0 %v5836, 1
    %v5907 = vpop.permute.xlu0 %5906
    %5908 = vrot.lane.b32.xlu0 %v5837, 1
    %v5909 = vpop.permute.xlu0 %5908
    %5910 = vrot.lane.b32.xlu0 %v5838, 1
    %v5911 = vpop.permute.xlu0 %5910
    %5912 = vrot.lane.b32.xlu0 %v5839, 1
    %v5913 = vpop.permute.xlu0 %5912
    %5914 = vrot.lane.b32.xlu0 %v5840, 1
    %v5915 = vpop.permute.xlu0 %5914
    %v5924 = vsel %vm215, %v5877, %v5901
    %v5925 = vsel %vm215, %v5879, %v5903
    %v5926 = vsel %vm215, %v5881, %v5905
    %v5927 = vsel %vm215, %v5883, %v5907
    %v5928 = vsel %vm215, %v5885, %v5909
    %v5929 = vsel %vm215, %v5887, %v5911
    %v5930 = vsel %vm215, %v5889, %v5913
    %v5931 = vsel %vm215, %v5891, %v5915
    %v5932 = vsel %vm5515, %v5924, 0.0
    %v5933 = vsel %vm5515, %v5925, 0.0
    %v5934 = vsel %vm5515, %v5926, 0.0
    %v5935 = vsel %vm5515, %v5927, 0.0
    %v5936 = vsel %vm5515, %v5928, 0.0
    %v5937 = vsel %vm5515, %v5929, 0.0
    %v5938 = vsel %vm5515, %v5930, 0.0
    %v5939 = vsel %vm5515, %v5931, 0.0
    %5940 = vrot.lane.b32.xlu0 %v5833, 127
    %v5941 = vpop.permute.xlu0 %5940
    %5942 = vrot.lane.b32.xlu0 %v5834, 127
    %v5943 = vpop.permute.xlu0 %5942
    %5944 = vrot.lane.b32.xlu0 %v5835, 127
    %v5945 = vpop.permute.xlu0 %5944
    %5946 = vrot.lane.b32.xlu0 %v5836, 127
    %v5947 = vpop.permute.xlu0 %5946
    %5948 = vrot.lane.b32.xlu0 %v5837, 127
    %v5949 = vpop.permute.xlu0 %5948
    %5950 = vrot.lane.b32.xlu0 %v5838, 127
    %v5951 = vpop.permute.xlu0 %5950
    %5952 = vrot.lane.b32.xlu0 %v5839, 127
    %v5953 = vpop.permute.xlu0 %5952
    %5954 = vrot.lane.b32.xlu0 %v5840, 127
    %v5955 = vpop.permute.xlu0 %5954
    %5964 = vrot.lane.b32.xlu0 %v5833, 7
    %v5965 = vpop.permute.xlu0 %5964
    %5966 = vrot.lane.b32.xlu0 %v5834, 7
    %v5967 = vpop.permute.xlu0 %5966
    %5968 = vrot.lane.b32.xlu0 %v5835, 7
    %v5969 = vpop.permute.xlu0 %5968
    %5970 = vrot.lane.b32.xlu0 %v5836, 7
    %v5971 = vpop.permute.xlu0 %5970
    %5972 = vrot.lane.b32.xlu0 %v5837, 7
    %v5973 = vpop.permute.xlu0 %5972
    %5974 = vrot.lane.b32.xlu0 %v5838, 7
    %v5975 = vpop.permute.xlu0 %5974
    %5976 = vrot.lane.b32.xlu0 %v5839, 7
    %v5977 = vpop.permute.xlu0 %5976
    %5978 = vrot.lane.b32.xlu0 %v5840, 7
    %v5979 = vpop.permute.xlu0 %5978
    %v5988 = vsel %vm5572, %v5941, %v5965
    %v5989 = vsel %vm5572, %v5943, %v5967
    %v5990 = vsel %vm5572, %v5945, %v5969
    %v5991 = vsel %vm5572, %v5947, %v5971
    %v5992 = vsel %vm5572, %v5949, %v5973
    %v5993 = vsel %vm5572, %v5951, %v5975
    %v5994 = vsel %vm5572, %v5953, %v5977
    %v5995 = vsel %vm5572, %v5955, %v5979
    %v5996 = vsel %vm5587, %v5988, 0.0
    %v5997 = vsel %vm5587, %v5989, 0.0
    %v5998 = vsel %vm5587, %v5990, 0.0
    %v5999 = vsel %vm5587, %v5991, 0.0
    %v6000 = vsel %vm5587, %v5992, 0.0
    %v6001 = vsel %vm5587, %v5993, 0.0
    %v6002 = vsel %vm5587, %v5994, 0.0
    %v6003 = vsel %vm5587, %v5995, 0.0
    %v6004 = vpack.c.bf16 %v5933, %v5932
    %v6005 = vpack.c.bf16 %v5935, %v5934
    %v6006 = vpack.c.bf16 %v5937, %v5936
    %v6007 = vpack.c.bf16 %v5939, %v5938
    %v6008 = vpack.c.bf16 %v5834, %v5833
    %v6009 = vpack.c.bf16 %v5836, %v5835
    %v6010 = vpack.c.bf16 %v5838, %v5837
    %v6011 = vpack.c.bf16 %v5840, %v5839
    %v6012 = vpack.c.bf16 %v5997, %v5996
    %v6013 = vpack.c.bf16 %v5999, %v5998
    %v6014 = vpack.c.bf16 %v6001, %v6000
    %v6015 = vpack.c.bf16 %v6003, %v6002
    %v6024 = vunpack.c.l.b16 %v5842
    %v6025 = vunpack.c.h.b16 %v5842
    %v6026 = vunpack.c.l.b16 %v5843
    %v6027 = vunpack.c.h.b16 %v5843
    %v6028 = vunpack.c.l.b16 %v5844
    %v6029 = vunpack.c.h.b16 %v5844
    %v6030 = vunpack.c.l.b16 %v5845
    %v6031 = vunpack.c.h.b16 %v5845
    %v6032 = vunpack.c.l.b16 %v5846
    %v6033 = vunpack.c.h.b16 %v5846
    %v6034 = vunpack.c.l.b16 %v5847
    %v6035 = vunpack.c.h.b16 %v5847
    %v6036 = vunpack.c.l.b16 %v5848
    %v6037 = vunpack.c.h.b16 %v5848
    %v6038 = vunpack.c.l.b16 %v5849
    %v6039 = vunpack.c.h.b16 %v5849
    %v6040 = vpack.c.b16 %v6026, %v6024
    %v6041 = vpack.c.b16 %v6027, %v6025
    %v6042 = vpack.c.b16 %v6030, %v6028
    %v6043 = vpack.c.b16 %v6031, %v6029
    %v6044 = vpack.c.b16 %v6034, %v6032
    %v6045 = vpack.c.b16 %v6035, %v6033
    %v6046 = vpack.c.b16 %v6038, %v6036
    %v6047 = vpack.c.b16 %v6039, %v6037
    %v6053 = vsel %vm884, %v6041, 0
    %v6056 = vsel %vm884, %v6043, 0
    %v6059 = vsel %vm884, %v6045, 0
    %v6062 = vsel %vm884, %v6047, 0
    %6064 = vmatprep.subr.bf16.mxu0 0
    %6065 = vmatpush1.bf16.msra.mxu0 %v6004
    %6066 = vmatprep.subr.bf16.mxu0 0
    %6067 = vmatpush1.bf16.msra.mxu0 %v6005
    %6068 = vmatprep.subr.bf16.mxu0 0
    %6069 = vmatpush1.bf16.msra.mxu0 %v6006
    %6070 = vmatprep.subr.bf16.mxu0 0
    %6071 = vmatpush1.bf16.msra.mxu0 %v6007
    %6072 = vmatprep.subr.bf16.mxu0 0
    %6073 = vmatpush1.bf16.msra.mxu0 %v6008
    %6074 = vmatprep.subr.bf16.mxu0 0
    %6075 = vmatpush1.bf16.msra.mxu0 %v6009
    %6076 = vmatprep.subr.bf16.mxu0 0
    %6077 = vmatpush1.bf16.msra.mxu0 %v6010
    %6078 = vmatprep.subr.bf16.mxu0 0
    %6079 = vmatpush1.bf16.msra.mxu0 %v6011
    %6080 = vmatprep.subr.bf16.mxu0 0
    %6081 = vmatpush1.bf16.msra.mxu0 %v6012
    %6082 = vmatprep.subr.bf16.mxu0 0
    %6083 = vmatpush1.bf16.msra.mxu0 %v6013
    %6084 = vmatprep.subr.bf16.mxu0 0
    %6085 = vmatpush1.bf16.msra.mxu0 %v6014
    %6086 = vmatprep.subr.bf16.mxu0 0
    %6087 = vmatpush1.bf16.msra.mxu0 %v6015
    %6088 = vmatprep.subr.bf16.mxu0 0
    %6089 = vmatpush1.bf16.msra.mxu0 0
    %6090 = vmatprep.subr.bf16.mxu0 0
    %6091 = vmatpush1.bf16.msra.mxu0 0
    %6092 = vmatprep.subr.bf16.mxu0 0
    %6093 = vmatpush1.bf16.msra.mxu0 0
    %6094 = vmatprep.subr.bf16.mxu0 0
    %6095 = vmatpush1.bf16.msra.mxu0 0
    %6096 = vmatprep.mubr.bf16.mxu0 %v6053
    %6097 = vmatmul.mubr.bf16.gmra.mrb[0].mxu0 %v6040
    %v6098 = vpop.f32.mrb[0].mxu0
    %v6099 = vadd.f32 0.0, %v6098
    %v6100 = vpop.f32.mrb[0].mxu0
    %v6101 = vpop.f32.mrb[0].mxu0
    %v6102 = vadd.f32 0.0, %v6101
    %v6103 = vpop.f32.mrb[0].mxu0
    %6104 = vmatprep.mubr.bf16.mxu0 %v6056
    %6105 = vmatmul.mubr.bf16.gmra.mrb[0].mxu0 %v6042
    %v6106 = vpop.f32.mrb[0].mxu0
    %v6107 = vadd.f32 0.0, %v6106
    %v6108 = vpop.f32.mrb[0].mxu0
    %v6109 = vpop.f32.mrb[0].mxu0
    %v6110 = vadd.f32 0.0, %v6109
    %v6111 = vpop.f32.mrb[0].mxu0
    %6112 = vmatprep.mubr.bf16.mxu0 %v6059
    %6113 = vmatmul.mubr.bf16.gmra.mrb[0].mxu0 %v6044
    %v6114 = vpop.f32.mrb[0].mxu0
    %v6115 = vadd.f32 0.0, %v6114
    %v6116 = vpop.f32.mrb[0].mxu0
    %v6117 = vpop.f32.mrb[0].mxu0
    %v6118 = vadd.f32 0.0, %v6117
    %v6119 = vpop.f32.mrb[0].mxu0
    %6120 = vmatprep.mubr.bf16.mxu0 %v6062
    %6121 = vmatmul.mubr.bf16.gmra.mrb[0].mxu0 %v6046
    %v6122 = vpop.f32.mrb[0].mxu0
    %v6123 = vadd.f32 0.0, %v6122
    %v6124 = vpop.f32.mrb[0].mxu0
    %v6125 = vpop.f32.mrb[0].mxu0
    %v6126 = vadd.f32 0.0, %v6125
    %v6127 = vpop.f32.mrb[0].mxu0
    %6128 = vdwg.mxu0
    %6130 = vset.pattern.permute.xlu0 0
    %6131 = vperm.xlu0 %6130, %v5851
    %v6132 = vpop.permute.xlu0 %6131
    %6135 = vset.pattern.permute.xlu0 0
    %6136 = vperm.xlu0 %6135, %v5852
    %v6137 = vpop.permute.xlu0 %6136
    %6140 = vset.pattern.permute.xlu0 0
    %6141 = vperm.xlu0 %6140, %v5853
    %v6142 = vpop.permute.xlu0 %6141
    %6145 = vset.pattern.permute.xlu0 0
    %6146 = vperm.xlu0 %6145, %v5854
    %v6147 = vpop.permute.xlu0 %6146
    %6150 = vset.pattern.permute.xlu0 0
    %6151 = vperm.xlu0 %6150, %v5855
    %v6152 = vpop.permute.xlu0 %6151
    %6155 = vset.pattern.permute.xlu0 0
    %6156 = vperm.xlu0 %6155, %v5856
    %v6157 = vpop.permute.xlu0 %6156
    %6160 = vset.pattern.permute.xlu0 0
    %6161 = vperm.xlu0 %6160, %v5857
    %v6162 = vpop.permute.xlu0 %6161
    %6165 = vset.pattern.permute.xlu0 0
    %6166 = vperm.xlu0 %6165, %v5858
    %v6167 = vpop.permute.xlu0 %6166
    %v6169 = vmul.f32 %v6099, %v6132
    %v6170 = vmul.f32 %v6102, %v6137
    %v6171 = vmul.f32 %v6107, %v6142
    %v6172 = vmul.f32 %v6110, %v6147
    %v6173 = vmul.f32 %v6115, %v6152
    %v6174 = vmul.f32 %v6118, %v6157
    %v6175 = vmul.f32 %v6123, %v6162
    %v6176 = vmul.f32 %v6126, %v6167
    %6178 = vset.pattern.permute.xlu0 0
    %6179 = vperm.xlu0 %6178, %v5860
    %v6180 = vpop.permute.xlu0 %6179
    %6183 = vset.pattern.permute.xlu0 0
    %6184 = vperm.xlu0 %6183, %v5861
    %v6185 = vpop.permute.xlu0 %6184
    %6188 = vset.pattern.permute.xlu0 0
    %6189 = vperm.xlu0 %6188, %v5862
    %v6190 = vpop.permute.xlu0 %6189
    %6193 = vset.pattern.permute.xlu0 0
    %6194 = vperm.xlu0 %6193, %v5863
    %v6195 = vpop.permute.xlu0 %6194
    %6198 = vset.pattern.permute.xlu0 0
    %6199 = vperm.xlu0 %6198, %v5864
    %v6200 = vpop.permute.xlu0 %6199
    %6203 = vset.pattern.permute.xlu0 0
    %6204 = vperm.xlu0 %6203, %v5865
    %v6205 = vpop.permute.xlu0 %6204
    %6208 = vset.pattern.permute.xlu0 0
    %6209 = vperm.xlu0 %6208, %v5866
    %v6210 = vpop.permute.xlu0 %6209
    %6213 = vset.pattern.permute.xlu0 0
    %6214 = vperm.xlu0 %6213, %v5867
    %v6215 = vpop.permute.xlu0 %6214
    %v6217 = vadd.f32 %v6169, %v6180
    %v6218 = vadd.f32 %v6170, %v6185
    %v6219 = vadd.f32 %v6171, %v6190
    %v6220 = vadd.f32 %v6172, %v6195
    %v6221 = vadd.f32 %v6173, %v6200
    %v6222 = vadd.f32 %v6174, %v6205
    %v6223 = vadd.f32 %v6175, %v6210
    %v6224 = vadd.f32 %v6176, %v6215
    %v6225 = vadd.f32 %v6217, %v5379
    %v6226 = vadd.f32 %v6218, %v5384
    %v6227 = vadd.f32 %v6219, %v5389
    %v6228 = vadd.f32 %v6220, %v5394
    %v6229 = vadd.f32 %v6221, %v5399
    %v6230 = vadd.f32 %v6222, %v5404
    %v6231 = vadd.f32 %v6223, %v5409
    %v6232 = vadd.f32 %v6224, %v5414
    %v6233 = vld [vmem:[%s21] sm:$0xff]
    %vm6234 = vcmask 64512
    %v6236 = vsel %vm6234, %v6225, 0
    %v6239 = vsel %vm6234, %v6226, 0
    %v6242 = vsel %vm6234, %v6227, 0
    %v6245 = vsel %vm6234, %v6228, 0
    %v6248 = vsel %vm6234, %v6229, 0
    %v6251 = vsel %vm6234, %v6230, 0
    %v6254 = vsel %vm6234, %v6231, 0
    %v6257 = vsel %vm6234, %v6232, 0
    %6259 = vmatprep.subr.mxu0 0.0
    %6260 = vmatpush1.msra.mxu0 %v6233
    %6261 = vmatprep.subr.mxu0 0.0
    %6262 = vmatpush1.msra.mxu0 0.0
    %6263 = vmatprep.subr.mxu0 0.0
    %6264 = vmatpush1.msra.mxu0 0.0
    %6265 = vmatprep.subr.mxu0 0.0
    %6266 = vmatpush1.msra.mxu0 0.0
    %6267 = vmatprep.subr.mxu0 0.0
    %6268 = vmatpush1.msra.mxu0 0.0
    %6269 = vmatprep.subr.mxu0 0.0
    %6270 = vmatpush1.msra.mxu0 0.0
    %6271 = vmatprep.subr.mxu0 0.0
    %6272 = vmatpush1.msra.mxu0 0.0
    %6273 = vmatprep.subr.mxu0 0.0
    %6274 = vmatpush1.msra.mxu0 0.0
    %6275 = vmatprep.subr.mxu0 0.0
    %6276 = vmatpush1.msra.mxu0 0.0
    %6277 = vmatprep.subr.mxu0 0.0
    %6278 = vmatpush1.msra.mxu0 0.0
    %6279 = vmatprep.subr.mxu0 0.0
    %6280 = vmatpush1.msra.mxu0 0.0
    %6281 = vmatprep.subr.mxu0 0.0
    %6282 = vmatpush1.msra.mxu0 0.0
    %6283 = vmatprep.subr.mxu0 0.0
    %6284 = vmatpush1.msra.mxu0 0.0
    %6285 = vmatprep.subr.mxu0 0.0
    %6286 = vmatpush1.msra.mxu0 0.0
    %6287 = vmatprep.subr.mxu0 0.0
    %6288 = vmatpush1.msra.mxu0 0.0
    %6289 = vmatprep.subr.mxu0 0.0
    %6290 = vmatpush1.msra.mxu0 0.0
    %6291 = vmatprep.subr.mxu0 0.0
    %6292 = vmatpush1.msra.mxu0 0.0
    %6293 = vmatprep.subr.mxu0 0.0
    %6294 = vmatpush1.msra.mxu0 0.0
    %6295 = vmatprep.subr.mxu0 0.0
    %6296 = vmatpush1.msra.mxu0 0.0
    %6297 = vmatprep.subr.mxu0 0.0
    %6298 = vmatpush1.msra.mxu0 0.0
    %6299 = vmatprep.subr.mxu0 0.0
    %6300 = vmatpush1.msra.mxu0 0.0
    %6301 = vmatprep.subr.mxu0 0.0
    %6302 = vmatpush1.msra.mxu0 0.0
    %6303 = vmatprep.subr.mxu0 0.0
    %6304 = vmatpush1.msra.mxu0 0.0
    %6305 = vmatprep.subr.mxu0 0.0
    %6306 = vmatpush1.msra.mxu0 0.0
    %6307 = vmatprep.subr.mxu0 0.0
    %6308 = vmatpush1.msra.mxu0 0.0
    %6309 = vmatprep.subr.mxu0 0.0
    %6310 = vmatpush1.msra.mxu0 0.0
    %6311 = vmatprep.subr.mxu0 0.0
    %6312 = vmatpush1.msra.mxu0 0.0
    %6313 = vmatprep.subr.mxu0 0.0
    %6314 = vmatpush1.msra.mxu0 0.0
    %6315 = vmatprep.subr.mxu0 0.0
    %6316 = vmatpush1.msra.mxu0 0.0
    %6317 = vmatprep.subr.mxu0 0.0
    %6318 = vmatpush1.msra.mxu0 0.0
    %6319 = vmatprep.subr.mxu0 0.0
    %6320 = vmatpush1.msra.mxu0 0.0
    %6321 = vmatprep.subr.mxu0 0.0
    %6322 = vmatpush1.msra.mxu0 0.0
    %6323 = vmatprep.mubr.f32.mxu0 0.0
    %6324 = vmatmul.mubr.f32.gmra.mrb[0].mxu0 %v6236
    %v6325 = vpop.f32.mrb[0].mxu0
    %v6326 = vadd.f32 0.0, %v6325
    %v6327 = vpop.f32.mrb[0].mxu0
    %6328 = vmatprep.mubr.f32.mxu0 0.0
    %6329 = vmatmul.mubr.f32.gmra.mrb[0].mxu0 %v6239
    %v6330 = vpop.f32.mrb[0].mxu0
    %v6331 = vadd.f32 0.0, %v6330
    %v6332 = vpop.f32.mrb[0].mxu0
    %6333 = vmatprep.mubr.f32.mxu0 0.0
    %6334 = vmatmul.mubr.f32.gmra.mrb[0].mxu0 %v6242
    %v6335 = vpop.f32.mrb[0].mxu0
    %v6336 = vadd.f32 0.0, %v6335
    %v6337 = vpop.f32.mrb[0].mxu0
    %6338 = vmatprep.mubr.f32.mxu0 0.0
    %6339 = vmatmul.mubr.f32.gmra.mrb[0].mxu0 %v6245
    %v6340 = vpop.f32.mrb[0].mxu0
    %v6341 = vadd.f32 0.0, %v6340
    %v6342 = vpop.f32.mrb[0].mxu0
    %6343 = vmatprep.mubr.f32.mxu0 0.0
    %6344 = vmatmul.mubr.f32.gmra.mrb[0].mxu0 %v6248
    %v6345 = vpop.f32.mrb[0].mxu0
    %v6346 = vadd.f32 0.0, %v6345
    %v6347 = vpop.f32.mrb[0].mxu0
    %6348 = vmatprep.mubr.f32.mxu0 0.0
    %6349 = vmatmul.mubr.f32.gmra.mrb[0].mxu0 %v6251
    %v6350 = vpop.f32.mrb[0].mxu0
    %v6351 = vadd.f32 0.0, %v6350
    %v6352 = vpop.f32.mrb[0].mxu0
    %6353 = vmatprep.mubr.f32.mxu0 0.0
    %6354 = vmatmul.mubr.f32.gmra.mrb[0].mxu0 %v6254
    %v6355 = vpop.f32.mrb[0].mxu0
    %v6356 = vadd.f32 0.0, %v6355
    %v6357 = vpop.f32.mrb[0].mxu0
    %6358 = vmatprep.mubr.f32.mxu0 0.0
    %6359 = vmatmul.mubr.f32.gmra.mrb[0].mxu0 %v6257
    %v6360 = vpop.f32.mrb[0].mxu0
    %v6361 = vadd.f32 0.0, %v6360
    %v6362 = vpop.f32.mrb[0].mxu0
    %6363 = vdwg.mxu0
    %v6364 = vld [vmem:[%s15] sm:$0x1]
    %s6365 = scalar_lea.vmem %s3, 768
    %v6366 = vld [vmem:[%s6365] sm:$0xff]
    %v6367 = vld [vmem:[%s6365 + $0x8] sm:$0xff]
    %v6368 = vld [vmem:[%s6365 + $0x10] sm:$0xff]
    %v6369 = vld [vmem:[%s6365 + $0x18] sm:$0xff]
    %v6370 = vld [vmem:[%s6365 + $0x20] sm:$0xff]
    %v6371 = vld [vmem:[%s6365 + $0x28] sm:$0xff]
    %v6372 = vld [vmem:[%s6365 + $0x30] sm:$0xff]
    %v6373 = vld [vmem:[%s6365 + $0x38] sm:$0xff]
    %s6374 = scalar_lea.vmem %s4, 768
    %v6375 = vld [vmem:[%s6374] sm:$0xff]
    %v6376 = vld [vmem:[%s6374 + $0x8] sm:$0xff]
    %v6377 = vld [vmem:[%s6374 + $0x10] sm:$0xff]
    %v6378 = vld [vmem:[%s6374 + $0x18] sm:$0xff]
    %v6379 = vld [vmem:[%s6374 + $0x20] sm:$0xff]
    %v6380 = vld [vmem:[%s6374 + $0x28] sm:$0xff]
    %v6381 = vld [vmem:[%s6374 + $0x30] sm:$0xff]
    %v6382 = vld [vmem:[%s6374 + $0x38] sm:$0xff]
    %s6383 = scalar_lea.vmem %s5, 768
    %v6384 = vld [vmem:[%s6383] sm:$0xff]
    %v6385 = vld [vmem:[%s6383 + $0x8] sm:$0xff]
    %v6386 = vld [vmem:[%s6383 + $0x10] sm:$0xff]
    %v6387 = vld [vmem:[%s6383 + $0x18] sm:$0xff]
    %v6388 = vld [vmem:[%s6383 + $0x20] sm:$0xff]
    %v6389 = vld [vmem:[%s6383 + $0x28] sm:$0xff]
    %v6390 = vld [vmem:[%s6383 + $0x30] sm:$0xff]
    %v6391 = vld [vmem:[%s6383 + $0x38] sm:$0xff]
    %6400 = vrot.lane.b32.xlu0 %v6326, 125
    %v6401 = vpop.permute.xlu0 %6400
    %6402 = vrot.lane.b32.xlu0 %v6331, 125
    %v6403 = vpop.permute.xlu0 %6402
    %6404 = vrot.lane.b32.xlu0 %v6336, 125
    %v6405 = vpop.permute.xlu0 %6404
    %6406 = vrot.lane.b32.xlu0 %v6341, 125
    %v6407 = vpop.permute.xlu0 %6406
    %6408 = vrot.lane.b32.xlu0 %v6346, 125
    %v6409 = vpop.permute.xlu0 %6408
    %6410 = vrot.lane.b32.xlu0 %v6351, 125
    %v6411 = vpop.permute.xlu0 %6410
    %6412 = vrot.lane.b32.xlu0 %v6356, 125
    %v6413 = vpop.permute.xlu0 %6412
    %6414 = vrot.lane.b32.xlu0 %v6361, 125
    %v6415 = vpop.permute.xlu0 %6414
    %6424 = vrot.lane.b32.xlu0 %v6326, 1
    %v6425 = vpop.permute.xlu0 %6424
    %6426 = vrot.lane.b32.xlu0 %v6331, 1
    %v6427 = vpop.permute.xlu0 %6426
    %6428 = vrot.lane.b32.xlu0 %v6336, 1
    %v6429 = vpop.permute.xlu0 %6428
    %6430 = vrot.lane.b32.xlu0 %v6341, 1
    %v6431 = vpop.permute.xlu0 %6430
    %6432 = vrot.lane.b32.xlu0 %v6346, 1
    %v6433 = vpop.permute.xlu0 %6432
    %6434 = vrot.lane.b32.xlu0 %v6351, 1
    %v6435 = vpop.permute.xlu0 %6434
    %6436 = vrot.lane.b32.xlu0 %v6356, 1
    %v6437 = vpop.permute.xlu0 %6436
    %6438 = vrot.lane.b32.xlu0 %v6361, 1
    %v6439 = vpop.permute.xlu0 %6438
    %v6448 = vsel %vm215, %v6401, %v6425
    %v6449 = vsel %vm215, %v6403, %v6427
    %v6450 = vsel %vm215, %v6405, %v6429
    %v6451 = vsel %vm215, %v6407, %v6431
    %v6452 = vsel %vm215, %v6409, %v6433
    %v6453 = vsel %vm215, %v6411, %v6435
    %v6454 = vsel %vm215, %v6413, %v6437
    %v6455 = vsel %vm215, %v6415, %v6439
    %vm6456 = vcmp.ge.s32.totalorder %v6364, 1
    %v6457 = vsel %vm6456, 1, 0
    %v6458 = vlaneseq
    %v6459 = vshrl.u32 %v6458, 7
    %v6460 = vsub.s32 0, %v6459
    %v6461 = vrot.slane %v6457, %v6460
    %vm6462 = vcmp.eq.s32.totalorder %v6461, 1
    %v6463 = vsel %vm6462, %v6448, 0.0
    %v6464 = vsel %vm6462, %v6449, 0.0
    %v6465 = vsel %vm6462, %v6450, 0.0
    %v6466 = vsel %vm6462, %v6451, 0.0
    %v6467 = vsel %vm6462, %v6452, 0.0
    %v6468 = vsel %vm6462, %v6453, 0.0
    %v6469 = vsel %vm6462, %v6454, 0.0
    %v6470 = vsel %vm6462, %v6455, 0.0
    %6471 = vrot.lane.b32.xlu0 %v6326, 127
    %v6472 = vpop.permute.xlu0 %6471
    %6473 = vrot.lane.b32.xlu0 %v6331, 127
    %v6474 = vpop.permute.xlu0 %6473
    %6475 = vrot.lane.b32.xlu0 %v6336, 127
    %v6476 = vpop.permute.xlu0 %6475
    %6477 = vrot.lane.b32.xlu0 %v6341, 127
    %v6478 = vpop.permute.xlu0 %6477
    %6479 = vrot.lane.b32.xlu0 %v6346, 127
    %v6480 = vpop.permute.xlu0 %6479
    %6481 = vrot.lane.b32.xlu0 %v6351, 127
    %v6482 = vpop.permute.xlu0 %6481
    %6483 = vrot.lane.b32.xlu0 %v6356, 127
    %v6484 = vpop.permute.xlu0 %6483
    %6485 = vrot.lane.b32.xlu0 %v6361, 127
    %v6486 = vpop.permute.xlu0 %6485
    %6495 = vrot.lane.b32.xlu0 %v6326, 3
    %v6496 = vpop.permute.xlu0 %6495
    %6497 = vrot.lane.b32.xlu0 %v6331, 3
    %v6498 = vpop.permute.xlu0 %6497
    %6499 = vrot.lane.b32.xlu0 %v6336, 3
    %v6500 = vpop.permute.xlu0 %6499
    %6501 = vrot.lane.b32.xlu0 %v6341, 3
    %v6502 = vpop.permute.xlu0 %6501
    %6503 = vrot.lane.b32.xlu0 %v6346, 3
    %v6504 = vpop.permute.xlu0 %6503
    %6505 = vrot.lane.b32.xlu0 %v6351, 3
    %v6506 = vpop.permute.xlu0 %6505
    %6507 = vrot.lane.b32.xlu0 %v6356, 3
    %v6508 = vpop.permute.xlu0 %6507
    %6509 = vrot.lane.b32.xlu0 %v6361, 3
    %v6510 = vpop.permute.xlu0 %6509
    %v6519 = vsel %vm145, %v6472, %v6496
    %v6520 = vsel %vm145, %v6474, %v6498
    %v6521 = vsel %vm145, %v6476, %v6500
    %v6522 = vsel %vm145, %v6478, %v6502
    %v6523 = vsel %vm145, %v6480, %v6504
    %v6524 = vsel %vm145, %v6482, %v6506
    %v6525 = vsel %vm145, %v6484, %v6508
    %v6526 = vsel %vm145, %v6486, %v6510
    %vm6527 = vcmp.lt.s32.totalorder %v6364, 1
    %v6528 = vsel %vm6527, 1, 0
    %v6529 = vlaneseq
    %v6530 = vshrl.u32 %v6529, 7
    %v6531 = vsub.s32 0, %v6530
    %v6532 = vrot.slane %v6528, %v6531
    %vm6533 = vcmp.eq.s32.totalorder %v6532, 1
    %v6534 = vsel %vm6533, %v6519, 0.0
    %v6535 = vsel %vm6533, %v6520, 0.0
    %v6536 = vsel %vm6533, %v6521, 0.0
    %v6537 = vsel %vm6533, %v6522, 0.0
    %v6538 = vsel %vm6533, %v6523, 0.0
    %v6539 = vsel %vm6533, %v6524, 0.0
    %v6540 = vsel %vm6533, %v6525, 0.0
    %v6541 = vsel %vm6533, %v6526, 0.0
    %v6542 = vpack.c.bf16 %v6464, %v6463
    %v6543 = vpack.c.bf16 %v6466, %v6465
    %v6544 = vpack.c.bf16 %v6468, %v6467
    %v6545 = vpack.c.bf16 %v6470, %v6469
    %v6546 = vpack.c.bf16 %v6331, %v6326
    %v6547 = vpack.c.bf16 %v6341, %v6336
    %v6548 = vpack.c.bf16 %v6351, %v6346
    %v6549 = vpack.c.bf16 %v6361, %v6356
    %v6550 = vpack.c.bf16 %v6535, %v6534
    %v6551 = vpack.c.bf16 %v6537, %v6536
    %v6552 = vpack.c.bf16 %v6539, %v6538
    %v6553 = vpack.c.bf16 %v6541, %v6540
    %v6562 = vunpack.c.l.b16 %v6366
    %v6563 = vunpack.c.h.b16 %v6366
    %v6564 = vunpack.c.l.b16 %v6367
    %v6565 = vunpack.c.h.b16 %v6367
    %v6566 = vunpack.c.l.b16 %v6368
    %v6567 = vunpack.c.h.b16 %v6368
    %v6568 = vunpack.c.l.b16 %v6369
    %v6569 = vunpack.c.h.b16 %v6369
    %v6570 = vunpack.c.l.b16 %v6370
    %v6571 = vunpack.c.h.b16 %v6370
    %v6572 = vunpack.c.l.b16 %v6371
    %v6573 = vunpack.c.h.b16 %v6371
    %v6574 = vunpack.c.l.b16 %v6372
    %v6575 = vunpack.c.h.b16 %v6372
    %v6576 = vunpack.c.l.b16 %v6373
    %v6577 = vunpack.c.h.b16 %v6373
    %v6578 = vpack.c.b16 %v6564, %v6562
    %v6579 = vpack.c.b16 %v6565, %v6563
    %v6580 = vpack.c.b16 %v6568, %v6566
    %v6581 = vpack.c.b16 %v6569, %v6567
    %v6582 = vpack.c.b16 %v6572, %v6570
    %v6583 = vpack.c.b16 %v6573, %v6571
    %v6584 = vpack.c.b16 %v6576, %v6574
    %v6585 = vpack.c.b16 %v6577, %v6575
    %v6591 = vsel %vm884, %v6579, 0
    %v6594 = vsel %vm884, %v6581, 0
    %v6597 = vsel %vm884, %v6583, 0
    %v6600 = vsel %vm884, %v6585, 0
    %6602 = vmatprep.subr.bf16.mxu0 0
    %6603 = vmatpush1.bf16.msra.mxu0 %v6542
    %6604 = vmatprep.subr.bf16.mxu0 0
    %6605 = vmatpush1.bf16.msra.mxu0 %v6543
    %6606 = vmatprep.subr.bf16.mxu0 0
    %6607 = vmatpush1.bf16.msra.mxu0 %v6544
    %6608 = vmatprep.subr.bf16.mxu0 0
    %6609 = vmatpush1.bf16.msra.mxu0 %v6545
    %6610 = vmatprep.subr.bf16.mxu0 0
    %6611 = vmatpush1.bf16.msra.mxu0 %v6546
    %6612 = vmatprep.subr.bf16.mxu0 0
    %6613 = vmatpush1.bf16.msra.mxu0 %v6547
    %6614 = vmatprep.subr.bf16.mxu0 0
    %6615 = vmatpush1.bf16.msra.mxu0 %v6548
    %6616 = vmatprep.subr.bf16.mxu0 0
    %6617 = vmatpush1.bf16.msra.mxu0 %v6549
    %6618 = vmatprep.subr.bf16.mxu0 0
    %6619 = vmatpush1.bf16.msra.mxu0 %v6550
    %6620 = vmatprep.subr.bf16.mxu0 0
    %6621 = vmatpush1.bf16.msra.mxu0 %v6551
    %6622 = vmatprep.subr.bf16.mxu0 0
    %6623 = vmatpush1.bf16.msra.mxu0 %v6552
    %6624 = vmatprep.subr.bf16.mxu0 0
    %6625 = vmatpush1.bf16.msra.mxu0 %v6553
    %6626 = vmatprep.subr.bf16.mxu0 0
    %6627 = vmatpush1.bf16.msra.mxu0 0
    %6628 = vmatprep.subr.bf16.mxu0 0
    %6629 = vmatpush1.bf16.msra.mxu0 0
    %6630 = vmatprep.subr.bf16.mxu0 0
    %6631 = vmatpush1.bf16.msra.mxu0 0
    %6632 = vmatprep.subr.bf16.mxu0 0
    %6633 = vmatpush1.bf16.msra.mxu0 0
    %6634 = vmatprep.mubr.bf16.mxu0 %v6591
    %6635 = vmatmul.mubr.bf16.gmra.mrb[0].mxu0 %v6578
    %v6636 = vpop.f32.mrb[0].mxu0
    %v6637 = vadd.f32 0.0, %v6636
    %v6638 = vpop.f32.mrb[0].mxu0
    %v6639 = vpop.f32.mrb[0].mxu0
    %v6640 = vadd.f32 0.0, %v6639
    %v6641 = vpop.f32.mrb[0].mxu0
    %6642 = vmatprep.mubr.bf16.mxu0 %v6594
    %6643 = vmatmul.mubr.bf16.gmra.mrb[0].mxu0 %v6580
    %v6644 = vpop.f32.mrb[0].mxu0
    %v6645 = vadd.f32 0.0, %v6644
    %v6646 = vpop.f32.mrb[0].mxu0
    %v6647 = vpop.f32.mrb[0].mxu0
    %v6648 = vadd.f32 0.0, %v6647
    %v6649 = vpop.f32.mrb[0].mxu0
    %6650 = vmatprep.mubr.bf16.mxu0 %v6597
    %6651 = vmatmul.mubr.bf16.gmra.mrb[0].mxu0 %v6582
    %v6652 = vpop.f32.mrb[0].mxu0
    %v6653 = vadd.f32 0.0, %v6652
    %v6654 = vpop.f32.mrb[0].mxu0
    %v6655 = vpop.f32.mrb[0].mxu0
    %v6656 = vadd.f32 0.0, %v6655
    %v6657 = vpop.f32.mrb[0].mxu0
    %6658 = vmatprep.mubr.bf16.mxu0 %v6600
    %6659 = vmatmul.mubr.bf16.gmra.mrb[0].mxu0 %v6584
    %v6660 = vpop.f32.mrb[0].mxu0
    %v6661 = vadd.f32 0.0, %v6660
    %v6662 = vpop.f32.mrb[0].mxu0
    %v6663 = vpop.f32.mrb[0].mxu0
    %v6664 = vadd.f32 0.0, %v6663
    %v6665 = vpop.f32.mrb[0].mxu0
    %6666 = vdwg.mxu0
    %6668 = vset.pattern.permute.xlu0 0
    %6669 = vperm.xlu0 %6668, %v6375
    %v6670 = vpop.permute.xlu0 %6669
    %6673 = vset.pattern.permute.xlu0 0
    %6674 = vperm.xlu0 %6673, %v6376
    %v6675 = vpop.permute.xlu0 %6674
    %6678 = vset.pattern.permute.xlu0 0
    %6679 = vperm.xlu0 %6678, %v6377
    %v6680 = vpop.permute.xlu0 %6679
    %6683 = vset.pattern.permute.xlu0 0
    %6684 = vperm.xlu0 %6683, %v6378
    %v6685 = vpop.permute.xlu0 %6684
    %6688 = vset.pattern.permute.xlu0 0
    %6689 = vperm.xlu0 %6688, %v6379
    %v6690 = vpop.permute.xlu0 %6689
    %6693 = vset.pattern.permute.xlu0 0
    %6694 = vperm.xlu0 %6693, %v6380
    %v6695 = vpop.permute.xlu0 %6694
    %6698 = vset.pattern.permute.xlu0 0
    %6699 = vperm.xlu0 %6698, %v6381
    %v6700 = vpop.permute.xlu0 %6699
    %6703 = vset.pattern.permute.xlu0 0
    %6704 = vperm.xlu0 %6703, %v6382
    %v6705 = vpop.permute.xlu0 %6704
    %v6707 = vmul.f32 %v6637, %v6670
    %v6708 = vmul.f32 %v6640, %v6675
    %v6709 = vmul.f32 %v6645, %v6680
    %v6710 = vmul.f32 %v6648, %v6685
    %v6711 = vmul.f32 %v6653, %v6690
    %v6712 = vmul.f32 %v6656, %v6695
    %v6713 = vmul.f32 %v6661, %v6700
    %v6714 = vmul.f32 %v6664, %v6705
    %6716 = vset.pattern.permute.xlu0 0
    %6717 = vperm.xlu0 %6716, %v6384
    %v6718 = vpop.permute.xlu0 %6717
    %6721 = vset.pattern.permute.xlu0 0
    %6722 = vperm.xlu0 %6721, %v6385
    %v6723 = vpop.permute.xlu0 %6722
    %6726 = vset.pattern.permute.xlu0 0
    %6727 = vperm.xlu0 %6726, %v6386
    %v6728 = vpop.permute.xlu0 %6727
    %6731 = vset.pattern.permute.xlu0 0
    %6732 = vperm.xlu0 %6731, %v6387
    %v6733 = vpop.permute.xlu0 %6732
    %6736 = vset.pattern.permute.xlu0 0
    %6737 = vperm.xlu0 %6736, %v6388
    %v6738 = vpop.permute.xlu0 %6737
    %6741 = vset.pattern.permute.xlu0 0
    %6742 = vperm.xlu0 %6741, %v6389
    %v6743 = vpop.permute.xlu0 %6742
    %6746 = vset.pattern.permute.xlu0 0
    %6747 = vperm.xlu0 %6746, %v6390
    %v6748 = vpop.permute.xlu0 %6747
    %6751 = vset.pattern.permute.xlu0 0
    %6752 = vperm.xlu0 %6751, %v6391
    %v6753 = vpop.permute.xlu0 %6752
    %v6755 = vadd.f32 %v6707, %v6718
    %v6756 = vadd.f32 %v6708, %v6723
    %v6757 = vadd.f32 %v6709, %v6728
    %v6758 = vadd.f32 %v6710, %v6733
    %v6759 = vadd.f32 %v6711, %v6738
    %v6760 = vadd.f32 %v6712, %v6743
    %v6761 = vadd.f32 %v6713, %v6748
    %v6762 = vadd.f32 %v6714, %v6753
    %vm6763 = vcmp.ge.f32.partialorder %v6755, 0.0
    %vm6764 = vcmp.ge.f32.partialorder %v6756, 0.0
    %vm6765 = vcmp.ge.f32.partialorder %v6757, 0.0
    %vm6766 = vcmp.ge.f32.partialorder %v6758, 0.0
    %vm6767 = vcmp.ge.f32.partialorder %v6759, 0.0
    %vm6768 = vcmp.ge.f32.partialorder %v6760, 0.0
    %vm6769 = vcmp.ge.f32.partialorder %v6761, 0.0
    %vm6770 = vcmp.ge.f32.partialorder %v6762, 0.0
    %v6771 = vmul.f32 %v6755, 0.3
    %v6772 = vmul.f32 %v6756, 0.3
    %v6773 = vmul.f32 %v6757, 0.3
    %v6774 = vmul.f32 %v6758, 0.3
    %v6775 = vmul.f32 %v6759, 0.3
    %v6776 = vmul.f32 %v6760, 0.3
    %v6777 = vmul.f32 %v6761, 0.3
    %v6778 = vmul.f32 %v6762, 0.3
    %v6779 = vsel %vm6763, %v6755, %v6771
    %v6780 = vsel %vm6764, %v6756, %v6772
    %v6781 = vsel %vm6765, %v6757, %v6773
    %v6782 = vsel %vm6766, %v6758, %v6774
    %v6783 = vsel %vm6767, %v6759, %v6775
    %v6784 = vsel %vm6768, %v6760, %v6776
    %v6785 = vsel %vm6769, %v6761, %v6777
    %v6786 = vsel %vm6770, %v6762, %v6778
    %s6787 = scalar_lea.vmem %s3, 832
    %v6788 = vld [vmem:[%s6787] sm:$0xff]
    %v6789 = vld [vmem:[%s6787 + $0x8] sm:$0xff]
    %v6790 = vld [vmem:[%s6787 + $0x10] sm:$0xff]
    %v6791 = vld [vmem:[%s6787 + $0x18] sm:$0xff]
    %v6792 = vld [vmem:[%s6787 + $0x20] sm:$0xff]
    %v6793 = vld [vmem:[%s6787 + $0x28] sm:$0xff]
    %v6794 = vld [vmem:[%s6787 + $0x30] sm:$0xff]
    %v6795 = vld [vmem:[%s6787 + $0x38] sm:$0xff]
    %s6796 = scalar_lea.vmem %s4, 832
    %v6797 = vld [vmem:[%s6796] sm:$0xff]
    %v6798 = vld [vmem:[%s6796 + $0x8] sm:$0xff]
    %v6799 = vld [vmem:[%s6796 + $0x10] sm:$0xff]
    %v6800 = vld [vmem:[%s6796 + $0x18] sm:$0xff]
    %v6801 = vld [vmem:[%s6796 + $0x20] sm:$0xff]
    %v6802 = vld [vmem:[%s6796 + $0x28] sm:$0xff]
    %v6803 = vld [vmem:[%s6796 + $0x30] sm:$0xff]
    %v6804 = vld [vmem:[%s6796 + $0x38] sm:$0xff]
    %s6805 = scalar_lea.vmem %s5, 832
    %v6806 = vld [vmem:[%s6805] sm:$0xff]
    %v6807 = vld [vmem:[%s6805 + $0x8] sm:$0xff]
    %v6808 = vld [vmem:[%s6805 + $0x10] sm:$0xff]
    %v6809 = vld [vmem:[%s6805 + $0x18] sm:$0xff]
    %v6810 = vld [vmem:[%s6805 + $0x20] sm:$0xff]
    %v6811 = vld [vmem:[%s6805 + $0x28] sm:$0xff]
    %v6812 = vld [vmem:[%s6805 + $0x30] sm:$0xff]
    %v6813 = vld [vmem:[%s6805 + $0x38] sm:$0xff]
    %6822 = vrot.lane.b32.xlu0 %v6779, 125
    %v6823 = vpop.permute.xlu0 %6822
    %6824 = vrot.lane.b32.xlu0 %v6780, 125
    %v6825 = vpop.permute.xlu0 %6824
    %6826 = vrot.lane.b32.xlu0 %v6781, 125
    %v6827 = vpop.permute.xlu0 %6826
    %6828 = vrot.lane.b32.xlu0 %v6782, 125
    %v6829 = vpop.permute.xlu0 %6828
    %6830 = vrot.lane.b32.xlu0 %v6783, 125
    %v6831 = vpop.permute.xlu0 %6830
    %6832 = vrot.lane.b32.xlu0 %v6784, 125
    %v6833 = vpop.permute.xlu0 %6832
    %6834 = vrot.lane.b32.xlu0 %v6785, 125
    %v6835 = vpop.permute.xlu0 %6834
    %6836 = vrot.lane.b32.xlu0 %v6786, 125
    %v6837 = vpop.permute.xlu0 %6836
    %6846 = vrot.lane.b32.xlu0 %v6779, 1
    %v6847 = vpop.permute.xlu0 %6846
    %6848 = vrot.lane.b32.xlu0 %v6780, 1
    %v6849 = vpop.permute.xlu0 %6848
    %6850 = vrot.lane.b32.xlu0 %v6781, 1
    %v6851 = vpop.permute.xlu0 %6850
    %6852 = vrot.lane.b32.xlu0 %v6782, 1
    %v6853 = vpop.permute.xlu0 %6852
    %6854 = vrot.lane.b32.xlu0 %v6783, 1
    %v6855 = vpop.permute.xlu0 %6854
    %6856 = vrot.lane.b32.xlu0 %v6784, 1
    %v6857 = vpop.permute.xlu0 %6856
    %6858 = vrot.lane.b32.xlu0 %v6785, 1
    %v6859 = vpop.permute.xlu0 %6858
    %6860 = vrot.lane.b32.xlu0 %v6786, 1
    %v6861 = vpop.permute.xlu0 %6860
    %v6870 = vsel %vm215, %v6823, %v6847
    %v6871 = vsel %vm215, %v6825, %v6849
    %v6872 = vsel %vm215, %v6827, %v6851
    %v6873 = vsel %vm215, %v6829, %v6853
    %v6874 = vsel %vm215, %v6831, %v6855
    %v6875 = vsel %vm215, %v6833, %v6857
    %v6876 = vsel %vm215, %v6835, %v6859
    %v6877 = vsel %vm215, %v6837, %v6861
    %v6878 = vsel %vm6462, %v6870, 0.0
    %v6879 = vsel %vm6462, %v6871, 0.0
    %v6880 = vsel %vm6462, %v6872, 0.0
    %v6881 = vsel %vm6462, %v6873, 0.0
    %v6882 = vsel %vm6462, %v6874, 0.0
    %v6883 = vsel %vm6462, %v6875, 0.0
    %v6884 = vsel %vm6462, %v6876, 0.0
    %v6885 = vsel %vm6462, %v6877, 0.0
    %6886 = vrot.lane.b32.xlu0 %v6779, 127
    %v6887 = vpop.permute.xlu0 %6886
    %6888 = vrot.lane.b32.xlu0 %v6780, 127
    %v6889 = vpop.permute.xlu0 %6888
    %6890 = vrot.lane.b32.xlu0 %v6781, 127
    %v6891 = vpop.permute.xlu0 %6890
    %6892 = vrot.lane.b32.xlu0 %v6782, 127
    %v6893 = vpop.permute.xlu0 %6892
    %6894 = vrot.lane.b32.xlu0 %v6783, 127
    %v6895 = vpop.permute.xlu0 %6894
    %6896 = vrot.lane.b32.xlu0 %v6784, 127
    %v6897 = vpop.permute.xlu0 %6896
    %6898 = vrot.lane.b32.xlu0 %v6785, 127
    %v6899 = vpop.permute.xlu0 %6898
    %6900 = vrot.lane.b32.xlu0 %v6786, 127
    %v6901 = vpop.permute.xlu0 %6900
    %6910 = vrot.lane.b32.xlu0 %v6779, 3
    %v6911 = vpop.permute.xlu0 %6910
    %6912 = vrot.lane.b32.xlu0 %v6780, 3
    %v6913 = vpop.permute.xlu0 %6912
    %6914 = vrot.lane.b32.xlu0 %v6781, 3
    %v6915 = vpop.permute.xlu0 %6914
    %6916 = vrot.lane.b32.xlu0 %v6782, 3
    %v6917 = vpop.permute.xlu0 %6916
    %6918 = vrot.lane.b32.xlu0 %v6783, 3
    %v6919 = vpop.permute.xlu0 %6918
    %6920 = vrot.lane.b32.xlu0 %v6784, 3
    %v6921 = vpop.permute.xlu0 %6920
    %6922 = vrot.lane.b32.xlu0 %v6785, 3
    %v6923 = vpop.permute.xlu0 %6922
    %6924 = vrot.lane.b32.xlu0 %v6786, 3
    %v6925 = vpop.permute.xlu0 %6924
    %v6934 = vsel %vm145, %v6887, %v6911
    %v6935 = vsel %vm145, %v6889, %v6913
    %v6936 = vsel %vm145, %v6891, %v6915
    %v6937 = vsel %vm145, %v6893, %v6917
    %v6938 = vsel %vm145, %v6895, %v6919
    %v6939 = vsel %vm145, %v6897, %v6921
    %v6940 = vsel %vm145, %v6899, %v6923
    %v6941 = vsel %vm145, %v6901, %v6925
    %v6942 = vsel %vm6533, %v6934, 0.0
    %v6943 = vsel %vm6533, %v6935, 0.0
    %v6944 = vsel %vm6533, %v6936, 0.0
    %v6945 = vsel %vm6533, %v6937, 0.0
    %v6946 = vsel %vm6533, %v6938, 0.0
    %v6947 = vsel %vm6533, %v6939, 0.0
    %v6948 = vsel %vm6533, %v6940, 0.0
    %v6949 = vsel %vm6533, %v6941, 0.0
    %v6950 = vpack.c.bf16 %v6879, %v6878
    %v6951 = vpack.c.bf16 %v6881, %v6880
    %v6952 = vpack.c.bf16 %v6883, %v6882
    %v6953 = vpack.c.bf16 %v6885, %v6884
    %v6954 = vpack.c.bf16 %v6780, %v6779
    %v6955 = vpack.c.bf16 %v6782, %v6781
    %v6956 = vpack.c.bf16 %v6784, %v6783
    %v6957 = vpack.c.bf16 %v6786, %v6785
    %v6958 = vpack.c.bf16 %v6943, %v6942
    %v6959 = vpack.c.bf16 %v6945, %v6944
    %v6960 = vpack.c.bf16 %v6947, %v6946
    %v6961 = vpack.c.bf16 %v6949, %v6948
    %v6970 = vunpack.c.l.b16 %v6788
    %v6971 = vunpack.c.h.b16 %v6788
    %v6972 = vunpack.c.l.b16 %v6789
    %v6973 = vunpack.c.h.b16 %v6789
    %v6974 = vunpack.c.l.b16 %v6790
    %v6975 = vunpack.c.h.b16 %v6790
    %v6976 = vunpack.c.l.b16 %v6791
    %v6977 = vunpack.c.h.b16 %v6791
    %v6978 = vunpack.c.l.b16 %v6792
    %v6979 = vunpack.c.h.b16 %v6792
    %v6980 = vunpack.c.l.b16 %v6793
    %v6981 = vunpack.c.h.b16 %v6793
    %v6982 = vunpack.c.l.b16 %v6794
    %v6983 = vunpack.c.h.b16 %v6794
    %v6984 = vunpack.c.l.b16 %v6795
    %v6985 = vunpack.c.h.b16 %v6795
    %v6986 = vpack.c.b16 %v6972, %v6970
    %v6987 = vpack.c.b16 %v6973, %v6971
    %v6988 = vpack.c.b16 %v6976, %v6974
    %v6989 = vpack.c.b16 %v6977, %v6975
    %v6990 = vpack.c.b16 %v6980, %v6978
    %v6991 = vpack.c.b16 %v6981, %v6979
    %v6992 = vpack.c.b16 %v6984, %v6982
    %v6993 = vpack.c.b16 %v6985, %v6983
    %v6999 = vsel %vm884, %v6987, 0
    %v7002 = vsel %vm884, %v6989, 0
    %v7005 = vsel %vm884, %v6991, 0
    %v7008 = vsel %vm884, %v6993, 0
    %7010 = vmatprep.subr.bf16.mxu0 0
    %7011 = vmatpush1.bf16.msra.mxu0 %v6950
    %7012 = vmatprep.subr.bf16.mxu0 0
    %7013 = vmatpush1.bf16.msra.mxu0 %v6951
    %7014 = vmatprep.subr.bf16.mxu0 0
    %7015 = vmatpush1.bf16.msra.mxu0 %v6952
    %7016 = vmatprep.subr.bf16.mxu0 0
    %7017 = vmatpush1.bf16.msra.mxu0 %v6953
    %7018 = vmatprep.subr.bf16.mxu0 0
    %7019 = vmatpush1.bf16.msra.mxu0 %v6954
    %7020 = vmatprep.subr.bf16.mxu0 0
    %7021 = vmatpush1.bf16.msra.mxu0 %v6955
    %7022 = vmatprep.subr.bf16.mxu0 0
    %7023 = vmatpush1.bf16.msra.mxu0 %v6956
    %7024 = vmatprep.subr.bf16.mxu0 0
    %7025 = vmatpush1.bf16.msra.mxu0 %v6957
    %7026 = vmatprep.subr.bf16.mxu0 0
    %7027 = vmatpush1.bf16.msra.mxu0 %v6958
    %7028 = vmatprep.subr.bf16.mxu0 0
    %7029 = vmatpush1.bf16.msra.mxu0 %v6959
    %7030 = vmatprep.subr.bf16.mxu0 0
    %7031 = vmatpush1.bf16.msra.mxu0 %v6960
    %7032 = vmatprep.subr.bf16.mxu0 0
    %7033 = vmatpush1.bf16.msra.mxu0 %v6961
    %7034 = vmatprep.subr.bf16.mxu0 0
    %7035 = vmatpush1.bf16.msra.mxu0 0
    %7036 = vmatprep.subr.bf16.mxu0 0
    %7037 = vmatpush1.bf16.msra.mxu0 0
    %7038 = vmatprep.subr.bf16.mxu0 0
    %7039 = vmatpush1.bf16.msra.mxu0 0
    %7040 = vmatprep.subr.bf16.mxu0 0
    %7041 = vmatpush1.bf16.msra.mxu0 0
    %7042 = vmatprep.mubr.bf16.mxu0 %v6999
    %7043 = vmatmul.mubr.bf16.gmra.mrb[0].mxu0 %v6986
    %v7044 = vpop.f32.mrb[0].mxu0
    %v7045 = vadd.f32 0.0, %v7044
    %v7046 = vpop.f32.mrb[0].mxu0
    %v7047 = vpop.f32.mrb[0].mxu0
    %v7048 = vadd.f32 0.0, %v7047
    %v7049 = vpop.f32.mrb[0].mxu0
    %7050 = vmatprep.mubr.bf16.mxu0 %v7002
    %7051 = vmatmul.mubr.bf16.gmra.mrb[0].mxu0 %v6988
    %v7052 = vpop.f32.mrb[0].mxu0
    %v7053 = vadd.f32 0.0, %v7052
    %v7054 = vpop.f32.mrb[0].mxu0
    %v7055 = vpop.f32.mrb[0].mxu0
    %v7056 = vadd.f32 0.0, %v7055
    %v7057 = vpop.f32.mrb[0].mxu0
    %7058 = vmatprep.mubr.bf16.mxu0 %v7005
    %7059 = vmatmul.mubr.bf16.gmra.mrb[0].mxu0 %v6990
    %v7060 = vpop.f32.mrb[0].mxu0
    %v7061 = vadd.f32 0.0, %v7060
    %v7062 = vpop.f32.mrb[0].mxu0
    %v7063 = vpop.f32.mrb[0].mxu0
    %v7064 = vadd.f32 0.0, %v7063
    %v7065 = vpop.f32.mrb[0].mxu0
    %7066 = vmatprep.mubr.bf16.mxu0 %v7008
    %7067 = vmatmul.mubr.bf16.gmra.mrb[0].mxu0 %v6992
    %v7068 = vpop.f32.mrb[0].mxu0
    %v7069 = vadd.f32 0.0, %v7068
    %v7070 = vpop.f32.mrb[0].mxu0
    %v7071 = vpop.f32.mrb[0].mxu0
    %v7072 = vadd.f32 0.0, %v7071
    %v7073 = vpop.f32.mrb[0].mxu0
    %7074 = vdwg.mxu0
    %7076 = vset.pattern.permute.xlu0 0
    %7077 = vperm.xlu0 %7076, %v6797
    %v7078 = vpop.permute.xlu0 %7077
    %7081 = vset.pattern.permute.xlu0 0
    %7082 = vperm.xlu0 %7081, %v6798
    %v7083 = vpop.permute.xlu0 %7082
    %7086 = vset.pattern.permute.xlu0 0
    %7087 = vperm.xlu0 %7086, %v6799
    %v7088 = vpop.permute.xlu0 %7087
    %7091 = vset.pattern.permute.xlu0 0
    %7092 = vperm.xlu0 %7091, %v6800
    %v7093 = vpop.permute.xlu0 %7092
    %7096 = vset.pattern.permute.xlu0 0
    %7097 = vperm.xlu0 %7096, %v6801
    %v7098 = vpop.permute.xlu0 %7097
    %7101 = vset.pattern.permute.xlu0 0
    %7102 = vperm.xlu0 %7101, %v6802
    %v7103 = vpop.permute.xlu0 %7102
    %7106 = vset.pattern.permute.xlu0 0
    %7107 = vperm.xlu0 %7106, %v6803
    %v7108 = vpop.permute.xlu0 %7107
    %7111 = vset.pattern.permute.xlu0 0
    %7112 = vperm.xlu0 %7111, %v6804
    %v7113 = vpop.permute.xlu0 %7112
    %v7115 = vmul.f32 %v7045, %v7078
    %v7116 = vmul.f32 %v7048, %v7083
    %v7117 = vmul.f32 %v7053, %v7088
    %v7118 = vmul.f32 %v7056, %v7093
    %v7119 = vmul.f32 %v7061, %v7098
    %v7120 = vmul.f32 %v7064, %v7103
    %v7121 = vmul.f32 %v7069, %v7108
    %v7122 = vmul.f32 %v7072, %v7113
    %7124 = vset.pattern.permute.xlu0 0
    %7125 = vperm.xlu0 %7124, %v6806
    %v7126 = vpop.permute.xlu0 %7125
    %7129 = vset.pattern.permute.xlu0 0
    %7130 = vperm.xlu0 %7129, %v6807
    %v7131 = vpop.permute.xlu0 %7130
    %7134 = vset.pattern.permute.xlu0 0
    %7135 = vperm.xlu0 %7134, %v6808
    %v7136 = vpop.permute.xlu0 %7135
    %7139 = vset.pattern.permute.xlu0 0
    %7140 = vperm.xlu0 %7139, %v6809
    %v7141 = vpop.permute.xlu0 %7140
    %7144 = vset.pattern.permute.xlu0 0
    %7145 = vperm.xlu0 %7144, %v6810
    %v7146 = vpop.permute.xlu0 %7145
    %7149 = vset.pattern.permute.xlu0 0
    %7150 = vperm.xlu0 %7149, %v6811
    %v7151 = vpop.permute.xlu0 %7150
    %7154 = vset.pattern.permute.xlu0 0
    %7155 = vperm.xlu0 %7154, %v6812
    %v7156 = vpop.permute.xlu0 %7155
    %7159 = vset.pattern.permute.xlu0 0
    %7160 = vperm.xlu0 %7159, %v6813
    %v7161 = vpop.permute.xlu0 %7160
    %v7163 = vadd.f32 %v7115, %v7126
    %v7164 = vadd.f32 %v7116, %v7131
    %v7165 = vadd.f32 %v7117, %v7136
    %v7166 = vadd.f32 %v7118, %v7141
    %v7167 = vadd.f32 %v7119, %v7146
    %v7168 = vadd.f32 %v7120, %v7151
    %v7169 = vadd.f32 %v7121, %v7156
    %v7170 = vadd.f32 %v7122, %v7161
    %v7171 = vadd.f32 %v7163, %v6326
    %v7172 = vadd.f32 %v7164, %v6331
    %v7173 = vadd.f32 %v7165, %v6336
    %v7174 = vadd.f32 %v7166, %v6341
    %v7175 = vadd.f32 %v7167, %v6346
    %v7176 = vadd.f32 %v7168, %v6351
    %v7177 = vadd.f32 %v7169, %v6356
    %v7178 = vadd.f32 %v7170, %v6361
    %v7179 = vld [vmem:[%s8] sm:$0xf]
    %v7181 = vsel %vm110, %v7171, 0
    %v7184 = vsel %vm110, %v7172, 0
    %v7187 = vsel %vm110, %v7173, 0
    %v7190 = vsel %vm110, %v7174, 0
    %v7193 = vsel %vm110, %v7175, 0
    %v7196 = vsel %vm110, %v7176, 0
    %v7199 = vsel %vm110, %v7177, 0
    %v7202 = vsel %vm110, %v7178, 0
    %vm7204 = vcmask 1043456
    %v7206 = vsel %vm7204, %v7179, 0
    %7208 = vmatprep.subr.mxu0 0.0
    %7209 = vmatpush1.msra.mxu0 %v7206
    %7210 = vmatprep.subr.mxu0 0.0
    %7211 = vmatpush1.msra.mxu0 0.0
    %7212 = vmatprep.subr.mxu0 0.0
    %7213 = vmatpush1.msra.mxu0 0.0
    %7214 = vmatprep.subr.mxu0 0.0
    %7215 = vmatpush1.msra.mxu0 0.0
    %7216 = vmatprep.subr.mxu0 0.0
    %7217 = vmatpush1.msra.mxu0 0.0
    %7218 = vmatprep.subr.mxu0 0.0
    %7219 = vmatpush1.msra.mxu0 0.0
    %7220 = vmatprep.subr.mxu0 0.0
    %7221 = vmatpush1.msra.mxu0 0.0
    %7222 = vmatprep.subr.mxu0 0.0
    %7223 = vmatpush1.msra.mxu0 0.0
    %7224 = vmatprep.subr.mxu0 0.0
    %7225 = vmatpush1.msra.mxu0 0.0
    %7226 = vmatprep.subr.mxu0 0.0
    %7227 = vmatpush1.msra.mxu0 0.0
    %7228 = vmatprep.subr.mxu0 0.0
    %7229 = vmatpush1.msra.mxu0 0.0
    %7230 = vmatprep.subr.mxu0 0.0
    %7231 = vmatpush1.msra.mxu0 0.0
    %7232 = vmatprep.subr.mxu0 0.0
    %7233 = vmatpush1.msra.mxu0 0.0
    %7234 = vmatprep.subr.mxu0 0.0
    %7235 = vmatpush1.msra.mxu0 0.0
    %7236 = vmatprep.subr.mxu0 0.0
    %7237 = vmatpush1.msra.mxu0 0.0
    %7238 = vmatprep.subr.mxu0 0.0
    %7239 = vmatpush1.msra.mxu0 0.0
    %7240 = vmatprep.subr.mxu0 0.0
    %7241 = vmatpush1.msra.mxu0 0.0
    %7242 = vmatprep.subr.mxu0 0.0
    %7243 = vmatpush1.msra.mxu0 0.0
    %7244 = vmatprep.subr.mxu0 0.0
    %7245 = vmatpush1.msra.mxu0 0.0
    %7246 = vmatprep.subr.mxu0 0.0
    %7247 = vmatpush1.msra.mxu0 0.0
    %7248 = vmatprep.subr.mxu0 0.0
    %7249 = vmatpush1.msra.mxu0 0.0
    %7250 = vmatprep.subr.mxu0 0.0
    %7251 = vmatpush1.msra.mxu0 0.0
    %7252 = vmatprep.subr.mxu0 0.0
    %7253 = vmatpush1.msra.mxu0 0.0
    %7254 = vmatprep.subr.mxu0 0.0
    %7255 = vmatpush1.msra.mxu0 0.0
    %7256 = vmatprep.subr.mxu0 0.0
    %7257 = vmatpush1.msra.mxu0 0.0
    %7258 = vmatprep.subr.mxu0 0.0
    %7259 = vmatpush1.msra.mxu0 0.0
    %7260 = vmatprep.subr.mxu0 0.0
    %7261 = vmatpush1.msra.mxu0 0.0
    %7262 = vmatprep.subr.mxu0 0.0
    %7263 = vmatpush1.msra.mxu0 0.0
    %7264 = vmatprep.subr.mxu0 0.0
    %7265 = vmatpush1.msra.mxu0 0.0
    %7266 = vmatprep.subr.mxu0 0.0
    %7267 = vmatpush1.msra.mxu0 0.0
    %7268 = vmatprep.subr.mxu0 0.0
    %7269 = vmatpush1.msra.mxu0 0.0
    %7270 = vmatprep.subr.mxu0 0.0
    %7271 = vmatpush1.msra.mxu0 0.0
    %7272 = vmatprep.mubr.f32.mxu0 0.0
    %7273 = vmatmul.mubr.f32.gmra.mrb[0].mxu0 %v7181
    %v7274 = vpop.f32.mrb[0].mxu0
    %v7275 = vadd.f32 0.0, %v7274
    %v7276 = vpop.f32.mrb[0].mxu0
    %7277 = vmatprep.mubr.f32.mxu0 0.0
    %7278 = vmatmul.mubr.f32.gmra.mrb[0].mxu0 %v7184
    %v7279 = vpop.f32.mrb[0].mxu0
    %v7280 = vadd.f32 0.0, %v7279
    %v7281 = vpop.f32.mrb[0].mxu0
    %7282 = vmatprep.mubr.f32.mxu0 0.0
    %7283 = vmatmul.mubr.f32.gmra.mrb[0].mxu0 %v7187
    %v7284 = vpop.f32.mrb[0].mxu0
    %v7285 = vadd.f32 0.0, %v7284
    %v7286 = vpop.f32.mrb[0].mxu0
    %7287 = vmatprep.mubr.f32.mxu0 0.0
    %7288 = vmatmul.mubr.f32.gmra.mrb[0].mxu0 %v7190
    %v7289 = vpop.f32.mrb[0].mxu0
    %v7290 = vadd.f32 0.0, %v7289
    %v7291 = vpop.f32.mrb[0].mxu0
    %7292 = vmatprep.mubr.f32.mxu0 0.0
    %7293 = vmatmul.mubr.f32.gmra.mrb[0].mxu0 %v7193
    %v7294 = vpop.f32.mrb[0].mxu0
    %v7295 = vadd.f32 0.0, %v7294
    %v7296 = vpop.f32.mrb[0].mxu0
    %7297 = vmatprep.mubr.f32.mxu0 0.0
    %7298 = vmatmul.mubr.f32.gmra.mrb[0].mxu0 %v7196
    %v7299 = vpop.f32.mrb[0].mxu0
    %v7300 = vadd.f32 0.0, %v7299
    %v7301 = vpop.f32.mrb[0].mxu0
    %7302 = vmatprep.mubr.f32.mxu0 0.0
    %7303 = vmatmul.mubr.f32.gmra.mrb[0].mxu0 %v7199
    %v7304 = vpop.f32.mrb[0].mxu0
    %v7305 = vadd.f32 0.0, %v7304
    %v7306 = vpop.f32.mrb[0].mxu0
    %7307 = vmatprep.mubr.f32.mxu0 0.0
    %7308 = vmatmul.mubr.f32.gmra.mrb[0].mxu0 %v7202
    %v7309 = vpop.f32.mrb[0].mxu0
    %v7310 = vadd.f32 0.0, %v7309
    %v7311 = vpop.f32.mrb[0].mxu0
    %7312 = vdwg.mxu0
    %v7313 = vld [vmem:[%s6] sm:$0x1]
    %v7314 = vld [vmem:[#allocation2] sm:$0x1]
    %7316 = vset.pattern.permute.xlu0 0
    %7317 = vperm.xlu0 %7316, %v7314
    %v7318 = vpop.permute.xlu0 %7317
    %v7320 = vlaneseq
    %v7321 = vshrl.u32 %v7320, 7
    %v7322 = vsub.s32 0, %v7321
    %v7323 = vrot.slane %v7318, %v7322
    %v7325 = vsel %vm884, %v7313, 0
    %7327 = vmatprep.subr.mxu0 0.0
    %7328 = vmatpush1.msra.mxu0 %v7275
    %7329 = vmatprep.subr.mxu0 0.0
    %7330 = vmatpush1.msra.mxu0 %v7280
    %7331 = vmatprep.subr.mxu0 0.0
    %7332 = vmatpush1.msra.mxu0 %v7285
    %7333 = vmatprep.subr.mxu0 0.0
    %7334 = vmatpush1.msra.mxu0 %v7290
    %7335 = vmatprep.subr.mxu0 0.0
    %7336 = vmatpush1.msra.mxu0 %v7295
    %7337 = vmatprep.subr.mxu0 0.0
    %7338 = vmatpush1.msra.mxu0 %v7300
    %7339 = vmatprep.subr.mxu0 0.0
    %7340 = vmatpush1.msra.mxu0 %v7305
    %7341 = vmatprep.subr.mxu0 0.0
    %7342 = vmatpush1.msra.mxu0 %v7310
    %7343 = vmatprep.subr.mxu0 0.0
    %7344 = vmatpush1.msra.mxu0 0.0
    %7345 = vmatprep.subr.mxu0 0.0
    %7346 = vmatpush1.msra.mxu0 0.0
    %7347 = vmatprep.subr.mxu0 0.0
    %7348 = vmatpush1.msra.mxu0 0.0
    %7349 = vmatprep.subr.mxu0 0.0
    %7350 = vmatpush1.msra.mxu0 0.0
    %7351 = vmatprep.subr.mxu0 0.0
    %7352 = vmatpush1.msra.mxu0 0.0
    %7353 = vmatprep.subr.mxu0 0.0
    %7354 = vmatpush1.msra.mxu0 0.0
    %7355 = vmatprep.subr.mxu0 0.0
    %7356 = vmatpush1.msra.mxu0 0.0
    %7357 = vmatprep.subr.mxu0 0.0
    %7358 = vmatpush1.msra.mxu0 0.0
    %7359 = vmatprep.subr.mxu0 0.0
    %7360 = vmatpush1.msra.mxu0 0.0
    %7361 = vmatprep.subr.mxu0 0.0
    %7362 = vmatpush1.msra.mxu0 0.0
    %7363 = vmatprep.subr.mxu0 0.0
    %7364 = vmatpush1.msra.mxu0 0.0
    %7365 = vmatprep.subr.mxu0 0.0
    %7366 = vmatpush1.msra.mxu0 0.0
    %7367 = vmatprep.subr.mxu0 0.0
    %7368 = vmatpush1.msra.mxu0 0.0
    %7369 = vmatprep.subr.mxu0 0.0
    %7370 = vmatpush1.msra.mxu0 0.0
    %7371 = vmatprep.subr.mxu0 0.0
    %7372 = vmatpush1.msra.mxu0 0.0
    %7373 = vmatprep.subr.mxu0 0.0
    %7374 = vmatpush1.msra.mxu0 0.0
    %7375 = vmatprep.subr.mxu0 0.0
    %7376 = vmatpush1.msra.mxu0 0.0
    %7377 = vmatprep.subr.mxu0 0.0
    %7378 = vmatpush1.msra.mxu0 0.0
    %7379 = vmatprep.subr.mxu0 0.0
    %7380 = vmatpush1.msra.mxu0 0.0
    %7381 = vmatprep.subr.mxu0 0.0
    %7382 = vmatpush1.msra.mxu0 0.0
    %7383 = vmatprep.subr.mxu0 0.0
    %7384 = vmatpush1.msra.mxu0 0.0
    %7385 = vmatprep.subr.mxu0 0.0
    %7386 = vmatpush1.msra.mxu0 0.0
    %7387 = vmatprep.subr.mxu0 0.0
    %7388 = vmatpush1.msra.mxu0 0.0
    %7389 = vmatprep.subr.mxu0 0.0
    %7390 = vmatpush1.msra.mxu0 0.0
    %7391 = vmatprep.mubr.f32.mxu0 0.0
    %7392 = vmatmul.mubr.f32.gmra.mrb[0].mxu0 %v7325
    %v7393 = vpop.f32.mrb[0].mxu0
    %v7394 = vadd.f32 %v7323, %v7393
    %v7395 = vpop.f32.mrb[0].mxu0
    %7396 = vdwg.mxu0
    %vm7397 = vcmask 8192
    %7398 = vst.msk [vmem:[#allocation3] sm:$0x1] %vm7397, %v7394
    // Predicated region
    $region90: #{discriminator_forward.1} parent=1 // pred_check
      _
    $region91: #{discriminator_forward.1} parent=1 // pred_check_branch
      %7400 = sbr.rel (0) target = $region93
    $region92: #{discriminator_forward.1} parent=1 // pred_region
      %s7402 = ssub.s32 16, 16
      %7403 = vsyncadd [#allocation4], %s7402
      %s7405 = sshll.u32 [#allocation3], 4
      %s7406 = int_to_ptr.vmem [resolvable:$true] %s7405
      %7408 = dma.vmem_to_hbm [thread:$0]  %s7406, 16, %s22, [#allocation4]
    $region93: #{discriminator_forward.1} parent=1 // pred_fallthru
      _
    // Predicated region
    $region94: #{discriminator_forward.1} parent=1 // pred_check
      _
    $region95: #{discriminator_forward.1} parent=1 // pred_check_branch
      %7410 = sbr.rel (0) target = $region97
    $region96: #{discriminator_forward.1} parent=1 // pred_region
      %7411 = dma.done [#allocation4], 16
    $region97: #{discriminator_forward.1} parent=1 // pred_fallthru
      _
    %7412 = vsyncpa [#allocation4], 1

</llo_original>
